<compile_context>
chip_gen: v7x
topology: tpu7x:2x2x1
jax: 0.10.0
libtpu: 0.0.40
codegen_flags: <defaults>
</compile_context>

<pallas_src>
import functools

import jax
import jax.numpy as jnp
from jax.experimental import pallas as pl
from jax.experimental.pallas import tpu as pltpu

LANE = 128            # output-channel padding target (TPU lane width)
BASE_WIDTH = 16
BLOCKS = (2, 2, 2, 2)


def _round_up(x, m):
    return (x + m - 1) // m * m


# ----------------------------------------------------------------------------
# Pallas kernels
# ----------------------------------------------------------------------------
def _full_spec(shape):
    """BlockSpec covering the whole (small) array, grid=()."""
    zeros = (0,) * len(shape)
    return pl.BlockSpec(shape, lambda *args, z=zeros: z)


def _matmul_bn_kernel(x_ref, w_ref, s_ref, b_ref, *rest, relu, has_res):
    # Single full-K (tm, K) @ (K, tn) on the MXU, f32 accumulate.
    # Epilogue: folded-BN affine, optional residual add, optional ReLU.
    if has_res:
        res_ref, o_ref = rest
    else:
        (o_ref,) = rest

    acc = jnp.dot(x_ref[...], w_ref[...], preferred_element_type=jnp.float32)
    y = acc * s_ref[...] + b_ref[...]
    if has_res:
        y = y + res_ref[...].astype(jnp.float32)
    if relu:
        y = jnp.maximum(y, 0.0)
    o_ref[...] = y.astype(o_ref.dtype)


def _max_reduce_kernel(x_ref, o_ref):
    # x: (KK, tm, C) stacked pooling windows -> max over window axis.
    o_ref[...] = jnp.max(x_ref[...], axis=0)


def _gap_fc_kernel(x_ref, w_ref, b_ref, o_ref):
    # Global average pool over the spatial axis + final Linear, fused.
    feat = jnp.mean(x_ref[...].astype(jnp.float32), axis=1)          # (N, C)
    o_ref[...] = jnp.dot(feat.astype(jnp.bfloat16), w_ref[...],
                         preferred_element_type=jnp.float32) + b_ref[...]


# ----------------------------------------------------------------------------
# Tiling heuristics
# ----------------------------------------------------------------------------
def _pick_tm(m):
    # Split M into two tiles when large enough so both v7x TensorCores get
    # work ("parallel" grid dims); for M < 128 keep a single tile (fewer grid
    # steps on single-TC v5e/v6e, and tiny tiles only add per-step overhead).
    if m >= 128 and (m // 2) % 8 == 0:
        return m // 2
    return m


# ----------------------------------------------------------------------------
# Pallas wrappers
# ----------------------------------------------------------------------------
def matmul_bn(x, w, scale, bias, *, relu, residual=None,
              out_dtype=jnp.bfloat16):
    """(M,K)@(K,N) with folded-BN affine, optional residual add and ReLU.

    K is taken as a single full-extent tile (every conv here has K <= 1152,
    so x-tile + w-tile are well under a MiB in bf16).
    """
    M, K = x.shape
    K2, N = w.shape
    assert K == K2
    tm, tn = _pick_tm(M), N
    grid = (M // tm, N // tn)

    in_specs = [
        pl.BlockSpec((tm, K), lambda i, j: (i, 0)),
        pl.BlockSpec((K, tn), lambda i, j: (0, j)),
        pl.BlockSpec((1, tn), lambda i, j: (0, j)),
        pl.BlockSpec((1, tn), lambda i, j: (0, j)),
    ]
    args = [x, w, scale, bias]
    if residual is not None:
        in_specs.append(pl.BlockSpec((tm, tn), lambda i, j: (i, j)))
        args.append(residual)

    kernel = functools.partial(_matmul_bn_kernel, relu=relu,
                               has_res=residual is not None)
    return pl.pallas_call(
        kernel,
        out_shape=jax.ShapeDtypeStruct((M, N), out_dtype),
        grid_spec=pltpu.PrefetchScalarGridSpec(
            num_scalar_prefetch=0,
            grid=grid,
            in_specs=in_specs,
            out_specs=pl.BlockSpec((tm, tn), lambda i, j: (i, j)),
        ),
        compiler_params=pltpu.CompilerParams(
            dimension_semantics=("parallel", "parallel")),
    )(*args)


def max_reduce(stacked):
    kk, M, C = stacked.shape
    tm = _pick_tm(M)
    return pl.pallas_call(
        _max_reduce_kernel,
        out_shape=jax.ShapeDtypeStruct((M, C), stacked.dtype),
        grid_spec=pltpu.PrefetchScalarGridSpec(
            num_scalar_prefetch=0,
            grid=(M // tm,),
            in_specs=[pl.BlockSpec((kk, tm, C), lambda i: (0, i, 0))],
            out_specs=pl.BlockSpec((tm, C), lambda i: (i, 0)),
        ),
        compiler_params=pltpu.CompilerParams(
            dimension_semantics=("parallel",)),
    )(stacked)


def gap_fc(x, fc, num_classes):
    # Fused global average pool + Linear.  fc['w'] is bf16 (C, LANE),
    # fc['b'] is f32 (1, LANE); slice to num_classes outside.
    N, H, W, C = x.shape
    x3 = x.reshape(N, H * W, C)
    out = pl.pallas_call(
        _gap_fc_kernel,
        out_shape=jax.ShapeDtypeStruct((N, LANE), jnp.float32),
        in_specs=[_full_spec(x3.shape), _full_spec(fc['w'].shape),
                  _full_spec(fc['b'].shape)],
        out_specs=_full_spec((N, LANE)),
    )(x3, fc['w'], fc['b'])
    return out[:, :num_classes]


# ----------------------------------------------------------------------------
# Glue: im2col / pooling window extraction (plain JAX, layout plumbing only)
# ----------------------------------------------------------------------------
def _im2col(x, kh, kw, stride, pad, k_pad):
    # x: NHWC with REAL channel count -> patches (N*OH*OW, k_pad), flattened
    # in (kh, kw, C) order and zero-padded once to a 128-multiple K.
    N, H, W, C = x.shape
    if pad:
        x = jnp.pad(x, ((0, 0), (pad, pad), (pad, pad), (0, 0)))
    OH = (H + 2 * pad - kh) // stride + 1
    OW = (W + 2 * pad - kw) // stride + 1
    cols = []
    for ki in range(kh):
        for kj in range(kw):
            cols.append(x[:, ki:ki + stride * OH:stride,
                          kj:kj + stride * OW:stride, :])
    patches = jnp.concatenate(cols, axis=-1)          # (N, OH, OW, kh*kw*C)
    patches = patches.reshape(N * OH * OW, kh * kw * C)
    k_real = kh * kw * C
    if k_real < k_pad:
        patches = jnp.pad(patches, ((0, 0), (0, k_pad - k_real)))
    return patches, (N, OH, OW)


def conv_bn(x, conv, *, kh, kw, stride, pad, cin, relu, residual=None):
    # Conv2d(bias=False) + folded BN (+ residual add + ReLU) via im2col on the
    # REAL input channels + fused Pallas matmul (output padded to 128 lanes).
    xs = x[..., :cin] if x.shape[-1] != cin else x
    patches, (N, OH, OW) = _im2col(xs.astype(jnp.bfloat16), kh, kw, stride,
                                   pad, conv['w'].shape[0])
    res2d = None
    if residual is not None:
        res2d = residual.reshape(N * OH * OW, LANE)
    out = matmul_bn(patches, conv['w'], conv['s'], conv['b'],
                    relu=relu, residual=res2d)
    return out.reshape(N, OH, OW, LANE)


def maxpool3x3s2p1(x):
    N, H, W, C = x.shape
    k, s, pad = 3, 2, 1
    xp = jnp.pad(x, ((0, 0), (pad, pad), (pad, pad), (0, 0)),
                 constant_values=-jnp.inf)
    OH = (H + 2 * pad - k) // s + 1
    OW = (W + 2 * pad - k) // s + 1
    cols = []
    for ki in range(k):
        for kj in range(k):
            cols.append(xp[:, ki:ki + s * OH:s, kj:kj + s * OW:s, :])
    stacked = jnp.stack(cols, axis=0).reshape(k * k, N * OH * OW, C)
    return max_reduce(stacked).reshape(N, OH, OW, C)


# ----------------------------------------------------------------------------
# Model definition (ResNet-18 style, BasicBlock [2,2,2,2], reduced width)
# Conv weights are stored as 2-D bf16 (K_pad, 128): K = kh*kw*cin_real padded
# to the next 128-multiple; output channels padded to LANE=128 (lane-dense).
# ----------------------------------------------------------------------------
def _make_conv(key, kh, kw, cin, cout):
    w = 0.05 * jax.random.normal(key, (kh, kw, cin, cout), jnp.float32)
    k_real = kh * kw * cin
    k_pad = _round_up(k_real, LANE)
    w2d = w.reshape(k_real, cout)
    w2d = jnp.pad(w2d, ((0, k_pad - k_real), (0, LANE - cout)))
    return w2d.astype(jnp.bfloat16)


def _make_bn(key, c):
    k1, k2, k3, k4 = jax.random.split(key, 4)
    gamma = 1.0 + 0.1 * jax.random.normal(k1, (c,), jnp.float32)
    beta = 0.1 * jax.random.normal(k2, (c,), jnp.float32)
    mean = 0.1 * jax.random.normal(k3, (c,), jnp.float32)
    var = 1.0 + 0.1 * jax.random.uniform(k4, (c,), jnp.float32)
    eps = 1e-5
    scale = gamma / jnp.sqrt(var + eps)
    bias = beta - mean * scale
    # Padded output channels: scale=1, bias=0 so they stay exactly zero.
    scale = jnp.pad(scale, (0, LANE - c), constant_values=1.0)
    bias = jnp.pad(bias, (0, LANE - c))
    return scale.reshape(1, LANE), bias.reshape(1, LANE)


def _make_conv_bn(keys, kh, kw, cin, cout):
    s, b = _make_bn(next(keys), cout)
    return {'w': _make_conv(next(keys), kh, kw, cin, cout), 's': s, 'b': b}


def init_params(key, in_channels, num_classes):
    keys = iter(jax.random.split(key, 128))
    params = {}
    params['conv1'] = _make_conv_bn(keys, 7, 7, in_channels, BASE_WIDTH)

    chans = [BASE_WIDTH, BASE_WIDTH * 2, BASE_WIDTH * 4, BASE_WIDTH * 8]
    layers = []
    cin = BASE_WIDTH
    for li, (cout, nb) in enumerate(zip(chans, BLOCKS)):
        layer = []
        for bi in range(nb):
            stride = 2 if (li > 0 and bi == 0) else 1
            blk = {
                'conv1': _make_conv_bn(keys, 3, 3, cin, cout),
                'conv2': _make_conv_bn(keys, 3, 3, cout, cout),
            }
            if stride != 1 or cin != cout:
                blk['ds'] = _make_conv_bn(keys, 1, 1, cin, cout)
            layer.append(blk)
            cin = cout
        layers.append(layer)
    params['layers'] = layers

    fc_w = 0.05 * jax.random.normal(next(keys), (cin, num_classes),
                                    jnp.float32)
    params['fc'] = {
        'w': jnp.pad(fc_w, ((0, LANE - cin),
                            (0, LANE - num_classes))).astype(jnp.bfloat16),
        'b': jnp.zeros((1, LANE), jnp.float32),
    }
    return params


def basic_block(x, blk, *, stride, cin, cout):
    # TODO(synk): whole-BasicBlock single-pallas_call fusion (conv1+conv2+ds
    #             resident in VMEM) left for a follow-up; add+ReLU is fused
    #             into conv2's matmul epilogue.
    if 'ds' in blk:
        identity = conv_bn(x, blk['ds'], kh=1, kw=1, stride=stride, pad=0,
                           cin=cin, relu=False)
    else:
        identity = x
    out = conv_bn(x, blk['conv1'], kh=3, kw=3, stride=stride, pad=1,
                  cin=cin, relu=True)
    out = conv_bn(out, blk['conv2'], kh=3, kw=3, stride=1, pad=1,
                  cin=cout, relu=True, residual=identity)
    return out


def resnet_forward(x_nchw, params, *, num_classes, in_channels):
    # layout: input is NCHW (PyTorch); transpose to NHWC, activations in bf16.
    x = jnp.transpose(x_nchw, (0, 2, 3, 1)).astype(jnp.bfloat16)
    x = conv_bn(x, params['conv1'], kh=7, kw=7, stride=2, pad=3,
                cin=in_channels, relu=True)                 # stem 7x7/s2
    x = maxpool3x3s2p1(x)

    chans = [BASE_WIDTH, BASE_WIDTH * 2, BASE_WIDTH * 4, BASE_WIDTH * 8]
    cin = BASE_WIDTH
    for li, layer in enumerate(params['layers']):
        cout = chans[li]
        for bi, blk in enumerate(layer):
            stride = 2 if (li > 0 and bi == 0) else 1
            x = basic_block(x, blk, stride=stride, cin=cin, cout=cout)
            cin = cout

    return gap_fc(x, params['fc'], num_classes)


# ----------------------------------------------------------------------------
# Main
# ----------------------------------------------------------------------------
if __name__ == "__main__":
    key = jax.random.PRNGKey(0)
    pkey, xkey = jax.random.split(key)

    in_channels = 3
    num_classes = 10
    batch, spatial = 2, 32

    params = init_params(pkey, in_channels, num_classes)
    x = jax.random.normal(xkey, (batch, in_channels, spatial, spatial),
                          jnp.float32)

    fwd = jax.jit(functools.partial(resnet_forward,
                                    num_classes=num_classes,
                                    in_channels=in_channels))
    out = fwd(x, params)
    out = jax.block_until_ready(out)

    assert out.shape == (batch, num_classes), out.shape
    assert jnp.all(jnp.isfinite(out))
    print("KERNEL_OK")
</pallas_src>

<mosaic_0001>
module attributes {stable_mosaic.version = 11 : i64} {
  func.func @_matmul_bn_kernel(%arg0: i32, %arg1: i32, %arg2: memref<256x256xbf16, #tpu.memory_space<vmem>>, %arg3: memref<256x128xbf16, #tpu.memory_space<vmem>>, %arg4: memref<1x128xf32, #tpu.memory_space<vmem>>, %arg5: memref<1x128xf32, #tpu.memory_space<vmem>>, %arg6: memref<256x128xbf16, #tpu.memory_space<vmem>>) attributes {dimension_semantics = [#tpu.dimension_semantics<parallel>, #tpu.dimension_semantics<parallel>], iteration_bounds = array<i64: 2, 1>, scalar_prefetch = 0 : i64, scratch_operands = 0 : i64, tpu.core_type = #tpu.core_type<tc>, window_params = [{transform_indices = @transform_0, window_bounds = array<i64: 256, 256>}, {transform_indices = @transform_1, window_bounds = array<i64: 256, 128>}, {transform_indices = @transform_2, window_bounds = array<i64: 1, 128>}, {transform_indices = @transform_3, window_bounds = array<i64: 1, 128>}, {transform_indices = @transform_4, window_bounds = array<i64: 256, 128>}]} {
    %c0 = arith.constant 0 : index
    %c0_0 = arith.constant 0 : index
    %0 = vector.load %arg2[%c0, %c0_0] : memref<256x256xbf16, #tpu.memory_space<vmem>>, vector<256x256xbf16>
    %c0_1 = arith.constant 0 : index
    %c0_2 = arith.constant 0 : index
    %1 = vector.load %arg3[%c0_1, %c0_2] : memref<256x128xbf16, #tpu.memory_space<vmem>>, vector<256x128xbf16>
    %cst = arith.constant dense<0.000000e+00> : vector<256x128xf32>
    %2 = tpu.matmul %0, %1, %cst {dimension_numbers = #tpu.dot_dimension_numbers<[1], [0], [0], [1], [0, 0, 1, 1], [], []>} : vector<256x256xbf16>, vector<256x128xbf16>, vector<256x128xf32> -> vector<256x128xf32>
    %c0_3 = arith.constant 0 : index
    %c0_4 = arith.constant 0 : index
    %3 = vector.load %arg4[%c0_3, %c0_4] : memref<1x128xf32, #tpu.memory_space<vmem>>, vector<1x128xf32>
    %4 = vector.broadcast %3 : vector<1x128xf32> to vector<256x128xf32>
    %5 = arith.mulf %2, %4 : vector<256x128xf32>
    %c0_5 = arith.constant 0 : index
    %c0_6 = arith.constant 0 : index
    %6 = vector.load %arg5[%c0_5, %c0_6] : memref<1x128xf32, #tpu.memory_space<vmem>>, vector<1x128xf32>
    %7 = vector.broadcast %6 : vector<1x128xf32> to vector<256x128xf32>
    %8 = arith.addf %5, %7 : vector<256x128xf32>
    %cst_7 = arith.constant 0.000000e+00 : f32
    %9 = vector.broadcast %cst_7 : f32 to vector<256x128xf32>
    %10 = arith.maximumf %8, %9 : vector<256x128xf32>
    %11 = arith.truncf %10 : vector<256x128xf32> to vector<256x128xbf16>
    %c0_8 = arith.constant 0 : index
    %c0_9 = arith.constant 0 : index
    %12 = vector.load %arg6[%c0_8, %c0_9] : memref<256x128xbf16, #tpu.memory_space<vmem>>, vector<256x128xbf16>
    tpu.vector_store %arg6[%c0_8, %c0_9], %11 {strides = array<i32>} : memref<256x128xbf16, #tpu.memory_space<vmem>>, vector<256x128xbf16>,
    return
  }
  func.func @transform_0(%arg0: i32, %arg1: i32) -> (i32, i32) {
    %c0_i32 = arith.constant 0 : i32
    %c0_i32_0 = arith.constant 0 : i32
    return %arg0, %c0_i32 : i32, i32
  }
  func.func @transform_1(%arg0: i32, %arg1: i32) -> (i32, i32) {
    %c0_i32 = arith.constant 0 : i32
    %c0_i32_0 = arith.constant 0 : i32
    return %c0_i32, %arg1 : i32, i32
  }
  func.func @transform_2(%arg0: i32, %arg1: i32) -> (i32, i32) {
    %c0_i32 = arith.constant 0 : i32
    %c0_i32_0 = arith.constant 0 : i32
    return %c0_i32, %arg1 : i32, i32
  }
  func.func @transform_3(%arg0: i32, %arg1: i32) -> (i32, i32) {
    %c0_i32 = arith.constant 0 : i32
    %c0_i32_0 = arith.constant 0 : i32
    return %c0_i32, %arg1 : i32, i32
  }
  func.func @transform_4(%arg0: i32, %arg1: i32) -> (i32, i32) {
    %c0_i32 = arith.constant 0 : i32
    return %arg0, %arg1 : i32, i32
  }
}

module attributes {stable_mosaic.version = 11 : i64} {
  func.func @_max_reduce_kernel(%arg0: i32, %arg1: memref<9x64x128xbf16, #tpu.memory_space<vmem>>, %arg2: memref<64x128xbf16, #tpu.memory_space<vmem>>) attributes {dimension_semantics = [#tpu.dimension_semantics<parallel>], iteration_bounds = array<i64: 2>, scalar_prefetch = 0 : i64, scratch_operands = 0 : i64, tpu.core_type = #tpu.core_type<tc>, window_params = [{transform_indices = @transform_0, window_bounds = array<i64: 9, 64, 128>}, {transform_indices = @transform_1, window_bounds = array<i64: 64, 128>}]} {
    %c0 = arith.constant 0 : index
    %c0_0 = arith.constant 0 : index
    %c0_1 = arith.constant 0 : index
    %0 = vector.load %arg1[%c0, %c0_0, %c0_1] : memref<9x64x128xbf16, #tpu.memory_space<vmem>>, vector<9x64x128xbf16>
    %cst = arith.constant dense<0xFF80> : vector<64x128xbf16>
    %1 = vector.multi_reduction <maximumf>, %0, %cst [0] : vector<9x64x128xbf16> to vector<64x128xbf16>
    %c0_2 = arith.constant 0 : index
    %c0_3 = arith.constant 0 : index
    %2 = vector.load %arg2[%c0_2, %c0_3] : memref<64x128xbf16, #tpu.memory_space<vmem>>, vector<64x128xbf16>
    tpu.vector_store %arg2[%c0_2, %c0_3], %1 {strides = array<i32>} : memref<64x128xbf16, #tpu.memory_space<vmem>>, vector<64x128xbf16>,
    return
  }
  func.func @transform_0(%arg0: i32) -> (i32, i32, i32) {
    %c0_i32 = arith.constant 0 : i32
    %c0_i32_0 = arith.constant 0 : i32
    %c0_i32_1 = arith.constant 0 : i32
    return %c0_i32, %arg0, %c0_i32_0 : i32, i32, i32
  }
  func.func @transform_1(%arg0: i32) -> (i32, i32) {
    %c0_i32 = arith.constant 0 : i32
    %c0_i32_0 = arith.constant 0 : i32
    return %arg0, %c0_i32 : i32, i32
  }
}

module attributes {stable_mosaic.version = 11 : i64} {
  func.func @_matmul_bn_kernel(%arg0: i32, %arg1: i32, %arg2: memref<64x256xbf16, #tpu.memory_space<vmem>>, %arg3: memref<256x128xbf16, #tpu.memory_space<vmem>>, %arg4: memref<1x128xf32, #tpu.memory_space<vmem>>, %arg5: memref<1x128xf32, #tpu.memory_space<vmem>>, %arg6: memref<64x128xbf16, #tpu.memory_space<vmem>>) attributes {dimension_semantics = [#tpu.dimension_semantics<parallel>, #tpu.dimension_semantics<parallel>], iteration_bounds = array<i64: 2, 1>, scalar_prefetch = 0 : i64, scratch_operands = 0 : i64, tpu.core_type = #tpu.core_type<tc>, window_params = [{transform_indices = @transform_0, window_bounds = array<i64: 64, 256>}, {transform_indices = @transform_1, window_bounds = array<i64: 256, 128>}, {transform_indices = @transform_2, window_bounds = array<i64: 1, 128>}, {transform_indices = @transform_3, window_bounds = array<i64: 1, 128>}, {transform_indices = @transform_4, window_bounds = array<i64: 64, 128>}]} {
    %c0 = arith.constant 0 : index
    %c0_0 = arith.constant 0 : index
    %0 = vector.load %arg2[%c0, %c0_0] : memref<64x256xbf16, #tpu.memory_space<vmem>>, vector<64x256xbf16>
    %c0_1 = arith.constant 0 : index
    %c0_2 = arith.constant 0 : index
    %1 = vector.load %arg3[%c0_1, %c0_2] : memref<256x128xbf16, #tpu.memory_space<vmem>>, vector<256x128xbf16>
    %cst = arith.constant dense<0.000000e+00> : vector<64x128xf32>
    %2 = tpu.matmul %0, %1, %cst {dimension_numbers = #tpu.dot_dimension_numbers<[1], [0], [0], [1], [0, 0, 1, 1], [], []>} : vector<64x256xbf16>, vector<256x128xbf16>, vector<64x128xf32> -> vector<64x128xf32>
    %c0_3 = arith.constant 0 : index
    %c0_4 = arith.constant 0 : index
    %3 = vector.load %arg4[%c0_3, %c0_4] : memref<1x128xf32, #tpu.memory_space<vmem>>, vector<1x128xf32>
    %4 = vector.broadcast %3 : vector<1x128xf32> to vector<64x128xf32>
    %5 = arith.mulf %2, %4 : vector<64x128xf32>
    %c0_5 = arith.constant 0 : index
    %c0_6 = arith.constant 0 : index
    %6 = vector.load %arg5[%c0_5, %c0_6] : memref<1x128xf32, #tpu.memory_space<vmem>>, vector<1x128xf32>
    %7 = vector.broadcast %6 : vector<1x128xf32> to vector<64x128xf32>
    %8 = arith.addf %5, %7 : vector<64x128xf32>
    %cst_7 = arith.constant 0.000000e+00 : f32
    %9 = vector.broadcast %cst_7 : f32 to vector<64x128xf32>
    %10 = arith.maximumf %8, %9 : vector<64x128xf32>
    %11 = arith.truncf %10 : vector<64x128xf32> to vector<64x128xbf16>
    %c0_8 = arith.constant 0 : index
    %c0_9 = arith.constant 0 : index
    %12 = vector.load %arg6[%c0_8, %c0_9] : memref<64x128xbf16, #tpu.memory_space<vmem>>, vector<64x128xbf16>
    tpu.vector_store %arg6[%c0_8, %c0_9], %11 {strides = array<i32>} : memref<64x128xbf16, #tpu.memory_space<vmem>>, vector<64x128xbf16>,
    return
  }
  func.func @transform_0(%arg0: i32, %arg1: i32) -> (i32, i32) {
    %c0_i32 = arith.constant 0 : i32
    %c0_i32_0 = arith.constant 0 : i32
    return %arg0, %c0_i32 : i32, i32
  }
  func.func @transform_1(%arg0: i32, %arg1: i32) -> (i32, i32) {
    %c0_i32 = arith.constant 0 : i32
    %c0_i32_0 = arith.constant 0 : i32
    return %c0_i32, %arg1 : i32, i32
  }
  func.func @transform_2(%arg0: i32, %arg1: i32) -> (i32, i32) {
    %c0_i32 = arith.constant 0 : i32
    %c0_i32_0 = arith.constant 0 : i32
    return %c0_i32, %arg1 : i32, i32
  }
  func.func @transform_3(%arg0: i32, %arg1: i32) -> (i32, i32) {
    %c0_i32 = arith.constant 0 : i32
    %c0_i32_0 = arith.constant 0 : i32
    return %c0_i32, %arg1 : i32, i32
  }
  func.func @transform_4(%arg0: i32, %arg1: i32) -> (i32, i32) {
    %c0_i32 = arith.constant 0 : i32
    return %arg0, %arg1 : i32, i32
  }
}

module attributes {stable_mosaic.version = 11 : i64} {
  func.func @_matmul_bn_kernel(%arg0: i32, %arg1: i32, %arg2: memref<64x256xbf16, #tpu.memory_space<vmem>>, %arg3: memref<256x128xbf16, #tpu.memory_space<vmem>>, %arg4: memref<1x128xf32, #tpu.memory_space<vmem>>, %arg5: memref<1x128xf32, #tpu.memory_space<vmem>>, %arg6: memref<64x128xbf16, #tpu.memory_space<vmem>>, %arg7: memref<64x128xbf16, #tpu.memory_space<vmem>>) attributes {dimension_semantics = [#tpu.dimension_semantics<parallel>, #tpu.dimension_semantics<parallel>], iteration_bounds = array<i64: 2, 1>, scalar_prefetch = 0 : i64, scratch_operands = 0 : i64, tpu.core_type = #tpu.core_type<tc>, window_params = [{transform_indices = @transform_0, window_bounds = array<i64: 64, 256>}, {transform_indices = @transform_1, window_bounds = array<i64: 256, 128>}, {transform_indices = @transform_2, window_bounds = array<i64: 1, 128>}, {transform_indices = @transform_3, window_bounds = array<i64: 1, 128>}, {transform_indices = @transform_4, window_bounds = array<i64: 64, 128>}, {transform_indices = @transform_5, window_bounds = array<i64: 64, 128>}]} {
    %c0 = arith.constant 0 : index
    %c0_0 = arith.constant 0 : index
    %0 = vector.load %arg2[%c0, %c0_0] : memref<64x256xbf16, #tpu.memory_space<vmem>>, vector<64x256xbf16>
    %c0_1 = arith.constant 0 : index
    %c0_2 = arith.constant 0 : index
    %1 = vector.load %arg3[%c0_1, %c0_2] : memref<256x128xbf16, #tpu.memory_space<vmem>>, vector<256x128xbf16>
    %cst = arith.constant dense<0.000000e+00> : vector<64x128xf32>
    %2 = tpu.matmul %0, %1, %cst {dimension_numbers = #tpu.dot_dimension_numbers<[1], [0], [0], [1], [0, 0, 1, 1], [], []>} : vector<64x256xbf16>, vector<256x128xbf16>, vector<64x128xf32> -> vector<64x128xf32>
    %c0_3 = arith.constant 0 : index
    %c0_4 = arith.constant 0 : index
    %3 = vector.load %arg4[%c0_3, %c0_4] : memref<1x128xf32, #tpu.memory_space<vmem>>, vector<1x128xf32>
    %4 = vector.broadcast %3 : vector<1x128xf32> to vector<64x128xf32>
    %5 = arith.mulf %2, %4 : vector<64x128xf32>
    %c0_5 = arith.constant 0 : index
    %c0_6 = arith.constant 0 : index
    %6 = vector.load %arg5[%c0_5, %c0_6] : memref<1x128xf32, #tpu.memory_space<vmem>>, vector<1x128xf32>
    %7 = vector.broadcast %6 : vector<1x128xf32> to vector<64x128xf32>
    %8 = arith.addf %5, %7 : vector<64x128xf32>
    %c0_7 = arith.constant 0 : index
    %c0_8 = arith.constant 0 : index
    %9 = vector.load %arg6[%c0_7, %c0_8] : memref<64x128xbf16, #tpu.memory_space<vmem>>, vector<64x128xbf16>
    %10 = arith.extf %9 : vector<64x128xbf16> to vector<64x128xf32>
    %11 = arith.addf %8, %10 : vector<64x128xf32>
    %cst_9 = arith.constant 0.000000e+00 : f32
    %12 = vector.broadcast %cst_9 : f32 to vector<64x128xf32>
    %13 = arith.maximumf %11, %12 : vector<64x128xf32>
    %14 = arith.truncf %13 : vector<64x128xf32> to vector<64x128xbf16>
    %c0_10 = arith.constant 0 : index
    %c0_11 = arith.constant 0 : index
    %15 = vector.load %arg7[%c0_10, %c0_11] : memref<64x128xbf16, #tpu.memory_space<vmem>>, vector<64x128xbf16>
    tpu.vector_store %arg7[%c0_10, %c0_11], %14 {strides = array<i32>} : memref<64x128xbf16, #tpu.memory_space<vmem>>, vector<64x128xbf16>,
    return
  }
  func.func @transform_0(%arg0: i32, %arg1: i32) -> (i32, i32) {
    %c0_i32 = arith.constant 0 : i32
    %c0_i32_0 = arith.constant 0 : i32
    return %arg0, %c0_i32 : i32, i32
  }
  func.func @transform_1(%arg0: i32, %arg1: i32) -> (i32, i32) {
    %c0_i32 = arith.constant 0 : i32
    %c0_i32_0 = arith.constant 0 : i32
    return %c0_i32, %arg1 : i32, i32
  }
  func.func @transform_2(%arg0: i32, %arg1: i32) -> (i32, i32) {
    %c0_i32 = arith.constant 0 : i32
    %c0_i32_0 = arith.constant 0 : i32
    return %c0_i32, %arg1 : i32, i32
  }
  func.func @transform_3(%arg0: i32, %arg1: i32) -> (i32, i32) {
    %c0_i32 = arith.constant 0 : i32
    %c0_i32_0 = arith.constant 0 : i32
    return %c0_i32, %arg1 : i32, i32
  }
  func.func @transform_4(%arg0: i32, %arg1: i32) -> (i32, i32) {
    %c0_i32 = arith.constant 0 : i32
    return %arg0, %arg1 : i32, i32
  }
  func.func @transform_5(%arg0: i32, %arg1: i32) -> (i32, i32) {
    %c0_i32 = arith.constant 0 : i32
    return %arg0, %arg1 : i32, i32
  }
}

module attributes {stable_mosaic.version = 11 : i64} {
  func.func @_matmul_bn_kernel(%arg0: i32, %arg1: i32, %arg2: memref<32x256xbf16, #tpu.memory_space<vmem>>, %arg3: memref<256x128xbf16, #tpu.memory_space<vmem>>, %arg4: memref<1x128xf32, #tpu.memory_space<vmem>>, %arg5: memref<1x128xf32, #tpu.memory_space<vmem>>, %arg6: memref<32x128xbf16, #tpu.memory_space<vmem>>) attributes {dimension_semantics = [#tpu.dimension_semantics<parallel>, #tpu.dimension_semantics<parallel>], iteration_bounds = array<i64: 1, 1>, scalar_prefetch = 0 : i64, scratch_operands = 0 : i64, tpu.core_type = #tpu.core_type<tc>, window_params = [{transform_indices = @transform_0, window_bounds = array<i64: 32, 256>}, {transform_indices = @transform_1, window_bounds = array<i64: 256, 128>}, {transform_indices = @transform_2, window_bounds = array<i64: 1, 128>}, {transform_indices = @transform_3, window_bounds = array<i64: 1, 128>}, {transform_indices = @transform_4, window_bounds = array<i64: 32, 128>}]} {
    %c0 = arith.constant 0 : index
    %c0_0 = arith.constant 0 : index
    %0 = vector.load %arg2[%c0, %c0_0] : memref<32x256xbf16, #tpu.memory_space<vmem>>, vector<32x256xbf16>
    %c0_1 = arith.constant 0 : index
    %c0_2 = arith.constant 0 : index
    %1 = vector.load %arg3[%c0_1, %c0_2] : memref<256x128xbf16, #tpu.memory_space<vmem>>, vector<256x128xbf16>
    %cst = arith.constant dense<0.000000e+00> : vector<32x128xf32>
    %2 = tpu.matmul %0, %1, %cst {dimension_numbers = #tpu.dot_dimension_numbers<[1], [0], [0], [1], [0, 0, 1, 1], [], []>} : vector<32x256xbf16>, vector<256x128xbf16>, vector<32x128xf32> -> vector<32x128xf32>
    %c0_3 = arith.constant 0 : index
    %c0_4 = arith.constant 0 : index
    %3 = vector.load %arg4[%c0_3, %c0_4] : memref<1x128xf32, #tpu.memory_space<vmem>>, vector<1x128xf32>
    %4 = vector.broadcast %3 : vector<1x128xf32> to vector<32x128xf32>
    %5 = arith.mulf %2, %4 : vector<32x128xf32>
    %c0_5 = arith.constant 0 : index
    %c0_6 = arith.constant 0 : index
    %6 = vector.load %arg5[%c0_5, %c0_6] : memref<1x128xf32, #tpu.memory_space<vmem>>, vector<1x128xf32>
    %7 = vector.broadcast %6 : vector<1x128xf32> to vector<32x128xf32>
    %8 = arith.addf %5, %7 : vector<32x128xf32>
    %cst_7 = arith.constant 0.000000e+00 : f32
    %9 = vector.broadcast %cst_7 : f32 to vector<32x128xf32>
    %10 = arith.maximumf %8, %9 : vector<32x128xf32>
    %11 = arith.truncf %10 : vector<32x128xf32> to vector<32x128xbf16>
    %c0_8 = arith.constant 0 : index
    %c0_9 = arith.constant 0 : index
    %12 = vector.load %arg6[%c0_8, %c0_9] : memref<32x128xbf16, #tpu.memory_space<vmem>>, vector<32x128xbf16>
    tpu.vector_store %arg6[%c0_8, %c0_9], %11 {strides = array<i32>} : memref<32x128xbf16, #tpu.memory_space<vmem>>, vector<32x128xbf16>,
    return
  }
  func.func @transform_0(%arg0: i32, %arg1: i32) -> (i32, i32) {
    %c0_i32 = arith.constant 0 : i32
    %c0_i32_0 = arith.constant 0 : i32
    return %arg0, %c0_i32 : i32, i32
  }
  func.func @transform_1(%arg0: i32, %arg1: i32) -> (i32, i32) {
    %c0_i32 = arith.constant 0 : i32
    %c0_i32_0 = arith.constant 0 : i32
    return %c0_i32, %arg1 : i32, i32
  }
  func.func @transform_2(%arg0: i32, %arg1: i32) -> (i32, i32) {
    %c0_i32 = arith.constant 0 : i32
    %c0_i32_0 = arith.constant 0 : i32
    return %c0_i32, %arg1 : i32, i32
  }
  func.func @transform_3(%arg0: i32, %arg1: i32) -> (i32, i32) {
    %c0_i32 = arith.constant 0 : i32
    %c0_i32_0 = arith.constant 0 : i32
    return %c0_i32, %arg1 : i32, i32
  }
  func.func @transform_4(%arg0: i32, %arg1: i32) -> (i32, i32) {
    %c0_i32 = arith.constant 0 : i32
    return %arg0, %arg1 : i32, i32
  }
}

module attributes {stable_mosaic.version = 11 : i64} {
  func.func @_matmul_bn_kernel(%arg0: i32, %arg1: i32, %arg2: memref<32x384xbf16, #tpu.memory_space<vmem>>, %arg3: memref<384x128xbf16, #tpu.memory_space<vmem>>, %arg4: memref<1x128xf32, #tpu.memory_space<vmem>>, %arg5: memref<1x128xf32, #tpu.memory_space<vmem>>, %arg6: memref<32x128xbf16, #tpu.memory_space<vmem>>, %arg7: memref<32x128xbf16, #tpu.memory_space<vmem>>) attributes {dimension_semantics = [#tpu.dimension_semantics<parallel>, #tpu.dimension_semantics<parallel>], iteration_bounds = array<i64: 1, 1>, scalar_prefetch = 0 : i64, scratch_operands = 0 : i64, tpu.core_type = #tpu.core_type<tc>, window_params = [{transform_indices = @transform_0, window_bounds = array<i64: 32, 384>}, {transform_indices = @transform_1, window_bounds = array<i64: 384, 128>}, {transform_indices = @transform_2, window_bounds = array<i64: 1, 128>}, {transform_indices = @transform_3, window_bounds = array<i64: 1, 128>}, {transform_indices = @transform_4, window_bounds = array<i64: 32, 128>}, {transform_indices = @transform_5, window_bounds = array<i64: 32, 128>}]} {
    %c0 = arith.constant 0 : index
    %c0_0 = arith.constant 0 : index
    %0 = vector.load %arg2[%c0, %c0_0] : memref<32x384xbf16, #tpu.memory_space<vmem>>, vector<32x384xbf16>
    %c0_1 = arith.constant 0 : index
    %c0_2 = arith.constant 0 : index
    %1 = vector.load %arg3[%c0_1, %c0_2] : memref<384x128xbf16, #tpu.memory_space<vmem>>, vector<384x128xbf16>
    %cst = arith.constant dense<0.000000e+00> : vector<32x128xf32>
    %2 = tpu.matmul %0, %1, %cst {dimension_numbers = #tpu.dot_dimension_numbers<[1], [0], [0], [1], [0, 0, 1, 1], [], []>} : vector<32x384xbf16>, vector<384x128xbf16>, vector<32x128xf32> -> vector<32x128xf32>
    %c0_3 = arith.constant 0 : index
    %c0_4 = arith.constant 0 : index
    %3 = vector.load %arg4[%c0_3, %c0_4] : memref<1x128xf32, #tpu.memory_space<vmem>>, vector<1x128xf32>
    %4 = vector.broadcast %3 : vector<1x128xf32> to vector<32x128xf32>
    %5 = arith.mulf %2, %4 : vector<32x128xf32>
    %c0_5 = arith.constant 0 : index
    %c0_6 = arith.constant 0 : index
    %6 = vector.load %arg5[%c0_5, %c0_6] : memref<1x128xf32, #tpu.memory_space<vmem>>, vector<1x128xf32>
    %7 = vector.broadcast %6 : vector<1x128xf32> to vector<32x128xf32>
    %8 = arith.addf %5, %7 : vector<32x128xf32>
    %c0_7 = arith.constant 0 : index
    %c0_8 = arith.constant 0 : index
    %9 = vector.load %arg6[%c0_7, %c0_8] : memref<32x128xbf16, #tpu.memory_space<vmem>>, vector<32x128xbf16>
    %10 = arith.extf %9 : vector<32x128xbf16> to vector<32x128xf32>
    %11 = arith.addf %8, %10 : vector<32x128xf32>
    %cst_9 = arith.constant 0.000000e+00 : f32
    %12 = vector.broadcast %cst_9 : f32 to vector<32x128xf32>
    %13 = arith.maximumf %11, %12 : vector<32x128xf32>
    %14 = arith.truncf %13 : vector<32x128xf32> to vector<32x128xbf16>
    %c0_10 = arith.constant 0 : index
    %c0_11 = arith.constant 0 : index
    %15 = vector.load %arg7[%c0_10, %c0_11] : memref<32x128xbf16, #tpu.memory_space<vmem>>, vector<32x128xbf16>
    tpu.vector_store %arg7[%c0_10, %c0_11], %14 {strides = array<i32>} : memref<32x128xbf16, #tpu.memory_space<vmem>>, vector<32x128xbf16>,
    return
  }
  func.func @transform_0(%arg0: i32, %arg1: i32) -> (i32, i32) {
    %c0_i32 = arith.constant 0 : i32
    %c0_i32_0 = arith.constant 0 : i32
    return %arg0, %c0_i32 : i32, i32
  }
  func.func @transform_1(%arg0: i32, %arg1: i32) -> (i32, i32) {
    %c0_i32 = arith.constant 0 : i32
    %c0_i32_0 = arith.constant 0 : i32
    return %c0_i32, %arg1 : i32, i32
  }
  func.func @transform_2(%arg0: i32, %arg1: i32) -> (i32, i32) {
    %c0_i32 = arith.constant 0 : i32
    %c0_i32_0 = arith.constant 0 : i32
    return %c0_i32, %arg1 : i32, i32
  }
  func.func @transform_3(%arg0: i32, %arg1: i32) -> (i32, i32) {
    %c0_i32 = arith.constant 0 : i32
    %c0_i32_0 = arith.constant 0 : i32
    return %c0_i32, %arg1 : i32, i32
  }
  func.func @transform_4(%arg0: i32, %arg1: i32) -> (i32, i32) {
    %c0_i32 = arith.constant 0 : i32
    return %arg0, %arg1 : i32, i32
  }
  func.func @transform_5(%arg0: i32, %arg1: i32) -> (i32, i32) {
    %c0_i32 = arith.constant 0 : i32
    return %arg0, %arg1 : i32, i32
  }
}

module attributes {stable_mosaic.version = 11 : i64} {
  func.func @_matmul_bn_kernel(%arg0: i32, %arg1: i32, %arg2: memref<32x128xbf16, #tpu.memory_space<vmem>>, %arg3: memref<128x128xbf16, #tpu.memory_space<vmem>>, %arg4: memref<1x128xf32, #tpu.memory_space<vmem>>, %arg5: memref<1x128xf32, #tpu.memory_space<vmem>>, %arg6: memref<32x128xbf16, #tpu.memory_space<vmem>>) attributes {dimension_semantics = [#tpu.dimension_semantics<parallel>, #tpu.dimension_semantics<parallel>], iteration_bounds = array<i64: 1, 1>, scalar_prefetch = 0 : i64, scratch_operands = 0 : i64, tpu.core_type = #tpu.core_type<tc>, window_params = [{transform_indices = @transform_0, window_bounds = array<i64: 32, 128>}, {transform_indices = @transform_1, window_bounds = array<i64: 128, 128>}, {transform_indices = @transform_2, window_bounds = array<i64: 1, 128>}, {transform_indices = @transform_3, window_bounds = array<i64: 1, 128>}, {transform_indices = @transform_4, window_bounds = array<i64: 32, 128>}]} {
    %c0 = arith.constant 0 : index
    %c0_0 = arith.constant 0 : index
    %0 = vector.load %arg2[%c0, %c0_0] : memref<32x128xbf16, #tpu.memory_space<vmem>>, vector<32x128xbf16>
    %c0_1 = arith.constant 0 : index
    %c0_2 = arith.constant 0 : index
    %1 = vector.load %arg3[%c0_1, %c0_2] : memref<128x128xbf16, #tpu.memory_space<vmem>>, vector<128x128xbf16>
    %cst = arith.constant dense<0.000000e+00> : vector<32x128xf32>
    %2 = tpu.matmul %0, %1, %cst {dimension_numbers = #tpu.dot_dimension_numbers<[1], [0], [0], [1], [0, 0, 1, 1], [], []>} : vector<32x128xbf16>, vector<128x128xbf16>, vector<32x128xf32> -> vector<32x128xf32>
    %c0_3 = arith.constant 0 : index
    %c0_4 = arith.constant 0 : index
    %3 = vector.load %arg4[%c0_3, %c0_4] : memref<1x128xf32, #tpu.memory_space<vmem>>, vector<1x128xf32>
    %4 = vector.broadcast %3 : vector<1x128xf32> to vector<32x128xf32>
    %5 = arith.mulf %2, %4 : vector<32x128xf32>
    %c0_5 = arith.constant 0 : index
    %c0_6 = arith.constant 0 : index
    %6 = vector.load %arg5[%c0_5, %c0_6] : memref<1x128xf32, #tpu.memory_space<vmem>>, vector<1x128xf32>
    %7 = vector.broadcast %6 : vector<1x128xf32> to vector<32x128xf32>
    %8 = arith.addf %5, %7 : vector<32x128xf32>
    %9 = arith.truncf %8 : vector<32x128xf32> to vector<32x128xbf16>
    %c0_7 = arith.constant 0 : index
    %c0_8 = arith.constant 0 : index
    %10 = vector.load %arg6[%c0_7, %c0_8] : memref<32x128xbf16, #tpu.memory_space<vmem>>, vector<32x128xbf16>
    tpu.vector_store %arg6[%c0_7, %c0_8], %9 {strides = array<i32>} : memref<32x128xbf16, #tpu.memory_space<vmem>>, vector<32x128xbf16>,
    return
  }
  func.func @transform_0(%arg0: i32, %arg1: i32) -> (i32, i32) {
    %c0_i32 = arith.constant 0 : i32
    %c0_i32_0 = arith.constant 0 : i32
    return %arg0, %c0_i32 : i32, i32
  }
  func.func @transform_1(%arg0: i32, %arg1: i32) -> (i32, i32) {
    %c0_i32 = arith.constant 0 : i32
    %c0_i32_0 = arith.constant 0 : i32
    return %c0_i32, %arg1 : i32, i32
  }
  func.func @transform_2(%arg0: i32, %arg1: i32) -> (i32, i32) {
    %c0_i32 = arith.constant 0 : i32
    %c0_i32_0 = arith.constant 0 : i32
    return %c0_i32, %arg1 : i32, i32
  }
  func.func @transform_3(%arg0: i32, %arg1: i32) -> (i32, i32) {
    %c0_i32 = arith.constant 0 : i32
    %c0_i32_0 = arith.constant 0 : i32
    return %c0_i32, %arg1 : i32, i32
  }
  func.func @transform_4(%arg0: i32, %arg1: i32) -> (i32, i32) {
    %c0_i32 = arith.constant 0 : i32
    return %arg0, %arg1 : i32, i32
  }
}

module attributes {stable_mosaic.version = 11 : i64} {
  func.func @_matmul_bn_kernel(%arg0: i32, %arg1: i32, %arg2: memref<32x384xbf16, #tpu.memory_space<vmem>>, %arg3: memref<384x128xbf16, #tpu.memory_space<vmem>>, %arg4: memref<1x128xf32, #tpu.memory_space<vmem>>, %arg5: memref<1x128xf32, #tpu.memory_space<vmem>>, %arg6: memref<32x128xbf16, #tpu.memory_space<vmem>>) attributes {dimension_semantics = [#tpu.dimension_semantics<parallel>, #tpu.dimension_semantics<parallel>], iteration_bounds = array<i64: 1, 1>, scalar_prefetch = 0 : i64, scratch_operands = 0 : i64, tpu.core_type = #tpu.core_type<tc>, window_params = [{transform_indices = @transform_0, window_bounds = array<i64: 32, 384>}, {transform_indices = @transform_1, window_bounds = array<i64: 384, 128>}, {transform_indices = @transform_2, window_bounds = array<i64: 1, 128>}, {transform_indices = @transform_3, window_bounds = array<i64: 1, 128>}, {transform_indices = @transform_4, window_bounds = array<i64: 32, 128>}]} {
    %c0 = arith.constant 0 : index
    %c0_0 = arith.constant 0 : index
    %0 = vector.load %arg2[%c0, %c0_0] : memref<32x384xbf16, #tpu.memory_space<vmem>>, vector<32x384xbf16>
    %c0_1 = arith.constant 0 : index
    %c0_2 = arith.constant 0 : index
    %1 = vector.load %arg3[%c0_1, %c0_2] : memref<384x128xbf16, #tpu.memory_space<vmem>>, vector<384x128xbf16>
    %cst = arith.constant dense<0.000000e+00> : vector<32x128xf32>
    %2 = tpu.matmul %0, %1, %cst {dimension_numbers = #tpu.dot_dimension_numbers<[1], [0], [0], [1], [0, 0, 1, 1], [], []>} : vector<32x384xbf16>, vector<384x128xbf16>, vector<32x128xf32> -> vector<32x128xf32>
    %c0_3 = arith.constant 0 : index
    %c0_4 = arith.constant 0 : index
    %3 = vector.load %arg4[%c0_3, %c0_4] : memref<1x128xf32, #tpu.memory_space<vmem>>, vector<1x128xf32>
    %4 = vector.broadcast %3 : vector<1x128xf32> to vector<32x128xf32>
    %5 = arith.mulf %2, %4 : vector<32x128xf32>
    %c0_5 = arith.constant 0 : index
    %c0_6 = arith.constant 0 : index
    %6 = vector.load %arg5[%c0_5, %c0_6] : memref<1x128xf32, #tpu.memory_space<vmem>>, vector<1x128xf32>
    %7 = vector.broadcast %6 : vector<1x128xf32> to vector<32x128xf32>
    %8 = arith.addf %5, %7 : vector<32x128xf32>
    %cst_7 = arith.constant 0.000000e+00 : f32
    %9 = vector.broadcast %cst_7 : f32 to vector<32x128xf32>
    %10 = arith.maximumf %8, %9 : vector<32x128xf32>
    %11 = arith.truncf %10 : vector<32x128xf32> to vector<32x128xbf16>
    %c0_8 = arith.constant 0 : index
    %c0_9 = arith.constant 0 : index
    %12 = vector.load %arg6[%c0_8, %c0_9] : memref<32x128xbf16, #tpu.memory_space<vmem>>, vector<32x128xbf16>
    tpu.vector_store %arg6[%c0_8, %c0_9], %11 {strides = array<i32>} : memref<32x128xbf16, #tpu.memory_space<vmem>>, vector<32x128xbf16>,
    return
  }
  func.func @transform_0(%arg0: i32, %arg1: i32) -> (i32, i32) {
    %c0_i32 = arith.constant 0 : i32
    %c0_i32_0 = arith.constant 0 : i32
    return %arg0, %c0_i32 : i32, i32
  }
  func.func @transform_1(%arg0: i32, %arg1: i32) -> (i32, i32) {
    %c0_i32 = arith.constant 0 : i32
    %c0_i32_0 = arith.constant 0 : i32
    return %c0_i32, %arg1 : i32, i32
  }
  func.func @transform_2(%arg0: i32, %arg1: i32) -> (i32, i32) {
    %c0_i32 = arith.constant 0 : i32
    %c0_i32_0 = arith.constant 0 : i32
    return %c0_i32, %arg1 : i32, i32
  }
  func.func @transform_3(%arg0: i32, %arg1: i32) -> (i32, i32) {
    %c0_i32 = arith.constant 0 : i32
    %c0_i32_0 = arith.constant 0 : i32
    return %c0_i32, %arg1 : i32, i32
  }
  func.func @transform_4(%arg0: i32, %arg1: i32) -> (i32, i32) {
    %c0_i32 = arith.constant 0 : i32
    return %arg0, %arg1 : i32, i32
  }
}

module attributes {stable_mosaic.version = 11 : i64} {
  func.func @_matmul_bn_kernel(%arg0: i32, %arg1: i32, %arg2: memref<8x384xbf16, #tpu.memory_space<vmem>>, %arg3: memref<384x128xbf16, #tpu.memory_space<vmem>>, %arg4: memref<1x128xf32, #tpu.memory_space<vmem>>, %arg5: memref<1x128xf32, #tpu.memory_space<vmem>>, %arg6: memref<8x128xbf16, #tpu.memory_space<vmem>>) attributes {dimension_semantics = [#tpu.dimension_semantics<parallel>, #tpu.dimension_semantics<parallel>], iteration_bounds = array<i64: 1, 1>, scalar_prefetch = 0 : i64, scratch_operands = 0 : i64, tpu.core_type = #tpu.core_type<tc>, window_params = [{transform_indices = @transform_0, window_bounds = array<i64: 8, 384>}, {transform_indices = @transform_1, window_bounds = array<i64: 384, 128>}, {transform_indices = @transform_2, window_bounds = array<i64: 1, 128>}, {transform_indices = @transform_3, window_bounds = array<i64: 1, 128>}, {transform_indices = @transform_4, window_bounds = array<i64: 8, 128>}]} {
    %c0 = arith.constant 0 : index
    %c0_0 = arith.constant 0 : index
    %0 = vector.load %arg2[%c0, %c0_0] : memref<8x384xbf16, #tpu.memory_space<vmem>>, vector<8x384xbf16>
    %c0_1 = arith.constant 0 : index
    %c0_2 = arith.constant 0 : index
    %1 = vector.load %arg3[%c0_1, %c0_2] : memref<384x128xbf16, #tpu.memory_space<vmem>>, vector<384x128xbf16>
    %cst = arith.constant dense<0.000000e+00> : vector<8x128xf32>
    %2 = tpu.matmul %0, %1, %cst {dimension_numbers = #tpu.dot_dimension_numbers<[1], [0], [0], [1], [0, 0, 1, 1], [], []>} : vector<8x384xbf16>, vector<384x128xbf16>, vector<8x128xf32> -> vector<8x128xf32>
    %c0_3 = arith.constant 0 : index
    %c0_4 = arith.constant 0 : index
    %3 = vector.load %arg4[%c0_3, %c0_4] : memref<1x128xf32, #tpu.memory_space<vmem>>, vector<1x128xf32>
    %4 = vector.broadcast %3 : vector<1x128xf32> to vector<8x128xf32>
    %5 = arith.mulf %2, %4 : vector<8x128xf32>
    %c0_5 = arith.constant 0 : index
    %c0_6 = arith.constant 0 : index
    %6 = vector.load %arg5[%c0_5, %c0_6] : memref<1x128xf32, #tpu.memory_space<vmem>>, vector<1x128xf32>
    %7 = vector.broadcast %6 : vector<1x128xf32> to vector<8x128xf32>
    %8 = arith.addf %5, %7 : vector<8x128xf32>
    %cst_7 = arith.constant 0.000000e+00 : f32
    %9 = vector.broadcast %cst_7 : f32 to vector<8x128xf32>
    %10 = arith.maximumf %8, %9 : vector<8x128xf32>
    %11 = arith.truncf %10 : vector<8x128xf32> to vector<8x128xbf16>
    %c0_8 = arith.constant 0 : index
    %c0_9 = arith.constant 0 : index
    %12 = vector.load %arg6[%c0_8, %c0_9] : memref<8x128xbf16, #tpu.memory_space<vmem>>, vector<8x128xbf16>
    tpu.vector_store %arg6[%c0_8, %c0_9], %11 {strides = array<i32>} : memref<8x128xbf16, #tpu.memory_space<vmem>>, vector<8x128xbf16>,
    return
  }
  func.func @transform_0(%arg0: i32, %arg1: i32) -> (i32, i32) {
    %c0_i32 = arith.constant 0 : i32
    %c0_i32_0 = arith.constant 0 : i32
    return %arg0, %c0_i32 : i32, i32
  }
  func.func @transform_1(%arg0: i32, %arg1: i32) -> (i32, i32) {
    %c0_i32 = arith.constant 0 : i32
    %c0_i32_0 = arith.constant 0 : i32
    return %c0_i32, %arg1 : i32, i32
  }
  func.func @transform_2(%arg0: i32, %arg1: i32) -> (i32, i32) {
    %c0_i32 = arith.constant 0 : i32
    %c0_i32_0 = arith.constant 0 : i32
    return %c0_i32, %arg1 : i32, i32
  }
  func.func @transform_3(%arg0: i32, %arg1: i32) -> (i32, i32) {
    %c0_i32 = arith.constant 0 : i32
    %c0_i32_0 = arith.constant 0 : i32
    return %c0_i32, %arg1 : i32, i32
  }
  func.func @transform_4(%arg0: i32, %arg1: i32) -> (i32, i32) {
    %c0_i32 = arith.constant 0 : i32
    return %arg0, %arg1 : i32, i32
  }
}

module attributes {stable_mosaic.version = 11 : i64} {
  func.func @_matmul_bn_kernel(%arg0: i32, %arg1: i32, %arg2: memref<8x128xbf16, #tpu.memory_space<vmem>>, %arg3: memref<128x128xbf16, #tpu.memory_space<vmem>>, %arg4: memref<1x128xf32, #tpu.memory_space<vmem>>, %arg5: memref<1x128xf32, #tpu.memory_space<vmem>>, %arg6: memref<8x128xbf16, #tpu.memory_space<vmem>>) attributes {dimension_semantics = [#tpu.dimension_semantics<parallel>, #tpu.dimension_semantics<parallel>], iteration_bounds = array<i64: 1, 1>, scalar_prefetch = 0 : i64, scratch_operands = 0 : i64, tpu.core_type = #tpu.core_type<tc>, window_params = [{transform_indices = @transform_0, window_bounds = array<i64: 8, 128>}, {transform_indices = @transform_1, window_bounds = array<i64: 128, 128>}, {transform_indices = @transform_2, window_bounds = array<i64: 1, 128>}, {transform_indices = @transform_3, window_bounds = array<i64: 1, 128>}, {transform_indices = @transform_4, window_bounds = array<i64: 8, 128>}]} {
    %c0 = arith.constant 0 : index
    %c0_0 = arith.constant 0 : index
    %0 = vector.load %arg2[%c0, %c0_0] : memref<8x128xbf16, #tpu.memory_space<vmem>>, vector<8x128xbf16>
    %c0_1 = arith.constant 0 : index
    %c0_2 = arith.constant 0 : index
    %1 = vector.load %arg3[%c0_1, %c0_2] : memref<128x128xbf16, #tpu.memory_space<vmem>>, vector<128x128xbf16>
    %cst = arith.constant dense<0.000000e+00> : vector<8x128xf32>
    %2 = tpu.matmul %0, %1, %cst {dimension_numbers = #tpu.dot_dimension_numbers<[1], [0], [0], [1], [0, 0, 1, 1], [], []>} : vector<8x128xbf16>, vector<128x128xbf16>, vector<8x128xf32> -> vector<8x128xf32>
    %c0_3 = arith.constant 0 : index
    %c0_4 = arith.constant 0 : index
    %3 = vector.load %arg4[%c0_3, %c0_4] : memref<1x128xf32, #tpu.memory_space<vmem>>, vector<1x128xf32>
    %4 = vector.broadcast %3 : vector<1x128xf32> to vector<8x128xf32>
    %5 = arith.mulf %2, %4 : vector<8x128xf32>
    %c0_5 = arith.constant 0 : index
    %c0_6 = arith.constant 0 : index
    %6 = vector.load %arg5[%c0_5, %c0_6] : memref<1x128xf32, #tpu.memory_space<vmem>>, vector<1x128xf32>
    %7 = vector.broadcast %6 : vector<1x128xf32> to vector<8x128xf32>
    %8 = arith.addf %5, %7 : vector<8x128xf32>
    %9 = arith.truncf %8 : vector<8x128xf32> to vector<8x128xbf16>
    %c0_7 = arith.constant 0 : index
    %c0_8 = arith.constant 0 : index
    %10 = vector.load %arg6[%c0_7, %c0_8] : memref<8x128xbf16, #tpu.memory_space<vmem>>, vector<8x128xbf16>
    tpu.vector_store %arg6[%c0_7, %c0_8], %9 {strides = array<i32>} : memref<8x128xbf16, #tpu.memory_space<vmem>>, vector<8x128xbf16>,
    return
  }
  func.func @transform_0(%arg0: i32, %arg1: i32) -> (i32, i32) {
    %c0_i32 = arith.constant 0 : i32
    %c0_i32_0 = arith.constant 0 : i32
    return %arg0, %c0_i32 : i32, i32
  }
  func.func @transform_1(%arg0: i32, %arg1: i32) -> (i32, i32) {
    %c0_i32 = arith.constant 0 : i32
    %c0_i32_0 = arith.constant 0 : i32
    return %c0_i32, %arg1 : i32, i32
  }
  func.func @transform_2(%arg0: i32, %arg1: i32) -> (i32, i32) {
    %c0_i32 = arith.constant 0 : i32
    %c0_i32_0 = arith.constant 0 : i32
    return %c0_i32, %arg1 : i32, i32
  }
  func.func @transform_3(%arg0: i32, %arg1: i32) -> (i32, i32) {
    %c0_i32 = arith.constant 0 : i32
    %c0_i32_0 = arith.constant 0 : i32
    return %c0_i32, %arg1 : i32, i32
  }
  func.func @transform_4(%arg0: i32, %arg1: i32) -> (i32, i32) {
    %c0_i32 = arith.constant 0 : i32
    return %arg0, %arg1 : i32, i32
  }
}

module attributes {stable_mosaic.version = 11 : i64} {
  func.func @_matmul_bn_kernel(%arg0: i32, %arg1: i32, %arg2: memref<8x640xbf16, #tpu.memory_space<vmem>>, %arg3: memref<640x128xbf16, #tpu.memory_space<vmem>>, %arg4: memref<1x128xf32, #tpu.memory_space<vmem>>, %arg5: memref<1x128xf32, #tpu.memory_space<vmem>>, %arg6: memref<8x128xbf16, #tpu.memory_space<vmem>>, %arg7: memref<8x128xbf16, #tpu.memory_space<vmem>>) attributes {dimension_semantics = [#tpu.dimension_semantics<parallel>, #tpu.dimension_semantics<parallel>], iteration_bounds = array<i64: 1, 1>, scalar_prefetch = 0 : i64, scratch_operands = 0 : i64, tpu.core_type = #tpu.core_type<tc>, window_params = [{transform_indices = @transform_0, window_bounds = array<i64: 8, 640>}, {transform_indices = @transform_1, window_bounds = array<i64: 640, 128>}, {transform_indices = @transform_2, window_bounds = array<i64: 1, 128>}, {transform_indices = @transform_3, window_bounds = array<i64: 1, 128>}, {transform_indices = @transform_4, window_bounds = array<i64: 8, 128>}, {transform_indices = @transform_5, window_bounds = array<i64: 8, 128>}]} {
    %c0 = arith.constant 0 : index
    %c0_0 = arith.constant 0 : index
    %0 = vector.load %arg2[%c0, %c0_0] : memref<8x640xbf16, #tpu.memory_space<vmem>>, vector<8x640xbf16>
    %c0_1 = arith.constant 0 : index
    %c0_2 = arith.constant 0 : index
    %1 = vector.load %arg3[%c0_1, %c0_2] : memref<640x128xbf16, #tpu.memory_space<vmem>>, vector<640x128xbf16>
    %cst = arith.constant dense<0.000000e+00> : vector<8x128xf32>
    %2 = tpu.matmul %0, %1, %cst {dimension_numbers = #tpu.dot_dimension_numbers<[1], [0], [0], [1], [0, 0, 1, 1], [], []>} : vector<8x640xbf16>, vector<640x128xbf16>, vector<8x128xf32> -> vector<8x128xf32>
    %c0_3 = arith.constant 0 : index
    %c0_4 = arith.constant 0 : index
    %3 = vector.load %arg4[%c0_3, %c0_4] : memref<1x128xf32, #tpu.memory_space<vmem>>, vector<1x128xf32>
    %4 = vector.broadcast %3 : vector<1x128xf32> to vector<8x128xf32>
    %5 = arith.mulf %2, %4 : vector<8x128xf32>
    %c0_5 = arith.constant 0 : index
    %c0_6 = arith.constant 0 : index
    %6 = vector.load %arg5[%c0_5, %c0_6] : memref<1x128xf32, #tpu.memory_space<vmem>>, vector<1x128xf32>
    %7 = vector.broadcast %6 : vector<1x128xf32> to vector<8x128xf32>
    %8 = arith.addf %5, %7 : vector<8x128xf32>
    %c0_7 = arith.constant 0 : index
    %c0_8 = arith.constant 0 : index
    %9 = vector.load %arg6[%c0_7, %c0_8] : memref<8x128xbf16, #tpu.memory_space<vmem>>, vector<8x128xbf16>
    %10 = arith.extf %9 : vector<8x128xbf16> to vector<8x128xf32>
    %11 = arith.addf %8, %10 : vector<8x128xf32>
    %cst_9 = arith.constant 0.000000e+00 : f32
    %12 = vector.broadcast %cst_9 : f32 to vector<8x128xf32>
    %13 = arith.maximumf %11, %12 : vector<8x128xf32>
    %14 = arith.truncf %13 : vector<8x128xf32> to vector<8x128xbf16>
    %c0_10 = arith.constant 0 : index
    %c0_11 = arith.constant 0 : index
    %15 = vector.load %arg7[%c0_10, %c0_11] : memref<8x128xbf16, #tpu.memory_space<vmem>>, vector<8x128xbf16>
    tpu.vector_store %arg7[%c0_10, %c0_11], %14 {strides = array<i32>} : memref<8x128xbf16, #tpu.memory_space<vmem>>, vector<8x128xbf16>,
    return
  }
  func.func @transform_0(%arg0: i32, %arg1: i32) -> (i32, i32) {
    %c0_i32 = arith.constant 0 : i32
    %c0_i32_0 = arith.constant 0 : i32
    return %arg0, %c0_i32 : i32, i32
  }
  func.func @transform_1(%arg0: i32, %arg1: i32) -> (i32, i32) {
    %c0_i32 = arith.constant 0 : i32
    %c0_i32_0 = arith.constant 0 : i32
    return %c0_i32, %arg1 : i32, i32
  }
  func.func @transform_2(%arg0: i32, %arg1: i32) -> (i32, i32) {
    %c0_i32 = arith.constant 0 : i32
    %c0_i32_0 = arith.constant 0 : i32
    return %c0_i32, %arg1 : i32, i32
  }
  func.func @transform_3(%arg0: i32, %arg1: i32) -> (i32, i32) {
    %c0_i32 = arith.constant 0 : i32
    %c0_i32_0 = arith.constant 0 : i32
    return %c0_i32, %arg1 : i32, i32
  }
  func.func @transform_4(%arg0: i32, %arg1: i32) -> (i32, i32) {
    %c0_i32 = arith.constant 0 : i32
    return %arg0, %arg1 : i32, i32
  }
  func.func @transform_5(%arg0: i32, %arg1: i32) -> (i32, i32) {
    %c0_i32 = arith.constant 0 : i32
    return %arg0, %arg1 : i32, i32
  }
}

module attributes {stable_mosaic.version = 11 : i64} {
  func.func @_matmul_bn_kernel(%arg0: i32, %arg1: i32, %arg2: memref<8x640xbf16, #tpu.memory_space<vmem>>, %arg3: memref<640x128xbf16, #tpu.memory_space<vmem>>, %arg4: memref<1x128xf32, #tpu.memory_space<vmem>>, %arg5: memref<1x128xf32, #tpu.memory_space<vmem>>, %arg6: memref<8x128xbf16, #tpu.memory_space<vmem>>) attributes {dimension_semantics = [#tpu.dimension_semantics<parallel>, #tpu.dimension_semantics<parallel>], iteration_bounds = array<i64: 1, 1>, scalar_prefetch = 0 : i64, scratch_operands = 0 : i64, tpu.core_type = #tpu.core_type<tc>, window_params = [{transform_indices = @transform_0, window_bounds = array<i64: 8, 640>}, {transform_indices = @transform_1, window_bounds = array<i64: 640, 128>}, {transform_indices = @transform_2, window_bounds = array<i64: 1, 128>}, {transform_indices = @transform_3, window_bounds = array<i64: 1, 128>}, {transform_indices = @transform_4, window_bounds = array<i64: 8, 128>}]} {
    %c0 = arith.constant 0 : index
    %c0_0 = arith.constant 0 : index
    %0 = vector.load %arg2[%c0, %c0_0] : memref<8x640xbf16, #tpu.memory_space<vmem>>, vector<8x640xbf16>
    %c0_1 = arith.constant 0 : index
    %c0_2 = arith.constant 0 : index
    %1 = vector.load %arg3[%c0_1, %c0_2] : memref<640x128xbf16, #tpu.memory_space<vmem>>, vector<640x128xbf16>
    %cst = arith.constant dense<0.000000e+00> : vector<8x128xf32>
    %2 = tpu.matmul %0, %1, %cst {dimension_numbers = #tpu.dot_dimension_numbers<[1], [0], [0], [1], [0, 0, 1, 1], [], []>} : vector<8x640xbf16>, vector<640x128xbf16>, vector<8x128xf32> -> vector<8x128xf32>
    %c0_3 = arith.constant 0 : index
    %c0_4 = arith.constant 0 : index
    %3 = vector.load %arg4[%c0_3, %c0_4] : memref<1x128xf32, #tpu.memory_space<vmem>>, vector<1x128xf32>
    %4 = vector.broadcast %3 : vector<1x128xf32> to vector<8x128xf32>
    %5 = arith.mulf %2, %4 : vector<8x128xf32>
    %c0_5 = arith.constant 0 : index
    %c0_6 = arith.constant 0 : index
    %6 = vector.load %arg5[%c0_5, %c0_6] : memref<1x128xf32, #tpu.memory_space<vmem>>, vector<1x128xf32>
    %7 = vector.broadcast %6 : vector<1x128xf32> to vector<8x128xf32>
    %8 = arith.addf %5, %7 : vector<8x128xf32>
    %cst_7 = arith.constant 0.000000e+00 : f32
    %9 = vector.broadcast %cst_7 : f32 to vector<8x128xf32>
    %10 = arith.maximumf %8, %9 : vector<8x128xf32>
    %11 = arith.truncf %10 : vector<8x128xf32> to vector<8x128xbf16>
    %c0_8 = arith.constant 0 : index
    %c0_9 = arith.constant 0 : index
    %12 = vector.load %arg6[%c0_8, %c0_9] : memref<8x128xbf16, #tpu.memory_space<vmem>>, vector<8x128xbf16>
    tpu.vector_store %arg6[%c0_8, %c0_9], %11 {strides = array<i32>} : memref<8x128xbf16, #tpu.memory_space<vmem>>, vector<8x128xbf16>,
    return
  }
  func.func @transform_0(%arg0: i32, %arg1: i32) -> (i32, i32) {
    %c0_i32 = arith.constant 0 : i32
    %c0_i32_0 = arith.constant 0 : i32
    return %arg0, %c0_i32 : i32, i32
  }
  func.func @transform_1(%arg0: i32, %arg1: i32) -> (i32, i32) {
    %c0_i32 = arith.constant 0 : i32
    %c0_i32_0 = arith.constant 0 : i32
    return %c0_i32, %arg1 : i32, i32
  }
  func.func @transform_2(%arg0: i32, %arg1: i32) -> (i32, i32) {
    %c0_i32 = arith.constant 0 : i32
    %c0_i32_0 = arith.constant 0 : i32
    return %c0_i32, %arg1 : i32, i32
  }
  func.func @transform_3(%arg0: i32, %arg1: i32) -> (i32, i32) {
    %c0_i32 = arith.constant 0 : i32
    %c0_i32_0 = arith.constant 0 : i32
    return %c0_i32, %arg1 : i32, i32
  }
  func.func @transform_4(%arg0: i32, %arg1: i32) -> (i32, i32) {
    %c0_i32 = arith.constant 0 : i32
    return %arg0, %arg1 : i32, i32
  }
}

module attributes {stable_mosaic.version = 11 : i64} {
  func.func @_matmul_bn_kernel(%arg0: i32, %arg1: i32, %arg2: memref<2x640xbf16, #tpu.memory_space<vmem>>, %arg3: memref<640x128xbf16, #tpu.memory_space<vmem>>, %arg4: memref<1x128xf32, #tpu.memory_space<vmem>>, %arg5: memref<1x128xf32, #tpu.memory_space<vmem>>, %arg6: memref<2x128xbf16, #tpu.memory_space<vmem>>) attributes {dimension_semantics = [#tpu.dimension_semantics<parallel>, #tpu.dimension_semantics<parallel>], iteration_bounds = array<i64: 1, 1>, scalar_prefetch = 0 : i64, scratch_operands = 0 : i64, tpu.core_type = #tpu.core_type<tc>, window_params = [{transform_indices = @transform_0, window_bounds = array<i64: 2, 640>}, {transform_indices = @transform_1, window_bounds = array<i64: 640, 128>}, {transform_indices = @transform_2, window_bounds = array<i64: 1, 128>}, {transform_indices = @transform_3, window_bounds = array<i64: 1, 128>}, {transform_indices = @transform_4, window_bounds = array<i64: 2, 128>}]} {
    %c0 = arith.constant 0 : index
    %c0_0 = arith.constant 0 : index
    %0 = vector.load %arg2[%c0, %c0_0] : memref<2x640xbf16, #tpu.memory_space<vmem>>, vector<2x640xbf16>
    %c0_1 = arith.constant 0 : index
    %c0_2 = arith.constant 0 : index
    %1 = vector.load %arg3[%c0_1, %c0_2] : memref<640x128xbf16, #tpu.memory_space<vmem>>, vector<640x128xbf16>
    %cst = arith.constant dense<0.000000e+00> : vector<2x128xf32>
    %2 = tpu.matmul %0, %1, %cst {dimension_numbers = #tpu.dot_dimension_numbers<[1], [0], [0], [1], [0, 0, 1, 1], [], []>} : vector<2x640xbf16>, vector<640x128xbf16>, vector<2x128xf32> -> vector<2x128xf32>
    %c0_3 = arith.constant 0 : index
    %c0_4 = arith.constant 0 : index
    %3 = vector.load %arg4[%c0_3, %c0_4] : memref<1x128xf32, #tpu.memory_space<vmem>>, vector<1x128xf32>
    %4 = vector.broadcast %3 : vector<1x128xf32> to vector<2x128xf32>
    %5 = arith.mulf %2, %4 : vector<2x128xf32>
    %c0_5 = arith.constant 0 : index
    %c0_6 = arith.constant 0 : index
    %6 = vector.load %arg5[%c0_5, %c0_6] : memref<1x128xf32, #tpu.memory_space<vmem>>, vector<1x128xf32>
    %7 = vector.broadcast %6 : vector<1x128xf32> to vector<2x128xf32>
    %8 = arith.addf %5, %7 : vector<2x128xf32>
    %cst_7 = arith.constant 0.000000e+00 : f32
    %9 = vector.broadcast %cst_7 : f32 to vector<2x128xf32>
    %10 = arith.maximumf %8, %9 : vector<2x128xf32>
    %11 = arith.truncf %10 : vector<2x128xf32> to vector<2x128xbf16>
    %c0_8 = arith.constant 0 : index
    %c0_9 = arith.constant 0 : index
    %12 = vector.load %arg6[%c0_8, %c0_9] : memref<2x128xbf16, #tpu.memory_space<vmem>>, vector<2x128xbf16>
    tpu.vector_store %arg6[%c0_8, %c0_9], %11 {strides = array<i32>} : memref<2x128xbf16, #tpu.memory_space<vmem>>, vector<2x128xbf16>,
    return
  }
  func.func @transform_0(%arg0: i32, %arg1: i32) -> (i32, i32) {
    %c0_i32 = arith.constant 0 : i32
    %c0_i32_0 = arith.constant 0 : i32
    return %arg0, %c0_i32 : i32, i32
  }
  func.func @transform_1(%arg0: i32, %arg1: i32) -> (i32, i32) {
    %c0_i32 = arith.constant 0 : i32
    %c0_i32_0 = arith.constant 0 : i32
    return %c0_i32, %arg1 : i32, i32
  }
  func.func @transform_2(%arg0: i32, %arg1: i32) -> (i32, i32) {
    %c0_i32 = arith.constant 0 : i32
    %c0_i32_0 = arith.constant 0 : i32
    return %c0_i32, %arg1 : i32, i32
  }
  func.func @transform_3(%arg0: i32, %arg1: i32) -> (i32, i32) {
    %c0_i32 = arith.constant 0 : i32
    %c0_i32_0 = arith.constant 0 : i32
    return %c0_i32, %arg1 : i32, i32
  }
  func.func @transform_4(%arg0: i32, %arg1: i32) -> (i32, i32) {
    %c0_i32 = arith.constant 0 : i32
    return %arg0, %arg1 : i32, i32
  }
}

module attributes {stable_mosaic.version = 11 : i64} {
  func.func @_matmul_bn_kernel(%arg0: i32, %arg1: i32, %arg2: memref<2x128xbf16, #tpu.memory_space<vmem>>, %arg3: memref<128x128xbf16, #tpu.memory_space<vmem>>, %arg4: memref<1x128xf32, #tpu.memory_space<vmem>>, %arg5: memref<1x128xf32, #tpu.memory_space<vmem>>, %arg6: memref<2x128xbf16, #tpu.memory_space<vmem>>) attributes {dimension_semantics = [#tpu.dimension_semantics<parallel>, #tpu.dimension_semantics<parallel>], iteration_bounds = array<i64: 1, 1>, scalar_prefetch = 0 : i64, scratch_operands = 0 : i64, tpu.core_type = #tpu.core_type<tc>, window_params = [{transform_indices = @transform_0, window_bounds = array<i64: 2, 128>}, {transform_indices = @transform_1, window_bounds = array<i64: 128, 128>}, {transform_indices = @transform_2, window_bounds = array<i64: 1, 128>}, {transform_indices = @transform_3, window_bounds = array<i64: 1, 128>}, {transform_indices = @transform_4, window_bounds = array<i64: 2, 128>}]} {
    %c0 = arith.constant 0 : index
    %c0_0 = arith.constant 0 : index
    %0 = vector.load %arg2[%c0, %c0_0] : memref<2x128xbf16, #tpu.memory_space<vmem>>, vector<2x128xbf16>
    %c0_1 = arith.constant 0 : index
    %c0_2 = arith.constant 0 : index
    %1 = vector.load %arg3[%c0_1, %c0_2] : memref<128x128xbf16, #tpu.memory_space<vmem>>, vector<128x128xbf16>
    %cst = arith.constant dense<0.000000e+00> : vector<2x128xf32>
    %2 = tpu.matmul %0, %1, %cst {dimension_numbers = #tpu.dot_dimension_numbers<[1], [0], [0], [1], [0, 0, 1, 1], [], []>} : vector<2x128xbf16>, vector<128x128xbf16>, vector<2x128xf32> -> vector<2x128xf32>
    %c0_3 = arith.constant 0 : index
    %c0_4 = arith.constant 0 : index
    %3 = vector.load %arg4[%c0_3, %c0_4] : memref<1x128xf32, #tpu.memory_space<vmem>>, vector<1x128xf32>
    %4 = vector.broadcast %3 : vector<1x128xf32> to vector<2x128xf32>
    %5 = arith.mulf %2, %4 : vector<2x128xf32>
    %c0_5 = arith.constant 0 : index
    %c0_6 = arith.constant 0 : index
    %6 = vector.load %arg5[%c0_5, %c0_6] : memref<1x128xf32, #tpu.memory_space<vmem>>, vector<1x128xf32>
    %7 = vector.broadcast %6 : vector<1x128xf32> to vector<2x128xf32>
    %8 = arith.addf %5, %7 : vector<2x128xf32>
    %9 = arith.truncf %8 : vector<2x128xf32> to vector<2x128xbf16>
    %c0_7 = arith.constant 0 : index
    %c0_8 = arith.constant 0 : index
    %10 = vector.load %arg6[%c0_7, %c0_8] : memref<2x128xbf16, #tpu.memory_space<vmem>>, vector<2x128xbf16>
    tpu.vector_store %arg6[%c0_7, %c0_8], %9 {strides = array<i32>} : memref<2x128xbf16, #tpu.memory_space<vmem>>, vector<2x128xbf16>,
    return
  }
  func.func @transform_0(%arg0: i32, %arg1: i32) -> (i32, i32) {
    %c0_i32 = arith.constant 0 : i32
    %c0_i32_0 = arith.constant 0 : i32
    return %arg0, %c0_i32 : i32, i32
  }
  func.func @transform_1(%arg0: i32, %arg1: i32) -> (i32, i32) {
    %c0_i32 = arith.constant 0 : i32
    %c0_i32_0 = arith.constant 0 : i32
    return %c0_i32, %arg1 : i32, i32
  }
  func.func @transform_2(%arg0: i32, %arg1: i32) -> (i32, i32) {
    %c0_i32 = arith.constant 0 : i32
    %c0_i32_0 = arith.constant 0 : i32
    return %c0_i32, %arg1 : i32, i32
  }
  func.func @transform_3(%arg0: i32, %arg1: i32) -> (i32, i32) {
    %c0_i32 = arith.constant 0 : i32
    %c0_i32_0 = arith.constant 0 : i32
    return %c0_i32, %arg1 : i32, i32
  }
  func.func @transform_4(%arg0: i32, %arg1: i32) -> (i32, i32) {
    %c0_i32 = arith.constant 0 : i32
    return %arg0, %arg1 : i32, i32
  }
}

module attributes {stable_mosaic.version = 11 : i64} {
  func.func @_matmul_bn_kernel(%arg0: i32, %arg1: i32, %arg2: memref<2x1152xbf16, #tpu.memory_space<vmem>>, %arg3: memref<1152x128xbf16, #tpu.memory_space<vmem>>, %arg4: memref<1x128xf32, #tpu.memory_space<vmem>>, %arg5: memref<1x128xf32, #tpu.memory_space<vmem>>, %arg6: memref<2x128xbf16, #tpu.memory_space<vmem>>) attributes {dimension_semantics = [#tpu.dimension_semantics<parallel>, #tpu.dimension_semantics<parallel>], iteration_bounds = array<i64: 1, 1>, scalar_prefetch = 0 : i64, scratch_operands = 0 : i64, tpu.core_type = #tpu.core_type<tc>, window_params = [{transform_indices = @transform_0, window_bounds = array<i64: 2, 1152>}, {transform_indices = @transform_1, window_bounds = array<i64: 1152, 128>}, {transform_indices = @transform_2, window_bounds = array<i64: 1, 128>}, {transform_indices = @transform_3, window_bounds = array<i64: 1, 128>}, {transform_indices = @transform_4, window_bounds = array<i64: 2, 128>}]} {
    %c0 = arith.constant 0 : index
    %c0_0 = arith.constant 0 : index
    %0 = vector.load %arg2[%c0, %c0_0] : memref<2x1152xbf16, #tpu.memory_space<vmem>>, vector<2x1152xbf16>
    %c0_1 = arith.constant 0 : index
    %c0_2 = arith.constant 0 : index
    %1 = vector.load %arg3[%c0_1, %c0_2] : memref<1152x128xbf16, #tpu.memory_space<vmem>>, vector<1152x128xbf16>
    %cst = arith.constant dense<0.000000e+00> : vector<2x128xf32>
    %2 = tpu.matmul %0, %1, %cst {dimension_numbers = #tpu.dot_dimension_numbers<[1], [0], [0], [1], [0, 0, 1, 1], [], []>} : vector<2x1152xbf16>, vector<1152x128xbf16>, vector<2x128xf32> -> vector<2x128xf32>
    %c0_3 = arith.constant 0 : index
    %c0_4 = arith.constant 0 : index
    %3 = vector.load %arg4[%c0_3, %c0_4] : memref<1x128xf32, #tpu.memory_space<vmem>>, vector<1x128xf32>
    %4 = vector.broadcast %3 : vector<1x128xf32> to vector<2x128xf32>
    %5 = arith.mulf %2, %4 : vector<2x128xf32>
    %c0_5 = arith.constant 0 : index
    %c0_6 = arith.constant 0 : index
    %6 = vector.load %arg5[%c0_5, %c0_6] : memref<1x128xf32, #tpu.memory_space<vmem>>, vector<1x128xf32>
    %7 = vector.broadcast %6 : vector<1x128xf32> to vector<2x128xf32>
    %8 = arith.addf %5, %7 : vector<2x128xf32>
    %cst_7 = arith.constant 0.000000e+00 : f32
    %9 = vector.broadcast %cst_7 : f32 to vector<2x128xf32>
    %10 = arith.maximumf %8, %9 : vector<2x128xf32>
    %11 = arith.truncf %10 : vector<2x128xf32> to vector<2x128xbf16>
    %c0_8 = arith.constant 0 : index
    %c0_9 = arith.constant 0 : index
    %12 = vector.load %arg6[%c0_8, %c0_9] : memref<2x128xbf16, #tpu.memory_space<vmem>>, vector<2x128xbf16>
    tpu.vector_store %arg6[%c0_8, %c0_9], %11 {strides = array<i32>} : memref<2x128xbf16, #tpu.memory_space<vmem>>, vector<2x128xbf16>,
    return
  }
  func.func @transform_0(%arg0: i32, %arg1: i32) -> (i32, i32) {
    %c0_i32 = arith.constant 0 : i32
    %c0_i32_0 = arith.constant 0 : i32
    return %arg0, %c0_i32 : i32, i32
  }
  func.func @transform_1(%arg0: i32, %arg1: i32) -> (i32, i32) {
    %c0_i32 = arith.constant 0 : i32
    %c0_i32_0 = arith.constant 0 : i32
    return %c0_i32, %arg1 : i32, i32
  }
  func.func @transform_2(%arg0: i32, %arg1: i32) -> (i32, i32) {
    %c0_i32 = arith.constant 0 : i32
    %c0_i32_0 = arith.constant 0 : i32
    return %c0_i32, %arg1 : i32, i32
  }
  func.func @transform_3(%arg0: i32, %arg1: i32) -> (i32, i32) {
    %c0_i32 = arith.constant 0 : i32
    %c0_i32_0 = arith.constant 0 : i32
    return %c0_i32, %arg1 : i32, i32
  }
  func.func @transform_4(%arg0: i32, %arg1: i32) -> (i32, i32) {
    %c0_i32 = arith.constant 0 : i32
    return %arg0, %arg1 : i32, i32
  }
}

module attributes {stable_mosaic.version = 11 : i64} {
  func.func @_matmul_bn_kernel(%arg0: i32, %arg1: i32, %arg2: memref<2x1152xbf16, #tpu.memory_space<vmem>>, %arg3: memref<1152x128xbf16, #tpu.memory_space<vmem>>, %arg4: memref<1x128xf32, #tpu.memory_space<vmem>>, %arg5: memref<1x128xf32, #tpu.memory_space<vmem>>, %arg6: memref<2x128xbf16, #tpu.memory_space<vmem>>, %arg7: memref<2x128xbf16, #tpu.memory_space<vmem>>) attributes {dimension_semantics = [#tpu.dimension_semantics<parallel>, #tpu.dimension_semantics<parallel>], iteration_bounds = array<i64: 1, 1>, scalar_prefetch = 0 : i64, scratch_operands = 0 : i64, tpu.core_type = #tpu.core_type<tc>, window_params = [{transform_indices = @transform_0, window_bounds = array<i64: 2, 1152>}, {transform_indices = @transform_1, window_bounds = array<i64: 1152, 128>}, {transform_indices = @transform_2, window_bounds = array<i64: 1, 128>}, {transform_indices = @transform_3, window_bounds = array<i64: 1, 128>}, {transform_indices = @transform_4, window_bounds = array<i64: 2, 128>}, {transform_indices = @transform_5, window_bounds = array<i64: 2, 128>}]} {
    %c0 = arith.constant 0 : index
    %c0_0 = arith.constant 0 : index
    %0 = vector.load %arg2[%c0, %c0_0] : memref<2x1152xbf16, #tpu.memory_space<vmem>>, vector<2x1152xbf16>
    %c0_1 = arith.constant 0 : index
    %c0_2 = arith.constant 0 : index
    %1 = vector.load %arg3[%c0_1, %c0_2] : memref<1152x128xbf16, #tpu.memory_space<vmem>>, vector<1152x128xbf16>
    %cst = arith.constant dense<0.000000e+00> : vector<2x128xf32>
    %2 = tpu.matmul %0, %1, %cst {dimension_numbers = #tpu.dot_dimension_numbers<[1], [0], [0], [1], [0, 0, 1, 1], [], []>} : vector<2x1152xbf16>, vector<1152x128xbf16>, vector<2x128xf32> -> vector<2x128xf32>
    %c0_3 = arith.constant 0 : index
    %c0_4 = arith.constant 0 : index
    %3 = vector.load %arg4[%c0_3, %c0_4] : memref<1x128xf32, #tpu.memory_space<vmem>>, vector<1x128xf32>
    %4 = vector.broadcast %3 : vector<1x128xf32> to vector<2x128xf32>
    %5 = arith.mulf %2, %4 : vector<2x128xf32>
    %c0_5 = arith.constant 0 : index
    %c0_6 = arith.constant 0 : index
    %6 = vector.load %arg5[%c0_5, %c0_6] : memref<1x128xf32, #tpu.memory_space<vmem>>, vector<1x128xf32>
    %7 = vector.broadcast %6 : vector<1x128xf32> to vector<2x128xf32>
    %8 = arith.addf %5, %7 : vector<2x128xf32>
    %c0_7 = arith.constant 0 : index
    %c0_8 = arith.constant 0 : index
    %9 = vector.load %arg6[%c0_7, %c0_8] : memref<2x128xbf16, #tpu.memory_space<vmem>>, vector<2x128xbf16>
    %10 = arith.extf %9 : vector<2x128xbf16> to vector<2x128xf32>
    %11 = arith.addf %8, %10 : vector<2x128xf32>
    %cst_9 = arith.constant 0.000000e+00 : f32
    %12 = vector.broadcast %cst_9 : f32 to vector<2x128xf32>
    %13 = arith.maximumf %11, %12 : vector<2x128xf32>
    %14 = arith.truncf %13 : vector<2x128xf32> to vector<2x128xbf16>
    %c0_10 = arith.constant 0 : index
    %c0_11 = arith.constant 0 : index
    %15 = vector.load %arg7[%c0_10, %c0_11] : memref<2x128xbf16, #tpu.memory_space<vmem>>, vector<2x128xbf16>
    tpu.vector_store %arg7[%c0_10, %c0_11], %14 {strides = array<i32>} : memref<2x128xbf16, #tpu.memory_space<vmem>>, vector<2x128xbf16>,
    return
  }
  func.func @transform_0(%arg0: i32, %arg1: i32) -> (i32, i32) {
    %c0_i32 = arith.constant 0 : i32
    %c0_i32_0 = arith.constant 0 : i32
    return %arg0, %c0_i32 : i32, i32
  }
  func.func @transform_1(%arg0: i32, %arg1: i32) -> (i32, i32) {
    %c0_i32 = arith.constant 0 : i32
    %c0_i32_0 = arith.constant 0 : i32
    return %c0_i32, %arg1 : i32, i32
  }
  func.func @transform_2(%arg0: i32, %arg1: i32) -> (i32, i32) {
    %c0_i32 = arith.constant 0 : i32
    %c0_i32_0 = arith.constant 0 : i32
    return %c0_i32, %arg1 : i32, i32
  }
  func.func @transform_3(%arg0: i32, %arg1: i32) -> (i32, i32) {
    %c0_i32 = arith.constant 0 : i32
    %c0_i32_0 = arith.constant 0 : i32
    return %c0_i32, %arg1 : i32, i32
  }
  func.func @transform_4(%arg0: i32, %arg1: i32) -> (i32, i32) {
    %c0_i32 = arith.constant 0 : i32
    return %arg0, %arg1 : i32, i32
  }
  func.func @transform_5(%arg0: i32, %arg1: i32) -> (i32, i32) {
    %c0_i32 = arith.constant 0 : i32
    return %arg0, %arg1 : i32, i32
  }
}

module attributes {stable_mosaic.version = 11 : i64} {
  func.func @_gap_fc_kernel(%arg0: memref<2x1x128xbf16, #tpu.memory_space<vmem>>, %arg1: memref<128x128xbf16, #tpu.memory_space<vmem>>, %arg2: memref<1x128xf32, #tpu.memory_space<vmem>>, %arg3: memref<2x128xf32, #tpu.memory_space<vmem>>) attributes {dimension_semantics = [], scalar_prefetch = 0 : i64, scratch_operands = 0 : i64, tpu.core_type = #tpu.core_type<tc>} {
    %c0 = arith.constant 0 : index
    %c0_0 = arith.constant 0 : index
    %c0_1 = arith.constant 0 : index
    %0 = vector.load %arg0[%c0, %c0_0, %c0_1] : memref<2x1x128xbf16, #tpu.memory_space<vmem>>, vector<2x1x128xbf16>
    %1 = arith.extf %0 : vector<2x1x128xbf16> to vector<2x1x128xf32>
    %cst = arith.constant dense<0.000000e+00> : vector<2x128xf32>
    %2 = vector.multi_reduction <add>, %1, %cst [1] : vector<2x1x128xf32> to vector<2x128xf32>
    %cst_2 = arith.constant 1.000000e+00 : f32
    %3 = vector.broadcast %cst_2 : f32 to vector<2x128xf32>
    %4 = arith.divf %2, %3 : vector<2x128xf32>
    %5 = arith.truncf %4 : vector<2x128xf32> to vector<2x128xbf16>
    %c0_3 = arith.constant 0 : index
    %c0_4 = arith.constant 0 : index
    %6 = vector.load %arg1[%c0_3, %c0_4] : memref<128x128xbf16, #tpu.memory_space<vmem>>, vector<128x128xbf16>
    %cst_5 = arith.constant dense<0.000000e+00> : vector<2x128xf32>
    %7 = tpu.matmul %5, %6, %cst_5 {dimension_numbers = #tpu.dot_dimension_numbers<[1], [0], [0], [1], [0, 0, 1, 1], [], []>} : vector<2x128xbf16>, vector<128x128xbf16>, vector<2x128xf32> -> vector<2x128xf32>
    %c0_6 = arith.constant 0 : index
    %c0_7 = arith.constant 0 : index
    %8 = vector.load %arg2[%c0_6, %c0_7] : memref<1x128xf32, #tpu.memory_space<vmem>>, vector<1x128xf32>
    %9 = vector.broadcast %8 : vector<1x128xf32> to vector<2x128xf32>
    %10 = arith.addf %7, %9 : vector<2x128xf32>
    %c0_8 = arith.constant 0 : index
    %c0_9 = arith.constant 0 : index
    %11 = vector.load %arg3[%c0_8, %c0_9] : memref<2x128xf32, #tpu.memory_space<vmem>>, vector<2x128xf32>
    tpu.vector_store %arg3[%c0_8, %c0_9], %10 {strides = array<i32>} : memref<2x128xf32, #tpu.memory_space<vmem>>, vector<2x128xf32>,
    return
  }
}

</mosaic_0001>

<llo_original>
// kernel: resnet_forward.22
$region0: #{resnet_forward.22}
  #allocation0 [shape = 'u32[]', space=smem, size = 0x4, offset = 0x4, fixed_abs, tag = 'smem constant byte address 0x4 - core index']
  #allocation1 [shape = 'u32[144,128]{1,0:T(1,128)}', space=vmem, size = 0x12000, scoped, tag = 'internal scratch']
  %s0 = inlined_call_operand.vmem [shape: bf16[512,256], index: 0, kind: input, shape index: {}]
  %s1 = inlined_call_operand.vmem [shape: bf16[256,128], index: 1, kind: input, shape index: {}]
  %s2 = inlined_call_operand.vmem [shape: f32[1,128], index: 2, kind: input, shape index: {}]
  %s3 = inlined_call_operand.vmem [shape: f32[1,128], index: 3, kind: input, shape index: {}]
  %s4 = inlined_call_operand.vmem [shape: bf16[512,128], index: 4, kind: output, shape index: {}]
  %s5 = sld [smem:[#allocation0]]
  $region49: #{resnet_forward.22} parent=0
    _
  %s7 = ssub.s32 1, %s5
  %s8 = scalar_select 0, %s7, %s5
  loop: start=0, step=1, limit=4
  $region2: #{resnet_forward.22} parent=0 // loop_pre_header
    _
  $region3: #{resnet_forward.22} parent=0 // loop_header
    %s10 = sphi 0, %s14
    %p11 = scmp.ge.s32.totalorder %s10, 4
    %s17 = sphi 0, %s29
    %s18 = sphi 0, %s25
    %s19 = sphi 0, %s17
    %s20 = sphi 0, %s18
    %s21 = sphi 0, %s19
    %s22 = sphi 0, %s20
    %s32 = sphi 0, %s34
    %s35 = sphi 0, %s32
    %s36 = sphi 0, %s35
    %s52 = sphi 0, %s36
    %s58 = sphi 0, %s60
    %s61 = sphi 0, %s58
    %s62 = sphi 0, %s61
    %s78 = sphi 0, %s62
    %s84 = sphi 0, %s86
    %s87 = sphi 0, %s84
    %s88 = sphi 0, %s87
    %s104 = sphi 0, %s88
    %s110 = sphi 0, %s112
    %s113 = sphi 0, %s110
    %s114 = sphi 0, %s113
    %s130 = sphi 0, %s114
    %s138 = sphi 0, %s140
    %s141 = sphi 0, %s138
    %s142 = sphi 0, %s141
    %s158 = sphi 0, %s142
  $region4: #{resnet_forward.22} parent=0 // loop_header_branch
    %13 = sbr.rel (%p11) target = $region8
  $region5: #{resnet_forward.22} parent=0 // loop_body
    %s15 = ssub.s32 %s10, 1
    %s16 = ssub.s32 %s10, 2
    %s23 = sadd.s32 1, %s18
    %p24 = scmp.ge.s32.totalorder %s23, 1
    %s25 = scalar_select %p24, 0, %s23
    %s26 = sadd.s32 1, %s17
    %s27 = scalar_select %p24, %s26, %s17
    %p28 = scmp.ge.s32.totalorder %s27, 2
    %s29 = scalar_select %p28, 0, %s27
    %s30 = ssub.s32 %s17, %s29
    %p31 = scmp.eq.s32.totalorder %s30, 0
    %s33 = sadd.s32 %s32, 1
    %s34 = scalar_select %p31, %s32, %s33
    %p37 = pneg %p31
    %p38 = scmp.eq.s32.totalorder %s10, 1
    %p39 = por %p37, %p38
    %p40 = scmp.ne.s32.totalorder %s32, %s35
    %p41 = scmp.eq.s32.totalorder %s10, 0
    %p42 = por %p40, %p41
    %p43 = scmp.ne.s32.totalorder %s32, %s35
    %p44 = scmp.eq.s32.totalorder %s15, 1
    %p45 = por %p43, %p44
    %p46 = scmp.ne.s32.totalorder %s35, %s36
    %p47 = scmp.eq.s32.totalorder %s15, 0
    %p48 = por %p46, %p47
    %p49 = scmp.ne.s32.totalorder %s35, %s36
    %p50 = scmp.eq.s32.totalorder %s16, 1
    %p51 = por %p49, %p50
    %p53 = scmp.ne.s32.totalorder %s36, %s52
    %p54 = scmp.eq.s32.totalorder %s16, 0
    %p55 = por %p53, %p54
    %s56 = ssub.s32 %s18, %s25
    %p57 = scmp.eq.s32.totalorder %s56, 0
    %s59 = sadd.s32 %s58, 1
    %s60 = scalar_select %p57, %s58, %s59
    %p63 = pneg %p57
    %p64 = scmp.eq.s32.totalorder %s10, 1
    %p65 = por %p63, %p64
    %p66 = scmp.ne.s32.totalorder %s58, %s61
    %p67 = scmp.eq.s32.totalorder %s10, 0
    %p68 = por %p66, %p67
    %p69 = scmp.ne.s32.totalorder %s58, %s61
    %p70 = scmp.eq.s32.totalorder %s15, 1
    %p71 = por %p69, %p70
    %p72 = scmp.ne.s32.totalorder %s61, %s62
    %p73 = scmp.eq.s32.totalorder %s15, 0
    %p74 = por %p72, %p73
    %p75 = scmp.ne.s32.totalorder %s61, %s62
    %p76 = scmp.eq.s32.totalorder %s16, 1
    %p77 = por %p75, %p76
    %p79 = scmp.ne.s32.totalorder %s62, %s78
    %p80 = scmp.eq.s32.totalorder %s16, 0
    %p81 = por %p79, %p80
    %s82 = ssub.s32 %s18, %s25
    %p83 = scmp.eq.s32.totalorder %s82, 0
    %s85 = sadd.s32 %s84, 1
    %s86 = scalar_select %p83, %s84, %s85
    %p89 = pneg %p83
    %p90 = scmp.eq.s32.totalorder %s10, 1
    %p91 = por %p89, %p90
    %p92 = scmp.ne.s32.totalorder %s84, %s87
    %p93 = scmp.eq.s32.totalorder %s10, 0
    %p94 = por %p92, %p93
    %p95 = scmp.ne.s32.totalorder %s84, %s87
    %p96 = scmp.eq.s32.totalorder %s15, 1
    %p97 = por %p95, %p96
    %p98 = scmp.ne.s32.totalorder %s87, %s88
    %p99 = scmp.eq.s32.totalorder %s15, 0
    %p100 = por %p98, %p99
    %p101 = scmp.ne.s32.totalorder %s87, %s88
    %p102 = scmp.eq.s32.totalorder %s16, 1
    %p103 = por %p101, %p102
    %p105 = scmp.ne.s32.totalorder %s88, %s104
    %p106 = scmp.eq.s32.totalorder %s16, 0
    %p107 = por %p105, %p106
    %s108 = ssub.s32 %s18, %s25
    %p109 = scmp.eq.s32.totalorder %s108, 0
    %s111 = sadd.s32 %s110, 1
    %s112 = scalar_select %p109, %s110, %s111
    %p115 = pneg %p109
    %p116 = scmp.eq.s32.totalorder %s10, 1
    %p117 = por %p115, %p116
    %p118 = scmp.ne.s32.totalorder %s110, %s113
    %p119 = scmp.eq.s32.totalorder %s10, 0
    %p120 = por %p118, %p119
    %p121 = scmp.ne.s32.totalorder %s110, %s113
    %p122 = scmp.eq.s32.totalorder %s15, 1
    %p123 = por %p121, %p122
    %p124 = scmp.ne.s32.totalorder %s113, %s114
    %p125 = scmp.eq.s32.totalorder %s15, 0
    %p126 = por %p124, %p125
    %p127 = scmp.ne.s32.totalorder %s113, %s114
    %p128 = scmp.eq.s32.totalorder %s16, 1
    %p129 = por %p127, %p128
    %p131 = scmp.ne.s32.totalorder %s114, %s130
    %p132 = scmp.eq.s32.totalorder %s16, 0
    %p133 = por %p131, %p132
    %s134 = ssub.s32 %s17, %s29
    %s135 = ssub.s32 %s18, %s25
    %s136 = sor.u32 %s134, %s135
    %p137 = scmp.eq.s32.totalorder %s136, 0
    %s139 = sadd.s32 %s138, 1
    %s140 = scalar_select %p137, %s138, %s139
    %p143 = pneg %p137
    %p144 = scmp.eq.s32.totalorder %s10, 1
    %p145 = por %p143, %p144
    %p146 = scmp.ne.s32.totalorder %s138, %s141
    %p147 = scmp.eq.s32.totalorder %s10, 0
    %p148 = por %p146, %p147
    %p149 = scmp.ne.s32.totalorder %s138, %s141
    %p150 = scmp.eq.s32.totalorder %s15, 1
    %p151 = por %p149, %p150
    %p152 = scmp.ne.s32.totalorder %s141, %s142
    %p153 = scmp.eq.s32.totalorder %s15, 0
    %p154 = por %p152, %p153
    %p155 = scmp.ne.s32.totalorder %s141, %s142
    %p156 = scmp.eq.s32.totalorder %s16, 1
    %p157 = por %p155, %p156
    %p159 = scmp.ne.s32.totalorder %s142, %s158
    %p160 = scmp.eq.s32.totalorder %s16, 0
    %p161 = por %p159, %p160
    %p162 = scmp.le.s32.totalorder 1, %s10
    %p163 = scmp.lt.s32.totalorder %s10, 3
    %p164 = pnand %p162, %p163
    %p165 = pneg %p164
    // Predicated region
    $region9: #{resnet_forward.22} parent=5 // pred_check
      _
    $region10: #{resnet_forward.22} parent=5 // pred_check_branch
      %167 = sbr.rel (%p164) target = $region12
    $region11: #{resnet_forward.22} parent=5 // pred_region
      %s168 = ssub.s32 %s10, 1
      // Predicated region
      $region13: #{resnet_forward.22} parent=11 // pred_check
        %p169 = pneg %p74
      $region14: #{resnet_forward.22} parent=11 // pred_check_branch
        %171 = sbr.rel (%p169) target = $region16
      $region15: #{resnet_forward.22} parent=11 // pred_region
        %p172 = scmp.lt.s32.totalorder %s20, 0
        %s173 = scalar_select %p172, %s20, 0
        %s174 = smul.addr %s173, 4
        %s175 = scalar_lea.vmem %s1, %s174
      $region16: #{resnet_forward.22} parent=11 // pred_fallthru
        _
      // Predicated region
      $region17: #{resnet_forward.22} parent=11 // pred_check
        %p176 = pneg %p100
      $region18: #{resnet_forward.22} parent=11 // pred_check_branch
        %178 = sbr.rel (%p176) target = $region20
      $region19: #{resnet_forward.22} parent=11 // pred_region
        %p179 = scmp.lt.s32.totalorder %s20, 0
        %s180 = scalar_select %p179, %s20, 0
        %s181 = scalar_lea.vmem %s2, %s180
      $region20: #{resnet_forward.22} parent=11 // pred_fallthru
        _
      // Predicated region
      $region21: #{resnet_forward.22} parent=11 // pred_check
        %p182 = pneg %p126
      $region22: #{resnet_forward.22} parent=11 // pred_check_branch
        %184 = sbr.rel (%p182) target = $region24
      $region23: #{resnet_forward.22} parent=11 // pred_region
        %p185 = scmp.lt.s32.totalorder %s20, 0
        %s186 = scalar_select %p185, %s20, 0
        %s187 = scalar_lea.vmem %s3, %s186
      $region24: #{resnet_forward.22} parent=11 // pred_fallthru
        _
    $region12: #{resnet_forward.22} parent=5 // pred_fallthru
      _
    %p188 = scmp.lt.s32.totalorder %s10, 2
    // Predicated region
    $region25: #{resnet_forward.22} parent=5 // pred_check
      %p189 = pneg %p188
    $region26: #{resnet_forward.22} parent=5 // pred_check_branch
      %191 = sbr.rel (%p189) target = $region28
    $region27: #{resnet_forward.22} parent=5 // pred_region
      // Predicated region
      $region29: #{resnet_forward.22} parent=27 // pred_check
        %p192 = pneg %p42
      $region30: #{resnet_forward.22} parent=27 // pred_check_branch
        %194 = sbr.rel (%p192) target = $region32
      $region31: #{resnet_forward.22} parent=27 // pred_region
        %s195 = smul.u32 32, %s17
        %p196 = scmp.lt.s32.totalorder %s195, 63
        %s197 = scalar_select %p196, %s195, 63
        %s198 = smul.addr %s197, 2
        %s199 = smul.addr %s198, 4
        %s200 = scalar_lea.vmem %s0, %s199
        %s201 = smul.u32 32, %s17
      $region32: #{resnet_forward.22} parent=27 // pred_fallthru
        _
    $region28: #{resnet_forward.22} parent=5 // pred_fallthru
      _
    %p202 = scmp.le.s32.totalorder 1, %s10
    %p203 = scmp.lt.s32.totalorder %s10, 3
    %p204 = pnand %p202, %p203
    %p205 = pneg %p204
    // Predicated region
    $region33: #{resnet_forward.22} parent=5 // pred_check
      _
    $region34: #{resnet_forward.22} parent=5 // pred_check_branch
      %207 = sbr.rel (%p204) target = $region36
    $region35: #{resnet_forward.22} parent=5 // pred_region
      %s208 = ssub.s32 %s10, 1
      %s209 = smul.u32 32, %s19
      %p210 = scmp.lt.s32.totalorder %s209, 63
      %s211 = scalar_select %p210, %s209, 63
      %s212 = smul.addr %s211, 2
      %s213 = smul.addr %s212, 4
      %s214 = scalar_lea.vmem %s0, %s213
      %p215 = pneg %p48
      %p216 = pneg %p45
      %p217 = scmp.lt.s32.totalorder %s20, 0
      %s218 = scalar_select %p217, %s20, 0
      %s219 = smul.addr %s218, 4
      %s220 = scalar_lea.vmem %s1, %s219
      %p221 = pneg %p74
      %p222 = pneg %p71
      %p223 = scmp.lt.s32.totalorder %s20, 0
      %s224 = scalar_select %p223, %s20, 0
      %s225 = scalar_lea.vmem %s2, %s224
      %p226 = pneg %p100
      %p227 = pneg %p97
      %p228 = scmp.lt.s32.totalorder %s20, 0
      %s229 = scalar_select %p228, %s20, 0
      %s230 = scalar_lea.vmem %s3, %s229
      %p231 = pneg %p126
      %p232 = pneg %p123
      %p233 = pneg %p154
      %p234 = pneg %p151
      %s235 = smul.u32 32, %s19
      %p236 = scmp.lt.s32.totalorder %s235, 63
      %s237 = scalar_select %p236, %s235, 63
      %p238 = scmp.lt.s32.totalorder %s20, 0
      %s239 = scalar_select %p238, %s20, 0
      %s240 = sadd.s32 %s239, %s237
      %s241 = smul.addr %s240, 4
      %s242 = scalar_lea.vmem %s4, %s241
      %s243 = smul.u32 32, %s19
      %p244 = scmp.lt.s32.totalorder %s243, 63
      %s245 = scalar_select %p244, %s243, 63
      %s246 = smul.addr %s245, 2
      %s247 = smul.addr %s246, 4
      %s248 = scalar_lea.vmem %s0, %s247
      %s249 = smul.u32 32, %s19
      %p250 = scmp.lt.s32.totalorder %s20, 0
      %s251 = scalar_select %p250, %s20, 0
      %s252 = smul.addr %s251, 4
      %s253 = scalar_lea.vmem %s1, %s252
      %p254 = scmp.lt.s32.totalorder %s20, 0
      %s255 = scalar_select %p254, %s20, 0
      %s256 = scalar_lea.vmem %s2, %s255
      %p257 = scmp.lt.s32.totalorder %s20, 0
      %s258 = scalar_select %p257, %s20, 0
      %s259 = scalar_lea.vmem %s3, %s258
      %s260 = smul.u32 32, %s19
      %p261 = scmp.lt.s32.totalorder %s260, 63
      %s262 = scalar_select %p261, %s260, 63
      %p263 = scmp.lt.s32.totalorder %s20, 0
      %s264 = scalar_select %p263, %s20, 0
      %s265 = sadd.s32 %s264, %s262
      %s266 = smul.addr %s265, 4
      %s267 = scalar_lea.vmem %s4, %s266
      %s268 = smul.u32 32, %s19
      %v270 = vld [vmem:[%s248] sm:$0xff]
      %v271 = vld [vmem:[%s248 + $0x8] sm:$0xff]
      %v272 = vld [vmem:[%s248 + $0x10] sm:$0xff]
      %v273 = vld [vmem:[%s248 + $0x18] sm:$0xff]
      %v274 = vld [vmem:[%s248 + $0x20] sm:$0xff]
      %v275 = vld [vmem:[%s248 + $0x28] sm:$0xff]
      %v276 = vld [vmem:[%s248 + $0x30] sm:$0xff]
      %v277 = vld [vmem:[%s248 + $0x38] sm:$0xff]
      %v278 = vld [vmem:[%s248 + $0x40] sm:$0xff]
      %v279 = vld [vmem:[%s248 + $0x48] sm:$0xff]
      %v280 = vld [vmem:[%s248 + $0x50] sm:$0xff]
      %v281 = vld [vmem:[%s248 + $0x58] sm:$0xff]
      %v282 = vld [vmem:[%s248 + $0x60] sm:$0xff]
      %v283 = vld [vmem:[%s248 + $0x68] sm:$0xff]
      %v284 = vld [vmem:[%s248 + $0x70] sm:$0xff]
      %v285 = vld [vmem:[%s248 + $0x78] sm:$0xff]
      %v286 = vld [vmem:[%s248 + $0x80] sm:$0xff]
      %v287 = vld [vmem:[%s248 + $0x88] sm:$0xff]
      %v288 = vld [vmem:[%s248 + $0x90] sm:$0xff]
      %v289 = vld [vmem:[%s248 + $0x98] sm:$0xff]
      %v290 = vld [vmem:[%s248 + $0xa0] sm:$0xff]
      %v291 = vld [vmem:[%s248 + $0xa8] sm:$0xff]
      %v292 = vld [vmem:[%s248 + $0xb0] sm:$0xff]
      %v293 = vld [vmem:[%s248 + $0xb8] sm:$0xff]
      %v294 = vld [vmem:[%s248 + $0xc0] sm:$0xff]
      %v295 = vld [vmem:[%s248 + $0xc8] sm:$0xff]
      %v296 = vld [vmem:[%s248 + $0xd0] sm:$0xff]
      %v297 = vld [vmem:[%s248 + $0xd8] sm:$0xff]
      %v298 = vld [vmem:[%s248 + $0xe0] sm:$0xff]
      %v299 = vld [vmem:[%s248 + $0xe8] sm:$0xff]
      %v300 = vld [vmem:[%s248 + $0xf0] sm:$0xff]
      %v301 = vld [vmem:[%s248 + $0xf8] sm:$0xff]
      %v302 = vld [vmem:[%s253] sm:$0xf]
      %v303 = vld [vmem:[%s253 + $0x4] sm:$0xf]
      %v304 = vld [vmem:[%s253 + $0x8] sm:$0xf]
      %v305 = vld [vmem:[%s253 + $0xc] sm:$0xf]
      %v306 = vld [vmem:[%s253 + $0x10] sm:$0xf]
      %v307 = vld [vmem:[%s253 + $0x14] sm:$0xf]
      %v308 = vld [vmem:[%s253 + $0x18] sm:$0xf]
      %v309 = vld [vmem:[%s253 + $0x1c] sm:$0xf]
      %v310 = vld [vmem:[%s253 + $0x20] sm:$0xf]
      %v311 = vld [vmem:[%s253 + $0x24] sm:$0xf]
      %v312 = vld [vmem:[%s253 + $0x28] sm:$0xf]
      %v313 = vld [vmem:[%s253 + $0x2c] sm:$0xf]
      %v314 = vld [vmem:[%s253 + $0x30] sm:$0xf]
      %v315 = vld [vmem:[%s253 + $0x34] sm:$0xf]
      %v316 = vld [vmem:[%s253 + $0x38] sm:$0xf]
      %v317 = vld [vmem:[%s253 + $0x3c] sm:$0xf]
      %v318 = vld [vmem:[%s253 + $0x40] sm:$0xf]
      %v319 = vld [vmem:[%s253 + $0x44] sm:$0xf]
      %v320 = vld [vmem:[%s253 + $0x48] sm:$0xf]
      %v321 = vld [vmem:[%s253 + $0x4c] sm:$0xf]
      %v322 = vld [vmem:[%s253 + $0x50] sm:$0xf]
      %v323 = vld [vmem:[%s253 + $0x54] sm:$0xf]
      %v324 = vld [vmem:[%s253 + $0x58] sm:$0xf]
      %v325 = vld [vmem:[%s253 + $0x5c] sm:$0xf]
      %v326 = vld [vmem:[%s253 + $0x60] sm:$0xf]
      %v327 = vld [vmem:[%s253 + $0x64] sm:$0xf]
      %v328 = vld [vmem:[%s253 + $0x68] sm:$0xf]
      %v329 = vld [vmem:[%s253 + $0x6c] sm:$0xf]
      %v330 = vld [vmem:[%s253 + $0x70] sm:$0xf]
      %v331 = vld [vmem:[%s253 + $0x74] sm:$0xf]
      %v332 = vld [vmem:[%s253 + $0x78] sm:$0xf]
      %v333 = vld [vmem:[%s253 + $0x7c] sm:$0xf]
      %v366 = vunpack.c.l.b16 %v270
      %v367 = vunpack.c.h.b16 %v270
      %v368 = vunpack.c.l.b16 %v271
      %v369 = vunpack.c.h.b16 %v271
      %v370 = vunpack.c.l.b16 %v272
      %v371 = vunpack.c.h.b16 %v272
      %v372 = vunpack.c.l.b16 %v273
      %v373 = vunpack.c.h.b16 %v273
      %v374 = vunpack.c.l.b16 %v274
      %v375 = vunpack.c.h.b16 %v274
      %v376 = vunpack.c.l.b16 %v275
      %v377 = vunpack.c.h.b16 %v275
      %v378 = vunpack.c.l.b16 %v276
      %v379 = vunpack.c.h.b16 %v276
      %v380 = vunpack.c.l.b16 %v277
      %v381 = vunpack.c.h.b16 %v277
      %v382 = vunpack.c.l.b16 %v278
      %v383 = vunpack.c.h.b16 %v278
      %v384 = vunpack.c.l.b16 %v279
      %v385 = vunpack.c.h.b16 %v279
      %v386 = vunpack.c.l.b16 %v280
      %v387 = vunpack.c.h.b16 %v280
      %v388 = vunpack.c.l.b16 %v281
      %v389 = vunpack.c.h.b16 %v281
      %v390 = vunpack.c.l.b16 %v282
      %v391 = vunpack.c.h.b16 %v282
      %v392 = vunpack.c.l.b16 %v283
      %v393 = vunpack.c.h.b16 %v283
      %v394 = vunpack.c.l.b16 %v284
      %v395 = vunpack.c.h.b16 %v284
      %v396 = vunpack.c.l.b16 %v285
      %v397 = vunpack.c.h.b16 %v285
      %v398 = vunpack.c.l.b16 %v286
      %v399 = vunpack.c.h.b16 %v286
      %v400 = vunpack.c.l.b16 %v287
      %v401 = vunpack.c.h.b16 %v287
      %v402 = vunpack.c.l.b16 %v288
      %v403 = vunpack.c.h.b16 %v288
      %v404 = vunpack.c.l.b16 %v289
      %v405 = vunpack.c.h.b16 %v289
      %v406 = vunpack.c.l.b16 %v290
      %v407 = vunpack.c.h.b16 %v290
      %v408 = vunpack.c.l.b16 %v291
      %v409 = vunpack.c.h.b16 %v291
      %v410 = vunpack.c.l.b16 %v292
      %v411 = vunpack.c.h.b16 %v292
      %v412 = vunpack.c.l.b16 %v293
      %v413 = vunpack.c.h.b16 %v293
      %v414 = vunpack.c.l.b16 %v294
      %v415 = vunpack.c.h.b16 %v294
      %v416 = vunpack.c.l.b16 %v295
      %v417 = vunpack.c.h.b16 %v295
      %v418 = vunpack.c.l.b16 %v296
      %v419 = vunpack.c.h.b16 %v296
      %v420 = vunpack.c.l.b16 %v297
      %v421 = vunpack.c.h.b16 %v297
      %v422 = vunpack.c.l.b16 %v298
      %v423 = vunpack.c.h.b16 %v298
      %v424 = vunpack.c.l.b16 %v299
      %v425 = vunpack.c.h.b16 %v299
      %v426 = vunpack.c.l.b16 %v300
      %v427 = vunpack.c.h.b16 %v300
      %v428 = vunpack.c.l.b16 %v301
      %v429 = vunpack.c.h.b16 %v301
      %v430 = vpack.c.b16 %v368, %v366
      %v431 = vpack.c.b16 %v369, %v367
      %v432 = vpack.c.b16 %v372, %v370
      %v433 = vpack.c.b16 %v373, %v371
      %v434 = vpack.c.b16 %v376, %v374
      %v435 = vpack.c.b16 %v377, %v375
      %v436 = vpack.c.b16 %v380, %v378
      %v437 = vpack.c.b16 %v381, %v379
      %v438 = vpack.c.b16 %v384, %v382
      %v439 = vpack.c.b16 %v385, %v383
      %v440 = vpack.c.b16 %v388, %v386
      %v441 = vpack.c.b16 %v389, %v387
      %v442 = vpack.c.b16 %v392, %v390
      %v443 = vpack.c.b16 %v393, %v391
      %v444 = vpack.c.b16 %v396, %v394
      %v445 = vpack.c.b16 %v397, %v395
      %v446 = vpack.c.b16 %v400, %v398
      %v447 = vpack.c.b16 %v401, %v399
      %v448 = vpack.c.b16 %v404, %v402
      %v449 = vpack.c.b16 %v405, %v403
      %v450 = vpack.c.b16 %v408, %v406
      %v451 = vpack.c.b16 %v409, %v407
      %v452 = vpack.c.b16 %v412, %v410
      %v453 = vpack.c.b16 %v413, %v411
      %v454 = vpack.c.b16 %v416, %v414
      %v455 = vpack.c.b16 %v417, %v415
      %v456 = vpack.c.b16 %v420, %v418
      %v457 = vpack.c.b16 %v421, %v419
      %v458 = vpack.c.b16 %v424, %v422
      %v459 = vpack.c.b16 %v425, %v423
      %v460 = vpack.c.b16 %v428, %v426
      %v461 = vpack.c.b16 %v429, %v427
      %v526 = vunpack.c.l.b16 %v302
      %v527 = vunpack.c.l.b16 %v303
      %v528 = vunpack.c.l.b16 %v304
      %v529 = vunpack.c.l.b16 %v305
      %v530 = vunpack.c.l.b16 %v306
      %v531 = vunpack.c.l.b16 %v307
      %v532 = vunpack.c.l.b16 %v308
      %v533 = vunpack.c.l.b16 %v309
      %v534 = vunpack.c.l.b16 %v310
      %v535 = vunpack.c.l.b16 %v311
      %v536 = vunpack.c.l.b16 %v312
      %v537 = vunpack.c.l.b16 %v313
      %v538 = vunpack.c.l.b16 %v314
      %v539 = vunpack.c.l.b16 %v315
      %v540 = vunpack.c.l.b16 %v316
      %v541 = vunpack.c.l.b16 %v317
      %v542 = vunpack.c.l.b16 %v318
      %v543 = vunpack.c.l.b16 %v319
      %v544 = vunpack.c.l.b16 %v320
      %v545 = vunpack.c.l.b16 %v321
      %v546 = vunpack.c.l.b16 %v322
      %v547 = vunpack.c.l.b16 %v323
      %v548 = vunpack.c.l.b16 %v324
      %v549 = vunpack.c.l.b16 %v325
      %v550 = vunpack.c.l.b16 %v326
      %v551 = vunpack.c.l.b16 %v327
      %v552 = vunpack.c.l.b16 %v328
      %v553 = vunpack.c.l.b16 %v329
      %v554 = vunpack.c.l.b16 %v330
      %v555 = vunpack.c.l.b16 %v331
      %v556 = vunpack.c.l.b16 %v332
      %v557 = vunpack.c.l.b16 %v333
      %v558 = vpack.c.b16 %v527, %v526
      %v559 = vpack.c.b16 %v529, %v528
      %v560 = vpack.c.b16 %v531, %v530
      %v561 = vpack.c.b16 %v533, %v532
      %v562 = vpack.c.b16 %v535, %v534
      %v563 = vpack.c.b16 %v537, %v536
      %v564 = vpack.c.b16 %v539, %v538
      %v565 = vpack.c.b16 %v541, %v540
      %v566 = vpack.c.b16 %v543, %v542
      %v567 = vpack.c.b16 %v545, %v544
      %v568 = vpack.c.b16 %v547, %v546
      %v569 = vpack.c.b16 %v549, %v548
      %v570 = vpack.c.b16 %v551, %v550
      %v571 = vpack.c.b16 %v553, %v552
      %v572 = vpack.c.b16 %v555, %v554
      %v573 = vpack.c.b16 %v557, %v556
      %590 = vmatprep.subr.bf16.mxu0 0
      %591 = vmatpush1.bf16.msra.mxu0 %v558
      %592 = vmatprep.subr.bf16.mxu0 0
      %593 = vmatpush1.bf16.msra.mxu0 %v559
      %594 = vmatprep.subr.bf16.mxu0 0
      %595 = vmatpush1.bf16.msra.mxu0 %v560
      %596 = vmatprep.subr.bf16.mxu0 0
      %597 = vmatpush1.bf16.msra.mxu0 %v561
      %598 = vmatprep.subr.bf16.mxu0 0
      %599 = vmatpush1.bf16.msra.mxu0 %v562
      %600 = vmatprep.subr.bf16.mxu0 0
      %601 = vmatpush1.bf16.msra.mxu0 %v563
      %602 = vmatprep.subr.bf16.mxu0 0
      %603 = vmatpush1.bf16.msra.mxu0 %v564
      %604 = vmatprep.subr.bf16.mxu0 0
      %605 = vmatpush1.bf16.msra.mxu0 %v565
      %606 = vmatprep.subr.bf16.mxu0 0
      %607 = vmatpush1.bf16.msra.mxu0 %v566
      %608 = vmatprep.subr.bf16.mxu0 0
      %609 = vmatpush1.bf16.msra.mxu0 %v567
      %610 = vmatprep.subr.bf16.mxu0 0
      %611 = vmatpush1.bf16.msra.mxu0 %v568
      %612 = vmatprep.subr.bf16.mxu0 0
      %613 = vmatpush1.bf16.msra.mxu0 %v569
      %614 = vmatprep.subr.bf16.mxu0 0
      %615 = vmatpush1.bf16.msra.mxu0 %v570
      %616 = vmatprep.subr.bf16.mxu0 0
      %617 = vmatpush1.bf16.msra.mxu0 %v571
      %618 = vmatprep.subr.bf16.mxu0 0
      %619 = vmatpush1.bf16.msra.mxu0 %v572
      %620 = vmatprep.subr.bf16.mxu0 0
      %621 = vmatpush1.bf16.msra.mxu0 %v573
      %622 = vmatprep.mubr.bf16.mxu0 %v431
      %623 = vmatmul.mubr.bf16.gmra.mrb[0].mxu0 %v430
      %v624 = vpop.f32.mrb[0].mxu0
      %v625 = vadd.f32 0.0, %v624
      %v626 = vpop.f32.mrb[0].mxu0
      %v627 = vpop.f32.mrb[0].mxu0
      %v628 = vadd.f32 0.0, %v627
      %v629 = vpop.f32.mrb[0].mxu0
      %630 = vmatprep.mubr.bf16.mxu0 %v433
      %631 = vmatmul.mubr.bf16.gmra.mrb[0].mxu0 %v432
      %v632 = vpop.f32.mrb[0].mxu0
      %v633 = vadd.f32 0.0, %v632
      %v634 = vpop.f32.mrb[0].mxu0
      %v635 = vpop.f32.mrb[0].mxu0
      %v636 = vadd.f32 0.0, %v635
      %v637 = vpop.f32.mrb[0].mxu0
      %638 = vmatprep.mubr.bf16.mxu0 %v435
      %639 = vmatmul.mubr.bf16.gmra.mrb[0].mxu0 %v434
      %v640 = vpop.f32.mrb[0].mxu0
      %v641 = vadd.f32 0.0, %v640
      %v642 = vpop.f32.mrb[0].mxu0
      %v643 = vpop.f32.mrb[0].mxu0
      %v644 = vadd.f32 0.0, %v643
      %v645 = vpop.f32.mrb[0].mxu0
      %646 = vmatprep.mubr.bf16.mxu0 %v437
      %647 = vmatmul.mubr.bf16.gmra.mrb[0].mxu0 %v436
      %v648 = vpop.f32.mrb[0].mxu0
      %v649 = vadd.f32 0.0, %v648
      %v650 = vpop.f32.mrb[0].mxu0
      %v651 = vpop.f32.mrb[0].mxu0
      %v652 = vadd.f32 0.0, %v651
      %v653 = vpop.f32.mrb[0].mxu0
      %654 = vmatprep.mubr.bf16.mxu0 %v439
      %655 = vmatmul.mubr.bf16.gmra.mrb[0].mxu0 %v438
      %v656 = vpop.f32.mrb[0].mxu0
      %v657 = vadd.f32 0.0, %v656
      %v658 = vpop.f32.mrb[0].mxu0
      %v659 = vpop.f32.mrb[0].mxu0
      %v660 = vadd.f32 0.0, %v659
      %v661 = vpop.f32.mrb[0].mxu0
      %662 = vmatprep.mubr.bf16.mxu0 %v441
      %663 = vmatmul.mubr.bf16.gmra.mrb[0].mxu0 %v440
      %v664 = vpop.f32.mrb[0].mxu0
      %v665 = vadd.f32 0.0, %v664
      %v666 = vpop.f32.mrb[0].mxu0
      %v667 = vpop.f32.mrb[0].mxu0
      %v668 = vadd.f32 0.0, %v667
      %v669 = vpop.f32.mrb[0].mxu0
      %670 = vmatprep.mubr.bf16.mxu0 %v443
      %671 = vmatmul.mubr.bf16.gmra.mrb[0].mxu0 %v442
      %v672 = vpop.f32.mrb[0].mxu0
      %v673 = vadd.f32 0.0, %v672
      %v674 = vpop.f32.mrb[0].mxu0
      %v675 = vpop.f32.mrb[0].mxu0
      %v676 = vadd.f32 0.0, %v675
      %v677 = vpop.f32.mrb[0].mxu0
      %678 = vmatprep.mubr.bf16.mxu0 %v445
      %679 = vmatmul.mubr.bf16.gmra.mrb[0].mxu0 %v444
      %v680 = vpop.f32.mrb[0].mxu0
      %v681 = vadd.f32 0.0, %v680
      %v682 = vpop.f32.mrb[0].mxu0
      %v683 = vpop.f32.mrb[0].mxu0
      %v684 = vadd.f32 0.0, %v683
      %v685 = vpop.f32.mrb[0].mxu0
      %686 = vmatprep.mubr.bf16.mxu0 %v447
      %687 = vmatmul.mubr.bf16.gmra.mrb[0].mxu0 %v446
      %v688 = vpop.f32.mrb[0].mxu0
      %v689 = vadd.f32 0.0, %v688
      %v690 = vpop.f32.mrb[0].mxu0
      %v691 = vpop.f32.mrb[0].mxu0
      %v692 = vadd.f32 0.0, %v691
      %v693 = vpop.f32.mrb[0].mxu0
      %694 = vmatprep.mubr.bf16.mxu0 %v449
      %695 = vmatmul.mubr.bf16.gmra.mrb[0].mxu0 %v448
      %v696 = vpop.f32.mrb[0].mxu0
      %v697 = vadd.f32 0.0, %v696
      %v698 = vpop.f32.mrb[0].mxu0
      %v699 = vpop.f32.mrb[0].mxu0
      %v700 = vadd.f32 0.0, %v699
      %v701 = vpop.f32.mrb[0].mxu0
      %702 = vmatprep.mubr.bf16.mxu0 %v451
      %703 = vmatmul.mubr.bf16.gmra.mrb[0].mxu0 %v450
      %v704 = vpop.f32.mrb[0].mxu0
      %v705 = vadd.f32 0.0, %v704
      %v706 = vpop.f32.mrb[0].mxu0
      %v707 = vpop.f32.mrb[0].mxu0
      %v708 = vadd.f32 0.0, %v707
      %v709 = vpop.f32.mrb[0].mxu0
      %710 = vmatprep.mubr.bf16.mxu0 %v453
      %711 = vmatmul.mubr.bf16.gmra.mrb[0].mxu0 %v452
      %v712 = vpop.f32.mrb[0].mxu0
      %v713 = vadd.f32 0.0, %v712
      %v714 = vpop.f32.mrb[0].mxu0
      %v715 = vpop.f32.mrb[0].mxu0
      %v716 = vadd.f32 0.0, %v715
      %v717 = vpop.f32.mrb[0].mxu0
      %718 = vmatprep.mubr.bf16.mxu0 %v455
      %719 = vmatmul.mubr.bf16.gmra.mrb[0].mxu0 %v454
      %v720 = vpop.f32.mrb[0].mxu0
      %v721 = vadd.f32 0.0, %v720
      %v722 = vpop.f32.mrb[0].mxu0
      %v723 = vpop.f32.mrb[0].mxu0
      %v724 = vadd.f32 0.0, %v723
      %v725 = vpop.f32.mrb[0].mxu0
      %726 = vmatprep.mubr.bf16.mxu0 %v457
      %727 = vmatmul.mubr.bf16.gmra.mrb[0].mxu0 %v456
      %v728 = vpop.f32.mrb[0].mxu0
      %v729 = vadd.f32 0.0, %v728
      %v730 = vpop.f32.mrb[0].mxu0
      %v731 = vpop.f32.mrb[0].mxu0
      %v732 = vadd.f32 0.0, %v731
      %v733 = vpop.f32.mrb[0].mxu0
      %734 = vmatprep.mubr.bf16.mxu0 %v459
      %735 = vmatmul.mubr.bf16.gmra.mrb[0].mxu0 %v458
      %v736 = vpop.f32.mrb[0].mxu0
      %v737 = vadd.f32 0.0, %v736
      %v738 = vpop.f32.mrb[0].mxu0
      %v739 = vpop.f32.mrb[0].mxu0
      %v740 = vadd.f32 0.0, %v739
      %v741 = vpop.f32.mrb[0].mxu0
      %742 = vmatprep.mubr.bf16.mxu0 %v461
      %743 = vmatmul.mubr.bf16.gmra.mrb[0].mxu0 %v460
      %v744 = vpop.f32.mrb[0].mxu0
      %v745 = vadd.f32 0.0, %v744
      %v746 = vpop.f32.mrb[0].mxu0
      %v747 = vpop.f32.mrb[0].mxu0
      %v748 = vadd.f32 0.0, %v747
      %v749 = vpop.f32.mrb[0].mxu0
      %750 = vdwg.mxu0
      %v751 = vld [vmem:[%s256] sm:$0x1]
      %v753 = vlaneseq
      %v754 = vshrl.u32 %v753, 7
      %v755 = vsub.s32 0, %v754
      %v756 = vrot.slane %v751, %v755
      %v758 = vmul.f32 %v625, %v756
      %v759 = vmul.f32 %v628, %v756
      %v760 = vmul.f32 %v633, %v756
      %v761 = vmul.f32 %v636, %v756
      %v762 = vmul.f32 %v641, %v756
      %v763 = vmul.f32 %v644, %v756
      %v764 = vmul.f32 %v649, %v756
      %v765 = vmul.f32 %v652, %v756
      %v766 = vmul.f32 %v657, %v756
      %v767 = vmul.f32 %v660, %v756
      %v768 = vmul.f32 %v665, %v756
      %v769 = vmul.f32 %v668, %v756
      %v770 = vmul.f32 %v673, %v756
      %v771 = vmul.f32 %v676, %v756
      %v772 = vmul.f32 %v681, %v756
      %v773 = vmul.f32 %v684, %v756
      %v774 = vmul.f32 %v689, %v756
      %v775 = vmul.f32 %v692, %v756
      %v776 = vmul.f32 %v697, %v756
      %v777 = vmul.f32 %v700, %v756
      %v778 = vmul.f32 %v705, %v756
      %v779 = vmul.f32 %v708, %v756
      %v780 = vmul.f32 %v713, %v756
      %v781 = vmul.f32 %v716, %v756
      %v782 = vmul.f32 %v721, %v756
      %v783 = vmul.f32 %v724, %v756
      %v784 = vmul.f32 %v729, %v756
      %v785 = vmul.f32 %v732, %v756
      %v786 = vmul.f32 %v737, %v756
      %v787 = vmul.f32 %v740, %v756
      %v788 = vmul.f32 %v745, %v756
      %v789 = vmul.f32 %v748, %v756
      %v790 = vld [vmem:[%s259] sm:$0x1]
      %v792 = vlaneseq
      %v793 = vshrl.u32 %v792, 7
      %v794 = vsub.s32 0, %v793
      %v795 = vrot.slane %v790, %v794
      %v797 = vadd.f32 %v758, %v795
      %v798 = vadd.f32 %v759, %v795
      %v799 = vadd.f32 %v760, %v795
      %v800 = vadd.f32 %v761, %v795
      %v801 = vadd.f32 %v762, %v795
      %v802 = vadd.f32 %v763, %v795
      %v803 = vadd.f32 %v764, %v795
      %v804 = vadd.f32 %v765, %v795
      %v805 = vadd.f32 %v766, %v795
      %v806 = vadd.f32 %v767, %v795
      %v807 = vadd.f32 %v768, %v795
      %v808 = vadd.f32 %v769, %v795
      %v809 = vadd.f32 %v770, %v795
      %v810 = vadd.f32 %v771, %v795
      %v811 = vadd.f32 %v772, %v795
      %v812 = vadd.f32 %v773, %v795
      %v813 = vadd.f32 %v774, %v795
      %v814 = vadd.f32 %v775, %v795
      %v815 = vadd.f32 %v776, %v795
      %v816 = vadd.f32 %v777, %v795
      %v817 = vadd.f32 %v778, %v795
      %v818 = vadd.f32 %v779, %v795
      %v819 = vadd.f32 %v780, %v795
      %v820 = vadd.f32 %v781, %v795
      %v821 = vadd.f32 %v782, %v795
      %v822 = vadd.f32 %v783, %v795
      %v823 = vadd.f32 %v784, %v795
      %v824 = vadd.f32 %v785, %v795
      %v825 = vadd.f32 %v786, %v795
      %v826 = vadd.f32 %v787, %v795
      %v827 = vadd.f32 %v788, %v795
      %v828 = vadd.f32 %v789, %v795
      %v829 = vmax.f32 %v797, 0.0
      %v830 = vmax.f32 %v798, 0.0
      %v831 = vmax.f32 %v799, 0.0
      %v832 = vmax.f32 %v800, 0.0
      %v833 = vmax.f32 %v801, 0.0
      %v834 = vmax.f32 %v802, 0.0
      %v835 = vmax.f32 %v803, 0.0
      %v836 = vmax.f32 %v804, 0.0
      %v837 = vmax.f32 %v805, 0.0
      %v838 = vmax.f32 %v806, 0.0
      %v839 = vmax.f32 %v807, 0.0
      %v840 = vmax.f32 %v808, 0.0
      %v841 = vmax.f32 %v809, 0.0
      %v842 = vmax.f32 %v810, 0.0
      %v843 = vmax.f32 %v811, 0.0
      %v844 = vmax.f32 %v812, 0.0
      %v845 = vmax.f32 %v813, 0.0
      %v846 = vmax.f32 %v814, 0.0
      %v847 = vmax.f32 %v815, 0.0
      %v848 = vmax.f32 %v816, 0.0
      %v849 = vmax.f32 %v817, 0.0
      %v850 = vmax.f32 %v818, 0.0
      %v851 = vmax.f32 %v819, 0.0
      %v852 = vmax.f32 %v820, 0.0
      %v853 = vmax.f32 %v821, 0.0
      %v854 = vmax.f32 %v822, 0.0
      %v855 = vmax.f32 %v823, 0.0
      %v856 = vmax.f32 %v824, 0.0
      %v857 = vmax.f32 %v825, 0.0
      %v858 = vmax.f32 %v826, 0.0
      %v859 = vmax.f32 %v827, 0.0
      %v860 = vmax.f32 %v828, 0.0
      %v861 = vpack.c.bf16 %v830, %v829
      %v862 = vpack.c.bf16 %v832, %v831
      %v863 = vpack.c.bf16 %v834, %v833
      %v864 = vpack.c.bf16 %v836, %v835
      %v865 = vpack.c.bf16 %v838, %v837
      %v866 = vpack.c.bf16 %v840, %v839
      %v867 = vpack.c.bf16 %v842, %v841
      %v868 = vpack.c.bf16 %v844, %v843
      %v869 = vpack.c.bf16 %v846, %v845
      %v870 = vpack.c.bf16 %v848, %v847
      %v871 = vpack.c.bf16 %v850, %v849
      %v872 = vpack.c.bf16 %v852, %v851
      %v873 = vpack.c.bf16 %v854, %v853
      %v874 = vpack.c.bf16 %v856, %v855
      %v875 = vpack.c.bf16 %v858, %v857
      %v876 = vpack.c.bf16 %v860, %v859
      %v893 = vunpack.c.l.b16 %v861
      %v894 = vunpack.c.h.b16 %v861
      %v895 = vunpack.c.l.b16 %v862
      %v896 = vunpack.c.h.b16 %v862
      %v897 = vunpack.c.l.b16 %v863
      %v898 = vunpack.c.h.b16 %v863
      %v899 = vunpack.c.l.b16 %v864
      %v900 = vunpack.c.h.b16 %v864
      %v901 = vunpack.c.l.b16 %v865
      %v902 = vunpack.c.h.b16 %v865
      %v903 = vunpack.c.l.b16 %v866
      %v904 = vunpack.c.h.b16 %v866
      %v905 = vunpack.c.l.b16 %v867
      %v906 = vunpack.c.h.b16 %v867
      %v907 = vunpack.c.l.b16 %v868
      %v908 = vunpack.c.h.b16 %v868
      %v909 = vunpack.c.l.b16 %v869
      %v910 = vunpack.c.h.b16 %v869
      %v911 = vunpack.c.l.b16 %v870
      %v912 = vunpack.c.h.b16 %v870
      %v913 = vunpack.c.l.b16 %v871
      %v914 = vunpack.c.h.b16 %v871
      %v915 = vunpack.c.l.b16 %v872
      %v916 = vunpack.c.h.b16 %v872
      %v917 = vunpack.c.l.b16 %v873
      %v918 = vunpack.c.h.b16 %v873
      %v919 = vunpack.c.l.b16 %v874
      %v920 = vunpack.c.h.b16 %v874
      %v921 = vunpack.c.l.b16 %v875
      %v922 = vunpack.c.h.b16 %v875
      %v923 = vunpack.c.l.b16 %v876
      %v924 = vunpack.c.h.b16 %v876
      %v925 = vpack.c.b16 %v893, %v893
      %v926 = vpack.c.b16 %v894, %v894
      %v927 = vpack.c.b16 %v895, %v895
      %v928 = vpack.c.b16 %v896, %v896
      %v929 = vpack.c.b16 %v897, %v897
      %v930 = vpack.c.b16 %v898, %v898
      %v931 = vpack.c.b16 %v899, %v899
      %v932 = vpack.c.b16 %v900, %v900
      %v933 = vpack.c.b16 %v901, %v901
      %v934 = vpack.c.b16 %v902, %v902
      %v935 = vpack.c.b16 %v903, %v903
      %v936 = vpack.c.b16 %v904, %v904
      %v937 = vpack.c.b16 %v905, %v905
      %v938 = vpack.c.b16 %v906, %v906
      %v939 = vpack.c.b16 %v907, %v907
      %v940 = vpack.c.b16 %v908, %v908
      %v941 = vpack.c.b16 %v909, %v909
      %v942 = vpack.c.b16 %v910, %v910
      %v943 = vpack.c.b16 %v911, %v911
      %v944 = vpack.c.b16 %v912, %v912
      %v945 = vpack.c.b16 %v913, %v913
      %v946 = vpack.c.b16 %v914, %v914
      %v947 = vpack.c.b16 %v915, %v915
      %v948 = vpack.c.b16 %v916, %v916
      %v949 = vpack.c.b16 %v917, %v917
      %v950 = vpack.c.b16 %v918, %v918
      %v951 = vpack.c.b16 %v919, %v919
      %v952 = vpack.c.b16 %v920, %v920
      %v953 = vpack.c.b16 %v921, %v921
      %v954 = vpack.c.b16 %v922, %v922
      %v955 = vpack.c.b16 %v923, %v923
      %v956 = vpack.c.b16 %v924, %v924
      %989 = vst [vmem:[%s267] sm:$0xf] %v925
      %990 = vst [vmem:[%s267 + $0x4] sm:$0xf] %v926
      %991 = vst [vmem:[%s267 + $0x8] sm:$0xf] %v927
      %992 = vst [vmem:[%s267 + $0xc] sm:$0xf] %v928
      %993 = vst [vmem:[%s267 + $0x10] sm:$0xf] %v929
      %994 = vst [vmem:[%s267 + $0x14] sm:$0xf] %v930
      %995 = vst [vmem:[%s267 + $0x18] sm:$0xf] %v931
      %996 = vst [vmem:[%s267 + $0x1c] sm:$0xf] %v932
      %997 = vst [vmem:[%s267 + $0x20] sm:$0xf] %v933
      %998 = vst [vmem:[%s267 + $0x24] sm:$0xf] %v934
      %999 = vst [vmem:[%s267 + $0x28] sm:$0xf] %v935
      %1000 = vst [vmem:[%s267 + $0x2c] sm:$0xf] %v936
      %1001 = vst [vmem:[%s267 + $0x30] sm:$0xf] %v937
      %1002 = vst [vmem:[%s267 + $0x34] sm:$0xf] %v938
      %1003 = vst [vmem:[%s267 + $0x38] sm:$0xf] %v939
      %1004 = vst [vmem:[%s267 + $0x3c] sm:$0xf] %v940
      %1005 = vst [vmem:[%s267 + $0x40] sm:$0xf] %v941
      %1006 = vst [vmem:[%s267 + $0x44] sm:$0xf] %v942
      %1007 = vst [vmem:[%s267 + $0x48] sm:$0xf] %v943
      %1008 = vst [vmem:[%s267 + $0x4c] sm:$0xf] %v944
      %1009 = vst [vmem:[%s267 + $0x50] sm:$0xf] %v945
      %1010 = vst [vmem:[%s267 + $0x54] sm:$0xf] %v946
      %1011 = vst [vmem:[%s267 + $0x58] sm:$0xf] %v947
      %1012 = vst [vmem:[%s267 + $0x5c] sm:$0xf] %v948
      %1013 = vst [vmem:[%s267 + $0x60] sm:$0xf] %v949
      %1014 = vst [vmem:[%s267 + $0x64] sm:$0xf] %v950
      %1015 = vst [vmem:[%s267 + $0x68] sm:$0xf] %v951
      %1016 = vst [vmem:[%s267 + $0x6c] sm:$0xf] %v952
      %1017 = vst [vmem:[%s267 + $0x70] sm:$0xf] %v953
      %1018 = vst [vmem:[%s267 + $0x74] sm:$0xf] %v954
      %1019 = vst [vmem:[%s267 + $0x78] sm:$0xf] %v955
      %1020 = vst [vmem:[%s267 + $0x7c] sm:$0xf] %v956
      %s1021 = smul.u32 32, %s19
      %p1022 = scmp.lt.s32.totalorder %s1021, 63
      %s1023 = scalar_select %p1022, %s1021, 63
      %p1024 = scmp.lt.s32.totalorder %s20, 0
      %s1025 = scalar_select %p1024, %s20, 0
      %s1026 = sadd.s32 %s1025, %s1023
      %s1027 = smul.addr %s1026, 4
      %s1028 = scalar_lea.vmem %s4, %s1027
      // Predicated region
      $region37: #{resnet_forward.22} parent=35 // pred_check
        %p1029 = pneg %p151
      $region38: #{resnet_forward.22} parent=35 // pred_check_branch
        %1031 = sbr.rel (%p1029) target = $region40
      $region39: #{resnet_forward.22} parent=35 // pred_region
        %s1032 = smul.u32 32, %s19
      $region40: #{resnet_forward.22} parent=35 // pred_fallthru
        _
    $region36: #{resnet_forward.22} parent=5 // pred_fallthru
      _
    %p1033 = scmp.le.s32.totalorder 2, %s10
    // Predicated region
    $region41: #{resnet_forward.22} parent=5 // pred_check
      %p1034 = pneg %p1033
    $region42: #{resnet_forward.22} parent=5 // pred_check_branch
      %1036 = sbr.rel (%p1034) target = $region44
    $region43: #{resnet_forward.22} parent=5 // pred_region
      %s1037 = ssub.s32 %s10, 2
      // Predicated region
      $region45: #{resnet_forward.22} parent=43 // pred_check
        %p1038 = pneg %p157
      $region46: #{resnet_forward.22} parent=43 // pred_check_branch
        %1040 = sbr.rel (%p1038) target = $region48
      $region47: #{resnet_forward.22} parent=43 // pred_region
        %s1041 = smul.u32 32, %s21
        %p1042 = scmp.lt.s32.totalorder %s1041, 63
        %s1043 = scalar_select %p1042, %s1041, 63
        %p1044 = scmp.lt.s32.totalorder %s22, 0
        %s1045 = scalar_select %p1044, %s22, 0
        %s1046 = sadd.s32 %s1045, %s1043
        %s1047 = smul.addr %s1046, 4
        %s1048 = scalar_lea.vmem %s4, %s1047
      $region48: #{resnet_forward.22} parent=43 // pred_fallthru
        _
    $region44: #{resnet_forward.22} parent=5 // pred_fallthru
      _
  $region6: #{resnet_forward.22} parent=0 // loop_footer
    %s14 = sadd.s32 1, %s10
  $region7: #{resnet_forward.22} parent=0 // loop_footer_branch
    %9 = sbr.rel target = $region3
  $region8: #{resnet_forward.22} parent=0 // loop_exit
    _

// kernel: resnet_forward.23
$region0: #{resnet_forward.23}
  #allocation0 [shape = 'u32[]', space=smem, size = 0x4, offset = 0x4, fixed_abs, tag = 'smem constant byte address 0x4 - core index']
  #allocation1 [shape = 'u32[144,128]{1,0:T(1,128)}', space=vmem, size = 0x12000, scoped, tag = 'internal scratch']
  %s0 = inlined_call_operand.vmem [shape: bf16[9,128,128], index: 0, kind: input, shape index: {}]
  %s1 = inlined_call_operand.vmem [shape: bf16[128,128], index: 1, kind: output, shape index: {}]
  %s2 = sld [smem:[#allocation0]]
  $region78: #{resnet_forward.23} parent=0
    _
  %s4 = ssub.s32 1, %s2
  %s5 = scalar_select 0, %s4, %s2
  $region1: #{resnet_forward.23} parent=0
    #allocation2 [shape = 'u8[294912]{0}', space=vmem, size = 0x48000, scoped, tag = 'input window, operand 0']
    loop: start=0, step=1, limit=4
    $region2: #{resnet_forward.23} parent=1 // loop_pre_header
      _
    $region3: #{resnet_forward.23} parent=1 // loop_header
      %s7 = sphi 0, %s11
      %p8 = scmp.ge.s32.totalorder %s7, 4
      %s17 = sphi 0, %s19
      %s20 = sphi 0, %s17
      %s21 = sphi 0, %s20
      %s37 = sphi 0, %s21
      %s43 = sphi 0, %s45
      %s46 = sphi 0, %s43
      %s47 = sphi 0, %s46
      %s63 = sphi 0, %s47
    $region4: #{resnet_forward.23} parent=1 // loop_header_branch
      %10 = sbr.rel (%p8) target = $region8
    $region5: #{resnet_forward.23} parent=1 // loop_body
      %s12 = ssub.s32 %s7, 1
      %s13 = ssub.s32 %s7, 2
      %s14 = sadd.s32 %s7, 1
      %s15 = ssub.s32 %s7, %s14
      %p16 = scmp.eq.s32.totalorder %s15, 0
      %s18 = sadd.s32 %s17, 1
      %s19 = scalar_select %p16, %s17, %s18
      %p22 = pneg %p16
      %p23 = scmp.eq.s32.totalorder %s7, 1
      %p24 = por %p22, %p23
      %p25 = scmp.ne.s32.totalorder %s17, %s20
      %p26 = scmp.eq.s32.totalorder %s7, 0
      %p27 = por %p25, %p26
      %p28 = scmp.ne.s32.totalorder %s17, %s20
      %p29 = scmp.eq.s32.totalorder %s12, 1
      %p30 = por %p28, %p29
      %p31 = scmp.ne.s32.totalorder %s20, %s21
      %p32 = scmp.eq.s32.totalorder %s12, 0
      %p33 = por %p31, %p32
      %p34 = scmp.ne.s32.totalorder %s20, %s21
      %p35 = scmp.eq.s32.totalorder %s13, 1
      %p36 = por %p34, %p35
      %p38 = scmp.ne.s32.totalorder %s21, %s37
      %p39 = scmp.eq.s32.totalorder %s13, 0
      %p40 = por %p38, %p39
      %s41 = ssub.s32 %s7, %s14
      %p42 = scmp.eq.s32.totalorder %s41, 0
      %s44 = sadd.s32 %s43, 1
      %s45 = scalar_select %p42, %s43, %s44
      %p48 = pneg %p42
      %p49 = scmp.eq.s32.totalorder %s7, 1
      %p50 = por %p48, %p49
      %p51 = scmp.ne.s32.totalorder %s43, %s46
      %p52 = scmp.eq.s32.totalorder %s7, 0
      %p53 = por %p51, %p52
      %p54 = scmp.ne.s32.totalorder %s43, %s46
      %p55 = scmp.eq.s32.totalorder %s12, 1
      %p56 = por %p54, %p55
      %p57 = scmp.ne.s32.totalorder %s46, %s47
      %p58 = scmp.eq.s32.totalorder %s12, 0
      %p59 = por %p57, %p58
      %p60 = scmp.ne.s32.totalorder %s46, %s47
      %p61 = scmp.eq.s32.totalorder %s13, 1
      %p62 = por %p60, %p61
      %p64 = scmp.ne.s32.totalorder %s47, %s63
      %p65 = scmp.eq.s32.totalorder %s13, 0
      %p66 = por %p64, %p65
      %p67 = scmp.le.s32.totalorder 1, %s7
      %p68 = scmp.lt.s32.totalorder %s7, 3
      %p69 = pnand %p67, %p68
      %p70 = pneg %p69
      // Predicated region
      $region9: #{resnet_forward.23} parent=5 // pred_check
        _
      $region10: #{resnet_forward.23} parent=5 // pred_check_branch
        %72 = sbr.rel (%p69) target = $region12
      $region11: #{resnet_forward.23} parent=5 // pred_region
        %s73 = ssub.s32 %s7, 1
      $region12: #{resnet_forward.23} parent=5 // pred_fallthru
        _
      %p74 = scmp.lt.s32.totalorder %s7, 2
      // Predicated region
      $region13: #{resnet_forward.23} parent=5 // pred_check
        %p75 = pneg %p74
      $region14: #{resnet_forward.23} parent=5 // pred_check_branch
        %77 = sbr.rel (%p75) target = $region16
      $region15: #{resnet_forward.23} parent=5 // pred_region
        // Predicated region
        $region17: #{resnet_forward.23} parent=15 // pred_check
          %p78 = pneg %p27
        $region18: #{resnet_forward.23} parent=15 // pred_check_branch
          %80 = sbr.rel (%p78) target = $region20
        $region19: #{resnet_forward.23} parent=15 // pred_region
          %s81 = sand.u32 %s17, 1
          %s82 = sand.u32 %s17, 1
          %s83 = smul.addr %s82, 288
          %s84 = scalar_lea.vmem [#allocation2], %s83
          %s85 = smul.u32 8, %s7
          %s86 = smul.addr %s85, 4
          %s87 = scalar_lea.vmem %s0, %s86
          // Predicated region
          $region21: #{resnet_forward.23} parent=19 // pred_check
            _
          $region22: #{resnet_forward.23} parent=19 // pred_check_branch
            %89 = sbr.rel (0) target = $region24
          $region23: #{resnet_forward.23} parent=19 // pred_region
            // Predicated region
            $region25: #{resnet_forward.23} parent=23 // pred_check
              _
            $region26: #{resnet_forward.23} parent=23 // pred_check_branch
              %91 = sbr.rel target = $region28
            $region27: #{resnet_forward.23} parent=23 // pred_region
              // Predicated region
              $region40: #{resnet_forward.23} parent=27 // pred_check
                _
              $region41: #{resnet_forward.23} parent=27 // pred_check_branch
                %248 = sbr.rel (0) target = $region43
              $region42: #{resnet_forward.23} parent=27 // pred_region
                loop: start=0, step=1, limit=1
                $region44: #{resnet_forward.23} parent=42 // loop_pre_header
                  _
                $region45: #{resnet_forward.23} parent=42 // loop_header
                  %s250 = sphi 0, %s254
                  %p251 = scmp.ge.s32.totalorder %s250, 1
                  %s255 = sphi %s87, %s87
                  %s256 = sphi %s84, %s84
                $region46: #{resnet_forward.23} parent=42 // loop_header_branch
                  %253 = sbr.rel (%p251) target = $region50
                $region47: #{resnet_forward.23} parent=42 // loop_body
                  _
                $region48: #{resnet_forward.23} parent=42 // loop_footer
                  %s254 = sadd.s32 1, %s250
                $region49: #{resnet_forward.23} parent=42 // loop_footer_branch
                  %249 = sbr.rel target = $region45
                $region50: #{resnet_forward.23} parent=42 // loop_exit
                  _
                loop: start=0, step=1, limit=1
                $region51: #{resnet_forward.23} parent=42 // loop_pre_header
                  _
                $region52: #{resnet_forward.23} parent=42 // loop_header
                  %s259 = sphi 0, %s263
                  %p260 = scmp.ge.s32.totalorder %s259, 1
                  %s264 = sphi %s87, %s87
                  %s265 = sphi %s84, %s84
                $region53: #{resnet_forward.23} parent=42 // loop_header_branch
                  %262 = sbr.rel (%p260) target = $region57
                $region54: #{resnet_forward.23} parent=42 // loop_body
                  %v266 = vld [vmem:[%s264] sm:$0xf]
                  %267 = vst [vmem:[%s265] sm:$0xf] %v266
                  %v268 = vld [vmem:[%s264 + $0x4] sm:$0xf]
                  %269 = vst [vmem:[%s265 + $0x4] sm:$0xf] %v268
                  %v270 = vld [vmem:[%s264 + $0x8] sm:$0xf]
                  %271 = vst [vmem:[%s265 + $0x8] sm:$0xf] %v270
                  %v272 = vld [vmem:[%s264 + $0xc] sm:$0xf]
                  %273 = vst [vmem:[%s265 + $0xc] sm:$0xf] %v272
                  %v274 = vld [vmem:[%s264 + $0x10] sm:$0xf]
                  %275 = vst [vmem:[%s265 + $0x10] sm:$0xf] %v274
                  %v276 = vld [vmem:[%s264 + $0x14] sm:$0xf]
                  %277 = vst [vmem:[%s265 + $0x14] sm:$0xf] %v276
                  %v278 = vld [vmem:[%s264 + $0x18] sm:$0xf]
                  %279 = vst [vmem:[%s265 + $0x18] sm:$0xf] %v278
                  %v280 = vld [vmem:[%s264 + $0x1c] sm:$0xf]
                  %281 = vst [vmem:[%s265 + $0x1c] sm:$0xf] %v280
                  %v282 = vld [vmem:[%s264 + $0x40] sm:$0xf]
                  %283 = vst [vmem:[%s265 + $0x20] sm:$0xf] %v282
                  %v284 = vld [vmem:[%s264 + $0x44] sm:$0xf]
                  %285 = vst [vmem:[%s265 + $0x24] sm:$0xf] %v284
                  %v286 = vld [vmem:[%s264 + $0x48] sm:$0xf]
                  %287 = vst [vmem:[%s265 + $0x28] sm:$0xf] %v286
                  %v288 = vld [vmem:[%s264 + $0x4c] sm:$0xf]
                  %289 = vst [vmem:[%s265 + $0x2c] sm:$0xf] %v288
                  %v290 = vld [vmem:[%s264 + $0x50] sm:$0xf]
                  %291 = vst [vmem:[%s265 + $0x30] sm:$0xf] %v290
                  %v292 = vld [vmem:[%s264 + $0x54] sm:$0xf]
                  %293 = vst [vmem:[%s265 + $0x34] sm:$0xf] %v292
                  %v294 = vld [vmem:[%s264 + $0x58] sm:$0xf]
                  %295 = vst [vmem:[%s265 + $0x38] sm:$0xf] %v294
                  %v296 = vld [vmem:[%s264 + $0x5c] sm:$0xf]
                  %297 = vst [vmem:[%s265 + $0x3c] sm:$0xf] %v296
                  %v298 = vld [vmem:[%s264 + $0x80] sm:$0xf]
                  %299 = vst [vmem:[%s265 + $0x40] sm:$0xf] %v298
                  %v300 = vld [vmem:[%s264 + $0x84] sm:$0xf]
                  %301 = vst [vmem:[%s265 + $0x44] sm:$0xf] %v300
                  %v302 = vld [vmem:[%s264 + $0x88] sm:$0xf]
                  %303 = vst [vmem:[%s265 + $0x48] sm:$0xf] %v302
                  %v304 = vld [vmem:[%s264 + $0x8c] sm:$0xf]
                  %305 = vst [vmem:[%s265 + $0x4c] sm:$0xf] %v304
                  %v306 = vld [vmem:[%s264 + $0x90] sm:$0xf]
                  %307 = vst [vmem:[%s265 + $0x50] sm:$0xf] %v306
                  %v308 = vld [vmem:[%s264 + $0x94] sm:$0xf]
                  %309 = vst [vmem:[%s265 + $0x54] sm:$0xf] %v308
                  %v310 = vld [vmem:[%s264 + $0x98] sm:$0xf]
                  %311 = vst [vmem:[%s265 + $0x58] sm:$0xf] %v310
                  %v312 = vld [vmem:[%s264 + $0x9c] sm:$0xf]
                  %313 = vst [vmem:[%s265 + $0x5c] sm:$0xf] %v312
                  %v314 = vld [vmem:[%s264 + $0xc0] sm:$0xf]
                  %315 = vst [vmem:[%s265 + $0x60] sm:$0xf] %v314
                  %v316 = vld [vmem:[%s264 + $0xc4] sm:$0xf]
                  %317 = vst [vmem:[%s265 + $0x64] sm:$0xf] %v316
                  %v318 = vld [vmem:[%s264 + $0xc8] sm:$0xf]
                  %319 = vst [vmem:[%s265 + $0x68] sm:$0xf] %v318
                  %v320 = vld [vmem:[%s264 + $0xcc] sm:$0xf]
                  %321 = vst [vmem:[%s265 + $0x6c] sm:$0xf] %v320
                  %v322 = vld [vmem:[%s264 + $0xd0] sm:$0xf]
                  %323 = vst [vmem:[%s265 + $0x70] sm:$0xf] %v322
                  %v324 = vld [vmem:[%s264 + $0xd4] sm:$0xf]
                  %325 = vst [vmem:[%s265 + $0x74] sm:$0xf] %v324
                  %v326 = vld [vmem:[%s264 + $0xd8] sm:$0xf]
                  %327 = vst [vmem:[%s265 + $0x78] sm:$0xf] %v326
                  %v328 = vld [vmem:[%s264 + $0xdc] sm:$0xf]
                  %329 = vst [vmem:[%s265 + $0x7c] sm:$0xf] %v328
                  %v330 = vld [vmem:[%s264 + $0x100] sm:$0xf]
                  %331 = vst [vmem:[%s265 + $0x80] sm:$0xf] %v330
                  %v332 = vld [vmem:[%s264 + $0x104] sm:$0xf]
                  %333 = vst [vmem:[%s265 + $0x84] sm:$0xf] %v332
                  %v334 = vld [vmem:[%s264 + $0x108] sm:$0xf]
                  %335 = vst [vmem:[%s265 + $0x88] sm:$0xf] %v334
                  %v336 = vld [vmem:[%s264 + $0x10c] sm:$0xf]
                  %337 = vst [vmem:[%s265 + $0x8c] sm:$0xf] %v336
                  %v338 = vld [vmem:[%s264 + $0x110] sm:$0xf]
                  %339 = vst [vmem:[%s265 + $0x90] sm:$0xf] %v338
                  %v340 = vld [vmem:[%s264 + $0x114] sm:$0xf]
                  %341 = vst [vmem:[%s265 + $0x94] sm:$0xf] %v340
                  %v342 = vld [vmem:[%s264 + $0x118] sm:$0xf]
                  %343 = vst [vmem:[%s265 + $0x98] sm:$0xf] %v342
                  %v344 = vld [vmem:[%s264 + $0x11c] sm:$0xf]
                  %345 = vst [vmem:[%s265 + $0x9c] sm:$0xf] %v344
                  %v346 = vld [vmem:[%s264 + $0x140] sm:$0xf]
                  %347 = vst [vmem:[%s265 + $0xa0] sm:$0xf] %v346
                  %v348 = vld [vmem:[%s264 + $0x144] sm:$0xf]
                  %349 = vst [vmem:[%s265 + $0xa4] sm:$0xf] %v348
                  %v350 = vld [vmem:[%s264 + $0x148] sm:$0xf]
                  %351 = vst [vmem:[%s265 + $0xa8] sm:$0xf] %v350
                  %v352 = vld [vmem:[%s264 + $0x14c] sm:$0xf]
                  %353 = vst [vmem:[%s265 + $0xac] sm:$0xf] %v352
                  %v354 = vld [vmem:[%s264 + $0x150] sm:$0xf]
                  %355 = vst [vmem:[%s265 + $0xb0] sm:$0xf] %v354
                  %v356 = vld [vmem:[%s264 + $0x154] sm:$0xf]
                  %357 = vst [vmem:[%s265 + $0xb4] sm:$0xf] %v356
                  %v358 = vld [vmem:[%s264 + $0x158] sm:$0xf]
                  %359 = vst [vmem:[%s265 + $0xb8] sm:$0xf] %v358
                  %v360 = vld [vmem:[%s264 + $0x15c] sm:$0xf]
                  %361 = vst [vmem:[%s265 + $0xbc] sm:$0xf] %v360
                  %v362 = vld [vmem:[%s264 + $0x180] sm:$0xf]
                  %363 = vst [vmem:[%s265 + $0xc0] sm:$0xf] %v362
                  %v364 = vld [vmem:[%s264 + $0x184] sm:$0xf]
                  %365 = vst [vmem:[%s265 + $0xc4] sm:$0xf] %v364
                  %v366 = vld [vmem:[%s264 + $0x188] sm:$0xf]
                  %367 = vst [vmem:[%s265 + $0xc8] sm:$0xf] %v366
                  %v368 = vld [vmem:[%s264 + $0x18c] sm:$0xf]
                  %369 = vst [vmem:[%s265 + $0xcc] sm:$0xf] %v368
                  %v370 = vld [vmem:[%s264 + $0x190] sm:$0xf]
                  %371 = vst [vmem:[%s265 + $0xd0] sm:$0xf] %v370
                  %v372 = vld [vmem:[%s264 + $0x194] sm:$0xf]
                  %373 = vst [vmem:[%s265 + $0xd4] sm:$0xf] %v372
                  %v374 = vld [vmem:[%s264 + $0x198] sm:$0xf]
                  %375 = vst [vmem:[%s265 + $0xd8] sm:$0xf] %v374
                  %v376 = vld [vmem:[%s264 + $0x19c] sm:$0xf]
                  %377 = vst [vmem:[%s265 + $0xdc] sm:$0xf] %v376
                  %v378 = vld [vmem:[%s264 + $0x1c0] sm:$0xf]
                  %379 = vst [vmem:[%s265 + $0xe0] sm:$0xf] %v378
                  %v380 = vld [vmem:[%s264 + $0x1c4] sm:$0xf]
                  %381 = vst [vmem:[%s265 + $0xe4] sm:$0xf] %v380
                  %v382 = vld [vmem:[%s264 + $0x1c8] sm:$0xf]
                  %383 = vst [vmem:[%s265 + $0xe8] sm:$0xf] %v382
                  %v384 = vld [vmem:[%s264 + $0x1cc] sm:$0xf]
                  %385 = vst [vmem:[%s265 + $0xec] sm:$0xf] %v384
                  %v386 = vld [vmem:[%s264 + $0x1d0] sm:$0xf]
                  %387 = vst [vmem:[%s265 + $0xf0] sm:$0xf] %v386
                  %v388 = vld [vmem:[%s264 + $0x1d4] sm:$0xf]
                  %389 = vst [vmem:[%s265 + $0xf4] sm:$0xf] %v388
                  %v390 = vld [vmem:[%s264 + $0x1d8] sm:$0xf]
                  %391 = vst [vmem:[%s265 + $0xf8] sm:$0xf] %v390
                  %v392 = vld [vmem:[%s264 + $0x1dc] sm:$0xf]
                  %393 = vst [vmem:[%s265 + $0xfc] sm:$0xf] %v392
                  %v394 = vld [vmem:[%s264 + $0x200] sm:$0xf]
                  %395 = vst [vmem:[%s265 + $0x100] sm:$0xf] %v394
                  %v396 = vld [vmem:[%s264 + $0x204] sm:$0xf]
                  %397 = vst [vmem:[%s265 + $0x104] sm:$0xf] %v396
                  %v398 = vld [vmem:[%s264 + $0x208] sm:$0xf]
                  %399 = vst [vmem:[%s265 + $0x108] sm:$0xf] %v398
                  %v400 = vld [vmem:[%s264 + $0x20c] sm:$0xf]
                  %401 = vst [vmem:[%s265 + $0x10c] sm:$0xf] %v400
                  %v402 = vld [vmem:[%s264 + $0x210] sm:$0xf]
                  %403 = vst [vmem:[%s265 + $0x110] sm:$0xf] %v402
                  %v404 = vld [vmem:[%s264 + $0x214] sm:$0xf]
                  %405 = vst [vmem:[%s265 + $0x114] sm:$0xf] %v404
                  %v406 = vld [vmem:[%s264 + $0x218] sm:$0xf]
                  %407 = vst [vmem:[%s265 + $0x118] sm:$0xf] %v406
                  %v408 = vld [vmem:[%s264 + $0x21c] sm:$0xf]
                  %409 = vst [vmem:[%s265 + $0x11c] sm:$0xf] %v408
                $region55: #{resnet_forward.23} parent=42 // loop_footer
                  %s263 = sadd.s32 1, %s259
                $region56: #{resnet_forward.23} parent=42 // loop_footer_branch
                  %258 = sbr.rel target = $region52
                $region57: #{resnet_forward.23} parent=42 // loop_exit
                  _
              $region43: #{resnet_forward.23} parent=27 // pred_fallthru
                _
            $region28: #{resnet_forward.23} parent=23 // pred_fallthru
              _
            // Predicated region
            $region29: #{resnet_forward.23} parent=23 // pred_check
              _
            $region30: #{resnet_forward.23} parent=23 // pred_check_branch
              %93 = sbr.rel (0) target = $region32
            $region31: #{resnet_forward.23} parent=23 // pred_region
              loop: start=0, step=1, limit=1
              $region33: #{resnet_forward.23} parent=31 // loop_pre_header
                _
              $region34: #{resnet_forward.23} parent=31 // loop_header
                %s96 = sphi 0, %s100
                %p97 = scmp.ge.s32.totalorder %s96, 1
                %s101 = sphi %s87, %s87
                %s102 = sphi %s84, %s84
              $region35: #{resnet_forward.23} parent=31 // loop_header_branch
                %99 = sbr.rel (%p97) target = $region39
              $region36: #{resnet_forward.23} parent=31 // loop_body
                %v103 = vld [vmem:[%s101] sm:$0xf]
                %104 = vst [vmem:[%s102] sm:$0xf] %v103
                %v105 = vld [vmem:[%s101 + $0x4] sm:$0xf]
                %106 = vst [vmem:[%s102 + $0x4] sm:$0xf] %v105
                %v107 = vld [vmem:[%s101 + $0x8] sm:$0xf]
                %108 = vst [vmem:[%s102 + $0x8] sm:$0xf] %v107
                %v109 = vld [vmem:[%s101 + $0xc] sm:$0xf]
                %110 = vst [vmem:[%s102 + $0xc] sm:$0xf] %v109
                %v111 = vld [vmem:[%s101 + $0x10] sm:$0xf]
                %112 = vst [vmem:[%s102 + $0x10] sm:$0xf] %v111
                %v113 = vld [vmem:[%s101 + $0x14] sm:$0xf]
                %114 = vst [vmem:[%s102 + $0x14] sm:$0xf] %v113
                %v115 = vld [vmem:[%s101 + $0x18] sm:$0xf]
                %116 = vst [vmem:[%s102 + $0x18] sm:$0xf] %v115
                %v117 = vld [vmem:[%s101 + $0x1c] sm:$0xf]
                %118 = vst [vmem:[%s102 + $0x1c] sm:$0xf] %v117
                %v119 = vld [vmem:[%s101 + $0x40] sm:$0xf]
                %120 = vst [vmem:[%s102 + $0x20] sm:$0xf] %v119
                %v121 = vld [vmem:[%s101 + $0x44] sm:$0xf]
                %122 = vst [vmem:[%s102 + $0x24] sm:$0xf] %v121
                %v123 = vld [vmem:[%s101 + $0x48] sm:$0xf]
                %124 = vst [vmem:[%s102 + $0x28] sm:$0xf] %v123
                %v125 = vld [vmem:[%s101 + $0x4c] sm:$0xf]
                %126 = vst [vmem:[%s102 + $0x2c] sm:$0xf] %v125
                %v127 = vld [vmem:[%s101 + $0x50] sm:$0xf]
                %128 = vst [vmem:[%s102 + $0x30] sm:$0xf] %v127
                %v129 = vld [vmem:[%s101 + $0x54] sm:$0xf]
                %130 = vst [vmem:[%s102 + $0x34] sm:$0xf] %v129
                %v131 = vld [vmem:[%s101 + $0x58] sm:$0xf]
                %132 = vst [vmem:[%s102 + $0x38] sm:$0xf] %v131
                %v133 = vld [vmem:[%s101 + $0x5c] sm:$0xf]
                %134 = vst [vmem:[%s102 + $0x3c] sm:$0xf] %v133
                %v135 = vld [vmem:[%s101 + $0x80] sm:$0xf]
                %136 = vst [vmem:[%s102 + $0x40] sm:$0xf] %v135
                %v137 = vld [vmem:[%s101 + $0x84] sm:$0xf]
                %138 = vst [vmem:[%s102 + $0x44] sm:$0xf] %v137
                %v139 = vld [vmem:[%s101 + $0x88] sm:$0xf]
                %140 = vst [vmem:[%s102 + $0x48] sm:$0xf] %v139
                %v141 = vld [vmem:[%s101 + $0x8c] sm:$0xf]
                %142 = vst [vmem:[%s102 + $0x4c] sm:$0xf] %v141
                %v143 = vld [vmem:[%s101 + $0x90] sm:$0xf]
                %144 = vst [vmem:[%s102 + $0x50] sm:$0xf] %v143
                %v145 = vld [vmem:[%s101 + $0x94] sm:$0xf]
                %146 = vst [vmem:[%s102 + $0x54] sm:$0xf] %v145
                %v147 = vld [vmem:[%s101 + $0x98] sm:$0xf]
                %148 = vst [vmem:[%s102 + $0x58] sm:$0xf] %v147
                %v149 = vld [vmem:[%s101 + $0x9c] sm:$0xf]
                %150 = vst [vmem:[%s102 + $0x5c] sm:$0xf] %v149
                %v151 = vld [vmem:[%s101 + $0xc0] sm:$0xf]
                %152 = vst [vmem:[%s102 + $0x60] sm:$0xf] %v151
                %v153 = vld [vmem:[%s101 + $0xc4] sm:$0xf]
                %154 = vst [vmem:[%s102 + $0x64] sm:$0xf] %v153
                %v155 = vld [vmem:[%s101 + $0xc8] sm:$0xf]
                %156 = vst [vmem:[%s102 + $0x68] sm:$0xf] %v155
                %v157 = vld [vmem:[%s101 + $0xcc] sm:$0xf]
                %158 = vst [vmem:[%s102 + $0x6c] sm:$0xf] %v157
                %v159 = vld [vmem:[%s101 + $0xd0] sm:$0xf]
                %160 = vst [vmem:[%s102 + $0x70] sm:$0xf] %v159
                %v161 = vld [vmem:[%s101 + $0xd4] sm:$0xf]
                %162 = vst [vmem:[%s102 + $0x74] sm:$0xf] %v161
                %v163 = vld [vmem:[%s101 + $0xd8] sm:$0xf]
                %164 = vst [vmem:[%s102 + $0x78] sm:$0xf] %v163
                %v165 = vld [vmem:[%s101 + $0xdc] sm:$0xf]
                %166 = vst [vmem:[%s102 + $0x7c] sm:$0xf] %v165
                %v167 = vld [vmem:[%s101 + $0x100] sm:$0xf]
                %168 = vst [vmem:[%s102 + $0x80] sm:$0xf] %v167
                %v169 = vld [vmem:[%s101 + $0x104] sm:$0xf]
                %170 = vst [vmem:[%s102 + $0x84] sm:$0xf] %v169
                %v171 = vld [vmem:[%s101 + $0x108] sm:$0xf]
                %172 = vst [vmem:[%s102 + $0x88] sm:$0xf] %v171
                %v173 = vld [vmem:[%s101 + $0x10c] sm:$0xf]
                %174 = vst [vmem:[%s102 + $0x8c] sm:$0xf] %v173
                %v175 = vld [vmem:[%s101 + $0x110] sm:$0xf]
                %176 = vst [vmem:[%s102 + $0x90] sm:$0xf] %v175
                %v177 = vld [vmem:[%s101 + $0x114] sm:$0xf]
                %178 = vst [vmem:[%s102 + $0x94] sm:$0xf] %v177
                %v179 = vld [vmem:[%s101 + $0x118] sm:$0xf]
                %180 = vst [vmem:[%s102 + $0x98] sm:$0xf] %v179
                %v181 = vld [vmem:[%s101 + $0x11c] sm:$0xf]
                %182 = vst [vmem:[%s102 + $0x9c] sm:$0xf] %v181
                %v183 = vld [vmem:[%s101 + $0x140] sm:$0xf]
                %184 = vst [vmem:[%s102 + $0xa0] sm:$0xf] %v183
                %v185 = vld [vmem:[%s101 + $0x144] sm:$0xf]
                %186 = vst [vmem:[%s102 + $0xa4] sm:$0xf] %v185
                %v187 = vld [vmem:[%s101 + $0x148] sm:$0xf]
                %188 = vst [vmem:[%s102 + $0xa8] sm:$0xf] %v187
                %v189 = vld [vmem:[%s101 + $0x14c] sm:$0xf]
                %190 = vst [vmem:[%s102 + $0xac] sm:$0xf] %v189
                %v191 = vld [vmem:[%s101 + $0x150] sm:$0xf]
                %192 = vst [vmem:[%s102 + $0xb0] sm:$0xf] %v191
                %v193 = vld [vmem:[%s101 + $0x154] sm:$0xf]
                %194 = vst [vmem:[%s102 + $0xb4] sm:$0xf] %v193
                %v195 = vld [vmem:[%s101 + $0x158] sm:$0xf]
                %196 = vst [vmem:[%s102 + $0xb8] sm:$0xf] %v195
                %v197 = vld [vmem:[%s101 + $0x15c] sm:$0xf]
                %198 = vst [vmem:[%s102 + $0xbc] sm:$0xf] %v197
                %v199 = vld [vmem:[%s101 + $0x180] sm:$0xf]
                %200 = vst [vmem:[%s102 + $0xc0] sm:$0xf] %v199
                %v201 = vld [vmem:[%s101 + $0x184] sm:$0xf]
                %202 = vst [vmem:[%s102 + $0xc4] sm:$0xf] %v201
                %v203 = vld [vmem:[%s101 + $0x188] sm:$0xf]
                %204 = vst [vmem:[%s102 + $0xc8] sm:$0xf] %v203
                %v205 = vld [vmem:[%s101 + $0x18c] sm:$0xf]
                %206 = vst [vmem:[%s102 + $0xcc] sm:$0xf] %v205
                %v207 = vld [vmem:[%s101 + $0x190] sm:$0xf]
                %208 = vst [vmem:[%s102 + $0xd0] sm:$0xf] %v207
                %v209 = vld [vmem:[%s101 + $0x194] sm:$0xf]
                %210 = vst [vmem:[%s102 + $0xd4] sm:$0xf] %v209
                %v211 = vld [vmem:[%s101 + $0x198] sm:$0xf]
                %212 = vst [vmem:[%s102 + $0xd8] sm:$0xf] %v211
                %v213 = vld [vmem:[%s101 + $0x19c] sm:$0xf]
                %214 = vst [vmem:[%s102 + $0xdc] sm:$0xf] %v213
                %v215 = vld [vmem:[%s101 + $0x1c0] sm:$0xf]
                %216 = vst [vmem:[%s102 + $0xe0] sm:$0xf] %v215
                %v217 = vld [vmem:[%s101 + $0x1c4] sm:$0xf]
                %218 = vst [vmem:[%s102 + $0xe4] sm:$0xf] %v217
                %v219 = vld [vmem:[%s101 + $0x1c8] sm:$0xf]
                %220 = vst [vmem:[%s102 + $0xe8] sm:$0xf] %v219
                %v221 = vld [vmem:[%s101 + $0x1cc] sm:$0xf]
                %222 = vst [vmem:[%s102 + $0xec] sm:$0xf] %v221
                %v223 = vld [vmem:[%s101 + $0x1d0] sm:$0xf]
                %224 = vst [vmem:[%s102 + $0xf0] sm:$0xf] %v223
                %v225 = vld [vmem:[%s101 + $0x1d4] sm:$0xf]
                %226 = vst [vmem:[%s102 + $0xf4] sm:$0xf] %v225
                %v227 = vld [vmem:[%s101 + $0x1d8] sm:$0xf]
                %228 = vst [vmem:[%s102 + $0xf8] sm:$0xf] %v227
                %v229 = vld [vmem:[%s101 + $0x1dc] sm:$0xf]
                %230 = vst [vmem:[%s102 + $0xfc] sm:$0xf] %v229
                %v231 = vld [vmem:[%s101 + $0x200] sm:$0xf]
                %232 = vst [vmem:[%s102 + $0x100] sm:$0xf] %v231
                %v233 = vld [vmem:[%s101 + $0x204] sm:$0xf]
                %234 = vst [vmem:[%s102 + $0x104] sm:$0xf] %v233
                %v235 = vld [vmem:[%s101 + $0x208] sm:$0xf]
                %236 = vst [vmem:[%s102 + $0x108] sm:$0xf] %v235
                %v237 = vld [vmem:[%s101 + $0x20c] sm:$0xf]
                %238 = vst [vmem:[%s102 + $0x10c] sm:$0xf] %v237
                %v239 = vld [vmem:[%s101 + $0x210] sm:$0xf]
                %240 = vst [vmem:[%s102 + $0x110] sm:$0xf] %v239
                %v241 = vld [vmem:[%s101 + $0x214] sm:$0xf]
                %242 = vst [vmem:[%s102 + $0x114] sm:$0xf] %v241
                %v243 = vld [vmem:[%s101 + $0x218] sm:$0xf]
                %244 = vst [vmem:[%s102 + $0x118] sm:$0xf] %v243
                %v245 = vld [vmem:[%s101 + $0x21c] sm:$0xf]
                %246 = vst [vmem:[%s102 + $0x11c] sm:$0xf] %v245
              $region37: #{resnet_forward.23} parent=31 // loop_footer
                %s100 = sadd.s32 1, %s96
              $region38: #{resnet_forward.23} parent=31 // loop_footer_branch
                %95 = sbr.rel target = $region34
              $region39: #{resnet_forward.23} parent=31 // loop_exit
                _
            $region32: #{resnet_forward.23} parent=23 // pred_fallthru
              _
          $region24: #{resnet_forward.23} parent=19 // pred_fallthru
            _
          %410 = vnop
        $region20: #{resnet_forward.23} parent=15 // pred_fallthru
          _
      $region16: #{resnet_forward.23} parent=5 // pred_fallthru
        _
      %p411 = scmp.le.s32.totalorder 1, %s7
      %p412 = scmp.lt.s32.totalorder %s7, 3
      %p413 = pnand %p411, %p412
      %p414 = pneg %p413
      // Predicated region
      $region58: #{resnet_forward.23} parent=5 // pred_check
        _
      $region59: #{resnet_forward.23} parent=5 // pred_check_branch
        %416 = sbr.rel (%p413) target = $region61
      $region60: #{resnet_forward.23} parent=5 // pred_region
        %s417 = ssub.s32 %s7, 1
        %s418 = sand.u32 %s20, 1
        %s419 = sand.u32 %s20, 1
        %s420 = smul.addr %s419, 288
        %s421 = scalar_lea.vmem [#allocation2], %s420
        // Predicated region
        $region62: #{resnet_forward.23} parent=60 // pred_check
          %p422 = pneg %p33
        $region63: #{resnet_forward.23} parent=60 // pred_check_branch
          %424 = sbr.rel (%p422) target = $region65
        $region64: #{resnet_forward.23} parent=60 // pred_region
          _
        $region65: #{resnet_forward.23} parent=60 // pred_fallthru
          _
        %s425 = sand.u32 %s20, 1
        %s426 = sand.u32 %s20, 1
        %s427 = smul.addr %s426, 288
        %s428 = scalar_lea.vmem [#allocation2], %s427
        %p429 = pneg %p33
        %p430 = pneg %p30
        %p431 = pneg %p59
        %p432 = pneg %p56
        %s433 = smul.u32 8, %s12
        %p434 = scmp.lt.s32.totalorder %s433, 15
        %s435 = scalar_select %p434, %s433, 15
        %s436 = smul.addr %s435, 4
        %s437 = scalar_lea.vmem %s1, %s436
        %s438 = smul.u32 8, %s12
        %s439 = smul.u32 8, %s12
        %p440 = scmp.lt.s32.totalorder %s439, 15
        %s441 = scalar_select %p440, %s439, 15
        %s442 = smul.addr %s441, 4
        %s443 = scalar_lea.vmem %s1, %s442
        %s444 = smul.u32 8, %s12
        %v446 = vld [vmem:[%s421] sm:$0xf]
        %v447 = vld [vmem:[%s421 + $0x4] sm:$0xf]
        %v448 = vld [vmem:[%s421 + $0x8] sm:$0xf]
        %v449 = vld [vmem:[%s421 + $0xc] sm:$0xf]
        %v450 = vld [vmem:[%s421 + $0x10] sm:$0xf]
        %v451 = vld [vmem:[%s421 + $0x14] sm:$0xf]
        %v452 = vld [vmem:[%s421 + $0x18] sm:$0xf]
        %v453 = vld [vmem:[%s421 + $0x1c] sm:$0xf]
        %v454 = vld [vmem:[%s421 + $0x20] sm:$0xf]
        %v455 = vld [vmem:[%s421 + $0x24] sm:$0xf]
        %v456 = vld [vmem:[%s421 + $0x28] sm:$0xf]
        %v457 = vld [vmem:[%s421 + $0x2c] sm:$0xf]
        %v458 = vld [vmem:[%s421 + $0x30] sm:$0xf]
        %v459 = vld [vmem:[%s421 + $0x34] sm:$0xf]
        %v460 = vld [vmem:[%s421 + $0x38] sm:$0xf]
        %v461 = vld [vmem:[%s421 + $0x3c] sm:$0xf]
        %v462 = vld [vmem:[%s421 + $0x40] sm:$0xf]
        %v463 = vld [vmem:[%s421 + $0x44] sm:$0xf]
        %v464 = vld [vmem:[%s421 + $0x48] sm:$0xf]
        %v465 = vld [vmem:[%s421 + $0x4c] sm:$0xf]
        %v466 = vld [vmem:[%s421 + $0x50] sm:$0xf]
        %v467 = vld [vmem:[%s421 + $0x54] sm:$0xf]
        %v468 = vld [vmem:[%s421 + $0x58] sm:$0xf]
        %v469 = vld [vmem:[%s421 + $0x5c] sm:$0xf]
        %v470 = vld [vmem:[%s421 + $0x60] sm:$0xf]
        %v471 = vld [vmem:[%s421 + $0x64] sm:$0xf]
        %v472 = vld [vmem:[%s421 + $0x68] sm:$0xf]
        %v473 = vld [vmem:[%s421 + $0x6c] sm:$0xf]
        %v474 = vld [vmem:[%s421 + $0x70] sm:$0xf]
        %v475 = vld [vmem:[%s421 + $0x74] sm:$0xf]
        %v476 = vld [vmem:[%s421 + $0x78] sm:$0xf]
        %v477 = vld [vmem:[%s421 + $0x7c] sm:$0xf]
        %v478 = vld [vmem:[%s421 + $0x80] sm:$0xf]
        %v479 = vld [vmem:[%s421 + $0x84] sm:$0xf]
        %v480 = vld [vmem:[%s421 + $0x88] sm:$0xf]
        %v481 = vld [vmem:[%s421 + $0x8c] sm:$0xf]
        %v482 = vld [vmem:[%s421 + $0x90] sm:$0xf]
        %v483 = vld [vmem:[%s421 + $0x94] sm:$0xf]
        %v484 = vld [vmem:[%s421 + $0x98] sm:$0xf]
        %v485 = vld [vmem:[%s421 + $0x9c] sm:$0xf]
        %v486 = vld [vmem:[%s421 + $0xa0] sm:$0xf]
        %v487 = vld [vmem:[%s421 + $0xa4] sm:$0xf]
        %v488 = vld [vmem:[%s421 + $0xa8] sm:$0xf]
        %v489 = vld [vmem:[%s421 + $0xac] sm:$0xf]
        %v490 = vld [vmem:[%s421 + $0xb0] sm:$0xf]
        %v491 = vld [vmem:[%s421 + $0xb4] sm:$0xf]
        %v492 = vld [vmem:[%s421 + $0xb8] sm:$0xf]
        %v493 = vld [vmem:[%s421 + $0xbc] sm:$0xf]
        %v494 = vld [vmem:[%s421 + $0xc0] sm:$0xf]
        %v495 = vld [vmem:[%s421 + $0xc4] sm:$0xf]
        %v496 = vld [vmem:[%s421 + $0xc8] sm:$0xf]
        %v497 = vld [vmem:[%s421 + $0xcc] sm:$0xf]
        %v498 = vld [vmem:[%s421 + $0xd0] sm:$0xf]
        %v499 = vld [vmem:[%s421 + $0xd4] sm:$0xf]
        %v500 = vld [vmem:[%s421 + $0xd8] sm:$0xf]
        %v501 = vld [vmem:[%s421 + $0xdc] sm:$0xf]
        %v502 = vld [vmem:[%s421 + $0xe0] sm:$0xf]
        %v503 = vld [vmem:[%s421 + $0xe4] sm:$0xf]
        %v504 = vld [vmem:[%s421 + $0xe8] sm:$0xf]
        %v505 = vld [vmem:[%s421 + $0xec] sm:$0xf]
        %v506 = vld [vmem:[%s421 + $0xf0] sm:$0xf]
        %v507 = vld [vmem:[%s421 + $0xf4] sm:$0xf]
        %v508 = vld [vmem:[%s421 + $0xf8] sm:$0xf]
        %v509 = vld [vmem:[%s421 + $0xfc] sm:$0xf]
        %v510 = vld [vmem:[%s421 + $0x100] sm:$0xf]
        %v511 = vld [vmem:[%s421 + $0x104] sm:$0xf]
        %v512 = vld [vmem:[%s421 + $0x108] sm:$0xf]
        %v513 = vld [vmem:[%s421 + $0x10c] sm:$0xf]
        %v514 = vld [vmem:[%s421 + $0x110] sm:$0xf]
        %v515 = vld [vmem:[%s421 + $0x114] sm:$0xf]
        %v516 = vld [vmem:[%s421 + $0x118] sm:$0xf]
        %v517 = vld [vmem:[%s421 + $0x11c] sm:$0xf]
        %vm518 = vcmask 1043456
        %v521 = vsel %vm518, %v446, 4286644096
        %v524 = vsel %vm518, %v454, 4286644096
        %v526 = vmax.bf16 %v521, %v524
        %v528 = vsel %vm518, %v462, 4286644096
        %v530 = vmax.bf16 %v526, %v528
        %v532 = vsel %vm518, %v470, 4286644096
        %v534 = vmax.bf16 %v530, %v532
        %v536 = vsel %vm518, %v478, 4286644096
        %v538 = vmax.bf16 %v534, %v536
        %v540 = vsel %vm518, %v486, 4286644096
        %v542 = vmax.bf16 %v538, %v540
        %v544 = vsel %vm518, %v494, 4286644096
        %v546 = vmax.bf16 %v542, %v544
        %v548 = vsel %vm518, %v502, 4286644096
        %v550 = vmax.bf16 %v546, %v548
        %v552 = vsel %vm518, %v510, 4286644096
        %v554 = vmax.bf16 %v550, %v552
        %v556 = vsel %vm518, %v447, 4286644096
        %v559 = vsel %vm518, %v455, 4286644096
        %v561 = vmax.bf16 %v556, %v559
        %v563 = vsel %vm518, %v463, 4286644096
        %v565 = vmax.bf16 %v561, %v563
        %v567 = vsel %vm518, %v471, 4286644096
        %v569 = vmax.bf16 %v565, %v567
        %v571 = vsel %vm518, %v479, 4286644096
        %v573 = vmax.bf16 %v569, %v571
        %v575 = vsel %vm518, %v487, 4286644096
        %v577 = vmax.bf16 %v573, %v575
        %v579 = vsel %vm518, %v495, 4286644096
        %v581 = vmax.bf16 %v577, %v579
        %v583 = vsel %vm518, %v503, 4286644096
        %v585 = vmax.bf16 %v581, %v583
        %v587 = vsel %vm518, %v511, 4286644096
        %v589 = vmax.bf16 %v585, %v587
        %v591 = vsel %vm518, %v448, 4286644096
        %v594 = vsel %vm518, %v456, 4286644096
        %v596 = vmax.bf16 %v591, %v594
        %v598 = vsel %vm518, %v464, 4286644096
        %v600 = vmax.bf16 %v596, %v598
        %v602 = vsel %vm518, %v472, 4286644096
        %v604 = vmax.bf16 %v600, %v602
        %v606 = vsel %vm518, %v480, 4286644096
        %v608 = vmax.bf16 %v604, %v606
        %v610 = vsel %vm518, %v488, 4286644096
        %v612 = vmax.bf16 %v608, %v610
        %v614 = vsel %vm518, %v496, 4286644096
        %v616 = vmax.bf16 %v612, %v614
        %v618 = vsel %vm518, %v504, 4286644096
        %v620 = vmax.bf16 %v616, %v618
        %v622 = vsel %vm518, %v512, 4286644096
        %v624 = vmax.bf16 %v620, %v622
        %v626 = vsel %vm518, %v449, 4286644096
        %v629 = vsel %vm518, %v457, 4286644096
        %v631 = vmax.bf16 %v626, %v629
        %v633 = vsel %vm518, %v465, 4286644096
        %v635 = vmax.bf16 %v631, %v633
        %v637 = vsel %vm518, %v473, 4286644096
        %v639 = vmax.bf16 %v635, %v637
        %v641 = vsel %vm518, %v481, 4286644096
        %v643 = vmax.bf16 %v639, %v641
        %v645 = vsel %vm518, %v489, 4286644096
        %v647 = vmax.bf16 %v643, %v645
        %v649 = vsel %vm518, %v497, 4286644096
        %v651 = vmax.bf16 %v647, %v649
        %v653 = vsel %vm518, %v505, 4286644096
        %v655 = vmax.bf16 %v651, %v653
        %v657 = vsel %vm518, %v513, 4286644096
        %v659 = vmax.bf16 %v655, %v657
        %v661 = vsel %vm518, %v450, 4286644096
        %v664 = vsel %vm518, %v458, 4286644096
        %v666 = vmax.bf16 %v661, %v664
        %v668 = vsel %vm518, %v466, 4286644096
        %v670 = vmax.bf16 %v666, %v668
        %v672 = vsel %vm518, %v474, 4286644096
        %v674 = vmax.bf16 %v670, %v672
        %v676 = vsel %vm518, %v482, 4286644096
        %v678 = vmax.bf16 %v674, %v676
        %v680 = vsel %vm518, %v490, 4286644096
        %v682 = vmax.bf16 %v678, %v680
        %v684 = vsel %vm518, %v498, 4286644096
        %v686 = vmax.bf16 %v682, %v684
        %v688 = vsel %vm518, %v506, 4286644096
        %v690 = vmax.bf16 %v686, %v688
        %v692 = vsel %vm518, %v514, 4286644096
        %v694 = vmax.bf16 %v690, %v692
        %v696 = vsel %vm518, %v451, 4286644096
        %v699 = vsel %vm518, %v459, 4286644096
        %v701 = vmax.bf16 %v696, %v699
        %v703 = vsel %vm518, %v467, 4286644096
        %v705 = vmax.bf16 %v701, %v703
        %v707 = vsel %vm518, %v475, 4286644096
        %v709 = vmax.bf16 %v705, %v707
        %v711 = vsel %vm518, %v483, 4286644096
        %v713 = vmax.bf16 %v709, %v711
        %v715 = vsel %vm518, %v491, 4286644096
        %v717 = vmax.bf16 %v713, %v715
        %v719 = vsel %vm518, %v499, 4286644096
        %v721 = vmax.bf16 %v717, %v719
        %v723 = vsel %vm518, %v507, 4286644096
        %v725 = vmax.bf16 %v721, %v723
        %v727 = vsel %vm518, %v515, 4286644096
        %v729 = vmax.bf16 %v725, %v727
        %v731 = vsel %vm518, %v452, 4286644096
        %v734 = vsel %vm518, %v460, 4286644096
        %v736 = vmax.bf16 %v731, %v734
        %v738 = vsel %vm518, %v468, 4286644096
        %v740 = vmax.bf16 %v736, %v738
        %v742 = vsel %vm518, %v476, 4286644096
        %v744 = vmax.bf16 %v740, %v742
        %v746 = vsel %vm518, %v484, 4286644096
        %v748 = vmax.bf16 %v744, %v746
        %v750 = vsel %vm518, %v492, 4286644096
        %v752 = vmax.bf16 %v748, %v750
        %v754 = vsel %vm518, %v500, 4286644096
        %v756 = vmax.bf16 %v752, %v754
        %v758 = vsel %vm518, %v508, 4286644096
        %v760 = vmax.bf16 %v756, %v758
        %v762 = vsel %vm518, %v516, 4286644096
        %v764 = vmax.bf16 %v760, %v762
        %v766 = vsel %vm518, %v453, 4286644096
        %v769 = vsel %vm518, %v461, 4286644096
        %v771 = vmax.bf16 %v766, %v769
        %v773 = vsel %vm518, %v469, 4286644096
        %v775 = vmax.bf16 %v771, %v773
        %v777 = vsel %vm518, %v477, 4286644096
        %v779 = vmax.bf16 %v775, %v777
        %v781 = vsel %vm518, %v485, 4286644096
        %v783 = vmax.bf16 %v779, %v781
        %v785 = vsel %vm518, %v493, 4286644096
        %v787 = vmax.bf16 %v783, %v785
        %v789 = vsel %vm518, %v501, 4286644096
        %v791 = vmax.bf16 %v787, %v789
        %v793 = vsel %vm518, %v509, 4286644096
        %v795 = vmax.bf16 %v791, %v793
        %v797 = vsel %vm518, %v517, 4286644096
        %v799 = vmax.bf16 %v795, %v797
        %800 = vst [vmem:[%s443] sm:$0xf] %v554
        %801 = vst [vmem:[%s443 + $0x4] sm:$0xf] %v589
        %802 = vst [vmem:[%s443 + $0x8] sm:$0xf] %v624
        %803 = vst [vmem:[%s443 + $0xc] sm:$0xf] %v659
        %804 = vst [vmem:[%s443 + $0x10] sm:$0xf] %v694
        %805 = vst [vmem:[%s443 + $0x14] sm:$0xf] %v729
        %806 = vst [vmem:[%s443 + $0x18] sm:$0xf] %v764
        %807 = vst [vmem:[%s443 + $0x1c] sm:$0xf] %v799
        %s808 = smul.u32 8, %s12
        %p809 = scmp.lt.s32.totalorder %s808, 15
        %s810 = scalar_select %p809, %s808, 15
        %s811 = smul.addr %s810, 4
        %s812 = scalar_lea.vmem %s1, %s811
        // Predicated region
        $region66: #{resnet_forward.23} parent=60 // pred_check
          %p813 = pneg %p56
        $region67: #{resnet_forward.23} parent=60 // pred_check_branch
          %815 = sbr.rel (%p813) target = $region69
        $region68: #{resnet_forward.23} parent=60 // pred_region
          %s816 = smul.u32 8, %s12
        $region69: #{resnet_forward.23} parent=60 // pred_fallthru
          _
      $region61: #{resnet_forward.23} parent=5 // pred_fallthru
        _
      %p817 = scmp.le.s32.totalorder 2, %s7
      // Predicated region
      $region70: #{resnet_forward.23} parent=5 // pred_check
        %p818 = pneg %p817
      $region71: #{resnet_forward.23} parent=5 // pred_check_branch
        %820 = sbr.rel (%p818) target = $region73
      $region72: #{resnet_forward.23} parent=5 // pred_region
        %s821 = ssub.s32 %s7, 2
        // Predicated region
        $region74: #{resnet_forward.23} parent=72 // pred_check
          %p822 = pneg %p62
        $region75: #{resnet_forward.23} parent=72 // pred_check_branch
          %824 = sbr.rel (%p822) target = $region77
        $region76: #{resnet_forward.23} parent=72 // pred_region
          %s825 = smul.u32 8, %s13
          %p826 = scmp.lt.s32.totalorder %s825, 15
          %s827 = scalar_select %p826, %s825, 15
          %s828 = smul.addr %s827, 4
          %s829 = scalar_lea.vmem %s1, %s828
        $region77: #{resnet_forward.23} parent=72 // pred_fallthru
          _
      $region73: #{resnet_forward.23} parent=5 // pred_fallthru
        _
    $region6: #{resnet_forward.23} parent=1 // loop_footer
      %s11 = sadd.s32 1, %s7
    $region7: #{resnet_forward.23} parent=1 // loop_footer_branch
      %6 = sbr.rel target = $region3
    $region8: #{resnet_forward.23} parent=1 // loop_exit
      _

// kernel: resnet_forward.24
$region0: #{resnet_forward.24}
  #allocation0 [shape = 'u32[]', space=smem, size = 0x4, offset = 0x4, fixed_abs, tag = 'smem constant byte address 0x4 - core index']
  #allocation1 [shape = 'u32[144,128]{1,0:T(1,128)}', space=vmem, size = 0x12000, scoped, tag = 'internal scratch']
  %s0 = inlined_call_operand.vmem [shape: bf16[128,256], index: 0, kind: input, shape index: {}]
  %s1 = inlined_call_operand.vmem [shape: bf16[256,128], index: 1, kind: input, shape index: {}]
  %s2 = inlined_call_operand.vmem [shape: f32[1,128], index: 2, kind: input, shape index: {}]
  %s3 = inlined_call_operand.vmem [shape: f32[1,128], index: 3, kind: input, shape index: {}]
  %s4 = inlined_call_operand.vmem [shape: bf16[128,128], index: 4, kind: output, shape index: {}]
  %s5 = sld [smem:[#allocation0]]
  $region49: #{resnet_forward.24} parent=0
    _
  %s7 = ssub.s32 1, %s5
  %s8 = scalar_select 0, %s7, %s5
  loop: start=0, step=1, limit=4
  $region2: #{resnet_forward.24} parent=0 // loop_pre_header
    _
  $region3: #{resnet_forward.24} parent=0 // loop_header
    %s10 = sphi 0, %s14
    %p11 = scmp.ge.s32.totalorder %s10, 4
    %s17 = sphi 0, %s29
    %s18 = sphi 0, %s25
    %s19 = sphi 0, %s17
    %s20 = sphi 0, %s18
    %s21 = sphi 0, %s19
    %s22 = sphi 0, %s20
    %s32 = sphi 0, %s34
    %s35 = sphi 0, %s32
    %s36 = sphi 0, %s35
    %s52 = sphi 0, %s36
    %s58 = sphi 0, %s60
    %s61 = sphi 0, %s58
    %s62 = sphi 0, %s61
    %s78 = sphi 0, %s62
    %s84 = sphi 0, %s86
    %s87 = sphi 0, %s84
    %s88 = sphi 0, %s87
    %s104 = sphi 0, %s88
    %s110 = sphi 0, %s112
    %s113 = sphi 0, %s110
    %s114 = sphi 0, %s113
    %s130 = sphi 0, %s114
    %s138 = sphi 0, %s140
    %s141 = sphi 0, %s138
    %s142 = sphi 0, %s141
    %s158 = sphi 0, %s142
  $region4: #{resnet_forward.24} parent=0 // loop_header_branch
    %13 = sbr.rel (%p11) target = $region8
  $region5: #{resnet_forward.24} parent=0 // loop_body
    %s15 = ssub.s32 %s10, 1
    %s16 = ssub.s32 %s10, 2
    %s23 = sadd.s32 1, %s18
    %p24 = scmp.ge.s32.totalorder %s23, 1
    %s25 = scalar_select %p24, 0, %s23
    %s26 = sadd.s32 1, %s17
    %s27 = scalar_select %p24, %s26, %s17
    %p28 = scmp.ge.s32.totalorder %s27, 2
    %s29 = scalar_select %p28, 0, %s27
    %s30 = ssub.s32 %s17, %s29
    %p31 = scmp.eq.s32.totalorder %s30, 0
    %s33 = sadd.s32 %s32, 1
    %s34 = scalar_select %p31, %s32, %s33
    %p37 = pneg %p31
    %p38 = scmp.eq.s32.totalorder %s10, 1
    %p39 = por %p37, %p38
    %p40 = scmp.ne.s32.totalorder %s32, %s35
    %p41 = scmp.eq.s32.totalorder %s10, 0
    %p42 = por %p40, %p41
    %p43 = scmp.ne.s32.totalorder %s32, %s35
    %p44 = scmp.eq.s32.totalorder %s15, 1
    %p45 = por %p43, %p44
    %p46 = scmp.ne.s32.totalorder %s35, %s36
    %p47 = scmp.eq.s32.totalorder %s15, 0
    %p48 = por %p46, %p47
    %p49 = scmp.ne.s32.totalorder %s35, %s36
    %p50 = scmp.eq.s32.totalorder %s16, 1
    %p51 = por %p49, %p50
    %p53 = scmp.ne.s32.totalorder %s36, %s52
    %p54 = scmp.eq.s32.totalorder %s16, 0
    %p55 = por %p53, %p54
    %s56 = ssub.s32 %s18, %s25
    %p57 = scmp.eq.s32.totalorder %s56, 0
    %s59 = sadd.s32 %s58, 1
    %s60 = scalar_select %p57, %s58, %s59
    %p63 = pneg %p57
    %p64 = scmp.eq.s32.totalorder %s10, 1
    %p65 = por %p63, %p64
    %p66 = scmp.ne.s32.totalorder %s58, %s61
    %p67 = scmp.eq.s32.totalorder %s10, 0
    %p68 = por %p66, %p67
    %p69 = scmp.ne.s32.totalorder %s58, %s61
    %p70 = scmp.eq.s32.totalorder %s15, 1
    %p71 = por %p69, %p70
    %p72 = scmp.ne.s32.totalorder %s61, %s62
    %p73 = scmp.eq.s32.totalorder %s15, 0
    %p74 = por %p72, %p73
    %p75 = scmp.ne.s32.totalorder %s61, %s62
    %p76 = scmp.eq.s32.totalorder %s16, 1
    %p77 = por %p75, %p76
    %p79 = scmp.ne.s32.totalorder %s62, %s78
    %p80 = scmp.eq.s32.totalorder %s16, 0
    %p81 = por %p79, %p80
    %s82 = ssub.s32 %s18, %s25
    %p83 = scmp.eq.s32.totalorder %s82, 0
    %s85 = sadd.s32 %s84, 1
    %s86 = scalar_select %p83, %s84, %s85
    %p89 = pneg %p83
    %p90 = scmp.eq.s32.totalorder %s10, 1
    %p91 = por %p89, %p90
    %p92 = scmp.ne.s32.totalorder %s84, %s87
    %p93 = scmp.eq.s32.totalorder %s10, 0
    %p94 = por %p92, %p93
    %p95 = scmp.ne.s32.totalorder %s84, %s87
    %p96 = scmp.eq.s32.totalorder %s15, 1
    %p97 = por %p95, %p96
    %p98 = scmp.ne.s32.totalorder %s87, %s88
    %p99 = scmp.eq.s32.totalorder %s15, 0
    %p100 = por %p98, %p99
    %p101 = scmp.ne.s32.totalorder %s87, %s88
    %p102 = scmp.eq.s32.totalorder %s16, 1
    %p103 = por %p101, %p102
    %p105 = scmp.ne.s32.totalorder %s88, %s104
    %p106 = scmp.eq.s32.totalorder %s16, 0
    %p107 = por %p105, %p106
    %s108 = ssub.s32 %s18, %s25
    %p109 = scmp.eq.s32.totalorder %s108, 0
    %s111 = sadd.s32 %s110, 1
    %s112 = scalar_select %p109, %s110, %s111
    %p115 = pneg %p109
    %p116 = scmp.eq.s32.totalorder %s10, 1
    %p117 = por %p115, %p116
    %p118 = scmp.ne.s32.totalorder %s110, %s113
    %p119 = scmp.eq.s32.totalorder %s10, 0
    %p120 = por %p118, %p119
    %p121 = scmp.ne.s32.totalorder %s110, %s113
    %p122 = scmp.eq.s32.totalorder %s15, 1
    %p123 = por %p121, %p122
    %p124 = scmp.ne.s32.totalorder %s113, %s114
    %p125 = scmp.eq.s32.totalorder %s15, 0
    %p126 = por %p124, %p125
    %p127 = scmp.ne.s32.totalorder %s113, %s114
    %p128 = scmp.eq.s32.totalorder %s16, 1
    %p129 = por %p127, %p128
    %p131 = scmp.ne.s32.totalorder %s114, %s130
    %p132 = scmp.eq.s32.totalorder %s16, 0
    %p133 = por %p131, %p132
    %s134 = ssub.s32 %s17, %s29
    %s135 = ssub.s32 %s18, %s25
    %s136 = sor.u32 %s134, %s135
    %p137 = scmp.eq.s32.totalorder %s136, 0
    %s139 = sadd.s32 %s138, 1
    %s140 = scalar_select %p137, %s138, %s139
    %p143 = pneg %p137
    %p144 = scmp.eq.s32.totalorder %s10, 1
    %p145 = por %p143, %p144
    %p146 = scmp.ne.s32.totalorder %s138, %s141
    %p147 = scmp.eq.s32.totalorder %s10, 0
    %p148 = por %p146, %p147
    %p149 = scmp.ne.s32.totalorder %s138, %s141
    %p150 = scmp.eq.s32.totalorder %s15, 1
    %p151 = por %p149, %p150
    %p152 = scmp.ne.s32.totalorder %s141, %s142
    %p153 = scmp.eq.s32.totalorder %s15, 0
    %p154 = por %p152, %p153
    %p155 = scmp.ne.s32.totalorder %s141, %s142
    %p156 = scmp.eq.s32.totalorder %s16, 1
    %p157 = por %p155, %p156
    %p159 = scmp.ne.s32.totalorder %s142, %s158
    %p160 = scmp.eq.s32.totalorder %s16, 0
    %p161 = por %p159, %p160
    %p162 = scmp.le.s32.totalorder 1, %s10
    %p163 = scmp.lt.s32.totalorder %s10, 3
    %p164 = pnand %p162, %p163
    %p165 = pneg %p164
    // Predicated region
    $region9: #{resnet_forward.24} parent=5 // pred_check
      _
    $region10: #{resnet_forward.24} parent=5 // pred_check_branch
      %167 = sbr.rel (%p164) target = $region12
    $region11: #{resnet_forward.24} parent=5 // pred_region
      %s168 = ssub.s32 %s10, 1
      // Predicated region
      $region13: #{resnet_forward.24} parent=11 // pred_check
        %p169 = pneg %p74
      $region14: #{resnet_forward.24} parent=11 // pred_check_branch
        %171 = sbr.rel (%p169) target = $region16
      $region15: #{resnet_forward.24} parent=11 // pred_region
        %p172 = scmp.lt.s32.totalorder %s20, 0
        %s173 = scalar_select %p172, %s20, 0
        %s174 = smul.addr %s173, 4
        %s175 = scalar_lea.vmem %s1, %s174
      $region16: #{resnet_forward.24} parent=11 // pred_fallthru
        _
      // Predicated region
      $region17: #{resnet_forward.24} parent=11 // pred_check
        %p176 = pneg %p100
      $region18: #{resnet_forward.24} parent=11 // pred_check_branch
        %178 = sbr.rel (%p176) target = $region20
      $region19: #{resnet_forward.24} parent=11 // pred_region
        %p179 = scmp.lt.s32.totalorder %s20, 0
        %s180 = scalar_select %p179, %s20, 0
        %s181 = scalar_lea.vmem %s2, %s180
      $region20: #{resnet_forward.24} parent=11 // pred_fallthru
        _
      // Predicated region
      $region21: #{resnet_forward.24} parent=11 // pred_check
        %p182 = pneg %p126
      $region22: #{resnet_forward.24} parent=11 // pred_check_branch
        %184 = sbr.rel (%p182) target = $region24
      $region23: #{resnet_forward.24} parent=11 // pred_region
        %p185 = scmp.lt.s32.totalorder %s20, 0
        %s186 = scalar_select %p185, %s20, 0
        %s187 = scalar_lea.vmem %s3, %s186
      $region24: #{resnet_forward.24} parent=11 // pred_fallthru
        _
    $region12: #{resnet_forward.24} parent=5 // pred_fallthru
      _
    %p188 = scmp.lt.s32.totalorder %s10, 2
    // Predicated region
    $region25: #{resnet_forward.24} parent=5 // pred_check
      %p189 = pneg %p188
    $region26: #{resnet_forward.24} parent=5 // pred_check_branch
      %191 = sbr.rel (%p189) target = $region28
    $region27: #{resnet_forward.24} parent=5 // pred_region
      // Predicated region
      $region29: #{resnet_forward.24} parent=27 // pred_check
        %p192 = pneg %p42
      $region30: #{resnet_forward.24} parent=27 // pred_check_branch
        %194 = sbr.rel (%p192) target = $region32
      $region31: #{resnet_forward.24} parent=27 // pred_region
        %s195 = smul.u32 8, %s17
        %p196 = scmp.lt.s32.totalorder %s195, 15
        %s197 = scalar_select %p196, %s195, 15
        %s198 = smul.addr %s197, 2
        %s199 = smul.addr %s198, 4
        %s200 = scalar_lea.vmem %s0, %s199
        %s201 = smul.u32 8, %s17
      $region32: #{resnet_forward.24} parent=27 // pred_fallthru
        _
    $region28: #{resnet_forward.24} parent=5 // pred_fallthru
      _
    %p202 = scmp.le.s32.totalorder 1, %s10
    %p203 = scmp.lt.s32.totalorder %s10, 3
    %p204 = pnand %p202, %p203
    %p205 = pneg %p204
    // Predicated region
    $region33: #{resnet_forward.24} parent=5 // pred_check
      _
    $region34: #{resnet_forward.24} parent=5 // pred_check_branch
      %207 = sbr.rel (%p204) target = $region36
    $region35: #{resnet_forward.24} parent=5 // pred_region
      %s208 = ssub.s32 %s10, 1
      %s209 = smul.u32 8, %s19
      %p210 = scmp.lt.s32.totalorder %s209, 15
      %s211 = scalar_select %p210, %s209, 15
      %s212 = smul.addr %s211, 2
      %s213 = smul.addr %s212, 4
      %s214 = scalar_lea.vmem %s0, %s213
      %p215 = pneg %p48
      %p216 = pneg %p45
      %p217 = scmp.lt.s32.totalorder %s20, 0
      %s218 = scalar_select %p217, %s20, 0
      %s219 = smul.addr %s218, 4
      %s220 = scalar_lea.vmem %s1, %s219
      %p221 = pneg %p74
      %p222 = pneg %p71
      %p223 = scmp.lt.s32.totalorder %s20, 0
      %s224 = scalar_select %p223, %s20, 0
      %s225 = scalar_lea.vmem %s2, %s224
      %p226 = pneg %p100
      %p227 = pneg %p97
      %p228 = scmp.lt.s32.totalorder %s20, 0
      %s229 = scalar_select %p228, %s20, 0
      %s230 = scalar_lea.vmem %s3, %s229
      %p231 = pneg %p126
      %p232 = pneg %p123
      %p233 = pneg %p154
      %p234 = pneg %p151
      %s235 = smul.u32 8, %s19
      %p236 = scmp.lt.s32.totalorder %s235, 15
      %s237 = scalar_select %p236, %s235, 15
      %p238 = scmp.lt.s32.totalorder %s20, 0
      %s239 = scalar_select %p238, %s20, 0
      %s240 = sadd.s32 %s239, %s237
      %s241 = smul.addr %s240, 4
      %s242 = scalar_lea.vmem %s4, %s241
      %s243 = smul.u32 8, %s19
      %p244 = scmp.lt.s32.totalorder %s243, 15
      %s245 = scalar_select %p244, %s243, 15
      %s246 = smul.addr %s245, 2
      %s247 = smul.addr %s246, 4
      %s248 = scalar_lea.vmem %s0, %s247
      %s249 = smul.u32 8, %s19
      %p250 = scmp.lt.s32.totalorder %s20, 0
      %s251 = scalar_select %p250, %s20, 0
      %s252 = smul.addr %s251, 4
      %s253 = scalar_lea.vmem %s1, %s252
      %p254 = scmp.lt.s32.totalorder %s20, 0
      %s255 = scalar_select %p254, %s20, 0
      %s256 = scalar_lea.vmem %s2, %s255
      %p257 = scmp.lt.s32.totalorder %s20, 0
      %s258 = scalar_select %p257, %s20, 0
      %s259 = scalar_lea.vmem %s3, %s258
      %s260 = smul.u32 8, %s19
      %p261 = scmp.lt.s32.totalorder %s260, 15
      %s262 = scalar_select %p261, %s260, 15
      %p263 = scmp.lt.s32.totalorder %s20, 0
      %s264 = scalar_select %p263, %s20, 0
      %s265 = sadd.s32 %s264, %s262
      %s266 = smul.addr %s265, 4
      %s267 = scalar_lea.vmem %s4, %s266
      %s268 = smul.u32 8, %s19
      %v270 = vld [vmem:[%s248] sm:$0xff]
      %v271 = vld [vmem:[%s248 + $0x8] sm:$0xff]
      %v272 = vld [vmem:[%s248 + $0x10] sm:$0xff]
      %v273 = vld [vmem:[%s248 + $0x18] sm:$0xff]
      %v274 = vld [vmem:[%s248 + $0x20] sm:$0xff]
      %v275 = vld [vmem:[%s248 + $0x28] sm:$0xff]
      %v276 = vld [vmem:[%s248 + $0x30] sm:$0xff]
      %v277 = vld [vmem:[%s248 + $0x38] sm:$0xff]
      %v278 = vld [vmem:[%s253] sm:$0xf]
      %v279 = vld [vmem:[%s253 + $0x4] sm:$0xf]
      %v280 = vld [vmem:[%s253 + $0x8] sm:$0xf]
      %v281 = vld [vmem:[%s253 + $0xc] sm:$0xf]
      %v282 = vld [vmem:[%s253 + $0x10] sm:$0xf]
      %v283 = vld [vmem:[%s253 + $0x14] sm:$0xf]
      %v284 = vld [vmem:[%s253 + $0x18] sm:$0xf]
      %v285 = vld [vmem:[%s253 + $0x1c] sm:$0xf]
      %v286 = vld [vmem:[%s253 + $0x20] sm:$0xf]
      %v287 = vld [vmem:[%s253 + $0x24] sm:$0xf]
      %v288 = vld [vmem:[%s253 + $0x28] sm:$0xf]
      %v289 = vld [vmem:[%s253 + $0x2c] sm:$0xf]
      %v290 = vld [vmem:[%s253 + $0x30] sm:$0xf]
      %v291 = vld [vmem:[%s253 + $0x34] sm:$0xf]
      %v292 = vld [vmem:[%s253 + $0x38] sm:$0xf]
      %v293 = vld [vmem:[%s253 + $0x3c] sm:$0xf]
      %v294 = vld [vmem:[%s253 + $0x40] sm:$0xf]
      %v295 = vld [vmem:[%s253 + $0x44] sm:$0xf]
      %v296 = vld [vmem:[%s253 + $0x48] sm:$0xf]
      %v297 = vld [vmem:[%s253 + $0x4c] sm:$0xf]
      %v298 = vld [vmem:[%s253 + $0x50] sm:$0xf]
      %v299 = vld [vmem:[%s253 + $0x54] sm:$0xf]
      %v300 = vld [vmem:[%s253 + $0x58] sm:$0xf]
      %v301 = vld [vmem:[%s253 + $0x5c] sm:$0xf]
      %v302 = vld [vmem:[%s253 + $0x60] sm:$0xf]
      %v303 = vld [vmem:[%s253 + $0x64] sm:$0xf]
      %v304 = vld [vmem:[%s253 + $0x68] sm:$0xf]
      %v305 = vld [vmem:[%s253 + $0x6c] sm:$0xf]
      %v306 = vld [vmem:[%s253 + $0x70] sm:$0xf]
      %v307 = vld [vmem:[%s253 + $0x74] sm:$0xf]
      %v308 = vld [vmem:[%s253 + $0x78] sm:$0xf]
      %v309 = vld [vmem:[%s253 + $0x7c] sm:$0xf]
      %v318 = vunpack.c.l.b16 %v270
      %v319 = vunpack.c.h.b16 %v270
      %v320 = vunpack.c.l.b16 %v271
      %v321 = vunpack.c.h.b16 %v271
      %v322 = vunpack.c.l.b16 %v272
      %v323 = vunpack.c.h.b16 %v272
      %v324 = vunpack.c.l.b16 %v273
      %v325 = vunpack.c.h.b16 %v273
      %v326 = vunpack.c.l.b16 %v274
      %v327 = vunpack.c.h.b16 %v274
      %v328 = vunpack.c.l.b16 %v275
      %v329 = vunpack.c.h.b16 %v275
      %v330 = vunpack.c.l.b16 %v276
      %v331 = vunpack.c.h.b16 %v276
      %v332 = vunpack.c.l.b16 %v277
      %v333 = vunpack.c.h.b16 %v277
      %v334 = vpack.c.b16 %v320, %v318
      %v335 = vpack.c.b16 %v321, %v319
      %v336 = vpack.c.b16 %v324, %v322
      %v337 = vpack.c.b16 %v325, %v323
      %v338 = vpack.c.b16 %v328, %v326
      %v339 = vpack.c.b16 %v329, %v327
      %v340 = vpack.c.b16 %v332, %v330
      %v341 = vpack.c.b16 %v333, %v331
      %v382 = vunpack.c.l.b16 %v278
      %v383 = vunpack.c.l.b16 %v279
      %v384 = vunpack.c.l.b16 %v280
      %v385 = vunpack.c.l.b16 %v281
      %v386 = vunpack.c.l.b16 %v282
      %v387 = vunpack.c.l.b16 %v283
      %v388 = vunpack.c.l.b16 %v284
      %v389 = vunpack.c.l.b16 %v285
      %v390 = vunpack.c.l.b16 %v286
      %v391 = vunpack.c.l.b16 %v287
      %v392 = vunpack.c.l.b16 %v288
      %v393 = vunpack.c.l.b16 %v289
      %v394 = vunpack.c.l.b16 %v290
      %v395 = vunpack.c.l.b16 %v291
      %v396 = vunpack.c.l.b16 %v292
      %v397 = vunpack.c.l.b16 %v293
      %v398 = vunpack.c.l.b16 %v294
      %v399 = vunpack.c.l.b16 %v295
      %v400 = vunpack.c.l.b16 %v296
      %v401 = vunpack.c.l.b16 %v297
      %v402 = vunpack.c.l.b16 %v298
      %v403 = vunpack.c.l.b16 %v299
      %v404 = vunpack.c.l.b16 %v300
      %v405 = vunpack.c.l.b16 %v301
      %v406 = vunpack.c.l.b16 %v302
      %v407 = vunpack.c.l.b16 %v303
      %v408 = vunpack.c.l.b16 %v304
      %v409 = vunpack.c.l.b16 %v305
      %v410 = vunpack.c.l.b16 %v306
      %v411 = vunpack.c.l.b16 %v307
      %v412 = vunpack.c.l.b16 %v308
      %v413 = vunpack.c.l.b16 %v309
      %v414 = vpack.c.b16 %v383, %v382
      %v415 = vpack.c.b16 %v385, %v384
      %v416 = vpack.c.b16 %v387, %v386
      %v417 = vpack.c.b16 %v389, %v388
      %v418 = vpack.c.b16 %v391, %v390
      %v419 = vpack.c.b16 %v393, %v392
      %v420 = vpack.c.b16 %v395, %v394
      %v421 = vpack.c.b16 %v397, %v396
      %v422 = vpack.c.b16 %v399, %v398
      %v423 = vpack.c.b16 %v401, %v400
      %v424 = vpack.c.b16 %v403, %v402
      %v425 = vpack.c.b16 %v405, %v404
      %v426 = vpack.c.b16 %v407, %v406
      %v427 = vpack.c.b16 %v409, %v408
      %v428 = vpack.c.b16 %v411, %v410
      %v429 = vpack.c.b16 %v413, %v412
      %446 = vmatprep.subr.bf16.mxu0 0
      %447 = vmatpush1.bf16.msra.mxu0 %v414
      %448 = vmatprep.subr.bf16.mxu0 0
      %449 = vmatpush1.bf16.msra.mxu0 %v415
      %450 = vmatprep.subr.bf16.mxu0 0
      %451 = vmatpush1.bf16.msra.mxu0 %v416
      %452 = vmatprep.subr.bf16.mxu0 0
      %453 = vmatpush1.bf16.msra.mxu0 %v417
      %454 = vmatprep.subr.bf16.mxu0 0
      %455 = vmatpush1.bf16.msra.mxu0 %v418
      %456 = vmatprep.subr.bf16.mxu0 0
      %457 = vmatpush1.bf16.msra.mxu0 %v419
      %458 = vmatprep.subr.bf16.mxu0 0
      %459 = vmatpush1.bf16.msra.mxu0 %v420
      %460 = vmatprep.subr.bf16.mxu0 0
      %461 = vmatpush1.bf16.msra.mxu0 %v421
      %462 = vmatprep.subr.bf16.mxu0 0
      %463 = vmatpush1.bf16.msra.mxu0 %v422
      %464 = vmatprep.subr.bf16.mxu0 0
      %465 = vmatpush1.bf16.msra.mxu0 %v423
      %466 = vmatprep.subr.bf16.mxu0 0
      %467 = vmatpush1.bf16.msra.mxu0 %v424
      %468 = vmatprep.subr.bf16.mxu0 0
      %469 = vmatpush1.bf16.msra.mxu0 %v425
      %470 = vmatprep.subr.bf16.mxu0 0
      %471 = vmatpush1.bf16.msra.mxu0 %v426
      %472 = vmatprep.subr.bf16.mxu0 0
      %473 = vmatpush1.bf16.msra.mxu0 %v427
      %474 = vmatprep.subr.bf16.mxu0 0
      %475 = vmatpush1.bf16.msra.mxu0 %v428
      %476 = vmatprep.subr.bf16.mxu0 0
      %477 = vmatpush1.bf16.msra.mxu0 %v429
      %478 = vmatprep.mubr.bf16.mxu0 %v335
      %479 = vmatmul.mubr.bf16.gmra.mrb[0].mxu0 %v334
      %v480 = vpop.f32.mrb[0].mxu0
      %v481 = vadd.f32 0.0, %v480
      %v482 = vpop.f32.mrb[0].mxu0
      %v483 = vpop.f32.mrb[0].mxu0
      %v484 = vadd.f32 0.0, %v483
      %v485 = vpop.f32.mrb[0].mxu0
      %486 = vmatprep.mubr.bf16.mxu0 %v337
      %487 = vmatmul.mubr.bf16.gmra.mrb[0].mxu0 %v336
      %v488 = vpop.f32.mrb[0].mxu0
      %v489 = vadd.f32 0.0, %v488
      %v490 = vpop.f32.mrb[0].mxu0
      %v491 = vpop.f32.mrb[0].mxu0
      %v492 = vadd.f32 0.0, %v491
      %v493 = vpop.f32.mrb[0].mxu0
      %494 = vmatprep.mubr.bf16.mxu0 %v339
      %495 = vmatmul.mubr.bf16.gmra.mrb[0].mxu0 %v338
      %v496 = vpop.f32.mrb[0].mxu0
      %v497 = vadd.f32 0.0, %v496
      %v498 = vpop.f32.mrb[0].mxu0
      %v499 = vpop.f32.mrb[0].mxu0
      %v500 = vadd.f32 0.0, %v499
      %v501 = vpop.f32.mrb[0].mxu0
      %502 = vmatprep.mubr.bf16.mxu0 %v341
      %503 = vmatmul.mubr.bf16.gmra.mrb[0].mxu0 %v340
      %v504 = vpop.f32.mrb[0].mxu0
      %v505 = vadd.f32 0.0, %v504
      %v506 = vpop.f32.mrb[0].mxu0
      %v507 = vpop.f32.mrb[0].mxu0
      %v508 = vadd.f32 0.0, %v507
      %v509 = vpop.f32.mrb[0].mxu0
      %510 = vdwg.mxu0
      %v511 = vld [vmem:[%s256] sm:$0x1]
      %v513 = vlaneseq
      %v514 = vshrl.u32 %v513, 7
      %v515 = vsub.s32 0, %v514
      %v516 = vrot.slane %v511, %v515
      %v518 = vmul.f32 %v481, %v516
      %v519 = vmul.f32 %v484, %v516
      %v520 = vmul.f32 %v489, %v516
      %v521 = vmul.f32 %v492, %v516
      %v522 = vmul.f32 %v497, %v516
      %v523 = vmul.f32 %v500, %v516
      %v524 = vmul.f32 %v505, %v516
      %v525 = vmul.f32 %v508, %v516
      %v526 = vld [vmem:[%s259] sm:$0x1]
      %v528 = vlaneseq
      %v529 = vshrl.u32 %v528, 7
      %v530 = vsub.s32 0, %v529
      %v531 = vrot.slane %v526, %v530
      %v533 = vadd.f32 %v518, %v531
      %v534 = vadd.f32 %v519, %v531
      %v535 = vadd.f32 %v520, %v531
      %v536 = vadd.f32 %v521, %v531
      %v537 = vadd.f32 %v522, %v531
      %v538 = vadd.f32 %v523, %v531
      %v539 = vadd.f32 %v524, %v531
      %v540 = vadd.f32 %v525, %v531
      %v541 = vmax.f32 %v533, 0.0
      %v542 = vmax.f32 %v534, 0.0
      %v543 = vmax.f32 %v535, 0.0
      %v544 = vmax.f32 %v536, 0.0
      %v545 = vmax.f32 %v537, 0.0
      %v546 = vmax.f32 %v538, 0.0
      %v547 = vmax.f32 %v539, 0.0
      %v548 = vmax.f32 %v540, 0.0
      %v549 = vpack.c.bf16 %v542, %v541
      %v550 = vpack.c.bf16 %v544, %v543
      %v551 = vpack.c.bf16 %v546, %v545
      %v552 = vpack.c.bf16 %v548, %v547
      %v557 = vunpack.c.l.b16 %v549
      %v558 = vunpack.c.h.b16 %v549
      %v559 = vunpack.c.l.b16 %v550
      %v560 = vunpack.c.h.b16 %v550
      %v561 = vunpack.c.l.b16 %v551
      %v562 = vunpack.c.h.b16 %v551
      %v563 = vunpack.c.l.b16 %v552
      %v564 = vunpack.c.h.b16 %v552
      %v565 = vpack.c.b16 %v557, %v557
      %v566 = vpack.c.b16 %v558, %v558
      %v567 = vpack.c.b16 %v559, %v559
      %v568 = vpack.c.b16 %v560, %v560
      %v569 = vpack.c.b16 %v561, %v561
      %v570 = vpack.c.b16 %v562, %v562
      %v571 = vpack.c.b16 %v563, %v563
      %v572 = vpack.c.b16 %v564, %v564
      %581 = vst [vmem:[%s267] sm:$0xf] %v565
      %582 = vst [vmem:[%s267 + $0x4] sm:$0xf] %v566
      %583 = vst [vmem:[%s267 + $0x8] sm:$0xf] %v567
      %584 = vst [vmem:[%s267 + $0xc] sm:$0xf] %v568
      %585 = vst [vmem:[%s267 + $0x10] sm:$0xf] %v569
      %586 = vst [vmem:[%s267 + $0x14] sm:$0xf] %v570
      %587 = vst [vmem:[%s267 + $0x18] sm:$0xf] %v571
      %588 = vst [vmem:[%s267 + $0x1c] sm:$0xf] %v572
      %s589 = smul.u32 8, %s19
      %p590 = scmp.lt.s32.totalorder %s589, 15
      %s591 = scalar_select %p590, %s589, 15
      %p592 = scmp.lt.s32.totalorder %s20, 0
      %s593 = scalar_select %p592, %s20, 0
      %s594 = sadd.s32 %s593, %s591
      %s595 = smul.addr %s594, 4
      %s596 = scalar_lea.vmem %s4, %s595
      // Predicated region
      $region37: #{resnet_forward.24} parent=35 // pred_check
        %p597 = pneg %p151
      $region38: #{resnet_forward.24} parent=35 // pred_check_branch
        %599 = sbr.rel (%p597) target = $region40
      $region39: #{resnet_forward.24} parent=35 // pred_region
        %s600 = smul.u32 8, %s19
      $region40: #{resnet_forward.24} parent=35 // pred_fallthru
        _
    $region36: #{resnet_forward.24} parent=5 // pred_fallthru
      _
    %p601 = scmp.le.s32.totalorder 2, %s10
    // Predicated region
    $region41: #{resnet_forward.24} parent=5 // pred_check
      %p602 = pneg %p601
    $region42: #{resnet_forward.24} parent=5 // pred_check_branch
      %604 = sbr.rel (%p602) target = $region44
    $region43: #{resnet_forward.24} parent=5 // pred_region
      %s605 = ssub.s32 %s10, 2
      // Predicated region
      $region45: #{resnet_forward.24} parent=43 // pred_check
        %p606 = pneg %p157
      $region46: #{resnet_forward.24} parent=43 // pred_check_branch
        %608 = sbr.rel (%p606) target = $region48
      $region47: #{resnet_forward.24} parent=43 // pred_region
        %s609 = smul.u32 8, %s21
        %p610 = scmp.lt.s32.totalorder %s609, 15
        %s611 = scalar_select %p610, %s609, 15
        %p612 = scmp.lt.s32.totalorder %s22, 0
        %s613 = scalar_select %p612, %s22, 0
        %s614 = sadd.s32 %s613, %s611
        %s615 = smul.addr %s614, 4
        %s616 = scalar_lea.vmem %s4, %s615
      $region48: #{resnet_forward.24} parent=43 // pred_fallthru
        _
    $region44: #{resnet_forward.24} parent=5 // pred_fallthru
      _
  $region6: #{resnet_forward.24} parent=0 // loop_footer
    %s14 = sadd.s32 1, %s10
  $region7: #{resnet_forward.24} parent=0 // loop_footer_branch
    %9 = sbr.rel target = $region3
  $region8: #{resnet_forward.24} parent=0 // loop_exit
    _

// kernel: resnet_forward.25
$region0: #{resnet_forward.25}
  #allocation0 [shape = 'u32[]', space=smem, size = 0x4, offset = 0x4, fixed_abs, tag = 'smem constant byte address 0x4 - core index']
  #allocation1 [shape = 'u32[144,128]{1,0:T(1,128)}', space=vmem, size = 0x12000, scoped, tag = 'internal scratch']
  %s0 = inlined_call_operand.vmem [shape: bf16[128,256], index: 0, kind: input, shape index: {}]
  %s1 = inlined_call_operand.vmem [shape: bf16[256,128], index: 1, kind: input, shape index: {}]
  %s2 = inlined_call_operand.vmem [shape: f32[1,128], index: 2, kind: input, shape index: {}]
  %s3 = inlined_call_operand.vmem [shape: f32[1,128], index: 3, kind: input, shape index: {}]
  %s4 = inlined_call_operand.vmem [shape: bf16[128,128], index: 4, kind: input, shape index: {}]
  %s5 = inlined_call_operand.vmem [shape: bf16[128,128], index: 5, kind: output, shape index: {}]
  %s6 = sld [smem:[#allocation0]]
  $region53: #{resnet_forward.25} parent=0
    _
  %s8 = ssub.s32 1, %s6
  %s9 = scalar_select 0, %s8, %s6
  loop: start=0, step=1, limit=4
  $region2: #{resnet_forward.25} parent=0 // loop_pre_header
    _
  $region3: #{resnet_forward.25} parent=0 // loop_header
    %s11 = sphi 0, %s15
    %p12 = scmp.ge.s32.totalorder %s11, 4
    %s18 = sphi 0, %s30
    %s19 = sphi 0, %s26
    %s20 = sphi 0, %s18
    %s21 = sphi 0, %s19
    %s22 = sphi 0, %s20
    %s23 = sphi 0, %s21
    %s33 = sphi 0, %s35
    %s36 = sphi 0, %s33
    %s37 = sphi 0, %s36
    %s53 = sphi 0, %s37
    %s59 = sphi 0, %s61
    %s62 = sphi 0, %s59
    %s63 = sphi 0, %s62
    %s79 = sphi 0, %s63
    %s85 = sphi 0, %s87
    %s88 = sphi 0, %s85
    %s89 = sphi 0, %s88
    %s105 = sphi 0, %s89
    %s111 = sphi 0, %s113
    %s114 = sphi 0, %s111
    %s115 = sphi 0, %s114
    %s131 = sphi 0, %s115
    %s139 = sphi 0, %s141
    %s142 = sphi 0, %s139
    %s143 = sphi 0, %s142
    %s159 = sphi 0, %s143
    %s167 = sphi 0, %s169
    %s170 = sphi 0, %s167
    %s171 = sphi 0, %s170
    %s187 = sphi 0, %s171
  $region4: #{resnet_forward.25} parent=0 // loop_header_branch
    %14 = sbr.rel (%p12) target = $region8
  $region5: #{resnet_forward.25} parent=0 // loop_body
    %s16 = ssub.s32 %s11, 1
    %s17 = ssub.s32 %s11, 2
    %s24 = sadd.s32 1, %s19
    %p25 = scmp.ge.s32.totalorder %s24, 1
    %s26 = scalar_select %p25, 0, %s24
    %s27 = sadd.s32 1, %s18
    %s28 = scalar_select %p25, %s27, %s18
    %p29 = scmp.ge.s32.totalorder %s28, 2
    %s30 = scalar_select %p29, 0, %s28
    %s31 = ssub.s32 %s18, %s30
    %p32 = scmp.eq.s32.totalorder %s31, 0
    %s34 = sadd.s32 %s33, 1
    %s35 = scalar_select %p32, %s33, %s34
    %p38 = pneg %p32
    %p39 = scmp.eq.s32.totalorder %s11, 1
    %p40 = por %p38, %p39
    %p41 = scmp.ne.s32.totalorder %s33, %s36
    %p42 = scmp.eq.s32.totalorder %s11, 0
    %p43 = por %p41, %p42
    %p44 = scmp.ne.s32.totalorder %s33, %s36
    %p45 = scmp.eq.s32.totalorder %s16, 1
    %p46 = por %p44, %p45
    %p47 = scmp.ne.s32.totalorder %s36, %s37
    %p48 = scmp.eq.s32.totalorder %s16, 0
    %p49 = por %p47, %p48
    %p50 = scmp.ne.s32.totalorder %s36, %s37
    %p51 = scmp.eq.s32.totalorder %s17, 1
    %p52 = por %p50, %p51
    %p54 = scmp.ne.s32.totalorder %s37, %s53
    %p55 = scmp.eq.s32.totalorder %s17, 0
    %p56 = por %p54, %p55
    %s57 = ssub.s32 %s19, %s26
    %p58 = scmp.eq.s32.totalorder %s57, 0
    %s60 = sadd.s32 %s59, 1
    %s61 = scalar_select %p58, %s59, %s60
    %p64 = pneg %p58
    %p65 = scmp.eq.s32.totalorder %s11, 1
    %p66 = por %p64, %p65
    %p67 = scmp.ne.s32.totalorder %s59, %s62
    %p68 = scmp.eq.s32.totalorder %s11, 0
    %p69 = por %p67, %p68
    %p70 = scmp.ne.s32.totalorder %s59, %s62
    %p71 = scmp.eq.s32.totalorder %s16, 1
    %p72 = por %p70, %p71
    %p73 = scmp.ne.s32.totalorder %s62, %s63
    %p74 = scmp.eq.s32.totalorder %s16, 0
    %p75 = por %p73, %p74
    %p76 = scmp.ne.s32.totalorder %s62, %s63
    %p77 = scmp.eq.s32.totalorder %s17, 1
    %p78 = por %p76, %p77
    %p80 = scmp.ne.s32.totalorder %s63, %s79
    %p81 = scmp.eq.s32.totalorder %s17, 0
    %p82 = por %p80, %p81
    %s83 = ssub.s32 %s19, %s26
    %p84 = scmp.eq.s32.totalorder %s83, 0
    %s86 = sadd.s32 %s85, 1
    %s87 = scalar_select %p84, %s85, %s86
    %p90 = pneg %p84
    %p91 = scmp.eq.s32.totalorder %s11, 1
    %p92 = por %p90, %p91
    %p93 = scmp.ne.s32.totalorder %s85, %s88
    %p94 = scmp.eq.s32.totalorder %s11, 0
    %p95 = por %p93, %p94
    %p96 = scmp.ne.s32.totalorder %s85, %s88
    %p97 = scmp.eq.s32.totalorder %s16, 1
    %p98 = por %p96, %p97
    %p99 = scmp.ne.s32.totalorder %s88, %s89
    %p100 = scmp.eq.s32.totalorder %s16, 0
    %p101 = por %p99, %p100
    %p102 = scmp.ne.s32.totalorder %s88, %s89
    %p103 = scmp.eq.s32.totalorder %s17, 1
    %p104 = por %p102, %p103
    %p106 = scmp.ne.s32.totalorder %s89, %s105
    %p107 = scmp.eq.s32.totalorder %s17, 0
    %p108 = por %p106, %p107
    %s109 = ssub.s32 %s19, %s26
    %p110 = scmp.eq.s32.totalorder %s109, 0
    %s112 = sadd.s32 %s111, 1
    %s113 = scalar_select %p110, %s111, %s112
    %p116 = pneg %p110
    %p117 = scmp.eq.s32.totalorder %s11, 1
    %p118 = por %p116, %p117
    %p119 = scmp.ne.s32.totalorder %s111, %s114
    %p120 = scmp.eq.s32.totalorder %s11, 0
    %p121 = por %p119, %p120
    %p122 = scmp.ne.s32.totalorder %s111, %s114
    %p123 = scmp.eq.s32.totalorder %s16, 1
    %p124 = por %p122, %p123
    %p125 = scmp.ne.s32.totalorder %s114, %s115
    %p126 = scmp.eq.s32.totalorder %s16, 0
    %p127 = por %p125, %p126
    %p128 = scmp.ne.s32.totalorder %s114, %s115
    %p129 = scmp.eq.s32.totalorder %s17, 1
    %p130 = por %p128, %p129
    %p132 = scmp.ne.s32.totalorder %s115, %s131
    %p133 = scmp.eq.s32.totalorder %s17, 0
    %p134 = por %p132, %p133
    %s135 = ssub.s32 %s18, %s30
    %s136 = ssub.s32 %s19, %s26
    %s137 = sor.u32 %s135, %s136
    %p138 = scmp.eq.s32.totalorder %s137, 0
    %s140 = sadd.s32 %s139, 1
    %s141 = scalar_select %p138, %s139, %s140
    %p144 = pneg %p138
    %p145 = scmp.eq.s32.totalorder %s11, 1
    %p146 = por %p144, %p145
    %p147 = scmp.ne.s32.totalorder %s139, %s142
    %p148 = scmp.eq.s32.totalorder %s11, 0
    %p149 = por %p147, %p148
    %p150 = scmp.ne.s32.totalorder %s139, %s142
    %p151 = scmp.eq.s32.totalorder %s16, 1
    %p152 = por %p150, %p151
    %p153 = scmp.ne.s32.totalorder %s142, %s143
    %p154 = scmp.eq.s32.totalorder %s16, 0
    %p155 = por %p153, %p154
    %p156 = scmp.ne.s32.totalorder %s142, %s143
    %p157 = scmp.eq.s32.totalorder %s17, 1
    %p158 = por %p156, %p157
    %p160 = scmp.ne.s32.totalorder %s143, %s159
    %p161 = scmp.eq.s32.totalorder %s17, 0
    %p162 = por %p160, %p161
    %s163 = ssub.s32 %s18, %s30
    %s164 = ssub.s32 %s19, %s26
    %s165 = sor.u32 %s163, %s164
    %p166 = scmp.eq.s32.totalorder %s165, 0
    %s168 = sadd.s32 %s167, 1
    %s169 = scalar_select %p166, %s167, %s168
    %p172 = pneg %p166
    %p173 = scmp.eq.s32.totalorder %s11, 1
    %p174 = por %p172, %p173
    %p175 = scmp.ne.s32.totalorder %s167, %s170
    %p176 = scmp.eq.s32.totalorder %s11, 0
    %p177 = por %p175, %p176
    %p178 = scmp.ne.s32.totalorder %s167, %s170
    %p179 = scmp.eq.s32.totalorder %s16, 1
    %p180 = por %p178, %p179
    %p181 = scmp.ne.s32.totalorder %s170, %s171
    %p182 = scmp.eq.s32.totalorder %s16, 0
    %p183 = por %p181, %p182
    %p184 = scmp.ne.s32.totalorder %s170, %s171
    %p185 = scmp.eq.s32.totalorder %s17, 1
    %p186 = por %p184, %p185
    %p188 = scmp.ne.s32.totalorder %s171, %s187
    %p189 = scmp.eq.s32.totalorder %s17, 0
    %p190 = por %p188, %p189
    %p191 = scmp.le.s32.totalorder 1, %s11
    %p192 = scmp.lt.s32.totalorder %s11, 3
    %p193 = pnand %p191, %p192
    %p194 = pneg %p193
    // Predicated region
    $region9: #{resnet_forward.25} parent=5 // pred_check
      _
    $region10: #{resnet_forward.25} parent=5 // pred_check_branch
      %196 = sbr.rel (%p193) target = $region12
    $region11: #{resnet_forward.25} parent=5 // pred_region
      %s197 = ssub.s32 %s11, 1
      // Predicated region
      $region13: #{resnet_forward.25} parent=11 // pred_check
        %p198 = pneg %p75
      $region14: #{resnet_forward.25} parent=11 // pred_check_branch
        %200 = sbr.rel (%p198) target = $region16
      $region15: #{resnet_forward.25} parent=11 // pred_region
        %p201 = scmp.lt.s32.totalorder %s21, 0
        %s202 = scalar_select %p201, %s21, 0
        %s203 = smul.addr %s202, 4
        %s204 = scalar_lea.vmem %s1, %s203
      $region16: #{resnet_forward.25} parent=11 // pred_fallthru
        _
      // Predicated region
      $region17: #{resnet_forward.25} parent=11 // pred_check
        %p205 = pneg %p101
      $region18: #{resnet_forward.25} parent=11 // pred_check_branch
        %207 = sbr.rel (%p205) target = $region20
      $region19: #{resnet_forward.25} parent=11 // pred_region
        %p208 = scmp.lt.s32.totalorder %s21, 0
        %s209 = scalar_select %p208, %s21, 0
        %s210 = scalar_lea.vmem %s2, %s209
      $region20: #{resnet_forward.25} parent=11 // pred_fallthru
        _
      // Predicated region
      $region21: #{resnet_forward.25} parent=11 // pred_check
        %p211 = pneg %p127
      $region22: #{resnet_forward.25} parent=11 // pred_check_branch
        %213 = sbr.rel (%p211) target = $region24
      $region23: #{resnet_forward.25} parent=11 // pred_region
        %p214 = scmp.lt.s32.totalorder %s21, 0
        %s215 = scalar_select %p214, %s21, 0
        %s216 = scalar_lea.vmem %s3, %s215
      $region24: #{resnet_forward.25} parent=11 // pred_fallthru
        _
    $region12: #{resnet_forward.25} parent=5 // pred_fallthru
      _
    %p217 = scmp.lt.s32.totalorder %s11, 2
    // Predicated region
    $region25: #{resnet_forward.25} parent=5 // pred_check
      %p218 = pneg %p217
    $region26: #{resnet_forward.25} parent=5 // pred_check_branch
      %220 = sbr.rel (%p218) target = $region28
    $region27: #{resnet_forward.25} parent=5 // pred_region
      // Predicated region
      $region29: #{resnet_forward.25} parent=27 // pred_check
        %p221 = pneg %p43
      $region30: #{resnet_forward.25} parent=27 // pred_check_branch
        %223 = sbr.rel (%p221) target = $region32
      $region31: #{resnet_forward.25} parent=27 // pred_region
        %s224 = smul.u32 8, %s18
        %p225 = scmp.lt.s32.totalorder %s224, 15
        %s226 = scalar_select %p225, %s224, 15
        %s227 = smul.addr %s226, 2
        %s228 = smul.addr %s227, 4
        %s229 = scalar_lea.vmem %s0, %s228
        %s230 = smul.u32 8, %s18
      $region32: #{resnet_forward.25} parent=27 // pred_fallthru
        _
      // Predicated region
      $region33: #{resnet_forward.25} parent=27 // pred_check
        %p231 = pneg %p149
      $region34: #{resnet_forward.25} parent=27 // pred_check_branch
        %233 = sbr.rel (%p231) target = $region36
      $region35: #{resnet_forward.25} parent=27 // pred_region
        %s234 = smul.u32 8, %s18
        %p235 = scmp.lt.s32.totalorder %s234, 15
        %s236 = scalar_select %p235, %s234, 15
        %p237 = scmp.lt.s32.totalorder %s19, 0
        %s238 = scalar_select %p237, %s19, 0
        %s239 = sadd.s32 %s238, %s236
        %s240 = smul.addr %s239, 4
        %s241 = scalar_lea.vmem %s4, %s240
        %s242 = smul.u32 8, %s18
      $region36: #{resnet_forward.25} parent=27 // pred_fallthru
        _
    $region28: #{resnet_forward.25} parent=5 // pred_fallthru
      _
    %p243 = scmp.le.s32.totalorder 1, %s11
    %p244 = scmp.lt.s32.totalorder %s11, 3
    %p245 = pnand %p243, %p244
    %p246 = pneg %p245
    // Predicated region
    $region37: #{resnet_forward.25} parent=5 // pred_check
      _
    $region38: #{resnet_forward.25} parent=5 // pred_check_branch
      %248 = sbr.rel (%p245) target = $region40
    $region39: #{resnet_forward.25} parent=5 // pred_region
      %s249 = ssub.s32 %s11, 1
      %s250 = smul.u32 8, %s20
      %p251 = scmp.lt.s32.totalorder %s250, 15
      %s252 = scalar_select %p251, %s250, 15
      %s253 = smul.addr %s252, 2
      %s254 = smul.addr %s253, 4
      %s255 = scalar_lea.vmem %s0, %s254
      %p256 = pneg %p49
      %p257 = pneg %p46
      %p258 = scmp.lt.s32.totalorder %s21, 0
      %s259 = scalar_select %p258, %s21, 0
      %s260 = smul.addr %s259, 4
      %s261 = scalar_lea.vmem %s1, %s260
      %p262 = pneg %p75
      %p263 = pneg %p72
      %p264 = scmp.lt.s32.totalorder %s21, 0
      %s265 = scalar_select %p264, %s21, 0
      %s266 = scalar_lea.vmem %s2, %s265
      %p267 = pneg %p101
      %p268 = pneg %p98
      %p269 = scmp.lt.s32.totalorder %s21, 0
      %s270 = scalar_select %p269, %s21, 0
      %s271 = scalar_lea.vmem %s3, %s270
      %p272 = pneg %p127
      %p273 = pneg %p124
      %s274 = smul.u32 8, %s20
      %p275 = scmp.lt.s32.totalorder %s274, 15
      %s276 = scalar_select %p275, %s274, 15
      %p277 = scmp.lt.s32.totalorder %s21, 0
      %s278 = scalar_select %p277, %s21, 0
      %s279 = sadd.s32 %s278, %s276
      %s280 = smul.addr %s279, 4
      %s281 = scalar_lea.vmem %s4, %s280
      %p282 = pneg %p155
      %p283 = pneg %p152
      %p284 = pneg %p183
      %p285 = pneg %p180
      %s286 = smul.u32 8, %s20
      %p287 = scmp.lt.s32.totalorder %s286, 15
      %s288 = scalar_select %p287, %s286, 15
      %p289 = scmp.lt.s32.totalorder %s21, 0
      %s290 = scalar_select %p289, %s21, 0
      %s291 = sadd.s32 %s290, %s288
      %s292 = smul.addr %s291, 4
      %s293 = scalar_lea.vmem %s5, %s292
      %s294 = smul.u32 8, %s20
      %p295 = scmp.lt.s32.totalorder %s294, 15
      %s296 = scalar_select %p295, %s294, 15
      %s297 = smul.addr %s296, 2
      %s298 = smul.addr %s297, 4
      %s299 = scalar_lea.vmem %s0, %s298
      %s300 = smul.u32 8, %s20
      %p301 = scmp.lt.s32.totalorder %s21, 0
      %s302 = scalar_select %p301, %s21, 0
      %s303 = smul.addr %s302, 4
      %s304 = scalar_lea.vmem %s1, %s303
      %p305 = scmp.lt.s32.totalorder %s21, 0
      %s306 = scalar_select %p305, %s21, 0
      %s307 = scalar_lea.vmem %s2, %s306
      %p308 = scmp.lt.s32.totalorder %s21, 0
      %s309 = scalar_select %p308, %s21, 0
      %s310 = scalar_lea.vmem %s3, %s309
      %s311 = smul.u32 8, %s20
      %p312 = scmp.lt.s32.totalorder %s311, 15
      %s313 = scalar_select %p312, %s311, 15
      %p314 = scmp.lt.s32.totalorder %s21, 0
      %s315 = scalar_select %p314, %s21, 0
      %s316 = sadd.s32 %s315, %s313
      %s317 = smul.addr %s316, 4
      %s318 = scalar_lea.vmem %s4, %s317
      %s319 = smul.u32 8, %s20
      %s320 = smul.u32 8, %s20
      %p321 = scmp.lt.s32.totalorder %s320, 15
      %s322 = scalar_select %p321, %s320, 15
      %p323 = scmp.lt.s32.totalorder %s21, 0
      %s324 = scalar_select %p323, %s21, 0
      %s325 = sadd.s32 %s324, %s322
      %s326 = smul.addr %s325, 4
      %s327 = scalar_lea.vmem %s5, %s326
      %s328 = smul.u32 8, %s20
      %v330 = vld [vmem:[%s299] sm:$0xff]
      %v331 = vld [vmem:[%s299 + $0x8] sm:$0xff]
      %v332 = vld [vmem:[%s299 + $0x10] sm:$0xff]
      %v333 = vld [vmem:[%s299 + $0x18] sm:$0xff]
      %v334 = vld [vmem:[%s299 + $0x20] sm:$0xff]
      %v335 = vld [vmem:[%s299 + $0x28] sm:$0xff]
      %v336 = vld [vmem:[%s299 + $0x30] sm:$0xff]
      %v337 = vld [vmem:[%s299 + $0x38] sm:$0xff]
      %v338 = vld [vmem:[%s304] sm:$0xf]
      %v339 = vld [vmem:[%s304 + $0x4] sm:$0xf]
      %v340 = vld [vmem:[%s304 + $0x8] sm:$0xf]
      %v341 = vld [vmem:[%s304 + $0xc] sm:$0xf]
      %v342 = vld [vmem:[%s304 + $0x10] sm:$0xf]
      %v343 = vld [vmem:[%s304 + $0x14] sm:$0xf]
      %v344 = vld [vmem:[%s304 + $0x18] sm:$0xf]
      %v345 = vld [vmem:[%s304 + $0x1c] sm:$0xf]
      %v346 = vld [vmem:[%s304 + $0x20] sm:$0xf]
      %v347 = vld [vmem:[%s304 + $0x24] sm:$0xf]
      %v348 = vld [vmem:[%s304 + $0x28] sm:$0xf]
      %v349 = vld [vmem:[%s304 + $0x2c] sm:$0xf]
      %v350 = vld [vmem:[%s304 + $0x30] sm:$0xf]
      %v351 = vld [vmem:[%s304 + $0x34] sm:$0xf]
      %v352 = vld [vmem:[%s304 + $0x38] sm:$0xf]
      %v353 = vld [vmem:[%s304 + $0x3c] sm:$0xf]
      %v354 = vld [vmem:[%s304 + $0x40] sm:$0xf]
      %v355 = vld [vmem:[%s304 + $0x44] sm:$0xf]
      %v356 = vld [vmem:[%s304 + $0x48] sm:$0xf]
      %v357 = vld [vmem:[%s304 + $0x4c] sm:$0xf]
      %v358 = vld [vmem:[%s304 + $0x50] sm:$0xf]
      %v359 = vld [vmem:[%s304 + $0x54] sm:$0xf]
      %v360 = vld [vmem:[%s304 + $0x58] sm:$0xf]
      %v361 = vld [vmem:[%s304 + $0x5c] sm:$0xf]
      %v362 = vld [vmem:[%s304 + $0x60] sm:$0xf]
      %v363 = vld [vmem:[%s304 + $0x64] sm:$0xf]
      %v364 = vld [vmem:[%s304 + $0x68] sm:$0xf]
      %v365 = vld [vmem:[%s304 + $0x6c] sm:$0xf]
      %v366 = vld [vmem:[%s304 + $0x70] sm:$0xf]
      %v367 = vld [vmem:[%s304 + $0x74] sm:$0xf]
      %v368 = vld [vmem:[%s304 + $0x78] sm:$0xf]
      %v369 = vld [vmem:[%s304 + $0x7c] sm:$0xf]
      %v378 = vunpack.c.l.b16 %v330
      %v379 = vunpack.c.h.b16 %v330
      %v380 = vunpack.c.l.b16 %v331
      %v381 = vunpack.c.h.b16 %v331
      %v382 = vunpack.c.l.b16 %v332
      %v383 = vunpack.c.h.b16 %v332
      %v384 = vunpack.c.l.b16 %v333
      %v385 = vunpack.c.h.b16 %v333
      %v386 = vunpack.c.l.b16 %v334
      %v387 = vunpack.c.h.b16 %v334
      %v388 = vunpack.c.l.b16 %v335
      %v389 = vunpack.c.h.b16 %v335
      %v390 = vunpack.c.l.b16 %v336
      %v391 = vunpack.c.h.b16 %v336
      %v392 = vunpack.c.l.b16 %v337
      %v393 = vunpack.c.h.b16 %v337
      %v394 = vpack.c.b16 %v380, %v378
      %v395 = vpack.c.b16 %v381, %v379
      %v396 = vpack.c.b16 %v384, %v382
      %v397 = vpack.c.b16 %v385, %v383
      %v398 = vpack.c.b16 %v388, %v386
      %v399 = vpack.c.b16 %v389, %v387
      %v400 = vpack.c.b16 %v392, %v390
      %v401 = vpack.c.b16 %v393, %v391
      %v442 = vunpack.c.l.b16 %v338
      %v443 = vunpack.c.l.b16 %v339
      %v444 = vunpack.c.l.b16 %v340
      %v445 = vunpack.c.l.b16 %v341
      %v446 = vunpack.c.l.b16 %v342
      %v447 = vunpack.c.l.b16 %v343
      %v448 = vunpack.c.l.b16 %v344
      %v449 = vunpack.c.l.b16 %v345
      %v450 = vunpack.c.l.b16 %v346
      %v451 = vunpack.c.l.b16 %v347
      %v452 = vunpack.c.l.b16 %v348
      %v453 = vunpack.c.l.b16 %v349
      %v454 = vunpack.c.l.b16 %v350
      %v455 = vunpack.c.l.b16 %v351
      %v456 = vunpack.c.l.b16 %v352
      %v457 = vunpack.c.l.b16 %v353
      %v458 = vunpack.c.l.b16 %v354
      %v459 = vunpack.c.l.b16 %v355
      %v460 = vunpack.c.l.b16 %v356
      %v461 = vunpack.c.l.b16 %v357
      %v462 = vunpack.c.l.b16 %v358
      %v463 = vunpack.c.l.b16 %v359
      %v464 = vunpack.c.l.b16 %v360
      %v465 = vunpack.c.l.b16 %v361
      %v466 = vunpack.c.l.b16 %v362
      %v467 = vunpack.c.l.b16 %v363
      %v468 = vunpack.c.l.b16 %v364
      %v469 = vunpack.c.l.b16 %v365
      %v470 = vunpack.c.l.b16 %v366
      %v471 = vunpack.c.l.b16 %v367
      %v472 = vunpack.c.l.b16 %v368
      %v473 = vunpack.c.l.b16 %v369
      %v474 = vpack.c.b16 %v443, %v442
      %v475 = vpack.c.b16 %v445, %v444
      %v476 = vpack.c.b16 %v447, %v446
      %v477 = vpack.c.b16 %v449, %v448
      %v478 = vpack.c.b16 %v451, %v450
      %v479 = vpack.c.b16 %v453, %v452
      %v480 = vpack.c.b16 %v455, %v454
      %v481 = vpack.c.b16 %v457, %v456
      %v482 = vpack.c.b16 %v459, %v458
      %v483 = vpack.c.b16 %v461, %v460
      %v484 = vpack.c.b16 %v463, %v462
      %v485 = vpack.c.b16 %v465, %v464
      %v486 = vpack.c.b16 %v467, %v466
      %v487 = vpack.c.b16 %v469, %v468
      %v488 = vpack.c.b16 %v471, %v470
      %v489 = vpack.c.b16 %v473, %v472
      %506 = vmatprep.subr.bf16.mxu0 0
      %507 = vmatpush1.bf16.msra.mxu0 %v474
      %508 = vmatprep.subr.bf16.mxu0 0
      %509 = vmatpush1.bf16.msra.mxu0 %v475
      %510 = vmatprep.subr.bf16.mxu0 0
      %511 = vmatpush1.bf16.msra.mxu0 %v476
      %512 = vmatprep.subr.bf16.mxu0 0
      %513 = vmatpush1.bf16.msra.mxu0 %v477
      %514 = vmatprep.subr.bf16.mxu0 0
      %515 = vmatpush1.bf16.msra.mxu0 %v478
      %516 = vmatprep.subr.bf16.mxu0 0
      %517 = vmatpush1.bf16.msra.mxu0 %v479
      %518 = vmatprep.subr.bf16.mxu0 0
      %519 = vmatpush1.bf16.msra.mxu0 %v480
      %520 = vmatprep.subr.bf16.mxu0 0
      %521 = vmatpush1.bf16.msra.mxu0 %v481
      %522 = vmatprep.subr.bf16.mxu0 0
      %523 = vmatpush1.bf16.msra.mxu0 %v482
      %524 = vmatprep.subr.bf16.mxu0 0
      %525 = vmatpush1.bf16.msra.mxu0 %v483
      %526 = vmatprep.subr.bf16.mxu0 0
      %527 = vmatpush1.bf16.msra.mxu0 %v484
      %528 = vmatprep.subr.bf16.mxu0 0
      %529 = vmatpush1.bf16.msra.mxu0 %v485
      %530 = vmatprep.subr.bf16.mxu0 0
      %531 = vmatpush1.bf16.msra.mxu0 %v486
      %532 = vmatprep.subr.bf16.mxu0 0
      %533 = vmatpush1.bf16.msra.mxu0 %v487
      %534 = vmatprep.subr.bf16.mxu0 0
      %535 = vmatpush1.bf16.msra.mxu0 %v488
      %536 = vmatprep.subr.bf16.mxu0 0
      %537 = vmatpush1.bf16.msra.mxu0 %v489
      %538 = vmatprep.mubr.bf16.mxu0 %v395
      %539 = vmatmul.mubr.bf16.gmra.mrb[0].mxu0 %v394
      %v540 = vpop.f32.mrb[0].mxu0
      %v541 = vadd.f32 0.0, %v540
      %v542 = vpop.f32.mrb[0].mxu0
      %v543 = vpop.f32.mrb[0].mxu0
      %v544 = vadd.f32 0.0, %v543
      %v545 = vpop.f32.mrb[0].mxu0
      %546 = vmatprep.mubr.bf16.mxu0 %v397
      %547 = vmatmul.mubr.bf16.gmra.mrb[0].mxu0 %v396
      %v548 = vpop.f32.mrb[0].mxu0
      %v549 = vadd.f32 0.0, %v548
      %v550 = vpop.f32.mrb[0].mxu0
      %v551 = vpop.f32.mrb[0].mxu0
      %v552 = vadd.f32 0.0, %v551
      %v553 = vpop.f32.mrb[0].mxu0
      %554 = vmatprep.mubr.bf16.mxu0 %v399
      %555 = vmatmul.mubr.bf16.gmra.mrb[0].mxu0 %v398
      %v556 = vpop.f32.mrb[0].mxu0
      %v557 = vadd.f32 0.0, %v556
      %v558 = vpop.f32.mrb[0].mxu0
      %v559 = vpop.f32.mrb[0].mxu0
      %v560 = vadd.f32 0.0, %v559
      %v561 = vpop.f32.mrb[0].mxu0
      %562 = vmatprep.mubr.bf16.mxu0 %v401
      %563 = vmatmul.mubr.bf16.gmra.mrb[0].mxu0 %v400
      %v564 = vpop.f32.mrb[0].mxu0
      %v565 = vadd.f32 0.0, %v564
      %v566 = vpop.f32.mrb[0].mxu0
      %v567 = vpop.f32.mrb[0].mxu0
      %v568 = vadd.f32 0.0, %v567
      %v569 = vpop.f32.mrb[0].mxu0
      %570 = vdwg.mxu0
      %v571 = vld [vmem:[%s307] sm:$0x1]
      %v573 = vlaneseq
      %v574 = vshrl.u32 %v573, 7
      %v575 = vsub.s32 0, %v574
      %v576 = vrot.slane %v571, %v575
      %v578 = vmul.f32 %v541, %v576
      %v579 = vmul.f32 %v544, %v576
      %v580 = vmul.f32 %v549, %v576
      %v581 = vmul.f32 %v552, %v576
      %v582 = vmul.f32 %v557, %v576
      %v583 = vmul.f32 %v560, %v576
      %v584 = vmul.f32 %v565, %v576
      %v585 = vmul.f32 %v568, %v576
      %v586 = vld [vmem:[%s310] sm:$0x1]
      %v588 = vlaneseq
      %v589 = vshrl.u32 %v588, 7
      %v590 = vsub.s32 0, %v589
      %v591 = vrot.slane %v586, %v590
      %v593 = vadd.f32 %v578, %v591
      %v594 = vadd.f32 %v579, %v591
      %v595 = vadd.f32 %v580, %v591
      %v596 = vadd.f32 %v581, %v591
      %v597 = vadd.f32 %v582, %v591
      %v598 = vadd.f32 %v583, %v591
      %v599 = vadd.f32 %v584, %v591
      %v600 = vadd.f32 %v585, %v591
      %v601 = vld [vmem:[%s318] sm:$0xf]
      %v602 = vld [vmem:[%s318 + $0x4] sm:$0xf]
      %v603 = vld [vmem:[%s318 + $0x8] sm:$0xf]
      %v604 = vld [vmem:[%s318 + $0xc] sm:$0xf]
      %v605 = vld [vmem:[%s318 + $0x10] sm:$0xf]
      %v606 = vld [vmem:[%s318 + $0x14] sm:$0xf]
      %v607 = vld [vmem:[%s318 + $0x18] sm:$0xf]
      %v608 = vld [vmem:[%s318 + $0x1c] sm:$0xf]
      %v609 = vunpack.c.l.bf16 %v601
      %v610 = vunpack.c.l.bf16 %v602
      %v611 = vunpack.c.l.bf16 %v603
      %v612 = vunpack.c.l.bf16 %v604
      %v613 = vunpack.c.l.bf16 %v605
      %v614 = vunpack.c.l.bf16 %v606
      %v615 = vunpack.c.l.bf16 %v607
      %v616 = vunpack.c.l.bf16 %v608
      %v617 = vadd.f32 %v593, %v609
      %v618 = vadd.f32 %v594, %v610
      %v619 = vadd.f32 %v595, %v611
      %v620 = vadd.f32 %v596, %v612
      %v621 = vadd.f32 %v597, %v613
      %v622 = vadd.f32 %v598, %v614
      %v623 = vadd.f32 %v599, %v615
      %v624 = vadd.f32 %v600, %v616
      %v625 = vmax.f32 %v617, 0.0
      %v626 = vmax.f32 %v618, 0.0
      %v627 = vmax.f32 %v619, 0.0
      %v628 = vmax.f32 %v620, 0.0
      %v629 = vmax.f32 %v621, 0.0
      %v630 = vmax.f32 %v622, 0.0
      %v631 = vmax.f32 %v623, 0.0
      %v632 = vmax.f32 %v624, 0.0
      %v633 = vpack.c.bf16 %v626, %v625
      %v634 = vpack.c.bf16 %v628, %v627
      %v635 = vpack.c.bf16 %v630, %v629
      %v636 = vpack.c.bf16 %v632, %v631
      %v641 = vunpack.c.l.b16 %v633
      %v642 = vunpack.c.h.b16 %v633
      %v643 = vunpack.c.l.b16 %v634
      %v644 = vunpack.c.h.b16 %v634
      %v645 = vunpack.c.l.b16 %v635
      %v646 = vunpack.c.h.b16 %v635
      %v647 = vunpack.c.l.b16 %v636
      %v648 = vunpack.c.h.b16 %v636
      %v649 = vpack.c.b16 %v641, %v641
      %v650 = vpack.c.b16 %v642, %v642
      %v651 = vpack.c.b16 %v643, %v643
      %v652 = vpack.c.b16 %v644, %v644
      %v653 = vpack.c.b16 %v645, %v645
      %v654 = vpack.c.b16 %v646, %v646
      %v655 = vpack.c.b16 %v647, %v647
      %v656 = vpack.c.b16 %v648, %v648
      %665 = vst [vmem:[%s327] sm:$0xf] %v649
      %666 = vst [vmem:[%s327 + $0x4] sm:$0xf] %v650
      %667 = vst [vmem:[%s327 + $0x8] sm:$0xf] %v651
      %668 = vst [vmem:[%s327 + $0xc] sm:$0xf] %v652
      %669 = vst [vmem:[%s327 + $0x10] sm:$0xf] %v653
      %670 = vst [vmem:[%s327 + $0x14] sm:$0xf] %v654
      %671 = vst [vmem:[%s327 + $0x18] sm:$0xf] %v655
      %672 = vst [vmem:[%s327 + $0x1c] sm:$0xf] %v656
      %s673 = smul.u32 8, %s20
      %p674 = scmp.lt.s32.totalorder %s673, 15
      %s675 = scalar_select %p674, %s673, 15
      %p676 = scmp.lt.s32.totalorder %s21, 0
      %s677 = scalar_select %p676, %s21, 0
      %s678 = sadd.s32 %s677, %s675
      %s679 = smul.addr %s678, 4
      %s680 = scalar_lea.vmem %s5, %s679
      // Predicated region
      $region41: #{resnet_forward.25} parent=39 // pred_check
        %p681 = pneg %p180
      $region42: #{resnet_forward.25} parent=39 // pred_check_branch
        %683 = sbr.rel (%p681) target = $region44
      $region43: #{resnet_forward.25} parent=39 // pred_region
        %s684 = smul.u32 8, %s20
      $region44: #{resnet_forward.25} parent=39 // pred_fallthru
        _
    $region40: #{resnet_forward.25} parent=5 // pred_fallthru
      _
    %p685 = scmp.le.s32.totalorder 2, %s11
    // Predicated region
    $region45: #{resnet_forward.25} parent=5 // pred_check
      %p686 = pneg %p685
    $region46: #{resnet_forward.25} parent=5 // pred_check_branch
      %688 = sbr.rel (%p686) target = $region48
    $region47: #{resnet_forward.25} parent=5 // pred_region
      %s689 = ssub.s32 %s11, 2
      // Predicated region
      $region49: #{resnet_forward.25} parent=47 // pred_check
        %p690 = pneg %p186
      $region50: #{resnet_forward.25} parent=47 // pred_check_branch
        %692 = sbr.rel (%p690) target = $region52
      $region51: #{resnet_forward.25} parent=47 // pred_region
        %s693 = smul.u32 8, %s22
        %p694 = scmp.lt.s32.totalorder %s693, 15
        %s695 = scalar_select %p694, %s693, 15
        %p696 = scmp.lt.s32.totalorder %s23, 0
        %s697 = scalar_select %p696, %s23, 0
        %s698 = sadd.s32 %s697, %s695
        %s699 = smul.addr %s698, 4
        %s700 = scalar_lea.vmem %s5, %s699
      $region52: #{resnet_forward.25} parent=47 // pred_fallthru
        _
    $region48: #{resnet_forward.25} parent=5 // pred_fallthru
      _
  $region6: #{resnet_forward.25} parent=0 // loop_footer
    %s15 = sadd.s32 1, %s11
  $region7: #{resnet_forward.25} parent=0 // loop_footer_branch
    %10 = sbr.rel target = $region3
  $region8: #{resnet_forward.25} parent=0 // loop_exit
    _

// kernel: resnet_forward.29
$region0: #{resnet_forward.29}
  #allocation0 [shape = 'u32[]', space=smem, size = 0x4, offset = 0x4, fixed_abs, tag = 'smem constant byte address 0x4 - core index']
  #allocation1 [shape = 'u32[144,128]{1,0:T(1,128)}', space=vmem, size = 0x12000, scoped, tag = 'internal scratch']
  %s0 = inlined_call_operand.vmem [shape: bf16[32,256], index: 0, kind: input, shape index: {}]
  %s1 = inlined_call_operand.vmem [shape: bf16[256,128], index: 1, kind: input, shape index: {}]
  %s2 = inlined_call_operand.vmem [shape: f32[1,128], index: 2, kind: input, shape index: {}]
  %s3 = inlined_call_operand.vmem [shape: f32[1,128], index: 3, kind: input, shape index: {}]
  %s4 = inlined_call_operand.vmem [shape: bf16[32,128], index: 4, kind: output, shape index: {}]
  %s5 = sld [smem:[#allocation0]]
  $region26: #{resnet_forward.29} parent=0
    _
  %s7 = ssub.s32 1, %s5
  %s8 = scalar_select 0, %s7, %s5
  // Predicated region
  $region2: #{resnet_forward.29} parent=0 // pred_check
    _
  $region3: #{resnet_forward.29} parent=0 // pred_check_branch
    %10 = sbr.rel (0) target = $region5
  $region4: #{resnet_forward.29} parent=0 // pred_region
    _
  $region5: #{resnet_forward.29} parent=0 // pred_fallthru
    _
  // Predicated region
  $region6: #{resnet_forward.29} parent=0 // pred_check
    _
  $region7: #{resnet_forward.29} parent=0 // pred_check_branch
    %12 = sbr.rel (0) target = $region9
  $region8: #{resnet_forward.29} parent=0 // pred_region
    _
  $region9: #{resnet_forward.29} parent=0 // pred_fallthru
    _
  // Predicated region
  $region10: #{resnet_forward.29} parent=0 // pred_check
    _
  $region11: #{resnet_forward.29} parent=0 // pred_check_branch
    %14 = sbr.rel (0) target = $region13
  $region12: #{resnet_forward.29} parent=0 // pred_region
    _
  $region13: #{resnet_forward.29} parent=0 // pred_fallthru
    _
  // Predicated region
  $region14: #{resnet_forward.29} parent=0 // pred_check
    _
  $region15: #{resnet_forward.29} parent=0 // pred_check_branch
    %16 = sbr.rel (0) target = $region17
  $region16: #{resnet_forward.29} parent=0 // pred_region
    _
  $region17: #{resnet_forward.29} parent=0 // pred_fallthru
    _
  %v18 = vld [vmem:[%s0] sm:$0xff]
  %v19 = vld [vmem:[%s0 + $0x8] sm:$0xff]
  %v20 = vld [vmem:[%s0 + $0x10] sm:$0xff]
  %v21 = vld [vmem:[%s0 + $0x18] sm:$0xff]
  %v22 = vld [vmem:[%s1] sm:$0xf]
  %v23 = vld [vmem:[%s1 + $0x4] sm:$0xf]
  %v24 = vld [vmem:[%s1 + $0x8] sm:$0xf]
  %v25 = vld [vmem:[%s1 + $0xc] sm:$0xf]
  %v26 = vld [vmem:[%s1 + $0x10] sm:$0xf]
  %v27 = vld [vmem:[%s1 + $0x14] sm:$0xf]
  %v28 = vld [vmem:[%s1 + $0x18] sm:$0xf]
  %v29 = vld [vmem:[%s1 + $0x1c] sm:$0xf]
  %v30 = vld [vmem:[%s1 + $0x20] sm:$0xf]
  %v31 = vld [vmem:[%s1 + $0x24] sm:$0xf]
  %v32 = vld [vmem:[%s1 + $0x28] sm:$0xf]
  %v33 = vld [vmem:[%s1 + $0x2c] sm:$0xf]
  %v34 = vld [vmem:[%s1 + $0x30] sm:$0xf]
  %v35 = vld [vmem:[%s1 + $0x34] sm:$0xf]
  %v36 = vld [vmem:[%s1 + $0x38] sm:$0xf]
  %v37 = vld [vmem:[%s1 + $0x3c] sm:$0xf]
  %v38 = vld [vmem:[%s1 + $0x40] sm:$0xf]
  %v39 = vld [vmem:[%s1 + $0x44] sm:$0xf]
  %v40 = vld [vmem:[%s1 + $0x48] sm:$0xf]
  %v41 = vld [vmem:[%s1 + $0x4c] sm:$0xf]
  %v42 = vld [vmem:[%s1 + $0x50] sm:$0xf]
  %v43 = vld [vmem:[%s1 + $0x54] sm:$0xf]
  %v44 = vld [vmem:[%s1 + $0x58] sm:$0xf]
  %v45 = vld [vmem:[%s1 + $0x5c] sm:$0xf]
  %v46 = vld [vmem:[%s1 + $0x60] sm:$0xf]
  %v47 = vld [vmem:[%s1 + $0x64] sm:$0xf]
  %v48 = vld [vmem:[%s1 + $0x68] sm:$0xf]
  %v49 = vld [vmem:[%s1 + $0x6c] sm:$0xf]
  %v50 = vld [vmem:[%s1 + $0x70] sm:$0xf]
  %v51 = vld [vmem:[%s1 + $0x74] sm:$0xf]
  %v52 = vld [vmem:[%s1 + $0x78] sm:$0xf]
  %v53 = vld [vmem:[%s1 + $0x7c] sm:$0xf]
  %v58 = vunpack.c.l.b16 %v18
  %v59 = vunpack.c.h.b16 %v18
  %v60 = vunpack.c.l.b16 %v19
  %v61 = vunpack.c.h.b16 %v19
  %v62 = vunpack.c.l.b16 %v20
  %v63 = vunpack.c.h.b16 %v20
  %v64 = vunpack.c.l.b16 %v21
  %v65 = vunpack.c.h.b16 %v21
  %v66 = vpack.c.b16 %v60, %v58
  %v67 = vpack.c.b16 %v61, %v59
  %v68 = vpack.c.b16 %v64, %v62
  %v69 = vpack.c.b16 %v65, %v63
  %v106 = vunpack.c.l.b16 %v22
  %v107 = vunpack.c.l.b16 %v23
  %v108 = vunpack.c.l.b16 %v24
  %v109 = vunpack.c.l.b16 %v25
  %v110 = vunpack.c.l.b16 %v26
  %v111 = vunpack.c.l.b16 %v27
  %v112 = vunpack.c.l.b16 %v28
  %v113 = vunpack.c.l.b16 %v29
  %v114 = vunpack.c.l.b16 %v30
  %v115 = vunpack.c.l.b16 %v31
  %v116 = vunpack.c.l.b16 %v32
  %v117 = vunpack.c.l.b16 %v33
  %v118 = vunpack.c.l.b16 %v34
  %v119 = vunpack.c.l.b16 %v35
  %v120 = vunpack.c.l.b16 %v36
  %v121 = vunpack.c.l.b16 %v37
  %v122 = vunpack.c.l.b16 %v38
  %v123 = vunpack.c.l.b16 %v39
  %v124 = vunpack.c.l.b16 %v40
  %v125 = vunpack.c.l.b16 %v41
  %v126 = vunpack.c.l.b16 %v42
  %v127 = vunpack.c.l.b16 %v43
  %v128 = vunpack.c.l.b16 %v44
  %v129 = vunpack.c.l.b16 %v45
  %v130 = vunpack.c.l.b16 %v46
  %v131 = vunpack.c.l.b16 %v47
  %v132 = vunpack.c.l.b16 %v48
  %v133 = vunpack.c.l.b16 %v49
  %v134 = vunpack.c.l.b16 %v50
  %v135 = vunpack.c.l.b16 %v51
  %v136 = vunpack.c.l.b16 %v52
  %v137 = vunpack.c.l.b16 %v53
  %v138 = vpack.c.b16 %v107, %v106
  %v139 = vpack.c.b16 %v109, %v108
  %v140 = vpack.c.b16 %v111, %v110
  %v141 = vpack.c.b16 %v113, %v112
  %v142 = vpack.c.b16 %v115, %v114
  %v143 = vpack.c.b16 %v117, %v116
  %v144 = vpack.c.b16 %v119, %v118
  %v145 = vpack.c.b16 %v121, %v120
  %v146 = vpack.c.b16 %v123, %v122
  %v147 = vpack.c.b16 %v125, %v124
  %v148 = vpack.c.b16 %v127, %v126
  %v149 = vpack.c.b16 %v129, %v128
  %v150 = vpack.c.b16 %v131, %v130
  %v151 = vpack.c.b16 %v133, %v132
  %v152 = vpack.c.b16 %v135, %v134
  %v153 = vpack.c.b16 %v137, %v136
  %170 = vmatprep.subr.bf16.mxu0 0
  %171 = vmatpush1.bf16.msra.mxu0 %v138
  %172 = vmatprep.subr.bf16.mxu0 0
  %173 = vmatpush1.bf16.msra.mxu0 %v139
  %174 = vmatprep.subr.bf16.mxu0 0
  %175 = vmatpush1.bf16.msra.mxu0 %v140
  %176 = vmatprep.subr.bf16.mxu0 0
  %177 = vmatpush1.bf16.msra.mxu0 %v141
  %178 = vmatprep.subr.bf16.mxu0 0
  %179 = vmatpush1.bf16.msra.mxu0 %v142
  %180 = vmatprep.subr.bf16.mxu0 0
  %181 = vmatpush1.bf16.msra.mxu0 %v143
  %182 = vmatprep.subr.bf16.mxu0 0
  %183 = vmatpush1.bf16.msra.mxu0 %v144
  %184 = vmatprep.subr.bf16.mxu0 0
  %185 = vmatpush1.bf16.msra.mxu0 %v145
  %186 = vmatprep.subr.bf16.mxu0 0
  %187 = vmatpush1.bf16.msra.mxu0 %v146
  %188 = vmatprep.subr.bf16.mxu0 0
  %189 = vmatpush1.bf16.msra.mxu0 %v147
  %190 = vmatprep.subr.bf16.mxu0 0
  %191 = vmatpush1.bf16.msra.mxu0 %v148
  %192 = vmatprep.subr.bf16.mxu0 0
  %193 = vmatpush1.bf16.msra.mxu0 %v149
  %194 = vmatprep.subr.bf16.mxu0 0
  %195 = vmatpush1.bf16.msra.mxu0 %v150
  %196 = vmatprep.subr.bf16.mxu0 0
  %197 = vmatpush1.bf16.msra.mxu0 %v151
  %198 = vmatprep.subr.bf16.mxu0 0
  %199 = vmatpush1.bf16.msra.mxu0 %v152
  %200 = vmatprep.subr.bf16.mxu0 0
  %201 = vmatpush1.bf16.msra.mxu0 %v153
  %202 = vmatprep.mubr.bf16.mxu0 %v67
  %203 = vmatmul.mubr.bf16.gmra.mrb[0].mxu0 %v66
  %v204 = vpop.f32.mrb[0].mxu0
  %v205 = vadd.f32 0.0, %v204
  %v206 = vpop.f32.mrb[0].mxu0
  %v207 = vpop.f32.mrb[0].mxu0
  %v208 = vadd.f32 0.0, %v207
  %v209 = vpop.f32.mrb[0].mxu0
  %210 = vmatprep.mubr.bf16.mxu0 %v69
  %211 = vmatmul.mubr.bf16.gmra.mrb[0].mxu0 %v68
  %v212 = vpop.f32.mrb[0].mxu0
  %v213 = vadd.f32 0.0, %v212
  %v214 = vpop.f32.mrb[0].mxu0
  %v215 = vpop.f32.mrb[0].mxu0
  %v216 = vadd.f32 0.0, %v215
  %v217 = vpop.f32.mrb[0].mxu0
  %218 = vdwg.mxu0
  %v219 = vld [vmem:[%s2] sm:$0x1]
  %v221 = vlaneseq
  %v222 = vshrl.u32 %v221, 7
  %v223 = vsub.s32 0, %v222
  %v224 = vrot.slane %v219, %v223
  %v226 = vmul.f32 %v205, %v224
  %v227 = vmul.f32 %v208, %v224
  %v228 = vmul.f32 %v213, %v224
  %v229 = vmul.f32 %v216, %v224
  %v230 = vld [vmem:[%s3] sm:$0x1]
  %v232 = vlaneseq
  %v233 = vshrl.u32 %v232, 7
  %v234 = vsub.s32 0, %v233
  %v235 = vrot.slane %v230, %v234
  %v237 = vadd.f32 %v226, %v235
  %v238 = vadd.f32 %v227, %v235
  %v239 = vadd.f32 %v228, %v235
  %v240 = vadd.f32 %v229, %v235
  %v241 = vmax.f32 %v237, 0.0
  %v242 = vmax.f32 %v238, 0.0
  %v243 = vmax.f32 %v239, 0.0
  %v244 = vmax.f32 %v240, 0.0
  %v245 = vpack.c.bf16 %v242, %v241
  %v246 = vpack.c.bf16 %v244, %v243
  %v249 = vunpack.c.l.b16 %v245
  %v250 = vunpack.c.h.b16 %v245
  %v251 = vunpack.c.l.b16 %v246
  %v252 = vunpack.c.h.b16 %v246
  %v253 = vpack.c.b16 %v249, %v249
  %v254 = vpack.c.b16 %v250, %v250
  %v255 = vpack.c.b16 %v251, %v251
  %v256 = vpack.c.b16 %v252, %v252
  %261 = vst [vmem:[%s4] sm:$0xf] %v253
  %262 = vst [vmem:[%s4 + $0x4] sm:$0xf] %v254
  %263 = vst [vmem:[%s4 + $0x8] sm:$0xf] %v255
  %264 = vst [vmem:[%s4 + $0xc] sm:$0xf] %v256
  // Predicated region
  $region18: #{resnet_forward.29} parent=0 // pred_check
    _
  $region19: #{resnet_forward.29} parent=0 // pred_check_branch
    %266 = sbr.rel (0) target = $region21
  $region20: #{resnet_forward.29} parent=0 // pred_region
    _
  $region21: #{resnet_forward.29} parent=0 // pred_fallthru
    _
  // Predicated region
  $region22: #{resnet_forward.29} parent=0 // pred_check
    _
  $region23: #{resnet_forward.29} parent=0 // pred_check_branch
    %268 = sbr.rel (0) target = $region25
  $region24: #{resnet_forward.29} parent=0 // pred_region
    _
  $region25: #{resnet_forward.29} parent=0 // pred_fallthru
    _

// kernel: resnet_forward.28
$region0: #{resnet_forward.28}
  #allocation0 [shape = 'u32[]', space=smem, size = 0x4, offset = 0x4, fixed_abs, tag = 'smem constant byte address 0x4 - core index']
  #allocation1 [shape = 'u32[144,128]{1,0:T(1,128)}', space=vmem, size = 0x12000, scoped, tag = 'internal scratch']
  %s0 = inlined_call_operand.vmem [shape: bf16[32,128], index: 0, kind: input, shape index: {}]
  %s1 = inlined_call_operand.vmem [shape: bf16[128,128], index: 1, kind: input, shape index: {}]
  %s2 = inlined_call_operand.vmem [shape: f32[1,128], index: 2, kind: input, shape index: {}]
  %s3 = inlined_call_operand.vmem [shape: f32[1,128], index: 3, kind: input, shape index: {}]
  %s4 = inlined_call_operand.vmem [shape: bf16[32,128], index: 4, kind: output, shape index: {}]
  %s5 = sld [smem:[#allocation0]]
  $region26: #{resnet_forward.28} parent=0
    _
  %s7 = ssub.s32 1, %s5
  %s8 = scalar_select 0, %s7, %s5
  // Predicated region
  $region2: #{resnet_forward.28} parent=0 // pred_check
    _
  $region3: #{resnet_forward.28} parent=0 // pred_check_branch
    %10 = sbr.rel (0) target = $region5
  $region4: #{resnet_forward.28} parent=0 // pred_region
    _
  $region5: #{resnet_forward.28} parent=0 // pred_fallthru
    _
  // Predicated region
  $region6: #{resnet_forward.28} parent=0 // pred_check
    _
  $region7: #{resnet_forward.28} parent=0 // pred_check_branch
    %12 = sbr.rel (0) target = $region9
  $region8: #{resnet_forward.28} parent=0 // pred_region
    _
  $region9: #{resnet_forward.28} parent=0 // pred_fallthru
    _
  // Predicated region
  $region10: #{resnet_forward.28} parent=0 // pred_check
    _
  $region11: #{resnet_forward.28} parent=0 // pred_check_branch
    %14 = sbr.rel (0) target = $region13
  $region12: #{resnet_forward.28} parent=0 // pred_region
    _
  $region13: #{resnet_forward.28} parent=0 // pred_fallthru
    _
  // Predicated region
  $region14: #{resnet_forward.28} parent=0 // pred_check
    _
  $region15: #{resnet_forward.28} parent=0 // pred_check_branch
    %16 = sbr.rel (0) target = $region17
  $region16: #{resnet_forward.28} parent=0 // pred_region
    _
  $region17: #{resnet_forward.28} parent=0 // pred_fallthru
    _
  %v18 = vld [vmem:[%s0] sm:$0xf]
  %v19 = vld [vmem:[%s0 + $0x4] sm:$0xf]
  %v20 = vld [vmem:[%s0 + $0x8] sm:$0xf]
  %v21 = vld [vmem:[%s0 + $0xc] sm:$0xf]
  %v22 = vld [vmem:[%s1] sm:$0xf]
  %v23 = vld [vmem:[%s1 + $0x4] sm:$0xf]
  %v24 = vld [vmem:[%s1 + $0x8] sm:$0xf]
  %v25 = vld [vmem:[%s1 + $0xc] sm:$0xf]
  %v26 = vld [vmem:[%s1 + $0x10] sm:$0xf]
  %v27 = vld [vmem:[%s1 + $0x14] sm:$0xf]
  %v28 = vld [vmem:[%s1 + $0x18] sm:$0xf]
  %v29 = vld [vmem:[%s1 + $0x1c] sm:$0xf]
  %v30 = vld [vmem:[%s1 + $0x20] sm:$0xf]
  %v31 = vld [vmem:[%s1 + $0x24] sm:$0xf]
  %v32 = vld [vmem:[%s1 + $0x28] sm:$0xf]
  %v33 = vld [vmem:[%s1 + $0x2c] sm:$0xf]
  %v34 = vld [vmem:[%s1 + $0x30] sm:$0xf]
  %v35 = vld [vmem:[%s1 + $0x34] sm:$0xf]
  %v36 = vld [vmem:[%s1 + $0x38] sm:$0xf]
  %v37 = vld [vmem:[%s1 + $0x3c] sm:$0xf]
  %v42 = vunpack.c.l.b16 %v18
  %v43 = vunpack.c.l.b16 %v19
  %v44 = vunpack.c.l.b16 %v20
  %v45 = vunpack.c.l.b16 %v21
  %v46 = vpack.c.b16 %v43, %v42
  %v47 = vpack.c.b16 %v45, %v44
  %v66 = vunpack.c.l.b16 %v22
  %v67 = vunpack.c.l.b16 %v23
  %v68 = vunpack.c.l.b16 %v24
  %v69 = vunpack.c.l.b16 %v25
  %v70 = vunpack.c.l.b16 %v26
  %v71 = vunpack.c.l.b16 %v27
  %v72 = vunpack.c.l.b16 %v28
  %v73 = vunpack.c.l.b16 %v29
  %v74 = vunpack.c.l.b16 %v30
  %v75 = vunpack.c.l.b16 %v31
  %v76 = vunpack.c.l.b16 %v32
  %v77 = vunpack.c.l.b16 %v33
  %v78 = vunpack.c.l.b16 %v34
  %v79 = vunpack.c.l.b16 %v35
  %v80 = vunpack.c.l.b16 %v36
  %v81 = vunpack.c.l.b16 %v37
  %v82 = vpack.c.b16 %v67, %v66
  %v83 = vpack.c.b16 %v69, %v68
  %v84 = vpack.c.b16 %v71, %v70
  %v85 = vpack.c.b16 %v73, %v72
  %v86 = vpack.c.b16 %v75, %v74
  %v87 = vpack.c.b16 %v77, %v76
  %v88 = vpack.c.b16 %v79, %v78
  %v89 = vpack.c.b16 %v81, %v80
  %98 = vmatprep.subr.bf16.mxu0 0
  %99 = vmatpush1.bf16.msra.mxu0 %v82
  %100 = vmatprep.subr.bf16.mxu0 0
  %101 = vmatpush1.bf16.msra.mxu0 %v83
  %102 = vmatprep.subr.bf16.mxu0 0
  %103 = vmatpush1.bf16.msra.mxu0 %v84
  %104 = vmatprep.subr.bf16.mxu0 0
  %105 = vmatpush1.bf16.msra.mxu0 %v85
  %106 = vmatprep.subr.bf16.mxu0 0
  %107 = vmatpush1.bf16.msra.mxu0 %v86
  %108 = vmatprep.subr.bf16.mxu0 0
  %109 = vmatpush1.bf16.msra.mxu0 %v87
  %110 = vmatprep.subr.bf16.mxu0 0
  %111 = vmatpush1.bf16.msra.mxu0 %v88
  %112 = vmatprep.subr.bf16.mxu0 0
  %113 = vmatpush1.bf16.msra.mxu0 %v89
  %114 = vmatprep.subr.bf16.mxu0 0
  %115 = vmatpush1.bf16.msra.mxu0 0
  %116 = vmatprep.subr.bf16.mxu0 0
  %117 = vmatpush1.bf16.msra.mxu0 0
  %118 = vmatprep.subr.bf16.mxu0 0
  %119 = vmatpush1.bf16.msra.mxu0 0
  %120 = vmatprep.subr.bf16.mxu0 0
  %121 = vmatpush1.bf16.msra.mxu0 0
  %122 = vmatprep.subr.bf16.mxu0 0
  %123 = vmatpush1.bf16.msra.mxu0 0
  %124 = vmatprep.subr.bf16.mxu0 0
  %125 = vmatpush1.bf16.msra.mxu0 0
  %126 = vmatprep.subr.bf16.mxu0 0
  %127 = vmatpush1.bf16.msra.mxu0 0
  %128 = vmatprep.subr.bf16.mxu0 0
  %129 = vmatpush1.bf16.msra.mxu0 0
  %130 = vmatprep.mubr.bf16.mxu0 0
  %131 = vmatmul.mubr.bf16.gmra.mrb[0].mxu0 %v46
  %v132 = vpop.f32.mrb[0].mxu0
  %v133 = vadd.f32 0.0, %v132
  %v134 = vpop.f32.mrb[0].mxu0
  %v135 = vpop.f32.mrb[0].mxu0
  %v136 = vadd.f32 0.0, %v135
  %v137 = vpop.f32.mrb[0].mxu0
  %138 = vmatprep.mubr.bf16.mxu0 0
  %139 = vmatmul.mubr.bf16.gmra.mrb[0].mxu0 %v47
  %v140 = vpop.f32.mrb[0].mxu0
  %v141 = vadd.f32 0.0, %v140
  %v142 = vpop.f32.mrb[0].mxu0
  %v143 = vpop.f32.mrb[0].mxu0
  %v144 = vadd.f32 0.0, %v143
  %v145 = vpop.f32.mrb[0].mxu0
  %146 = vdwg.mxu0
  %v147 = vld [vmem:[%s2] sm:$0x1]
  %v149 = vlaneseq
  %v150 = vshrl.u32 %v149, 7
  %v151 = vsub.s32 0, %v150
  %v152 = vrot.slane %v147, %v151
  %v154 = vmul.f32 %v133, %v152
  %v155 = vmul.f32 %v136, %v152
  %v156 = vmul.f32 %v141, %v152
  %v157 = vmul.f32 %v144, %v152
  %v158 = vld [vmem:[%s3] sm:$0x1]
  %v160 = vlaneseq
  %v161 = vshrl.u32 %v160, 7
  %v162 = vsub.s32 0, %v161
  %v163 = vrot.slane %v158, %v162
  %v165 = vadd.f32 %v154, %v163
  %v166 = vadd.f32 %v155, %v163
  %v167 = vadd.f32 %v156, %v163
  %v168 = vadd.f32 %v157, %v163
  %v169 = vpack.c.bf16 %v166, %v165
  %v170 = vpack.c.bf16 %v168, %v167
  %v173 = vunpack.c.l.b16 %v169
  %v174 = vunpack.c.h.b16 %v169
  %v175 = vunpack.c.l.b16 %v170
  %v176 = vunpack.c.h.b16 %v170
  %v177 = vpack.c.b16 %v173, %v173
  %v178 = vpack.c.b16 %v174, %v174
  %v179 = vpack.c.b16 %v175, %v175
  %v180 = vpack.c.b16 %v176, %v176
  %185 = vst [vmem:[%s4] sm:$0xf] %v177
  %186 = vst [vmem:[%s4 + $0x4] sm:$0xf] %v178
  %187 = vst [vmem:[%s4 + $0x8] sm:$0xf] %v179
  %188 = vst [vmem:[%s4 + $0xc] sm:$0xf] %v180
  // Predicated region
  $region18: #{resnet_forward.28} parent=0 // pred_check
    _
  $region19: #{resnet_forward.28} parent=0 // pred_check_branch
    %190 = sbr.rel (0) target = $region21
  $region20: #{resnet_forward.28} parent=0 // pred_region
    _
  $region21: #{resnet_forward.28} parent=0 // pred_fallthru
    _
  // Predicated region
  $region22: #{resnet_forward.28} parent=0 // pred_check
    _
  $region23: #{resnet_forward.28} parent=0 // pred_check_branch
    %192 = sbr.rel (0) target = $region25
  $region24: #{resnet_forward.28} parent=0 // pred_region
    _
  $region25: #{resnet_forward.28} parent=0 // pred_fallthru
    _

// kernel: resnet_forward.30
$region0: #{resnet_forward.30}
  #allocation0 [shape = 'u32[]', space=smem, size = 0x4, offset = 0x4, fixed_abs, tag = 'smem constant byte address 0x4 - core index']
  #allocation1 [shape = 'u32[144,128]{1,0:T(1,128)}', space=vmem, size = 0x12000, scoped, tag = 'internal scratch']
  %s0 = inlined_call_operand.vmem [shape: bf16[32,384], index: 0, kind: input, shape index: {}]
  %s1 = inlined_call_operand.vmem [shape: bf16[384,128], index: 1, kind: input, shape index: {}]
  %s2 = inlined_call_operand.vmem [shape: f32[1,128], index: 2, kind: input, shape index: {}]
  %s3 = inlined_call_operand.vmem [shape: f32[1,128], index: 3, kind: input, shape index: {}]
  %s4 = inlined_call_operand.vmem [shape: bf16[32,128], index: 4, kind: input, shape index: {}]
  %s5 = inlined_call_operand.vmem [shape: bf16[32,128], index: 5, kind: output, shape index: {}]
  %s6 = sld [smem:[#allocation0]]
  $region30: #{resnet_forward.30} parent=0
    _
  %s8 = ssub.s32 1, %s6
  %s9 = scalar_select 0, %s8, %s6
  // Predicated region
  $region2: #{resnet_forward.30} parent=0 // pred_check
    _
  $region3: #{resnet_forward.30} parent=0 // pred_check_branch
    %11 = sbr.rel (0) target = $region5
  $region4: #{resnet_forward.30} parent=0 // pred_region
    _
  $region5: #{resnet_forward.30} parent=0 // pred_fallthru
    _
  // Predicated region
  $region6: #{resnet_forward.30} parent=0 // pred_check
    _
  $region7: #{resnet_forward.30} parent=0 // pred_check_branch
    %13 = sbr.rel (0) target = $region9
  $region8: #{resnet_forward.30} parent=0 // pred_region
    _
  $region9: #{resnet_forward.30} parent=0 // pred_fallthru
    _
  // Predicated region
  $region10: #{resnet_forward.30} parent=0 // pred_check
    _
  $region11: #{resnet_forward.30} parent=0 // pred_check_branch
    %15 = sbr.rel (0) target = $region13
  $region12: #{resnet_forward.30} parent=0 // pred_region
    _
  $region13: #{resnet_forward.30} parent=0 // pred_fallthru
    _
  // Predicated region
  $region14: #{resnet_forward.30} parent=0 // pred_check
    _
  $region15: #{resnet_forward.30} parent=0 // pred_check_branch
    %17 = sbr.rel (0) target = $region17
  $region16: #{resnet_forward.30} parent=0 // pred_region
    _
  $region17: #{resnet_forward.30} parent=0 // pred_fallthru
    _
  // Predicated region
  $region18: #{resnet_forward.30} parent=0 // pred_check
    _
  $region19: #{resnet_forward.30} parent=0 // pred_check_branch
    %19 = sbr.rel (0) target = $region21
  $region20: #{resnet_forward.30} parent=0 // pred_region
    _
  $region21: #{resnet_forward.30} parent=0 // pred_fallthru
    _
  %v21 = vld [vmem:[%s0] sm:$0xff]
  %v22 = vld [vmem:[%s0 + $0x8] sm:$0xf]
  %v23 = vld [vmem:[%s0 + $0xc] sm:$0xff]
  %v24 = vld [vmem:[%s0 + $0x14] sm:$0xf]
  %v25 = vld [vmem:[%s0 + $0x18] sm:$0xff]
  %v26 = vld [vmem:[%s0 + $0x20] sm:$0xf]
  %v27 = vld [vmem:[%s0 + $0x24] sm:$0xff]
  %v28 = vld [vmem:[%s0 + $0x2c] sm:$0xf]
  %v29 = vld [vmem:[%s1] sm:$0xf]
  %v30 = vld [vmem:[%s1 + $0x4] sm:$0xf]
  %v31 = vld [vmem:[%s1 + $0x8] sm:$0xf]
  %v32 = vld [vmem:[%s1 + $0xc] sm:$0xf]
  %v33 = vld [vmem:[%s1 + $0x10] sm:$0xf]
  %v34 = vld [vmem:[%s1 + $0x14] sm:$0xf]
  %v35 = vld [vmem:[%s1 + $0x18] sm:$0xf]
  %v36 = vld [vmem:[%s1 + $0x1c] sm:$0xf]
  %v37 = vld [vmem:[%s1 + $0x20] sm:$0xf]
  %v38 = vld [vmem:[%s1 + $0x24] sm:$0xf]
  %v39 = vld [vmem:[%s1 + $0x28] sm:$0xf]
  %v40 = vld [vmem:[%s1 + $0x2c] sm:$0xf]
  %v41 = vld [vmem:[%s1 + $0x30] sm:$0xf]
  %v42 = vld [vmem:[%s1 + $0x34] sm:$0xf]
  %v43 = vld [vmem:[%s1 + $0x38] sm:$0xf]
  %v44 = vld [vmem:[%s1 + $0x3c] sm:$0xf]
  %v45 = vld [vmem:[%s1 + $0x40] sm:$0xf]
  %v46 = vld [vmem:[%s1 + $0x44] sm:$0xf]
  %v47 = vld [vmem:[%s1 + $0x48] sm:$0xf]
  %v48 = vld [vmem:[%s1 + $0x4c] sm:$0xf]
  %v49 = vld [vmem:[%s1 + $0x50] sm:$0xf]
  %v50 = vld [vmem:[%s1 + $0x54] sm:$0xf]
  %v51 = vld [vmem:[%s1 + $0x58] sm:$0xf]
  %v52 = vld [vmem:[%s1 + $0x5c] sm:$0xf]
  %v53 = vld [vmem:[%s1 + $0x60] sm:$0xf]
  %v54 = vld [vmem:[%s1 + $0x64] sm:$0xf]
  %v55 = vld [vmem:[%s1 + $0x68] sm:$0xf]
  %v56 = vld [vmem:[%s1 + $0x6c] sm:$0xf]
  %v57 = vld [vmem:[%s1 + $0x70] sm:$0xf]
  %v58 = vld [vmem:[%s1 + $0x74] sm:$0xf]
  %v59 = vld [vmem:[%s1 + $0x78] sm:$0xf]
  %v60 = vld [vmem:[%s1 + $0x7c] sm:$0xf]
  %v61 = vld [vmem:[%s1 + $0x80] sm:$0xf]
  %v62 = vld [vmem:[%s1 + $0x84] sm:$0xf]
  %v63 = vld [vmem:[%s1 + $0x88] sm:$0xf]
  %v64 = vld [vmem:[%s1 + $0x8c] sm:$0xf]
  %v65 = vld [vmem:[%s1 + $0x90] sm:$0xf]
  %v66 = vld [vmem:[%s1 + $0x94] sm:$0xf]
  %v67 = vld [vmem:[%s1 + $0x98] sm:$0xf]
  %v68 = vld [vmem:[%s1 + $0x9c] sm:$0xf]
  %v69 = vld [vmem:[%s1 + $0xa0] sm:$0xf]
  %v70 = vld [vmem:[%s1 + $0xa4] sm:$0xf]
  %v71 = vld [vmem:[%s1 + $0xa8] sm:$0xf]
  %v72 = vld [vmem:[%s1 + $0xac] sm:$0xf]
  %v73 = vld [vmem:[%s1 + $0xb0] sm:$0xf]
  %v74 = vld [vmem:[%s1 + $0xb4] sm:$0xf]
  %v75 = vld [vmem:[%s1 + $0xb8] sm:$0xf]
  %v76 = vld [vmem:[%s1 + $0xbc] sm:$0xf]
  %v85 = vunpack.c.l.b16 %v21
  %v86 = vunpack.c.h.b16 %v21
  %v87 = vunpack.c.l.b16 %v22
  %v88 = vunpack.c.l.b16 %v23
  %v89 = vunpack.c.h.b16 %v23
  %v90 = vunpack.c.l.b16 %v24
  %v91 = vunpack.c.l.b16 %v25
  %v92 = vunpack.c.h.b16 %v25
  %v93 = vunpack.c.l.b16 %v26
  %v94 = vunpack.c.l.b16 %v27
  %v95 = vunpack.c.h.b16 %v27
  %v96 = vunpack.c.l.b16 %v28
  %v97 = vpack.c.b16 %v88, %v85
  %v98 = vpack.c.b16 %v89, %v86
  %v99 = vpack.c.b16 %v90, %v87
  %v100 = vpack.c.b16 %v94, %v91
  %v101 = vpack.c.b16 %v95, %v92
  %v102 = vpack.c.b16 %v96, %v93
  %v157 = vunpack.c.l.b16 %v29
  %v158 = vunpack.c.l.b16 %v30
  %v159 = vunpack.c.l.b16 %v31
  %v160 = vunpack.c.l.b16 %v32
  %v161 = vunpack.c.l.b16 %v33
  %v162 = vunpack.c.l.b16 %v34
  %v163 = vunpack.c.l.b16 %v35
  %v164 = vunpack.c.l.b16 %v36
  %v165 = vunpack.c.l.b16 %v37
  %v166 = vunpack.c.l.b16 %v38
  %v167 = vunpack.c.l.b16 %v39
  %v168 = vunpack.c.l.b16 %v40
  %v169 = vunpack.c.l.b16 %v41
  %v170 = vunpack.c.l.b16 %v42
  %v171 = vunpack.c.l.b16 %v43
  %v172 = vunpack.c.l.b16 %v44
  %v173 = vunpack.c.l.b16 %v45
  %v174 = vunpack.c.l.b16 %v46
  %v175 = vunpack.c.l.b16 %v47
  %v176 = vunpack.c.l.b16 %v48
  %v177 = vunpack.c.l.b16 %v49
  %v178 = vunpack.c.l.b16 %v50
  %v179 = vunpack.c.l.b16 %v51
  %v180 = vunpack.c.l.b16 %v52
  %v181 = vunpack.c.l.b16 %v53
  %v182 = vunpack.c.l.b16 %v54
  %v183 = vunpack.c.l.b16 %v55
  %v184 = vunpack.c.l.b16 %v56
  %v185 = vunpack.c.l.b16 %v57
  %v186 = vunpack.c.l.b16 %v58
  %v187 = vunpack.c.l.b16 %v59
  %v188 = vunpack.c.l.b16 %v60
  %v189 = vunpack.c.l.b16 %v61
  %v190 = vunpack.c.l.b16 %v62
  %v191 = vunpack.c.l.b16 %v63
  %v192 = vunpack.c.l.b16 %v64
  %v193 = vunpack.c.l.b16 %v65
  %v194 = vunpack.c.l.b16 %v66
  %v195 = vunpack.c.l.b16 %v67
  %v196 = vunpack.c.l.b16 %v68
  %v197 = vunpack.c.l.b16 %v69
  %v198 = vunpack.c.l.b16 %v70
  %v199 = vunpack.c.l.b16 %v71
  %v200 = vunpack.c.l.b16 %v72
  %v201 = vunpack.c.l.b16 %v73
  %v202 = vunpack.c.l.b16 %v74
  %v203 = vunpack.c.l.b16 %v75
  %v204 = vunpack.c.l.b16 %v76
  %v205 = vpack.c.b16 %v158, %v157
  %v206 = vpack.c.b16 %v160, %v159
  %v207 = vpack.c.b16 %v162, %v161
  %v208 = vpack.c.b16 %v164, %v163
  %v209 = vpack.c.b16 %v166, %v165
  %v210 = vpack.c.b16 %v168, %v167
  %v211 = vpack.c.b16 %v170, %v169
  %v212 = vpack.c.b16 %v172, %v171
  %v213 = vpack.c.b16 %v174, %v173
  %v214 = vpack.c.b16 %v176, %v175
  %v215 = vpack.c.b16 %v178, %v177
  %v216 = vpack.c.b16 %v180, %v179
  %v217 = vpack.c.b16 %v182, %v181
  %v218 = vpack.c.b16 %v184, %v183
  %v219 = vpack.c.b16 %v186, %v185
  %v220 = vpack.c.b16 %v188, %v187
  %v221 = vpack.c.b16 %v190, %v189
  %v222 = vpack.c.b16 %v192, %v191
  %v223 = vpack.c.b16 %v194, %v193
  %v224 = vpack.c.b16 %v196, %v195
  %v225 = vpack.c.b16 %v198, %v197
  %v226 = vpack.c.b16 %v200, %v199
  %v227 = vpack.c.b16 %v202, %v201
  %v228 = vpack.c.b16 %v204, %v203
  %253 = vmatprep.subr.bf16.mxu0 0
  %254 = vmatpush1.bf16.msra.mxu0 %v205
  %255 = vmatprep.subr.bf16.mxu0 0
  %256 = vmatpush1.bf16.msra.mxu0 %v206
  %257 = vmatprep.subr.bf16.mxu0 0
  %258 = vmatpush1.bf16.msra.mxu0 %v207
  %259 = vmatprep.subr.bf16.mxu0 0
  %260 = vmatpush1.bf16.msra.mxu0 %v208
  %261 = vmatprep.subr.bf16.mxu0 0
  %262 = vmatpush1.bf16.msra.mxu0 %v209
  %263 = vmatprep.subr.bf16.mxu0 0
  %264 = vmatpush1.bf16.msra.mxu0 %v210
  %265 = vmatprep.subr.bf16.mxu0 0
  %266 = vmatpush1.bf16.msra.mxu0 %v211
  %267 = vmatprep.subr.bf16.mxu0 0
  %268 = vmatpush1.bf16.msra.mxu0 %v212
  %269 = vmatprep.subr.bf16.mxu0 0
  %270 = vmatpush1.bf16.msra.mxu0 %v213
  %271 = vmatprep.subr.bf16.mxu0 0
  %272 = vmatpush1.bf16.msra.mxu0 %v214
  %273 = vmatprep.subr.bf16.mxu0 0
  %274 = vmatpush1.bf16.msra.mxu0 %v215
  %275 = vmatprep.subr.bf16.mxu0 0
  %276 = vmatpush1.bf16.msra.mxu0 %v216
  %277 = vmatprep.subr.bf16.mxu0 0
  %278 = vmatpush1.bf16.msra.mxu0 %v217
  %279 = vmatprep.subr.bf16.mxu0 0
  %280 = vmatpush1.bf16.msra.mxu0 %v218
  %281 = vmatprep.subr.bf16.mxu0 0
  %282 = vmatpush1.bf16.msra.mxu0 %v219
  %283 = vmatprep.subr.bf16.mxu0 0
  %284 = vmatpush1.bf16.msra.mxu0 %v220
  %285 = vmatprep.mubr.bf16.mxu0 %v98
  %286 = vmatmul.mubr.bf16.gmra.mrb[0].mxu0 %v97
  %v287 = vpop.f32.mrb[0].mxu0
  %v288 = vadd.f32 0.0, %v287
  %v289 = vpop.f32.mrb[0].mxu0
  %v290 = vpop.f32.mrb[0].mxu0
  %v291 = vadd.f32 0.0, %v290
  %v292 = vpop.f32.mrb[0].mxu0
  %293 = vmatprep.mubr.bf16.mxu0 %v101
  %294 = vmatmul.mubr.bf16.gmra.mrb[0].mxu0 %v100
  %v295 = vpop.f32.mrb[0].mxu0
  %v296 = vadd.f32 0.0, %v295
  %v297 = vpop.f32.mrb[0].mxu0
  %v298 = vpop.f32.mrb[0].mxu0
  %v299 = vadd.f32 0.0, %v298
  %v300 = vpop.f32.mrb[0].mxu0
  %301 = vdwg.mxu0
  %302 = vmatprep.subr.bf16.mxu0 0
  %303 = vmatpush1.bf16.msra.mxu0 %v221
  %304 = vmatprep.subr.bf16.mxu0 0
  %305 = vmatpush1.bf16.msra.mxu0 %v222
  %306 = vmatprep.subr.bf16.mxu0 0
  %307 = vmatpush1.bf16.msra.mxu0 %v223
  %308 = vmatprep.subr.bf16.mxu0 0
  %309 = vmatpush1.bf16.msra.mxu0 %v224
  %310 = vmatprep.subr.bf16.mxu0 0
  %311 = vmatpush1.bf16.msra.mxu0 %v225
  %312 = vmatprep.subr.bf16.mxu0 0
  %313 = vmatpush1.bf16.msra.mxu0 %v226
  %314 = vmatprep.subr.bf16.mxu0 0
  %315 = vmatpush1.bf16.msra.mxu0 %v227
  %316 = vmatprep.subr.bf16.mxu0 0
  %317 = vmatpush1.bf16.msra.mxu0 %v228
  %318 = vmatprep.subr.bf16.mxu0 0
  %319 = vmatpush1.bf16.msra.mxu0 0
  %320 = vmatprep.subr.bf16.mxu0 0
  %321 = vmatpush1.bf16.msra.mxu0 0
  %322 = vmatprep.subr.bf16.mxu0 0
  %323 = vmatpush1.bf16.msra.mxu0 0
  %324 = vmatprep.subr.bf16.mxu0 0
  %325 = vmatpush1.bf16.msra.mxu0 0
  %326 = vmatprep.subr.bf16.mxu0 0
  %327 = vmatpush1.bf16.msra.mxu0 0
  %328 = vmatprep.subr.bf16.mxu0 0
  %329 = vmatpush1.bf16.msra.mxu0 0
  %330 = vmatprep.subr.bf16.mxu0 0
  %331 = vmatpush1.bf16.msra.mxu0 0
  %332 = vmatprep.subr.bf16.mxu0 0
  %333 = vmatpush1.bf16.msra.mxu0 0
  %334 = vmatprep.mubr.bf16.mxu0 0
  %335 = vmatmul.mubr.bf16.gmra.mrb[0].mxu0 %v99
  %v336 = vpop.f32.mrb[0].mxu0
  %v337 = vadd.f32 %v288, %v336
  %v338 = vpop.f32.mrb[0].mxu0
  %v339 = vpop.f32.mrb[0].mxu0
  %v340 = vadd.f32 %v291, %v339
  %v341 = vpop.f32.mrb[0].mxu0
  %342 = vmatprep.mubr.bf16.mxu0 0
  %343 = vmatmul.mubr.bf16.gmra.mrb[0].mxu0 %v102
  %v344 = vpop.f32.mrb[0].mxu0
  %v345 = vadd.f32 %v296, %v344
  %v346 = vpop.f32.mrb[0].mxu0
  %v347 = vpop.f32.mrb[0].mxu0
  %v348 = vadd.f32 %v299, %v347
  %v349 = vpop.f32.mrb[0].mxu0
  %350 = vdwg.mxu0
  %v351 = vld [vmem:[%s2] sm:$0x1]
  %v353 = vlaneseq
  %v354 = vshrl.u32 %v353, 7
  %v355 = vsub.s32 0, %v354
  %v356 = vrot.slane %v351, %v355
  %v358 = vmul.f32 %v337, %v356
  %v359 = vmul.f32 %v340, %v356
  %v360 = vmul.f32 %v345, %v356
  %v361 = vmul.f32 %v348, %v356
  %v362 = vld [vmem:[%s3] sm:$0x1]
  %v364 = vlaneseq
  %v365 = vshrl.u32 %v364, 7
  %v366 = vsub.s32 0, %v365
  %v367 = vrot.slane %v362, %v366
  %v369 = vadd.f32 %v358, %v367
  %v370 = vadd.f32 %v359, %v367
  %v371 = vadd.f32 %v360, %v367
  %v372 = vadd.f32 %v361, %v367
  %v373 = vld [vmem:[%s4] sm:$0xf]
  %v374 = vld [vmem:[%s4 + $0x4] sm:$0xf]
  %v375 = vld [vmem:[%s4 + $0x8] sm:$0xf]
  %v376 = vld [vmem:[%s4 + $0xc] sm:$0xf]
  %v377 = vunpack.c.l.bf16 %v373
  %v378 = vunpack.c.l.bf16 %v374
  %v379 = vunpack.c.l.bf16 %v375
  %v380 = vunpack.c.l.bf16 %v376
  %v381 = vadd.f32 %v369, %v377
  %v382 = vadd.f32 %v370, %v378
  %v383 = vadd.f32 %v371, %v379
  %v384 = vadd.f32 %v372, %v380
  %v385 = vmax.f32 %v381, 0.0
  %v386 = vmax.f32 %v382, 0.0
  %v387 = vmax.f32 %v383, 0.0
  %v388 = vmax.f32 %v384, 0.0
  %v389 = vpack.c.bf16 %v386, %v385
  %v390 = vpack.c.bf16 %v388, %v387
  %v393 = vunpack.c.l.b16 %v389
  %v394 = vunpack.c.h.b16 %v389
  %v395 = vunpack.c.l.b16 %v390
  %v396 = vunpack.c.h.b16 %v390
  %v397 = vpack.c.b16 %v393, %v393
  %v398 = vpack.c.b16 %v394, %v394
  %v399 = vpack.c.b16 %v395, %v395
  %v400 = vpack.c.b16 %v396, %v396
  %405 = vst [vmem:[%s5] sm:$0xf] %v397
  %406 = vst [vmem:[%s5 + $0x4] sm:$0xf] %v398
  %407 = vst [vmem:[%s5 + $0x8] sm:$0xf] %v399
  %408 = vst [vmem:[%s5 + $0xc] sm:$0xf] %v400
  // Predicated region
  $region22: #{resnet_forward.30} parent=0 // pred_check
    _
  $region23: #{resnet_forward.30} parent=0 // pred_check_branch
    %410 = sbr.rel (0) target = $region25
  $region24: #{resnet_forward.30} parent=0 // pred_region
    _
  $region25: #{resnet_forward.30} parent=0 // pred_fallthru
    _
  // Predicated region
  $region26: #{resnet_forward.30} parent=0 // pred_check
    _
  $region27: #{resnet_forward.30} parent=0 // pred_check_branch
    %412 = sbr.rel (0) target = $region29
  $region28: #{resnet_forward.30} parent=0 // pred_region
    _
  $region29: #{resnet_forward.30} parent=0 // pred_fallthru
    _

// kernel: resnet_forward.31
$region0: #{resnet_forward.31}
  #allocation0 [shape = 'u32[]', space=smem, size = 0x4, offset = 0x4, fixed_abs, tag = 'smem constant byte address 0x4 - core index']
  #allocation1 [shape = 'u32[144,128]{1,0:T(1,128)}', space=vmem, size = 0x12000, scoped, tag = 'internal scratch']
  %s0 = inlined_call_operand.vmem [shape: bf16[32,384], index: 0, kind: input, shape index: {}]
  %s1 = inlined_call_operand.vmem [shape: bf16[384,128], index: 1, kind: input, shape index: {}]
  %s2 = inlined_call_operand.vmem [shape: f32[1,128], index: 2, kind: input, shape index: {}]
  %s3 = inlined_call_operand.vmem [shape: f32[1,128], index: 3, kind: input, shape index: {}]
  %s4 = inlined_call_operand.vmem [shape: bf16[32,128], index: 4, kind: output, shape index: {}]
  %s5 = sld [smem:[#allocation0]]
  $region26: #{resnet_forward.31} parent=0
    _
  %s7 = ssub.s32 1, %s5
  %s8 = scalar_select 0, %s7, %s5
  // Predicated region
  $region2: #{resnet_forward.31} parent=0 // pred_check
    _
  $region3: #{resnet_forward.31} parent=0 // pred_check_branch
    %10 = sbr.rel (0) target = $region5
  $region4: #{resnet_forward.31} parent=0 // pred_region
    _
  $region5: #{resnet_forward.31} parent=0 // pred_fallthru
    _
  // Predicated region
  $region6: #{resnet_forward.31} parent=0 // pred_check
    _
  $region7: #{resnet_forward.31} parent=0 // pred_check_branch
    %12 = sbr.rel (0) target = $region9
  $region8: #{resnet_forward.31} parent=0 // pred_region
    _
  $region9: #{resnet_forward.31} parent=0 // pred_fallthru
    _
  // Predicated region
  $region10: #{resnet_forward.31} parent=0 // pred_check
    _
  $region11: #{resnet_forward.31} parent=0 // pred_check_branch
    %14 = sbr.rel (0) target = $region13
  $region12: #{resnet_forward.31} parent=0 // pred_region
    _
  $region13: #{resnet_forward.31} parent=0 // pred_fallthru
    _
  // Predicated region
  $region14: #{resnet_forward.31} parent=0 // pred_check
    _
  $region15: #{resnet_forward.31} parent=0 // pred_check_branch
    %16 = sbr.rel (0) target = $region17
  $region16: #{resnet_forward.31} parent=0 // pred_region
    _
  $region17: #{resnet_forward.31} parent=0 // pred_fallthru
    _
  %v18 = vld [vmem:[%s0] sm:$0xff]
  %v19 = vld [vmem:[%s0 + $0x8] sm:$0xf]
  %v20 = vld [vmem:[%s0 + $0xc] sm:$0xff]
  %v21 = vld [vmem:[%s0 + $0x14] sm:$0xf]
  %v22 = vld [vmem:[%s0 + $0x18] sm:$0xff]
  %v23 = vld [vmem:[%s0 + $0x20] sm:$0xf]
  %v24 = vld [vmem:[%s0 + $0x24] sm:$0xff]
  %v25 = vld [vmem:[%s0 + $0x2c] sm:$0xf]
  %v26 = vld [vmem:[%s1] sm:$0xf]
  %v27 = vld [vmem:[%s1 + $0x4] sm:$0xf]
  %v28 = vld [vmem:[%s1 + $0x8] sm:$0xf]
  %v29 = vld [vmem:[%s1 + $0xc] sm:$0xf]
  %v30 = vld [vmem:[%s1 + $0x10] sm:$0xf]
  %v31 = vld [vmem:[%s1 + $0x14] sm:$0xf]
  %v32 = vld [vmem:[%s1 + $0x18] sm:$0xf]
  %v33 = vld [vmem:[%s1 + $0x1c] sm:$0xf]
  %v34 = vld [vmem:[%s1 + $0x20] sm:$0xf]
  %v35 = vld [vmem:[%s1 + $0x24] sm:$0xf]
  %v36 = vld [vmem:[%s1 + $0x28] sm:$0xf]
  %v37 = vld [vmem:[%s1 + $0x2c] sm:$0xf]
  %v38 = vld [vmem:[%s1 + $0x30] sm:$0xf]
  %v39 = vld [vmem:[%s1 + $0x34] sm:$0xf]
  %v40 = vld [vmem:[%s1 + $0x38] sm:$0xf]
  %v41 = vld [vmem:[%s1 + $0x3c] sm:$0xf]
  %v42 = vld [vmem:[%s1 + $0x40] sm:$0xf]
  %v43 = vld [vmem:[%s1 + $0x44] sm:$0xf]
  %v44 = vld [vmem:[%s1 + $0x48] sm:$0xf]
  %v45 = vld [vmem:[%s1 + $0x4c] sm:$0xf]
  %v46 = vld [vmem:[%s1 + $0x50] sm:$0xf]
  %v47 = vld [vmem:[%s1 + $0x54] sm:$0xf]
  %v48 = vld [vmem:[%s1 + $0x58] sm:$0xf]
  %v49 = vld [vmem:[%s1 + $0x5c] sm:$0xf]
  %v50 = vld [vmem:[%s1 + $0x60] sm:$0xf]
  %v51 = vld [vmem:[%s1 + $0x64] sm:$0xf]
  %v52 = vld [vmem:[%s1 + $0x68] sm:$0xf]
  %v53 = vld [vmem:[%s1 + $0x6c] sm:$0xf]
  %v54 = vld [vmem:[%s1 + $0x70] sm:$0xf]
  %v55 = vld [vmem:[%s1 + $0x74] sm:$0xf]
  %v56 = vld [vmem:[%s1 + $0x78] sm:$0xf]
  %v57 = vld [vmem:[%s1 + $0x7c] sm:$0xf]
  %v58 = vld [vmem:[%s1 + $0x80] sm:$0xf]
  %v59 = vld [vmem:[%s1 + $0x84] sm:$0xf]
  %v60 = vld [vmem:[%s1 + $0x88] sm:$0xf]
  %v61 = vld [vmem:[%s1 + $0x8c] sm:$0xf]
  %v62 = vld [vmem:[%s1 + $0x90] sm:$0xf]
  %v63 = vld [vmem:[%s1 + $0x94] sm:$0xf]
  %v64 = vld [vmem:[%s1 + $0x98] sm:$0xf]
  %v65 = vld [vmem:[%s1 + $0x9c] sm:$0xf]
  %v66 = vld [vmem:[%s1 + $0xa0] sm:$0xf]
  %v67 = vld [vmem:[%s1 + $0xa4] sm:$0xf]
  %v68 = vld [vmem:[%s1 + $0xa8] sm:$0xf]
  %v69 = vld [vmem:[%s1 + $0xac] sm:$0xf]
  %v70 = vld [vmem:[%s1 + $0xb0] sm:$0xf]
  %v71 = vld [vmem:[%s1 + $0xb4] sm:$0xf]
  %v72 = vld [vmem:[%s1 + $0xb8] sm:$0xf]
  %v73 = vld [vmem:[%s1 + $0xbc] sm:$0xf]
  %v82 = vunpack.c.l.b16 %v18
  %v83 = vunpack.c.h.b16 %v18
  %v84 = vunpack.c.l.b16 %v19
  %v85 = vunpack.c.l.b16 %v20
  %v86 = vunpack.c.h.b16 %v20
  %v87 = vunpack.c.l.b16 %v21
  %v88 = vunpack.c.l.b16 %v22
  %v89 = vunpack.c.h.b16 %v22
  %v90 = vunpack.c.l.b16 %v23
  %v91 = vunpack.c.l.b16 %v24
  %v92 = vunpack.c.h.b16 %v24
  %v93 = vunpack.c.l.b16 %v25
  %v94 = vpack.c.b16 %v85, %v82
  %v95 = vpack.c.b16 %v86, %v83
  %v96 = vpack.c.b16 %v87, %v84
  %v97 = vpack.c.b16 %v91, %v88
  %v98 = vpack.c.b16 %v92, %v89
  %v99 = vpack.c.b16 %v93, %v90
  %v154 = vunpack.c.l.b16 %v26
  %v155 = vunpack.c.l.b16 %v27
  %v156 = vunpack.c.l.b16 %v28
  %v157 = vunpack.c.l.b16 %v29
  %v158 = vunpack.c.l.b16 %v30
  %v159 = vunpack.c.l.b16 %v31
  %v160 = vunpack.c.l.b16 %v32
  %v161 = vunpack.c.l.b16 %v33
  %v162 = vunpack.c.l.b16 %v34
  %v163 = vunpack.c.l.b16 %v35
  %v164 = vunpack.c.l.b16 %v36
  %v165 = vunpack.c.l.b16 %v37
  %v166 = vunpack.c.l.b16 %v38
  %v167 = vunpack.c.l.b16 %v39
  %v168 = vunpack.c.l.b16 %v40
  %v169 = vunpack.c.l.b16 %v41
  %v170 = vunpack.c.l.b16 %v42
  %v171 = vunpack.c.l.b16 %v43
  %v172 = vunpack.c.l.b16 %v44
  %v173 = vunpack.c.l.b16 %v45
  %v174 = vunpack.c.l.b16 %v46
  %v175 = vunpack.c.l.b16 %v47
  %v176 = vunpack.c.l.b16 %v48
  %v177 = vunpack.c.l.b16 %v49
  %v178 = vunpack.c.l.b16 %v50
  %v179 = vunpack.c.l.b16 %v51
  %v180 = vunpack.c.l.b16 %v52
  %v181 = vunpack.c.l.b16 %v53
  %v182 = vunpack.c.l.b16 %v54
  %v183 = vunpack.c.l.b16 %v55
  %v184 = vunpack.c.l.b16 %v56
  %v185 = vunpack.c.l.b16 %v57
  %v186 = vunpack.c.l.b16 %v58
  %v187 = vunpack.c.l.b16 %v59
  %v188 = vunpack.c.l.b16 %v60
  %v189 = vunpack.c.l.b16 %v61
  %v190 = vunpack.c.l.b16 %v62
  %v191 = vunpack.c.l.b16 %v63
  %v192 = vunpack.c.l.b16 %v64
  %v193 = vunpack.c.l.b16 %v65
  %v194 = vunpack.c.l.b16 %v66
  %v195 = vunpack.c.l.b16 %v67
  %v196 = vunpack.c.l.b16 %v68
  %v197 = vunpack.c.l.b16 %v69
  %v198 = vunpack.c.l.b16 %v70
  %v199 = vunpack.c.l.b16 %v71
  %v200 = vunpack.c.l.b16 %v72
  %v201 = vunpack.c.l.b16 %v73
  %v202 = vpack.c.b16 %v155, %v154
  %v203 = vpack.c.b16 %v157, %v156
  %v204 = vpack.c.b16 %v159, %v158
  %v205 = vpack.c.b16 %v161, %v160
  %v206 = vpack.c.b16 %v163, %v162
  %v207 = vpack.c.b16 %v165, %v164
  %v208 = vpack.c.b16 %v167, %v166
  %v209 = vpack.c.b16 %v169, %v168
  %v210 = vpack.c.b16 %v171, %v170
  %v211 = vpack.c.b16 %v173, %v172
  %v212 = vpack.c.b16 %v175, %v174
  %v213 = vpack.c.b16 %v177, %v176
  %v214 = vpack.c.b16 %v179, %v178
  %v215 = vpack.c.b16 %v181, %v180
  %v216 = vpack.c.b16 %v183, %v182
  %v217 = vpack.c.b16 %v185, %v184
  %v218 = vpack.c.b16 %v187, %v186
  %v219 = vpack.c.b16 %v189, %v188
  %v220 = vpack.c.b16 %v191, %v190
  %v221 = vpack.c.b16 %v193, %v192
  %v222 = vpack.c.b16 %v195, %v194
  %v223 = vpack.c.b16 %v197, %v196
  %v224 = vpack.c.b16 %v199, %v198
  %v225 = vpack.c.b16 %v201, %v200
  %250 = vmatprep.subr.bf16.mxu0 0
  %251 = vmatpush1.bf16.msra.mxu0 %v202
  %252 = vmatprep.subr.bf16.mxu0 0
  %253 = vmatpush1.bf16.msra.mxu0 %v203
  %254 = vmatprep.subr.bf16.mxu0 0
  %255 = vmatpush1.bf16.msra.mxu0 %v204
  %256 = vmatprep.subr.bf16.mxu0 0
  %257 = vmatpush1.bf16.msra.mxu0 %v205
  %258 = vmatprep.subr.bf16.mxu0 0
  %259 = vmatpush1.bf16.msra.mxu0 %v206
  %260 = vmatprep.subr.bf16.mxu0 0
  %261 = vmatpush1.bf16.msra.mxu0 %v207
  %262 = vmatprep.subr.bf16.mxu0 0
  %263 = vmatpush1.bf16.msra.mxu0 %v208
  %264 = vmatprep.subr.bf16.mxu0 0
  %265 = vmatpush1.bf16.msra.mxu0 %v209
  %266 = vmatprep.subr.bf16.mxu0 0
  %267 = vmatpush1.bf16.msra.mxu0 %v210
  %268 = vmatprep.subr.bf16.mxu0 0
  %269 = vmatpush1.bf16.msra.mxu0 %v211
  %270 = vmatprep.subr.bf16.mxu0 0
  %271 = vmatpush1.bf16.msra.mxu0 %v212
  %272 = vmatprep.subr.bf16.mxu0 0
  %273 = vmatpush1.bf16.msra.mxu0 %v213
  %274 = vmatprep.subr.bf16.mxu0 0
  %275 = vmatpush1.bf16.msra.mxu0 %v214
  %276 = vmatprep.subr.bf16.mxu0 0
  %277 = vmatpush1.bf16.msra.mxu0 %v215
  %278 = vmatprep.subr.bf16.mxu0 0
  %279 = vmatpush1.bf16.msra.mxu0 %v216
  %280 = vmatprep.subr.bf16.mxu0 0
  %281 = vmatpush1.bf16.msra.mxu0 %v217
  %282 = vmatprep.mubr.bf16.mxu0 %v95
  %283 = vmatmul.mubr.bf16.gmra.mrb[0].mxu0 %v94
  %v284 = vpop.f32.mrb[0].mxu0
  %v285 = vadd.f32 0.0, %v284
  %v286 = vpop.f32.mrb[0].mxu0
  %v287 = vpop.f32.mrb[0].mxu0
  %v288 = vadd.f32 0.0, %v287
  %v289 = vpop.f32.mrb[0].mxu0
  %290 = vmatprep.mubr.bf16.mxu0 %v98
  %291 = vmatmul.mubr.bf16.gmra.mrb[0].mxu0 %v97
  %v292 = vpop.f32.mrb[0].mxu0
  %v293 = vadd.f32 0.0, %v292
  %v294 = vpop.f32.mrb[0].mxu0
  %v295 = vpop.f32.mrb[0].mxu0
  %v296 = vadd.f32 0.0, %v295
  %v297 = vpop.f32.mrb[0].mxu0
  %298 = vdwg.mxu0
  %299 = vmatprep.subr.bf16.mxu0 0
  %300 = vmatpush1.bf16.msra.mxu0 %v218
  %301 = vmatprep.subr.bf16.mxu0 0
  %302 = vmatpush1.bf16.msra.mxu0 %v219
  %303 = vmatprep.subr.bf16.mxu0 0
  %304 = vmatpush1.bf16.msra.mxu0 %v220
  %305 = vmatprep.subr.bf16.mxu0 0
  %306 = vmatpush1.bf16.msra.mxu0 %v221
  %307 = vmatprep.subr.bf16.mxu0 0
  %308 = vmatpush1.bf16.msra.mxu0 %v222
  %309 = vmatprep.subr.bf16.mxu0 0
  %310 = vmatpush1.bf16.msra.mxu0 %v223
  %311 = vmatprep.subr.bf16.mxu0 0
  %312 = vmatpush1.bf16.msra.mxu0 %v224
  %313 = vmatprep.subr.bf16.mxu0 0
  %314 = vmatpush1.bf16.msra.mxu0 %v225
  %315 = vmatprep.subr.bf16.mxu0 0
  %316 = vmatpush1.bf16.msra.mxu0 0
  %317 = vmatprep.subr.bf16.mxu0 0
  %318 = vmatpush1.bf16.msra.mxu0 0
  %319 = vmatprep.subr.bf16.mxu0 0
  %320 = vmatpush1.bf16.msra.mxu0 0
  %321 = vmatprep.subr.bf16.mxu0 0
  %322 = vmatpush1.bf16.msra.mxu0 0
  %323 = vmatprep.subr.bf16.mxu0 0
  %324 = vmatpush1.bf16.msra.mxu0 0
  %325 = vmatprep.subr.bf16.mxu0 0
  %326 = vmatpush1.bf16.msra.mxu0 0
  %327 = vmatprep.subr.bf16.mxu0 0
  %328 = vmatpush1.bf16.msra.mxu0 0
  %329 = vmatprep.subr.bf16.mxu0 0
  %330 = vmatpush1.bf16.msra.mxu0 0
  %331 = vmatprep.mubr.bf16.mxu0 0
  %332 = vmatmul.mubr.bf16.gmra.mrb[0].mxu0 %v96
  %v333 = vpop.f32.mrb[0].mxu0
  %v334 = vadd.f32 %v285, %v333
  %v335 = vpop.f32.mrb[0].mxu0
  %v336 = vpop.f32.mrb[0].mxu0
  %v337 = vadd.f32 %v288, %v336
  %v338 = vpop.f32.mrb[0].mxu0
  %339 = vmatprep.mubr.bf16.mxu0 0
  %340 = vmatmul.mubr.bf16.gmra.mrb[0].mxu0 %v99
  %v341 = vpop.f32.mrb[0].mxu0
  %v342 = vadd.f32 %v293, %v341
  %v343 = vpop.f32.mrb[0].mxu0
  %v344 = vpop.f32.mrb[0].mxu0
  %v345 = vadd.f32 %v296, %v344
  %v346 = vpop.f32.mrb[0].mxu0
  %347 = vdwg.mxu0
  %v348 = vld [vmem:[%s2] sm:$0x1]
  %v350 = vlaneseq
  %v351 = vshrl.u32 %v350, 7
  %v352 = vsub.s32 0, %v351
  %v353 = vrot.slane %v348, %v352
  %v355 = vmul.f32 %v334, %v353
  %v356 = vmul.f32 %v337, %v353
  %v357 = vmul.f32 %v342, %v353
  %v358 = vmul.f32 %v345, %v353
  %v359 = vld [vmem:[%s3] sm:$0x1]
  %v361 = vlaneseq
  %v362 = vshrl.u32 %v361, 7
  %v363 = vsub.s32 0, %v362
  %v364 = vrot.slane %v359, %v363
  %v366 = vadd.f32 %v355, %v364
  %v367 = vadd.f32 %v356, %v364
  %v368 = vadd.f32 %v357, %v364
  %v369 = vadd.f32 %v358, %v364
  %v370 = vmax.f32 %v366, 0.0
  %v371 = vmax.f32 %v367, 0.0
  %v372 = vmax.f32 %v368, 0.0
  %v373 = vmax.f32 %v369, 0.0
  %v374 = vpack.c.bf16 %v371, %v370
  %v375 = vpack.c.bf16 %v373, %v372
  %v378 = vunpack.c.l.b16 %v374
  %v379 = vunpack.c.h.b16 %v374
  %v380 = vunpack.c.l.b16 %v375
  %v381 = vunpack.c.h.b16 %v375
  %v382 = vpack.c.b16 %v378, %v378
  %v383 = vpack.c.b16 %v379, %v379
  %v384 = vpack.c.b16 %v380, %v380
  %v385 = vpack.c.b16 %v381, %v381
  %390 = vst [vmem:[%s4] sm:$0xf] %v382
  %391 = vst [vmem:[%s4 + $0x4] sm:$0xf] %v383
  %392 = vst [vmem:[%s4 + $0x8] sm:$0xf] %v384
  %393 = vst [vmem:[%s4 + $0xc] sm:$0xf] %v385
  // Predicated region
  $region18: #{resnet_forward.31} parent=0 // pred_check
    _
  $region19: #{resnet_forward.31} parent=0 // pred_check_branch
    %395 = sbr.rel (0) target = $region21
  $region20: #{resnet_forward.31} parent=0 // pred_region
    _
  $region21: #{resnet_forward.31} parent=0 // pred_fallthru
    _
  // Predicated region
  $region22: #{resnet_forward.31} parent=0 // pred_check
    _
  $region23: #{resnet_forward.31} parent=0 // pred_check_branch
    %397 = sbr.rel (0) target = $region25
  $region24: #{resnet_forward.31} parent=0 // pred_region
    _
  $region25: #{resnet_forward.31} parent=0 // pred_fallthru
    _

// kernel: resnet_forward.34
$region0: #{resnet_forward.34}
  #allocation0 [shape = 'u32[]', space=smem, size = 0x4, offset = 0x4, fixed_abs, tag = 'smem constant byte address 0x4 - core index']
  #allocation1 [shape = 'u32[144,128]{1,0:T(1,128)}', space=vmem, size = 0x12000, scoped, tag = 'internal scratch']
  %s0 = inlined_call_operand.vmem [shape: bf16[8,384], index: 0, kind: input, shape index: {}]
  %s1 = inlined_call_operand.vmem [shape: bf16[384,128], index: 1, kind: input, shape index: {}]
  %s2 = inlined_call_operand.vmem [shape: f32[1,128], index: 2, kind: input, shape index: {}]
  %s3 = inlined_call_operand.vmem [shape: f32[1,128], index: 3, kind: input, shape index: {}]
  %s4 = inlined_call_operand.vmem [shape: bf16[8,128], index: 4, kind: output, shape index: {}]
  %s5 = sld [smem:[#allocation0]]
  $region26: #{resnet_forward.34} parent=0
    _
  %s7 = ssub.s32 1, %s5
  %s8 = scalar_select 0, %s7, %s5
  // Predicated region
  $region2: #{resnet_forward.34} parent=0 // pred_check
    _
  $region3: #{resnet_forward.34} parent=0 // pred_check_branch
    %10 = sbr.rel (0) target = $region5
  $region4: #{resnet_forward.34} parent=0 // pred_region
    _
  $region5: #{resnet_forward.34} parent=0 // pred_fallthru
    _
  // Predicated region
  $region6: #{resnet_forward.34} parent=0 // pred_check
    _
  $region7: #{resnet_forward.34} parent=0 // pred_check_branch
    %12 = sbr.rel (0) target = $region9
  $region8: #{resnet_forward.34} parent=0 // pred_region
    _
  $region9: #{resnet_forward.34} parent=0 // pred_fallthru
    _
  // Predicated region
  $region10: #{resnet_forward.34} parent=0 // pred_check
    _
  $region11: #{resnet_forward.34} parent=0 // pred_check_branch
    %14 = sbr.rel (0) target = $region13
  $region12: #{resnet_forward.34} parent=0 // pred_region
    _
  $region13: #{resnet_forward.34} parent=0 // pred_fallthru
    _
  // Predicated region
  $region14: #{resnet_forward.34} parent=0 // pred_check
    _
  $region15: #{resnet_forward.34} parent=0 // pred_check_branch
    %16 = sbr.rel (0) target = $region17
  $region16: #{resnet_forward.34} parent=0 // pred_region
    _
  $region17: #{resnet_forward.34} parent=0 // pred_fallthru
    _
  %v18 = vld [vmem:[%s0] sm:$0xff]
  %v19 = vld [vmem:[%s0 + $0x8] sm:$0xf]
  %v20 = vld [vmem:[%s1] sm:$0xf]
  %v21 = vld [vmem:[%s1 + $0x4] sm:$0xf]
  %v22 = vld [vmem:[%s1 + $0x8] sm:$0xf]
  %v23 = vld [vmem:[%s1 + $0xc] sm:$0xf]
  %v24 = vld [vmem:[%s1 + $0x10] sm:$0xf]
  %v25 = vld [vmem:[%s1 + $0x14] sm:$0xf]
  %v26 = vld [vmem:[%s1 + $0x18] sm:$0xf]
  %v27 = vld [vmem:[%s1 + $0x1c] sm:$0xf]
  %v28 = vld [vmem:[%s1 + $0x20] sm:$0xf]
  %v29 = vld [vmem:[%s1 + $0x24] sm:$0xf]
  %v30 = vld [vmem:[%s1 + $0x28] sm:$0xf]
  %v31 = vld [vmem:[%s1 + $0x2c] sm:$0xf]
  %v32 = vld [vmem:[%s1 + $0x30] sm:$0xf]
  %v33 = vld [vmem:[%s1 + $0x34] sm:$0xf]
  %v34 = vld [vmem:[%s1 + $0x38] sm:$0xf]
  %v35 = vld [vmem:[%s1 + $0x3c] sm:$0xf]
  %v36 = vld [vmem:[%s1 + $0x40] sm:$0xf]
  %v37 = vld [vmem:[%s1 + $0x44] sm:$0xf]
  %v38 = vld [vmem:[%s1 + $0x48] sm:$0xf]
  %v39 = vld [vmem:[%s1 + $0x4c] sm:$0xf]
  %v40 = vld [vmem:[%s1 + $0x50] sm:$0xf]
  %v41 = vld [vmem:[%s1 + $0x54] sm:$0xf]
  %v42 = vld [vmem:[%s1 + $0x58] sm:$0xf]
  %v43 = vld [vmem:[%s1 + $0x5c] sm:$0xf]
  %v44 = vld [vmem:[%s1 + $0x60] sm:$0xf]
  %v45 = vld [vmem:[%s1 + $0x64] sm:$0xf]
  %v46 = vld [vmem:[%s1 + $0x68] sm:$0xf]
  %v47 = vld [vmem:[%s1 + $0x6c] sm:$0xf]
  %v48 = vld [vmem:[%s1 + $0x70] sm:$0xf]
  %v49 = vld [vmem:[%s1 + $0x74] sm:$0xf]
  %v50 = vld [vmem:[%s1 + $0x78] sm:$0xf]
  %v51 = vld [vmem:[%s1 + $0x7c] sm:$0xf]
  %v52 = vld [vmem:[%s1 + $0x80] sm:$0xf]
  %v53 = vld [vmem:[%s1 + $0x84] sm:$0xf]
  %v54 = vld [vmem:[%s1 + $0x88] sm:$0xf]
  %v55 = vld [vmem:[%s1 + $0x8c] sm:$0xf]
  %v56 = vld [vmem:[%s1 + $0x90] sm:$0xf]
  %v57 = vld [vmem:[%s1 + $0x94] sm:$0xf]
  %v58 = vld [vmem:[%s1 + $0x98] sm:$0xf]
  %v59 = vld [vmem:[%s1 + $0x9c] sm:$0xf]
  %v60 = vld [vmem:[%s1 + $0xa0] sm:$0xf]
  %v61 = vld [vmem:[%s1 + $0xa4] sm:$0xf]
  %v62 = vld [vmem:[%s1 + $0xa8] sm:$0xf]
  %v63 = vld [vmem:[%s1 + $0xac] sm:$0xf]
  %v64 = vld [vmem:[%s1 + $0xb0] sm:$0xf]
  %v65 = vld [vmem:[%s1 + $0xb4] sm:$0xf]
  %v66 = vld [vmem:[%s1 + $0xb8] sm:$0xf]
  %v67 = vld [vmem:[%s1 + $0xbc] sm:$0xf]
  %v70 = vunpack.c.l.b16 %v18
  %v71 = vunpack.c.h.b16 %v18
  %v72 = vunpack.c.l.b16 %v19
  %v73 = vpack.c.b16 %v70, %v70
  %v74 = vpack.c.b16 %v71, %v71
  %v75 = vpack.c.b16 %v72, %v72
  %v127 = vunpack.c.l.b16 %v20
  %v128 = vunpack.c.l.b16 %v21
  %v129 = vunpack.c.l.b16 %v22
  %v130 = vunpack.c.l.b16 %v23
  %v131 = vunpack.c.l.b16 %v24
  %v132 = vunpack.c.l.b16 %v25
  %v133 = vunpack.c.l.b16 %v26
  %v134 = vunpack.c.l.b16 %v27
  %v135 = vunpack.c.l.b16 %v28
  %v136 = vunpack.c.l.b16 %v29
  %v137 = vunpack.c.l.b16 %v30
  %v138 = vunpack.c.l.b16 %v31
  %v139 = vunpack.c.l.b16 %v32
  %v140 = vunpack.c.l.b16 %v33
  %v141 = vunpack.c.l.b16 %v34
  %v142 = vunpack.c.l.b16 %v35
  %v143 = vunpack.c.l.b16 %v36
  %v144 = vunpack.c.l.b16 %v37
  %v145 = vunpack.c.l.b16 %v38
  %v146 = vunpack.c.l.b16 %v39
  %v147 = vunpack.c.l.b16 %v40
  %v148 = vunpack.c.l.b16 %v41
  %v149 = vunpack.c.l.b16 %v42
  %v150 = vunpack.c.l.b16 %v43
  %v151 = vunpack.c.l.b16 %v44
  %v152 = vunpack.c.l.b16 %v45
  %v153 = vunpack.c.l.b16 %v46
  %v154 = vunpack.c.l.b16 %v47
  %v155 = vunpack.c.l.b16 %v48
  %v156 = vunpack.c.l.b16 %v49
  %v157 = vunpack.c.l.b16 %v50
  %v158 = vunpack.c.l.b16 %v51
  %v159 = vunpack.c.l.b16 %v52
  %v160 = vunpack.c.l.b16 %v53
  %v161 = vunpack.c.l.b16 %v54
  %v162 = vunpack.c.l.b16 %v55
  %v163 = vunpack.c.l.b16 %v56
  %v164 = vunpack.c.l.b16 %v57
  %v165 = vunpack.c.l.b16 %v58
  %v166 = vunpack.c.l.b16 %v59
  %v167 = vunpack.c.l.b16 %v60
  %v168 = vunpack.c.l.b16 %v61
  %v169 = vunpack.c.l.b16 %v62
  %v170 = vunpack.c.l.b16 %v63
  %v171 = vunpack.c.l.b16 %v64
  %v172 = vunpack.c.l.b16 %v65
  %v173 = vunpack.c.l.b16 %v66
  %v174 = vunpack.c.l.b16 %v67
  %v175 = vpack.c.b16 %v128, %v127
  %v176 = vpack.c.b16 %v130, %v129
  %v177 = vpack.c.b16 %v132, %v131
  %v178 = vpack.c.b16 %v134, %v133
  %v179 = vpack.c.b16 %v136, %v135
  %v180 = vpack.c.b16 %v138, %v137
  %v181 = vpack.c.b16 %v140, %v139
  %v182 = vpack.c.b16 %v142, %v141
  %v183 = vpack.c.b16 %v144, %v143
  %v184 = vpack.c.b16 %v146, %v145
  %v185 = vpack.c.b16 %v148, %v147
  %v186 = vpack.c.b16 %v150, %v149
  %v187 = vpack.c.b16 %v152, %v151
  %v188 = vpack.c.b16 %v154, %v153
  %v189 = vpack.c.b16 %v156, %v155
  %v190 = vpack.c.b16 %v158, %v157
  %v191 = vpack.c.b16 %v160, %v159
  %v192 = vpack.c.b16 %v162, %v161
  %v193 = vpack.c.b16 %v164, %v163
  %v194 = vpack.c.b16 %v166, %v165
  %v195 = vpack.c.b16 %v168, %v167
  %v196 = vpack.c.b16 %v170, %v169
  %v197 = vpack.c.b16 %v172, %v171
  %v198 = vpack.c.b16 %v174, %v173
  %223 = vmatprep.subr.bf16.mxu0 0
  %224 = vmatpush1.bf16.msra.mxu0 %v175
  %225 = vmatprep.subr.bf16.mxu0 0
  %226 = vmatpush1.bf16.msra.mxu0 %v176
  %227 = vmatprep.subr.bf16.mxu0 0
  %228 = vmatpush1.bf16.msra.mxu0 %v177
  %229 = vmatprep.subr.bf16.mxu0 0
  %230 = vmatpush1.bf16.msra.mxu0 %v178
  %231 = vmatprep.subr.bf16.mxu0 0
  %232 = vmatpush1.bf16.msra.mxu0 %v179
  %233 = vmatprep.subr.bf16.mxu0 0
  %234 = vmatpush1.bf16.msra.mxu0 %v180
  %235 = vmatprep.subr.bf16.mxu0 0
  %236 = vmatpush1.bf16.msra.mxu0 %v181
  %237 = vmatprep.subr.bf16.mxu0 0
  %238 = vmatpush1.bf16.msra.mxu0 %v182
  %239 = vmatprep.subr.bf16.mxu0 0
  %240 = vmatpush1.bf16.msra.mxu0 %v183
  %241 = vmatprep.subr.bf16.mxu0 0
  %242 = vmatpush1.bf16.msra.mxu0 %v184
  %243 = vmatprep.subr.bf16.mxu0 0
  %244 = vmatpush1.bf16.msra.mxu0 %v185
  %245 = vmatprep.subr.bf16.mxu0 0
  %246 = vmatpush1.bf16.msra.mxu0 %v186
  %247 = vmatprep.subr.bf16.mxu0 0
  %248 = vmatpush1.bf16.msra.mxu0 %v187
  %249 = vmatprep.subr.bf16.mxu0 0
  %250 = vmatpush1.bf16.msra.mxu0 %v188
  %251 = vmatprep.subr.bf16.mxu0 0
  %252 = vmatpush1.bf16.msra.mxu0 %v189
  %253 = vmatprep.subr.bf16.mxu0 0
  %254 = vmatpush1.bf16.msra.mxu0 %v190
  %255 = vmatprep.mubr.bf16.mxu0 %v74
  %256 = vmatmul.mubr.bf16.gmra.mrb[0].mxu0 %v73
  %v257 = vpop.f32.mrb[0].mxu0
  %v258 = vadd.f32 0.0, %v257
  %v259 = vpop.f32.mrb[0].mxu0
  %v260 = vpop.f32.mrb[0].mxu0
  %v261 = vpop.f32.mrb[0].mxu0
  %262 = vdwg.mxu0
  %263 = vmatprep.subr.bf16.mxu0 0
  %264 = vmatpush1.bf16.msra.mxu0 %v191
  %265 = vmatprep.subr.bf16.mxu0 0
  %266 = vmatpush1.bf16.msra.mxu0 %v192
  %267 = vmatprep.subr.bf16.mxu0 0
  %268 = vmatpush1.bf16.msra.mxu0 %v193
  %269 = vmatprep.subr.bf16.mxu0 0
  %270 = vmatpush1.bf16.msra.mxu0 %v194
  %271 = vmatprep.subr.bf16.mxu0 0
  %272 = vmatpush1.bf16.msra.mxu0 %v195
  %273 = vmatprep.subr.bf16.mxu0 0
  %274 = vmatpush1.bf16.msra.mxu0 %v196
  %275 = vmatprep.subr.bf16.mxu0 0
  %276 = vmatpush1.bf16.msra.mxu0 %v197
  %277 = vmatprep.subr.bf16.mxu0 0
  %278 = vmatpush1.bf16.msra.mxu0 %v198
  %279 = vmatprep.subr.bf16.mxu0 0
  %280 = vmatpush1.bf16.msra.mxu0 0
  %281 = vmatprep.subr.bf16.mxu0 0
  %282 = vmatpush1.bf16.msra.mxu0 0
  %283 = vmatprep.subr.bf16.mxu0 0
  %284 = vmatpush1.bf16.msra.mxu0 0
  %285 = vmatprep.subr.bf16.mxu0 0
  %286 = vmatpush1.bf16.msra.mxu0 0
  %287 = vmatprep.subr.bf16.mxu0 0
  %288 = vmatpush1.bf16.msra.mxu0 0
  %289 = vmatprep.subr.bf16.mxu0 0
  %290 = vmatpush1.bf16.msra.mxu0 0
  %291 = vmatprep.subr.bf16.mxu0 0
  %292 = vmatpush1.bf16.msra.mxu0 0
  %293 = vmatprep.subr.bf16.mxu0 0
  %294 = vmatpush1.bf16.msra.mxu0 0
  %295 = vmatprep.mubr.bf16.mxu0 0
  %296 = vmatmul.mubr.bf16.gmra.mrb[0].mxu0 %v75
  %v297 = vpop.f32.mrb[0].mxu0
  %v298 = vadd.f32 %v258, %v297
  %v299 = vpop.f32.mrb[0].mxu0
  %v300 = vpop.f32.mrb[0].mxu0
  %v301 = vpop.f32.mrb[0].mxu0
  %302 = vdwg.mxu0
  %v303 = vld [vmem:[%s2] sm:$0x1]
  %v305 = vlaneseq
  %v306 = vshrl.u32 %v305, 7
  %v307 = vsub.s32 0, %v306
  %v308 = vrot.slane %v303, %v307
  %v310 = vmul.f32 %v298, %v308
  %v311 = vld [vmem:[%s3] sm:$0x1]
  %v313 = vlaneseq
  %v314 = vshrl.u32 %v313, 7
  %v315 = vsub.s32 0, %v314
  %v316 = vrot.slane %v311, %v315
  %v318 = vadd.f32 %v310, %v316
  %v319 = vmax.f32 %v318, 0.0
  %v320 = vpack.c.bf16 %v319, %v319
  %321 = vst [vmem:[%s4] sm:$0xf] %v320
  // Predicated region
  $region18: #{resnet_forward.34} parent=0 // pred_check
    _
  $region19: #{resnet_forward.34} parent=0 // pred_check_branch
    %323 = sbr.rel (0) target = $region21
  $region20: #{resnet_forward.34} parent=0 // pred_region
    _
  $region21: #{resnet_forward.34} parent=0 // pred_fallthru
    _
  // Predicated region
  $region22: #{resnet_forward.34} parent=0 // pred_check
    _
  $region23: #{resnet_forward.34} parent=0 // pred_check_branch
    %325 = sbr.rel (0) target = $region25
  $region24: #{resnet_forward.34} parent=0 // pred_region
    _
  $region25: #{resnet_forward.34} parent=0 // pred_fallthru
    _

// kernel: resnet_forward.33
$region0: #{resnet_forward.33}
  #allocation0 [shape = 'u32[]', space=smem, size = 0x4, offset = 0x4, fixed_abs, tag = 'smem constant byte address 0x4 - core index']
  #allocation1 [shape = 'u32[144,128]{1,0:T(1,128)}', space=vmem, size = 0x12000, scoped, tag = 'internal scratch']
  %s0 = inlined_call_operand.vmem [shape: bf16[8,128], index: 0, kind: input, shape index: {}]
  %s1 = inlined_call_operand.vmem [shape: bf16[128,128], index: 1, kind: input, shape index: {}]
  %s2 = inlined_call_operand.vmem [shape: f32[1,128], index: 2, kind: input, shape index: {}]
  %s3 = inlined_call_operand.vmem [shape: f32[1,128], index: 3, kind: input, shape index: {}]
  %s4 = inlined_call_operand.vmem [shape: bf16[8,128], index: 4, kind: output, shape index: {}]
  %s5 = sld [smem:[#allocation0]]
  $region26: #{resnet_forward.33} parent=0
    _
  %s7 = ssub.s32 1, %s5
  %s8 = scalar_select 0, %s7, %s5
  // Predicated region
  $region2: #{resnet_forward.33} parent=0 // pred_check
    _
  $region3: #{resnet_forward.33} parent=0 // pred_check_branch
    %10 = sbr.rel (0) target = $region5
  $region4: #{resnet_forward.33} parent=0 // pred_region
    _
  $region5: #{resnet_forward.33} parent=0 // pred_fallthru
    _
  // Predicated region
  $region6: #{resnet_forward.33} parent=0 // pred_check
    _
  $region7: #{resnet_forward.33} parent=0 // pred_check_branch
    %12 = sbr.rel (0) target = $region9
  $region8: #{resnet_forward.33} parent=0 // pred_region
    _
  $region9: #{resnet_forward.33} parent=0 // pred_fallthru
    _
  // Predicated region
  $region10: #{resnet_forward.33} parent=0 // pred_check
    _
  $region11: #{resnet_forward.33} parent=0 // pred_check_branch
    %14 = sbr.rel (0) target = $region13
  $region12: #{resnet_forward.33} parent=0 // pred_region
    _
  $region13: #{resnet_forward.33} parent=0 // pred_fallthru
    _
  // Predicated region
  $region14: #{resnet_forward.33} parent=0 // pred_check
    _
  $region15: #{resnet_forward.33} parent=0 // pred_check_branch
    %16 = sbr.rel (0) target = $region17
  $region16: #{resnet_forward.33} parent=0 // pred_region
    _
  $region17: #{resnet_forward.33} parent=0 // pred_fallthru
    _
  %v18 = vld [vmem:[%s0] sm:$0xf]
  %v19 = vld [vmem:[%s1] sm:$0xf]
  %v20 = vld [vmem:[%s1 + $0x4] sm:$0xf]
  %v21 = vld [vmem:[%s1 + $0x8] sm:$0xf]
  %v22 = vld [vmem:[%s1 + $0xc] sm:$0xf]
  %v23 = vld [vmem:[%s1 + $0x10] sm:$0xf]
  %v24 = vld [vmem:[%s1 + $0x14] sm:$0xf]
  %v25 = vld [vmem:[%s1 + $0x18] sm:$0xf]
  %v26 = vld [vmem:[%s1 + $0x1c] sm:$0xf]
  %v27 = vld [vmem:[%s1 + $0x20] sm:$0xf]
  %v28 = vld [vmem:[%s1 + $0x24] sm:$0xf]
  %v29 = vld [vmem:[%s1 + $0x28] sm:$0xf]
  %v30 = vld [vmem:[%s1 + $0x2c] sm:$0xf]
  %v31 = vld [vmem:[%s1 + $0x30] sm:$0xf]
  %v32 = vld [vmem:[%s1 + $0x34] sm:$0xf]
  %v33 = vld [vmem:[%s1 + $0x38] sm:$0xf]
  %v34 = vld [vmem:[%s1 + $0x3c] sm:$0xf]
  %v51 = vunpack.c.l.b16 %v19
  %v52 = vunpack.c.l.b16 %v20
  %v53 = vunpack.c.l.b16 %v21
  %v54 = vunpack.c.l.b16 %v22
  %v55 = vunpack.c.l.b16 %v23
  %v56 = vunpack.c.l.b16 %v24
  %v57 = vunpack.c.l.b16 %v25
  %v58 = vunpack.c.l.b16 %v26
  %v59 = vunpack.c.l.b16 %v27
  %v60 = vunpack.c.l.b16 %v28
  %v61 = vunpack.c.l.b16 %v29
  %v62 = vunpack.c.l.b16 %v30
  %v63 = vunpack.c.l.b16 %v31
  %v64 = vunpack.c.l.b16 %v32
  %v65 = vunpack.c.l.b16 %v33
  %v66 = vunpack.c.l.b16 %v34
  %v67 = vpack.c.b16 %v52, %v51
  %v68 = vpack.c.b16 %v54, %v53
  %v69 = vpack.c.b16 %v56, %v55
  %v70 = vpack.c.b16 %v58, %v57
  %v71 = vpack.c.b16 %v60, %v59
  %v72 = vpack.c.b16 %v62, %v61
  %v73 = vpack.c.b16 %v64, %v63
  %v74 = vpack.c.b16 %v66, %v65
  %83 = vmatprep.subr.bf16.mxu0 0
  %84 = vmatpush1.bf16.msra.mxu0 %v67
  %85 = vmatprep.subr.bf16.mxu0 0
  %86 = vmatpush1.bf16.msra.mxu0 %v68
  %87 = vmatprep.subr.bf16.mxu0 0
  %88 = vmatpush1.bf16.msra.mxu0 %v69
  %89 = vmatprep.subr.bf16.mxu0 0
  %90 = vmatpush1.bf16.msra.mxu0 %v70
  %91 = vmatprep.subr.bf16.mxu0 0
  %92 = vmatpush1.bf16.msra.mxu0 %v71
  %93 = vmatprep.subr.bf16.mxu0 0
  %94 = vmatpush1.bf16.msra.mxu0 %v72
  %95 = vmatprep.subr.bf16.mxu0 0
  %96 = vmatpush1.bf16.msra.mxu0 %v73
  %97 = vmatprep.subr.bf16.mxu0 0
  %98 = vmatpush1.bf16.msra.mxu0 %v74
  %99 = vmatprep.subr.bf16.mxu0 0
  %100 = vmatpush1.bf16.msra.mxu0 0
  %101 = vmatprep.subr.bf16.mxu0 0
  %102 = vmatpush1.bf16.msra.mxu0 0
  %103 = vmatprep.subr.bf16.mxu0 0
  %104 = vmatpush1.bf16.msra.mxu0 0
  %105 = vmatprep.subr.bf16.mxu0 0
  %106 = vmatpush1.bf16.msra.mxu0 0
  %107 = vmatprep.subr.bf16.mxu0 0
  %108 = vmatpush1.bf16.msra.mxu0 0
  %109 = vmatprep.subr.bf16.mxu0 0
  %110 = vmatpush1.bf16.msra.mxu0 0
  %111 = vmatprep.subr.bf16.mxu0 0
  %112 = vmatpush1.bf16.msra.mxu0 0
  %113 = vmatprep.subr.bf16.mxu0 0
  %114 = vmatpush1.bf16.msra.mxu0 0
  %115 = vmatprep.mubr.bf16.mxu0 0
  %116 = vmatmul.mubr.bf16.gmra.mrb[0].mxu0 %v18
  %v117 = vpop.f32.mrb[0].mxu0
  %v118 = vadd.f32 0.0, %v117
  %v119 = vpop.f32.mrb[0].mxu0
  %v120 = vpop.f32.mrb[0].mxu0
  %v121 = vpop.f32.mrb[0].mxu0
  %122 = vdwg.mxu0
  %v123 = vld [vmem:[%s2] sm:$0x1]
  %v125 = vlaneseq
  %v126 = vshrl.u32 %v125, 7
  %v127 = vsub.s32 0, %v126
  %v128 = vrot.slane %v123, %v127
  %v130 = vmul.f32 %v118, %v128
  %v131 = vld [vmem:[%s3] sm:$0x1]
  %v133 = vlaneseq
  %v134 = vshrl.u32 %v133, 7
  %v135 = vsub.s32 0, %v134
  %v136 = vrot.slane %v131, %v135
  %v138 = vadd.f32 %v130, %v136
  %v139 = vpack.c.bf16 %v138, %v138
  %140 = vst [vmem:[%s4] sm:$0xf] %v139
  // Predicated region
  $region18: #{resnet_forward.33} parent=0 // pred_check
    _
  $region19: #{resnet_forward.33} parent=0 // pred_check_branch
    %142 = sbr.rel (0) target = $region21
  $region20: #{resnet_forward.33} parent=0 // pred_region
    _
  $region21: #{resnet_forward.33} parent=0 // pred_fallthru
    _
  // Predicated region
  $region22: #{resnet_forward.33} parent=0 // pred_check
    _
  $region23: #{resnet_forward.33} parent=0 // pred_check_branch
    %144 = sbr.rel (0) target = $region25
  $region24: #{resnet_forward.33} parent=0 // pred_region
    _
  $region25: #{resnet_forward.33} parent=0 // pred_fallthru
    _

// kernel: resnet_forward.35
$region0: #{resnet_forward.35}
  #allocation0 [shape = 'u32[]', space=smem, size = 0x4, offset = 0x4, fixed_abs, tag = 'smem constant byte address 0x4 - core index']
  #allocation1 [shape = 'u32[144,128]{1,0:T(1,128)}', space=vmem, size = 0x12000, scoped, tag = 'internal scratch']
  %s0 = inlined_call_operand.vmem [shape: bf16[8,640], index: 0, kind: input, shape index: {}]
  %s1 = inlined_call_operand.vmem [shape: bf16[640,128], index: 1, kind: input, shape index: {}]
  %s2 = inlined_call_operand.vmem [shape: f32[1,128], index: 2, kind: input, shape index: {}]
  %s3 = inlined_call_operand.vmem [shape: f32[1,128], index: 3, kind: input, shape index: {}]
  %s4 = inlined_call_operand.vmem [shape: bf16[8,128], index: 4, kind: input, shape index: {}]
  %s5 = inlined_call_operand.vmem [shape: bf16[8,128], index: 5, kind: output, shape index: {}]
  %s6 = sld [smem:[#allocation0]]
  $region30: #{resnet_forward.35} parent=0
    _
  %s8 = ssub.s32 1, %s6
  %s9 = scalar_select 0, %s8, %s6
  // Predicated region
  $region2: #{resnet_forward.35} parent=0 // pred_check
    _
  $region3: #{resnet_forward.35} parent=0 // pred_check_branch
    %11 = sbr.rel (0) target = $region5
  $region4: #{resnet_forward.35} parent=0 // pred_region
    _
  $region5: #{resnet_forward.35} parent=0 // pred_fallthru
    _
  // Predicated region
  $region6: #{resnet_forward.35} parent=0 // pred_check
    _
  $region7: #{resnet_forward.35} parent=0 // pred_check_branch
    %13 = sbr.rel (0) target = $region9
  $region8: #{resnet_forward.35} parent=0 // pred_region
    _
  $region9: #{resnet_forward.35} parent=0 // pred_fallthru
    _
  // Predicated region
  $region10: #{resnet_forward.35} parent=0 // pred_check
    _
  $region11: #{resnet_forward.35} parent=0 // pred_check_branch
    %15 = sbr.rel (0) target = $region13
  $region12: #{resnet_forward.35} parent=0 // pred_region
    _
  $region13: #{resnet_forward.35} parent=0 // pred_fallthru
    _
  // Predicated region
  $region14: #{resnet_forward.35} parent=0 // pred_check
    _
  $region15: #{resnet_forward.35} parent=0 // pred_check_branch
    %17 = sbr.rel (0) target = $region17
  $region16: #{resnet_forward.35} parent=0 // pred_region
    _
  $region17: #{resnet_forward.35} parent=0 // pred_fallthru
    _
  // Predicated region
  $region18: #{resnet_forward.35} parent=0 // pred_check
    _
  $region19: #{resnet_forward.35} parent=0 // pred_check_branch
    %19 = sbr.rel (0) target = $region21
  $region20: #{resnet_forward.35} parent=0 // pred_region
    _
  $region21: #{resnet_forward.35} parent=0 // pred_fallthru
    _
  %v21 = vld [vmem:[%s0] sm:$0xff]
  %v22 = vld [vmem:[%s0 + $0x8] sm:$0xff]
  %v23 = vld [vmem:[%s0 + $0x10] sm:$0xf]
  %v24 = vld [vmem:[%s1] sm:$0xf]
  %v25 = vld [vmem:[%s1 + $0x4] sm:$0xf]
  %v26 = vld [vmem:[%s1 + $0x8] sm:$0xf]
  %v27 = vld [vmem:[%s1 + $0xc] sm:$0xf]
  %v28 = vld [vmem:[%s1 + $0x10] sm:$0xf]
  %v29 = vld [vmem:[%s1 + $0x14] sm:$0xf]
  %v30 = vld [vmem:[%s1 + $0x18] sm:$0xf]
  %v31 = vld [vmem:[%s1 + $0x1c] sm:$0xf]
  %v32 = vld [vmem:[%s1 + $0x20] sm:$0xf]
  %v33 = vld [vmem:[%s1 + $0x24] sm:$0xf]
  %v34 = vld [vmem:[%s1 + $0x28] sm:$0xf]
  %v35 = vld [vmem:[%s1 + $0x2c] sm:$0xf]
  %v36 = vld [vmem:[%s1 + $0x30] sm:$0xf]
  %v37 = vld [vmem:[%s1 + $0x34] sm:$0xf]
  %v38 = vld [vmem:[%s1 + $0x38] sm:$0xf]
  %v39 = vld [vmem:[%s1 + $0x3c] sm:$0xf]
  %v40 = vld [vmem:[%s1 + $0x40] sm:$0xf]
  %v41 = vld [vmem:[%s1 + $0x44] sm:$0xf]
  %v42 = vld [vmem:[%s1 + $0x48] sm:$0xf]
  %v43 = vld [vmem:[%s1 + $0x4c] sm:$0xf]
  %v44 = vld [vmem:[%s1 + $0x50] sm:$0xf]
  %v45 = vld [vmem:[%s1 + $0x54] sm:$0xf]
  %v46 = vld [vmem:[%s1 + $0x58] sm:$0xf]
  %v47 = vld [vmem:[%s1 + $0x5c] sm:$0xf]
  %v48 = vld [vmem:[%s1 + $0x60] sm:$0xf]
  %v49 = vld [vmem:[%s1 + $0x64] sm:$0xf]
  %v50 = vld [vmem:[%s1 + $0x68] sm:$0xf]
  %v51 = vld [vmem:[%s1 + $0x6c] sm:$0xf]
  %v52 = vld [vmem:[%s1 + $0x70] sm:$0xf]
  %v53 = vld [vmem:[%s1 + $0x74] sm:$0xf]
  %v54 = vld [vmem:[%s1 + $0x78] sm:$0xf]
  %v55 = vld [vmem:[%s1 + $0x7c] sm:$0xf]
  %v56 = vld [vmem:[%s1 + $0x80] sm:$0xf]
  %v57 = vld [vmem:[%s1 + $0x84] sm:$0xf]
  %v58 = vld [vmem:[%s1 + $0x88] sm:$0xf]
  %v59 = vld [vmem:[%s1 + $0x8c] sm:$0xf]
  %v60 = vld [vmem:[%s1 + $0x90] sm:$0xf]
  %v61 = vld [vmem:[%s1 + $0x94] sm:$0xf]
  %v62 = vld [vmem:[%s1 + $0x98] sm:$0xf]
  %v63 = vld [vmem:[%s1 + $0x9c] sm:$0xf]
  %v64 = vld [vmem:[%s1 + $0xa0] sm:$0xf]
  %v65 = vld [vmem:[%s1 + $0xa4] sm:$0xf]
  %v66 = vld [vmem:[%s1 + $0xa8] sm:$0xf]
  %v67 = vld [vmem:[%s1 + $0xac] sm:$0xf]
  %v68 = vld [vmem:[%s1 + $0xb0] sm:$0xf]
  %v69 = vld [vmem:[%s1 + $0xb4] sm:$0xf]
  %v70 = vld [vmem:[%s1 + $0xb8] sm:$0xf]
  %v71 = vld [vmem:[%s1 + $0xbc] sm:$0xf]
  %v72 = vld [vmem:[%s1 + $0xc0] sm:$0xf]
  %v73 = vld [vmem:[%s1 + $0xc4] sm:$0xf]
  %v74 = vld [vmem:[%s1 + $0xc8] sm:$0xf]
  %v75 = vld [vmem:[%s1 + $0xcc] sm:$0xf]
  %v76 = vld [vmem:[%s1 + $0xd0] sm:$0xf]
  %v77 = vld [vmem:[%s1 + $0xd4] sm:$0xf]
  %v78 = vld [vmem:[%s1 + $0xd8] sm:$0xf]
  %v79 = vld [vmem:[%s1 + $0xdc] sm:$0xf]
  %v80 = vld [vmem:[%s1 + $0xe0] sm:$0xf]
  %v81 = vld [vmem:[%s1 + $0xe4] sm:$0xf]
  %v82 = vld [vmem:[%s1 + $0xe8] sm:$0xf]
  %v83 = vld [vmem:[%s1 + $0xec] sm:$0xf]
  %v84 = vld [vmem:[%s1 + $0xf0] sm:$0xf]
  %v85 = vld [vmem:[%s1 + $0xf4] sm:$0xf]
  %v86 = vld [vmem:[%s1 + $0xf8] sm:$0xf]
  %v87 = vld [vmem:[%s1 + $0xfc] sm:$0xf]
  %v88 = vld [vmem:[%s1 + $0x100] sm:$0xf]
  %v89 = vld [vmem:[%s1 + $0x104] sm:$0xf]
  %v90 = vld [vmem:[%s1 + $0x108] sm:$0xf]
  %v91 = vld [vmem:[%s1 + $0x10c] sm:$0xf]
  %v92 = vld [vmem:[%s1 + $0x110] sm:$0xf]
  %v93 = vld [vmem:[%s1 + $0x114] sm:$0xf]
  %v94 = vld [vmem:[%s1 + $0x118] sm:$0xf]
  %v95 = vld [vmem:[%s1 + $0x11c] sm:$0xf]
  %v96 = vld [vmem:[%s1 + $0x120] sm:$0xf]
  %v97 = vld [vmem:[%s1 + $0x124] sm:$0xf]
  %v98 = vld [vmem:[%s1 + $0x128] sm:$0xf]
  %v99 = vld [vmem:[%s1 + $0x12c] sm:$0xf]
  %v100 = vld [vmem:[%s1 + $0x130] sm:$0xf]
  %v101 = vld [vmem:[%s1 + $0x134] sm:$0xf]
  %v102 = vld [vmem:[%s1 + $0x138] sm:$0xf]
  %v103 = vld [vmem:[%s1 + $0x13c] sm:$0xf]
  %v107 = vunpack.c.l.b16 %v21
  %v108 = vunpack.c.h.b16 %v21
  %v109 = vunpack.c.l.b16 %v22
  %v110 = vunpack.c.h.b16 %v22
  %v111 = vunpack.c.l.b16 %v23
  %v112 = vpack.c.b16 %v107, %v107
  %v113 = vpack.c.b16 %v108, %v108
  %v114 = vpack.c.b16 %v109, %v109
  %v115 = vpack.c.b16 %v110, %v110
  %v116 = vpack.c.b16 %v111, %v111
  %v202 = vunpack.c.l.b16 %v24
  %v203 = vunpack.c.l.b16 %v25
  %v204 = vunpack.c.l.b16 %v26
  %v205 = vunpack.c.l.b16 %v27
  %v206 = vunpack.c.l.b16 %v28
  %v207 = vunpack.c.l.b16 %v29
  %v208 = vunpack.c.l.b16 %v30
  %v209 = vunpack.c.l.b16 %v31
  %v210 = vunpack.c.l.b16 %v32
  %v211 = vunpack.c.l.b16 %v33
  %v212 = vunpack.c.l.b16 %v34
  %v213 = vunpack.c.l.b16 %v35
  %v214 = vunpack.c.l.b16 %v36
  %v215 = vunpack.c.l.b16 %v37
  %v216 = vunpack.c.l.b16 %v38
  %v217 = vunpack.c.l.b16 %v39
  %v218 = vunpack.c.l.b16 %v40
  %v219 = vunpack.c.l.b16 %v41
  %v220 = vunpack.c.l.b16 %v42
  %v221 = vunpack.c.l.b16 %v43
  %v222 = vunpack.c.l.b16 %v44
  %v223 = vunpack.c.l.b16 %v45
  %v224 = vunpack.c.l.b16 %v46
  %v225 = vunpack.c.l.b16 %v47
  %v226 = vunpack.c.l.b16 %v48
  %v227 = vunpack.c.l.b16 %v49
  %v228 = vunpack.c.l.b16 %v50
  %v229 = vunpack.c.l.b16 %v51
  %v230 = vunpack.c.l.b16 %v52
  %v231 = vunpack.c.l.b16 %v53
  %v232 = vunpack.c.l.b16 %v54
  %v233 = vunpack.c.l.b16 %v55
  %v234 = vunpack.c.l.b16 %v56
  %v235 = vunpack.c.l.b16 %v57
  %v236 = vunpack.c.l.b16 %v58
  %v237 = vunpack.c.l.b16 %v59
  %v238 = vunpack.c.l.b16 %v60
  %v239 = vunpack.c.l.b16 %v61
  %v240 = vunpack.c.l.b16 %v62
  %v241 = vunpack.c.l.b16 %v63
  %v242 = vunpack.c.l.b16 %v64
  %v243 = vunpack.c.l.b16 %v65
  %v244 = vunpack.c.l.b16 %v66
  %v245 = vunpack.c.l.b16 %v67
  %v246 = vunpack.c.l.b16 %v68
  %v247 = vunpack.c.l.b16 %v69
  %v248 = vunpack.c.l.b16 %v70
  %v249 = vunpack.c.l.b16 %v71
  %v250 = vunpack.c.l.b16 %v72
  %v251 = vunpack.c.l.b16 %v73
  %v252 = vunpack.c.l.b16 %v74
  %v253 = vunpack.c.l.b16 %v75
  %v254 = vunpack.c.l.b16 %v76
  %v255 = vunpack.c.l.b16 %v77
  %v256 = vunpack.c.l.b16 %v78
  %v257 = vunpack.c.l.b16 %v79
  %v258 = vunpack.c.l.b16 %v80
  %v259 = vunpack.c.l.b16 %v81
  %v260 = vunpack.c.l.b16 %v82
  %v261 = vunpack.c.l.b16 %v83
  %v262 = vunpack.c.l.b16 %v84
  %v263 = vunpack.c.l.b16 %v85
  %v264 = vunpack.c.l.b16 %v86
  %v265 = vunpack.c.l.b16 %v87
  %v266 = vunpack.c.l.b16 %v88
  %v267 = vunpack.c.l.b16 %v89
  %v268 = vunpack.c.l.b16 %v90
  %v269 = vunpack.c.l.b16 %v91
  %v270 = vunpack.c.l.b16 %v92
  %v271 = vunpack.c.l.b16 %v93
  %v272 = vunpack.c.l.b16 %v94
  %v273 = vunpack.c.l.b16 %v95
  %v274 = vunpack.c.l.b16 %v96
  %v275 = vunpack.c.l.b16 %v97
  %v276 = vunpack.c.l.b16 %v98
  %v277 = vunpack.c.l.b16 %v99
  %v278 = vunpack.c.l.b16 %v100
  %v279 = vunpack.c.l.b16 %v101
  %v280 = vunpack.c.l.b16 %v102
  %v281 = vunpack.c.l.b16 %v103
  %v282 = vpack.c.b16 %v203, %v202
  %v283 = vpack.c.b16 %v205, %v204
  %v284 = vpack.c.b16 %v207, %v206
  %v285 = vpack.c.b16 %v209, %v208
  %v286 = vpack.c.b16 %v211, %v210
  %v287 = vpack.c.b16 %v213, %v212
  %v288 = vpack.c.b16 %v215, %v214
  %v289 = vpack.c.b16 %v217, %v216
  %v290 = vpack.c.b16 %v219, %v218
  %v291 = vpack.c.b16 %v221, %v220
  %v292 = vpack.c.b16 %v223, %v222
  %v293 = vpack.c.b16 %v225, %v224
  %v294 = vpack.c.b16 %v227, %v226
  %v295 = vpack.c.b16 %v229, %v228
  %v296 = vpack.c.b16 %v231, %v230
  %v297 = vpack.c.b16 %v233, %v232
  %v298 = vpack.c.b16 %v235, %v234
  %v299 = vpack.c.b16 %v237, %v236
  %v300 = vpack.c.b16 %v239, %v238
  %v301 = vpack.c.b16 %v241, %v240
  %v302 = vpack.c.b16 %v243, %v242
  %v303 = vpack.c.b16 %v245, %v244
  %v304 = vpack.c.b16 %v247, %v246
  %v305 = vpack.c.b16 %v249, %v248
  %v306 = vpack.c.b16 %v251, %v250
  %v307 = vpack.c.b16 %v253, %v252
  %v308 = vpack.c.b16 %v255, %v254
  %v309 = vpack.c.b16 %v257, %v256
  %v310 = vpack.c.b16 %v259, %v258
  %v311 = vpack.c.b16 %v261, %v260
  %v312 = vpack.c.b16 %v263, %v262
  %v313 = vpack.c.b16 %v265, %v264
  %v314 = vpack.c.b16 %v267, %v266
  %v315 = vpack.c.b16 %v269, %v268
  %v316 = vpack.c.b16 %v271, %v270
  %v317 = vpack.c.b16 %v273, %v272
  %v318 = vpack.c.b16 %v275, %v274
  %v319 = vpack.c.b16 %v277, %v276
  %v320 = vpack.c.b16 %v279, %v278
  %v321 = vpack.c.b16 %v281, %v280
  %362 = vmatprep.subr.bf16.mxu0 0
  %363 = vmatpush1.bf16.msra.mxu0 %v282
  %364 = vmatprep.subr.bf16.mxu0 0
  %365 = vmatpush1.bf16.msra.mxu0 %v283
  %366 = vmatprep.subr.bf16.mxu0 0
  %367 = vmatpush1.bf16.msra.mxu0 %v284
  %368 = vmatprep.subr.bf16.mxu0 0
  %369 = vmatpush1.bf16.msra.mxu0 %v285
  %370 = vmatprep.subr.bf16.mxu0 0
  %371 = vmatpush1.bf16.msra.mxu0 %v286
  %372 = vmatprep.subr.bf16.mxu0 0
  %373 = vmatpush1.bf16.msra.mxu0 %v287
  %374 = vmatprep.subr.bf16.mxu0 0
  %375 = vmatpush1.bf16.msra.mxu0 %v288
  %376 = vmatprep.subr.bf16.mxu0 0
  %377 = vmatpush1.bf16.msra.mxu0 %v289
  %378 = vmatprep.subr.bf16.mxu0 0
  %379 = vmatpush1.bf16.msra.mxu0 %v290
  %380 = vmatprep.subr.bf16.mxu0 0
  %381 = vmatpush1.bf16.msra.mxu0 %v291
  %382 = vmatprep.subr.bf16.mxu0 0
  %383 = vmatpush1.bf16.msra.mxu0 %v292
  %384 = vmatprep.subr.bf16.mxu0 0
  %385 = vmatpush1.bf16.msra.mxu0 %v293
  %386 = vmatprep.subr.bf16.mxu0 0
  %387 = vmatpush1.bf16.msra.mxu0 %v294
  %388 = vmatprep.subr.bf16.mxu0 0
  %389 = vmatpush1.bf16.msra.mxu0 %v295
  %390 = vmatprep.subr.bf16.mxu0 0
  %391 = vmatpush1.bf16.msra.mxu0 %v296
  %392 = vmatprep.subr.bf16.mxu0 0
  %393 = vmatpush1.bf16.msra.mxu0 %v297
  %394 = vmatprep.mubr.bf16.mxu0 %v113
  %395 = vmatmul.mubr.bf16.gmra.mrb[0].mxu0 %v112
  %v396 = vpop.f32.mrb[0].mxu0
  %v397 = vadd.f32 0.0, %v396
  %v398 = vpop.f32.mrb[0].mxu0
  %v399 = vpop.f32.mrb[0].mxu0
  %v400 = vpop.f32.mrb[0].mxu0
  %401 = vdwg.mxu0
  %402 = vmatprep.subr.bf16.mxu0 0
  %403 = vmatpush1.bf16.msra.mxu0 %v298
  %404 = vmatprep.subr.bf16.mxu0 0
  %405 = vmatpush1.bf16.msra.mxu0 %v299
  %406 = vmatprep.subr.bf16.mxu0 0
  %407 = vmatpush1.bf16.msra.mxu0 %v300
  %408 = vmatprep.subr.bf16.mxu0 0
  %409 = vmatpush1.bf16.msra.mxu0 %v301
  %410 = vmatprep.subr.bf16.mxu0 0
  %411 = vmatpush1.bf16.msra.mxu0 %v302
  %412 = vmatprep.subr.bf16.mxu0 0
  %413 = vmatpush1.bf16.msra.mxu0 %v303
  %414 = vmatprep.subr.bf16.mxu0 0
  %415 = vmatpush1.bf16.msra.mxu0 %v304
  %416 = vmatprep.subr.bf16.mxu0 0
  %417 = vmatpush1.bf16.msra.mxu0 %v305
  %418 = vmatprep.subr.bf16.mxu0 0
  %419 = vmatpush1.bf16.msra.mxu0 %v306
  %420 = vmatprep.subr.bf16.mxu0 0
  %421 = vmatpush1.bf16.msra.mxu0 %v307
  %422 = vmatprep.subr.bf16.mxu0 0
  %423 = vmatpush1.bf16.msra.mxu0 %v308
  %424 = vmatprep.subr.bf16.mxu0 0
  %425 = vmatpush1.bf16.msra.mxu0 %v309
  %426 = vmatprep.subr.bf16.mxu0 0
  %427 = vmatpush1.bf16.msra.mxu0 %v310
  %428 = vmatprep.subr.bf16.mxu0 0
  %429 = vmatpush1.bf16.msra.mxu0 %v311
  %430 = vmatprep.subr.bf16.mxu0 0
  %431 = vmatpush1.bf16.msra.mxu0 %v312
  %432 = vmatprep.subr.bf16.mxu0 0
  %433 = vmatpush1.bf16.msra.mxu0 %v313
  %434 = vmatprep.mubr.bf16.mxu0 %v115
  %435 = vmatmul.mubr.bf16.gmra.mrb[0].mxu0 %v114
  %v436 = vpop.f32.mrb[0].mxu0
  %v437 = vadd.f32 %v397, %v436
  %v438 = vpop.f32.mrb[0].mxu0
  %v439 = vpop.f32.mrb[0].mxu0
  %v440 = vpop.f32.mrb[0].mxu0
  %441 = vdwg.mxu0
  %442 = vmatprep.subr.bf16.mxu0 0
  %443 = vmatpush1.bf16.msra.mxu0 %v314
  %444 = vmatprep.subr.bf16.mxu0 0
  %445 = vmatpush1.bf16.msra.mxu0 %v315
  %446 = vmatprep.subr.bf16.mxu0 0
  %447 = vmatpush1.bf16.msra.mxu0 %v316
  %448 = vmatprep.subr.bf16.mxu0 0
  %449 = vmatpush1.bf16.msra.mxu0 %v317
  %450 = vmatprep.subr.bf16.mxu0 0
  %451 = vmatpush1.bf16.msra.mxu0 %v318
  %452 = vmatprep.subr.bf16.mxu0 0
  %453 = vmatpush1.bf16.msra.mxu0 %v319
  %454 = vmatprep.subr.bf16.mxu0 0
  %455 = vmatpush1.bf16.msra.mxu0 %v320
  %456 = vmatprep.subr.bf16.mxu0 0
  %457 = vmatpush1.bf16.msra.mxu0 %v321
  %458 = vmatprep.subr.bf16.mxu0 0
  %459 = vmatpush1.bf16.msra.mxu0 0
  %460 = vmatprep.subr.bf16.mxu0 0
  %461 = vmatpush1.bf16.msra.mxu0 0
  %462 = vmatprep.subr.bf16.mxu0 0
  %463 = vmatpush1.bf16.msra.mxu0 0
  %464 = vmatprep.subr.bf16.mxu0 0
  %465 = vmatpush1.bf16.msra.mxu0 0
  %466 = vmatprep.subr.bf16.mxu0 0
  %467 = vmatpush1.bf16.msra.mxu0 0
  %468 = vmatprep.subr.bf16.mxu0 0
  %469 = vmatpush1.bf16.msra.mxu0 0
  %470 = vmatprep.subr.bf16.mxu0 0
  %471 = vmatpush1.bf16.msra.mxu0 0
  %472 = vmatprep.subr.bf16.mxu0 0
  %473 = vmatpush1.bf16.msra.mxu0 0
  %474 = vmatprep.mubr.bf16.mxu0 0
  %475 = vmatmul.mubr.bf16.gmra.mrb[0].mxu0 %v116
  %v476 = vpop.f32.mrb[0].mxu0
  %v477 = vadd.f32 %v437, %v476
  %v478 = vpop.f32.mrb[0].mxu0
  %v479 = vpop.f32.mrb[0].mxu0
  %v480 = vpop.f32.mrb[0].mxu0
  %481 = vdwg.mxu0
  %v482 = vld [vmem:[%s2] sm:$0x1]
  %v484 = vlaneseq
  %v485 = vshrl.u32 %v484, 7
  %v486 = vsub.s32 0, %v485
  %v487 = vrot.slane %v482, %v486
  %v489 = vmul.f32 %v477, %v487
  %v490 = vld [vmem:[%s3] sm:$0x1]
  %v492 = vlaneseq
  %v493 = vshrl.u32 %v492, 7
  %v494 = vsub.s32 0, %v493
  %v495 = vrot.slane %v490, %v494
  %v497 = vadd.f32 %v489, %v495
  %v498 = vld [vmem:[%s4] sm:$0xf]
  %v499 = vunpack.c.l.bf16 %v498
  %v500 = vadd.f32 %v497, %v499
  %v501 = vmax.f32 %v500, 0.0
  %v502 = vpack.c.bf16 %v501, %v501
  %503 = vst [vmem:[%s5] sm:$0xf] %v502
  // Predicated region
  $region22: #{resnet_forward.35} parent=0 // pred_check
    _
  $region23: #{resnet_forward.35} parent=0 // pred_check_branch
    %505 = sbr.rel (0) target = $region25
  $region24: #{resnet_forward.35} parent=0 // pred_region
    _
  $region25: #{resnet_forward.35} parent=0 // pred_fallthru
    _
  // Predicated region
  $region26: #{resnet_forward.35} parent=0 // pred_check
    _
  $region27: #{resnet_forward.35} parent=0 // pred_check_branch
    %507 = sbr.rel (0) target = $region29
  $region28: #{resnet_forward.35} parent=0 // pred_region
    _
  $region29: #{resnet_forward.35} parent=0 // pred_fallthru
    _

// kernel: resnet_forward.36
$region0: #{resnet_forward.36}
  #allocation0 [shape = 'u32[]', space=smem, size = 0x4, offset = 0x4, fixed_abs, tag = 'smem constant byte address 0x4 - core index']
  #allocation1 [shape = 'u32[144,128]{1,0:T(1,128)}', space=vmem, size = 0x12000, scoped, tag = 'internal scratch']
  %s0 = inlined_call_operand.vmem [shape: bf16[8,640], index: 0, kind: input, shape index: {}]
  %s1 = inlined_call_operand.vmem [shape: bf16[640,128], index: 1, kind: input, shape index: {}]
  %s2 = inlined_call_operand.vmem [shape: f32[1,128], index: 2, kind: input, shape index: {}]
  %s3 = inlined_call_operand.vmem [shape: f32[1,128], index: 3, kind: input, shape index: {}]
  %s4 = inlined_call_operand.vmem [shape: bf16[8,128], index: 4, kind: output, shape index: {}]
  %s5 = sld [smem:[#allocation0]]
  $region26: #{resnet_forward.36} parent=0
    _
  %s7 = ssub.s32 1, %s5
  %s8 = scalar_select 0, %s7, %s5
  // Predicated region
  $region2: #{resnet_forward.36} parent=0 // pred_check
    _
  $region3: #{resnet_forward.36} parent=0 // pred_check_branch
    %10 = sbr.rel (0) target = $region5
  $region4: #{resnet_forward.36} parent=0 // pred_region
    _
  $region5: #{resnet_forward.36} parent=0 // pred_fallthru
    _
  // Predicated region
  $region6: #{resnet_forward.36} parent=0 // pred_check
    _
  $region7: #{resnet_forward.36} parent=0 // pred_check_branch
    %12 = sbr.rel (0) target = $region9
  $region8: #{resnet_forward.36} parent=0 // pred_region
    _
  $region9: #{resnet_forward.36} parent=0 // pred_fallthru
    _
  // Predicated region
  $region10: #{resnet_forward.36} parent=0 // pred_check
    _
  $region11: #{resnet_forward.36} parent=0 // pred_check_branch
    %14 = sbr.rel (0) target = $region13
  $region12: #{resnet_forward.36} parent=0 // pred_region
    _
  $region13: #{resnet_forward.36} parent=0 // pred_fallthru
    _
  // Predicated region
  $region14: #{resnet_forward.36} parent=0 // pred_check
    _
  $region15: #{resnet_forward.36} parent=0 // pred_check_branch
    %16 = sbr.rel (0) target = $region17
  $region16: #{resnet_forward.36} parent=0 // pred_region
    _
  $region17: #{resnet_forward.36} parent=0 // pred_fallthru
    _
  %v18 = vld [vmem:[%s0] sm:$0xff]
  %v19 = vld [vmem:[%s0 + $0x8] sm:$0xff]
  %v20 = vld [vmem:[%s0 + $0x10] sm:$0xf]
  %v21 = vld [vmem:[%s1] sm:$0xf]
  %v22 = vld [vmem:[%s1 + $0x4] sm:$0xf]
  %v23 = vld [vmem:[%s1 + $0x8] sm:$0xf]
  %v24 = vld [vmem:[%s1 + $0xc] sm:$0xf]
  %v25 = vld [vmem:[%s1 + $0x10] sm:$0xf]
  %v26 = vld [vmem:[%s1 + $0x14] sm:$0xf]
  %v27 = vld [vmem:[%s1 + $0x18] sm:$0xf]
  %v28 = vld [vmem:[%s1 + $0x1c] sm:$0xf]
  %v29 = vld [vmem:[%s1 + $0x20] sm:$0xf]
  %v30 = vld [vmem:[%s1 + $0x24] sm:$0xf]
  %v31 = vld [vmem:[%s1 + $0x28] sm:$0xf]
  %v32 = vld [vmem:[%s1 + $0x2c] sm:$0xf]
  %v33 = vld [vmem:[%s1 + $0x30] sm:$0xf]
  %v34 = vld [vmem:[%s1 + $0x34] sm:$0xf]
  %v35 = vld [vmem:[%s1 + $0x38] sm:$0xf]
  %v36 = vld [vmem:[%s1 + $0x3c] sm:$0xf]
  %v37 = vld [vmem:[%s1 + $0x40] sm:$0xf]
  %v38 = vld [vmem:[%s1 + $0x44] sm:$0xf]
  %v39 = vld [vmem:[%s1 + $0x48] sm:$0xf]
  %v40 = vld [vmem:[%s1 + $0x4c] sm:$0xf]
  %v41 = vld [vmem:[%s1 + $0x50] sm:$0xf]
  %v42 = vld [vmem:[%s1 + $0x54] sm:$0xf]
  %v43 = vld [vmem:[%s1 + $0x58] sm:$0xf]
  %v44 = vld [vmem:[%s1 + $0x5c] sm:$0xf]
  %v45 = vld [vmem:[%s1 + $0x60] sm:$0xf]
  %v46 = vld [vmem:[%s1 + $0x64] sm:$0xf]
  %v47 = vld [vmem:[%s1 + $0x68] sm:$0xf]
  %v48 = vld [vmem:[%s1 + $0x6c] sm:$0xf]
  %v49 = vld [vmem:[%s1 + $0x70] sm:$0xf]
  %v50 = vld [vmem:[%s1 + $0x74] sm:$0xf]
  %v51 = vld [vmem:[%s1 + $0x78] sm:$0xf]
  %v52 = vld [vmem:[%s1 + $0x7c] sm:$0xf]
  %v53 = vld [vmem:[%s1 + $0x80] sm:$0xf]
  %v54 = vld [vmem:[%s1 + $0x84] sm:$0xf]
  %v55 = vld [vmem:[%s1 + $0x88] sm:$0xf]
  %v56 = vld [vmem:[%s1 + $0x8c] sm:$0xf]
  %v57 = vld [vmem:[%s1 + $0x90] sm:$0xf]
  %v58 = vld [vmem:[%s1 + $0x94] sm:$0xf]
  %v59 = vld [vmem:[%s1 + $0x98] sm:$0xf]
  %v60 = vld [vmem:[%s1 + $0x9c] sm:$0xf]
  %v61 = vld [vmem:[%s1 + $0xa0] sm:$0xf]
  %v62 = vld [vmem:[%s1 + $0xa4] sm:$0xf]
  %v63 = vld [vmem:[%s1 + $0xa8] sm:$0xf]
  %v64 = vld [vmem:[%s1 + $0xac] sm:$0xf]
  %v65 = vld [vmem:[%s1 + $0xb0] sm:$0xf]
  %v66 = vld [vmem:[%s1 + $0xb4] sm:$0xf]
  %v67 = vld [vmem:[%s1 + $0xb8] sm:$0xf]
  %v68 = vld [vmem:[%s1 + $0xbc] sm:$0xf]
  %v69 = vld [vmem:[%s1 + $0xc0] sm:$0xf]
  %v70 = vld [vmem:[%s1 + $0xc4] sm:$0xf]
  %v71 = vld [vmem:[%s1 + $0xc8] sm:$0xf]
  %v72 = vld [vmem:[%s1 + $0xcc] sm:$0xf]
  %v73 = vld [vmem:[%s1 + $0xd0] sm:$0xf]
  %v74 = vld [vmem:[%s1 + $0xd4] sm:$0xf]
  %v75 = vld [vmem:[%s1 + $0xd8] sm:$0xf]
  %v76 = vld [vmem:[%s1 + $0xdc] sm:$0xf]
  %v77 = vld [vmem:[%s1 + $0xe0] sm:$0xf]
  %v78 = vld [vmem:[%s1 + $0xe4] sm:$0xf]
  %v79 = vld [vmem:[%s1 + $0xe8] sm:$0xf]
  %v80 = vld [vmem:[%s1 + $0xec] sm:$0xf]
  %v81 = vld [vmem:[%s1 + $0xf0] sm:$0xf]
  %v82 = vld [vmem:[%s1 + $0xf4] sm:$0xf]
  %v83 = vld [vmem:[%s1 + $0xf8] sm:$0xf]
  %v84 = vld [vmem:[%s1 + $0xfc] sm:$0xf]
  %v85 = vld [vmem:[%s1 + $0x100] sm:$0xf]
  %v86 = vld [vmem:[%s1 + $0x104] sm:$0xf]
  %v87 = vld [vmem:[%s1 + $0x108] sm:$0xf]
  %v88 = vld [vmem:[%s1 + $0x10c] sm:$0xf]
  %v89 = vld [vmem:[%s1 + $0x110] sm:$0xf]
  %v90 = vld [vmem:[%s1 + $0x114] sm:$0xf]
  %v91 = vld [vmem:[%s1 + $0x118] sm:$0xf]
  %v92 = vld [vmem:[%s1 + $0x11c] sm:$0xf]
  %v93 = vld [vmem:[%s1 + $0x120] sm:$0xf]
  %v94 = vld [vmem:[%s1 + $0x124] sm:$0xf]
  %v95 = vld [vmem:[%s1 + $0x128] sm:$0xf]
  %v96 = vld [vmem:[%s1 + $0x12c] sm:$0xf]
  %v97 = vld [vmem:[%s1 + $0x130] sm:$0xf]
  %v98 = vld [vmem:[%s1 + $0x134] sm:$0xf]
  %v99 = vld [vmem:[%s1 + $0x138] sm:$0xf]
  %v100 = vld [vmem:[%s1 + $0x13c] sm:$0xf]
  %v104 = vunpack.c.l.b16 %v18
  %v105 = vunpack.c.h.b16 %v18
  %v106 = vunpack.c.l.b16 %v19
  %v107 = vunpack.c.h.b16 %v19
  %v108 = vunpack.c.l.b16 %v20
  %v109 = vpack.c.b16 %v104, %v104
  %v110 = vpack.c.b16 %v105, %v105
  %v111 = vpack.c.b16 %v106, %v106
  %v112 = vpack.c.b16 %v107, %v107
  %v113 = vpack.c.b16 %v108, %v108
  %v199 = vunpack.c.l.b16 %v21
  %v200 = vunpack.c.l.b16 %v22
  %v201 = vunpack.c.l.b16 %v23
  %v202 = vunpack.c.l.b16 %v24
  %v203 = vunpack.c.l.b16 %v25
  %v204 = vunpack.c.l.b16 %v26
  %v205 = vunpack.c.l.b16 %v27
  %v206 = vunpack.c.l.b16 %v28
  %v207 = vunpack.c.l.b16 %v29
  %v208 = vunpack.c.l.b16 %v30
  %v209 = vunpack.c.l.b16 %v31
  %v210 = vunpack.c.l.b16 %v32
  %v211 = vunpack.c.l.b16 %v33
  %v212 = vunpack.c.l.b16 %v34
  %v213 = vunpack.c.l.b16 %v35
  %v214 = vunpack.c.l.b16 %v36
  %v215 = vunpack.c.l.b16 %v37
  %v216 = vunpack.c.l.b16 %v38
  %v217 = vunpack.c.l.b16 %v39
  %v218 = vunpack.c.l.b16 %v40
  %v219 = vunpack.c.l.b16 %v41
  %v220 = vunpack.c.l.b16 %v42
  %v221 = vunpack.c.l.b16 %v43
  %v222 = vunpack.c.l.b16 %v44
  %v223 = vunpack.c.l.b16 %v45
  %v224 = vunpack.c.l.b16 %v46
  %v225 = vunpack.c.l.b16 %v47
  %v226 = vunpack.c.l.b16 %v48
  %v227 = vunpack.c.l.b16 %v49
  %v228 = vunpack.c.l.b16 %v50
  %v229 = vunpack.c.l.b16 %v51
  %v230 = vunpack.c.l.b16 %v52
  %v231 = vunpack.c.l.b16 %v53
  %v232 = vunpack.c.l.b16 %v54
  %v233 = vunpack.c.l.b16 %v55
  %v234 = vunpack.c.l.b16 %v56
  %v235 = vunpack.c.l.b16 %v57
  %v236 = vunpack.c.l.b16 %v58
  %v237 = vunpack.c.l.b16 %v59
  %v238 = vunpack.c.l.b16 %v60
  %v239 = vunpack.c.l.b16 %v61
  %v240 = vunpack.c.l.b16 %v62
  %v241 = vunpack.c.l.b16 %v63
  %v242 = vunpack.c.l.b16 %v64
  %v243 = vunpack.c.l.b16 %v65
  %v244 = vunpack.c.l.b16 %v66
  %v245 = vunpack.c.l.b16 %v67
  %v246 = vunpack.c.l.b16 %v68
  %v247 = vunpack.c.l.b16 %v69
  %v248 = vunpack.c.l.b16 %v70
  %v249 = vunpack.c.l.b16 %v71
  %v250 = vunpack.c.l.b16 %v72
  %v251 = vunpack.c.l.b16 %v73
  %v252 = vunpack.c.l.b16 %v74
  %v253 = vunpack.c.l.b16 %v75
  %v254 = vunpack.c.l.b16 %v76
  %v255 = vunpack.c.l.b16 %v77
  %v256 = vunpack.c.l.b16 %v78
  %v257 = vunpack.c.l.b16 %v79
  %v258 = vunpack.c.l.b16 %v80
  %v259 = vunpack.c.l.b16 %v81
  %v260 = vunpack.c.l.b16 %v82
  %v261 = vunpack.c.l.b16 %v83
  %v262 = vunpack.c.l.b16 %v84
  %v263 = vunpack.c.l.b16 %v85
  %v264 = vunpack.c.l.b16 %v86
  %v265 = vunpack.c.l.b16 %v87
  %v266 = vunpack.c.l.b16 %v88
  %v267 = vunpack.c.l.b16 %v89
  %v268 = vunpack.c.l.b16 %v90
  %v269 = vunpack.c.l.b16 %v91
  %v270 = vunpack.c.l.b16 %v92
  %v271 = vunpack.c.l.b16 %v93
  %v272 = vunpack.c.l.b16 %v94
  %v273 = vunpack.c.l.b16 %v95
  %v274 = vunpack.c.l.b16 %v96
  %v275 = vunpack.c.l.b16 %v97
  %v276 = vunpack.c.l.b16 %v98
  %v277 = vunpack.c.l.b16 %v99
  %v278 = vunpack.c.l.b16 %v100
  %v279 = vpack.c.b16 %v200, %v199
  %v280 = vpack.c.b16 %v202, %v201
  %v281 = vpack.c.b16 %v204, %v203
  %v282 = vpack.c.b16 %v206, %v205
  %v283 = vpack.c.b16 %v208, %v207
  %v284 = vpack.c.b16 %v210, %v209
  %v285 = vpack.c.b16 %v212, %v211
  %v286 = vpack.c.b16 %v214, %v213
  %v287 = vpack.c.b16 %v216, %v215
  %v288 = vpack.c.b16 %v218, %v217
  %v289 = vpack.c.b16 %v220, %v219
  %v290 = vpack.c.b16 %v222, %v221
  %v291 = vpack.c.b16 %v224, %v223
  %v292 = vpack.c.b16 %v226, %v225
  %v293 = vpack.c.b16 %v228, %v227
  %v294 = vpack.c.b16 %v230, %v229
  %v295 = vpack.c.b16 %v232, %v231
  %v296 = vpack.c.b16 %v234, %v233
  %v297 = vpack.c.b16 %v236, %v235
  %v298 = vpack.c.b16 %v238, %v237
  %v299 = vpack.c.b16 %v240, %v239
  %v300 = vpack.c.b16 %v242, %v241
  %v301 = vpack.c.b16 %v244, %v243
  %v302 = vpack.c.b16 %v246, %v245
  %v303 = vpack.c.b16 %v248, %v247
  %v304 = vpack.c.b16 %v250, %v249
  %v305 = vpack.c.b16 %v252, %v251
  %v306 = vpack.c.b16 %v254, %v253
  %v307 = vpack.c.b16 %v256, %v255
  %v308 = vpack.c.b16 %v258, %v257
  %v309 = vpack.c.b16 %v260, %v259
  %v310 = vpack.c.b16 %v262, %v261
  %v311 = vpack.c.b16 %v264, %v263
  %v312 = vpack.c.b16 %v266, %v265
  %v313 = vpack.c.b16 %v268, %v267
  %v314 = vpack.c.b16 %v270, %v269
  %v315 = vpack.c.b16 %v272, %v271
  %v316 = vpack.c.b16 %v274, %v273
  %v317 = vpack.c.b16 %v276, %v275
  %v318 = vpack.c.b16 %v278, %v277
  %359 = vmatprep.subr.bf16.mxu0 0
  %360 = vmatpush1.bf16.msra.mxu0 %v279
  %361 = vmatprep.subr.bf16.mxu0 0
  %362 = vmatpush1.bf16.msra.mxu0 %v280
  %363 = vmatprep.subr.bf16.mxu0 0
  %364 = vmatpush1.bf16.msra.mxu0 %v281
  %365 = vmatprep.subr.bf16.mxu0 0
  %366 = vmatpush1.bf16.msra.mxu0 %v282
  %367 = vmatprep.subr.bf16.mxu0 0
  %368 = vmatpush1.bf16.msra.mxu0 %v283
  %369 = vmatprep.subr.bf16.mxu0 0
  %370 = vmatpush1.bf16.msra.mxu0 %v284
  %371 = vmatprep.subr.bf16.mxu0 0
  %372 = vmatpush1.bf16.msra.mxu0 %v285
  %373 = vmatprep.subr.bf16.mxu0 0
  %374 = vmatpush1.bf16.msra.mxu0 %v286
  %375 = vmatprep.subr.bf16.mxu0 0
  %376 = vmatpush1.bf16.msra.mxu0 %v287
  %377 = vmatprep.subr.bf16.mxu0 0
  %378 = vmatpush1.bf16.msra.mxu0 %v288
  %379 = vmatprep.subr.bf16.mxu0 0
  %380 = vmatpush1.bf16.msra.mxu0 %v289
  %381 = vmatprep.subr.bf16.mxu0 0
  %382 = vmatpush1.bf16.msra.mxu0 %v290
  %383 = vmatprep.subr.bf16.mxu0 0
  %384 = vmatpush1.bf16.msra.mxu0 %v291
  %385 = vmatprep.subr.bf16.mxu0 0
  %386 = vmatpush1.bf16.msra.mxu0 %v292
  %387 = vmatprep.subr.bf16.mxu0 0
  %388 = vmatpush1.bf16.msra.mxu0 %v293
  %389 = vmatprep.subr.bf16.mxu0 0
  %390 = vmatpush1.bf16.msra.mxu0 %v294
  %391 = vmatprep.mubr.bf16.mxu0 %v110
  %392 = vmatmul.mubr.bf16.gmra.mrb[0].mxu0 %v109
  %v393 = vpop.f32.mrb[0].mxu0
  %v394 = vadd.f32 0.0, %v393
  %v395 = vpop.f32.mrb[0].mxu0
  %v396 = vpop.f32.mrb[0].mxu0
  %v397 = vpop.f32.mrb[0].mxu0
  %398 = vdwg.mxu0
  %399 = vmatprep.subr.bf16.mxu0 0
  %400 = vmatpush1.bf16.msra.mxu0 %v295
  %401 = vmatprep.subr.bf16.mxu0 0
  %402 = vmatpush1.bf16.msra.mxu0 %v296
  %403 = vmatprep.subr.bf16.mxu0 0
  %404 = vmatpush1.bf16.msra.mxu0 %v297
  %405 = vmatprep.subr.bf16.mxu0 0
  %406 = vmatpush1.bf16.msra.mxu0 %v298
  %407 = vmatprep.subr.bf16.mxu0 0
  %408 = vmatpush1.bf16.msra.mxu0 %v299
  %409 = vmatprep.subr.bf16.mxu0 0
  %410 = vmatpush1.bf16.msra.mxu0 %v300
  %411 = vmatprep.subr.bf16.mxu0 0
  %412 = vmatpush1.bf16.msra.mxu0 %v301
  %413 = vmatprep.subr.bf16.mxu0 0
  %414 = vmatpush1.bf16.msra.mxu0 %v302
  %415 = vmatprep.subr.bf16.mxu0 0
  %416 = vmatpush1.bf16.msra.mxu0 %v303
  %417 = vmatprep.subr.bf16.mxu0 0
  %418 = vmatpush1.bf16.msra.mxu0 %v304
  %419 = vmatprep.subr.bf16.mxu0 0
  %420 = vmatpush1.bf16.msra.mxu0 %v305
  %421 = vmatprep.subr.bf16.mxu0 0
  %422 = vmatpush1.bf16.msra.mxu0 %v306
  %423 = vmatprep.subr.bf16.mxu0 0
  %424 = vmatpush1.bf16.msra.mxu0 %v307
  %425 = vmatprep.subr.bf16.mxu0 0
  %426 = vmatpush1.bf16.msra.mxu0 %v308
  %427 = vmatprep.subr.bf16.mxu0 0
  %428 = vmatpush1.bf16.msra.mxu0 %v309
  %429 = vmatprep.subr.bf16.mxu0 0
  %430 = vmatpush1.bf16.msra.mxu0 %v310
  %431 = vmatprep.mubr.bf16.mxu0 %v112
  %432 = vmatmul.mubr.bf16.gmra.mrb[0].mxu0 %v111
  %v433 = vpop.f32.mrb[0].mxu0
  %v434 = vadd.f32 %v394, %v433
  %v435 = vpop.f32.mrb[0].mxu0
  %v436 = vpop.f32.mrb[0].mxu0
  %v437 = vpop.f32.mrb[0].mxu0
  %438 = vdwg.mxu0
  %439 = vmatprep.subr.bf16.mxu0 0
  %440 = vmatpush1.bf16.msra.mxu0 %v311
  %441 = vmatprep.subr.bf16.mxu0 0
  %442 = vmatpush1.bf16.msra.mxu0 %v312
  %443 = vmatprep.subr.bf16.mxu0 0
  %444 = vmatpush1.bf16.msra.mxu0 %v313
  %445 = vmatprep.subr.bf16.mxu0 0
  %446 = vmatpush1.bf16.msra.mxu0 %v314
  %447 = vmatprep.subr.bf16.mxu0 0
  %448 = vmatpush1.bf16.msra.mxu0 %v315
  %449 = vmatprep.subr.bf16.mxu0 0
  %450 = vmatpush1.bf16.msra.mxu0 %v316
  %451 = vmatprep.subr.bf16.mxu0 0
  %452 = vmatpush1.bf16.msra.mxu0 %v317
  %453 = vmatprep.subr.bf16.mxu0 0
  %454 = vmatpush1.bf16.msra.mxu0 %v318
  %455 = vmatprep.subr.bf16.mxu0 0
  %456 = vmatpush1.bf16.msra.mxu0 0
  %457 = vmatprep.subr.bf16.mxu0 0
  %458 = vmatpush1.bf16.msra.mxu0 0
  %459 = vmatprep.subr.bf16.mxu0 0
  %460 = vmatpush1.bf16.msra.mxu0 0
  %461 = vmatprep.subr.bf16.mxu0 0
  %462 = vmatpush1.bf16.msra.mxu0 0
  %463 = vmatprep.subr.bf16.mxu0 0
  %464 = vmatpush1.bf16.msra.mxu0 0
  %465 = vmatprep.subr.bf16.mxu0 0
  %466 = vmatpush1.bf16.msra.mxu0 0
  %467 = vmatprep.subr.bf16.mxu0 0
  %468 = vmatpush1.bf16.msra.mxu0 0
  %469 = vmatprep.subr.bf16.mxu0 0
  %470 = vmatpush1.bf16.msra.mxu0 0
  %471 = vmatprep.mubr.bf16.mxu0 0
  %472 = vmatmul.mubr.bf16.gmra.mrb[0].mxu0 %v113
  %v473 = vpop.f32.mrb[0].mxu0
  %v474 = vadd.f32 %v434, %v473
  %v475 = vpop.f32.mrb[0].mxu0
  %v476 = vpop.f32.mrb[0].mxu0
  %v477 = vpop.f32.mrb[0].mxu0
  %478 = vdwg.mxu0
  %v479 = vld [vmem:[%s2] sm:$0x1]
  %v481 = vlaneseq
  %v482 = vshrl.u32 %v481, 7
  %v483 = vsub.s32 0, %v482
  %v484 = vrot.slane %v479, %v483
  %v486 = vmul.f32 %v474, %v484
  %v487 = vld [vmem:[%s3] sm:$0x1]
  %v489 = vlaneseq
  %v490 = vshrl.u32 %v489, 7
  %v491 = vsub.s32 0, %v490
  %v492 = vrot.slane %v487, %v491
  %v494 = vadd.f32 %v486, %v492
  %v495 = vmax.f32 %v494, 0.0
  %v496 = vpack.c.bf16 %v495, %v495
  %497 = vst [vmem:[%s4] sm:$0xf] %v496
  // Predicated region
  $region18: #{resnet_forward.36} parent=0 // pred_check
    _
  $region19: #{resnet_forward.36} parent=0 // pred_check_branch
    %499 = sbr.rel (0) target = $region21
  $region20: #{resnet_forward.36} parent=0 // pred_region
    _
  $region21: #{resnet_forward.36} parent=0 // pred_fallthru
    _
  // Predicated region
  $region22: #{resnet_forward.36} parent=0 // pred_check
    _
  $region23: #{resnet_forward.36} parent=0 // pred_check_branch
    %501 = sbr.rel (0) target = $region25
  $region24: #{resnet_forward.36} parent=0 // pred_region
    _
  $region25: #{resnet_forward.36} parent=0 // pred_fallthru
    _

// kernel: resnet_forward.38
$region0: #{resnet_forward.38}
  #allocation0 [shape = 'u32[]', space=smem, size = 0x4, offset = 0x4, fixed_abs, tag = 'smem constant byte address 0x4 - core index']
  #allocation1 [shape = 'u32[144,128]{1,0:T(1,128)}', space=vmem, size = 0x12000, scoped, tag = 'internal scratch']
  %s0 = inlined_call_operand.vmem [shape: bf16[2,128], index: 0, kind: input, shape index: {}]
  %s1 = inlined_call_operand.vmem [shape: bf16[128,128], index: 1, kind: input, shape index: {}]
  %s2 = inlined_call_operand.vmem [shape: f32[1,128], index: 2, kind: input, shape index: {}]
  %s3 = inlined_call_operand.vmem [shape: f32[1,128], index: 3, kind: input, shape index: {}]
  %s4 = inlined_call_operand.vmem [shape: bf16[2,128], index: 4, kind: output, shape index: {}]
  %s5 = sld [smem:[#allocation0]]
  $region26: #{resnet_forward.38} parent=0
    _
  %s7 = ssub.s32 1, %s5
  %s8 = scalar_select 0, %s7, %s5
  // Predicated region
  $region2: #{resnet_forward.38} parent=0 // pred_check
    _
  $region3: #{resnet_forward.38} parent=0 // pred_check_branch
    %10 = sbr.rel (0) target = $region5
  $region4: #{resnet_forward.38} parent=0 // pred_region
    _
  $region5: #{resnet_forward.38} parent=0 // pred_fallthru
    _
  // Predicated region
  $region6: #{resnet_forward.38} parent=0 // pred_check
    _
  $region7: #{resnet_forward.38} parent=0 // pred_check_branch
    %12 = sbr.rel (0) target = $region9
  $region8: #{resnet_forward.38} parent=0 // pred_region
    _
  $region9: #{resnet_forward.38} parent=0 // pred_fallthru
    _
  // Predicated region
  $region10: #{resnet_forward.38} parent=0 // pred_check
    _
  $region11: #{resnet_forward.38} parent=0 // pred_check_branch
    %14 = sbr.rel (0) target = $region13
  $region12: #{resnet_forward.38} parent=0 // pred_region
    _
  $region13: #{resnet_forward.38} parent=0 // pred_fallthru
    _
  // Predicated region
  $region14: #{resnet_forward.38} parent=0 // pred_check
    _
  $region15: #{resnet_forward.38} parent=0 // pred_check_branch
    %16 = sbr.rel (0) target = $region17
  $region16: #{resnet_forward.38} parent=0 // pred_region
    _
  $region17: #{resnet_forward.38} parent=0 // pred_fallthru
    _
  %v18 = vld [vmem:[%s0] sm:$0x1]
  %v19 = vld [vmem:[%s1] sm:$0xf]
  %v20 = vld [vmem:[%s1 + $0x4] sm:$0xf]
  %v21 = vld [vmem:[%s1 + $0x8] sm:$0xf]
  %v22 = vld [vmem:[%s1 + $0xc] sm:$0xf]
  %v23 = vld [vmem:[%s1 + $0x10] sm:$0xf]
  %v24 = vld [vmem:[%s1 + $0x14] sm:$0xf]
  %v25 = vld [vmem:[%s1 + $0x18] sm:$0xf]
  %v26 = vld [vmem:[%s1 + $0x1c] sm:$0xf]
  %v27 = vld [vmem:[%s1 + $0x20] sm:$0xf]
  %v28 = vld [vmem:[%s1 + $0x24] sm:$0xf]
  %v29 = vld [vmem:[%s1 + $0x28] sm:$0xf]
  %v30 = vld [vmem:[%s1 + $0x2c] sm:$0xf]
  %v31 = vld [vmem:[%s1 + $0x30] sm:$0xf]
  %v32 = vld [vmem:[%s1 + $0x34] sm:$0xf]
  %v33 = vld [vmem:[%s1 + $0x38] sm:$0xf]
  %v34 = vld [vmem:[%s1 + $0x3c] sm:$0xf]
  %v51 = vunpack.c.l.b16 %v19
  %v52 = vunpack.c.l.b16 %v20
  %v53 = vunpack.c.l.b16 %v21
  %v54 = vunpack.c.l.b16 %v22
  %v55 = vunpack.c.l.b16 %v23
  %v56 = vunpack.c.l.b16 %v24
  %v57 = vunpack.c.l.b16 %v25
  %v58 = vunpack.c.l.b16 %v26
  %v59 = vunpack.c.l.b16 %v27
  %v60 = vunpack.c.l.b16 %v28
  %v61 = vunpack.c.l.b16 %v29
  %v62 = vunpack.c.l.b16 %v30
  %v63 = vunpack.c.l.b16 %v31
  %v64 = vunpack.c.l.b16 %v32
  %v65 = vunpack.c.l.b16 %v33
  %v66 = vunpack.c.l.b16 %v34
  %v67 = vpack.c.b16 %v52, %v51
  %v68 = vpack.c.b16 %v54, %v53
  %v69 = vpack.c.b16 %v56, %v55
  %v70 = vpack.c.b16 %v58, %v57
  %v71 = vpack.c.b16 %v60, %v59
  %v72 = vpack.c.b16 %v62, %v61
  %v73 = vpack.c.b16 %v64, %v63
  %v74 = vpack.c.b16 %v66, %v65
  %83 = vmatprep.subr.bf16.mxu0 0
  %84 = vmatpush1.bf16.msra.mxu0 %v67
  %85 = vmatprep.subr.bf16.mxu0 0
  %86 = vmatpush1.bf16.msra.mxu0 %v68
  %87 = vmatprep.subr.bf16.mxu0 0
  %88 = vmatpush1.bf16.msra.mxu0 %v69
  %89 = vmatprep.subr.bf16.mxu0 0
  %90 = vmatpush1.bf16.msra.mxu0 %v70
  %91 = vmatprep.subr.bf16.mxu0 0
  %92 = vmatpush1.bf16.msra.mxu0 %v71
  %93 = vmatprep.subr.bf16.mxu0 0
  %94 = vmatpush1.bf16.msra.mxu0 %v72
  %95 = vmatprep.subr.bf16.mxu0 0
  %96 = vmatpush1.bf16.msra.mxu0 %v73
  %97 = vmatprep.subr.bf16.mxu0 0
  %98 = vmatpush1.bf16.msra.mxu0 %v74
  %99 = vmatprep.subr.bf16.mxu0 0
  %100 = vmatpush1.bf16.msra.mxu0 0
  %101 = vmatprep.subr.bf16.mxu0 0
  %102 = vmatpush1.bf16.msra.mxu0 0
  %103 = vmatprep.subr.bf16.mxu0 0
  %104 = vmatpush1.bf16.msra.mxu0 0
  %105 = vmatprep.subr.bf16.mxu0 0
  %106 = vmatpush1.bf16.msra.mxu0 0
  %107 = vmatprep.subr.bf16.mxu0 0
  %108 = vmatpush1.bf16.msra.mxu0 0
  %109 = vmatprep.subr.bf16.mxu0 0
  %110 = vmatpush1.bf16.msra.mxu0 0
  %111 = vmatprep.subr.bf16.mxu0 0
  %112 = vmatpush1.bf16.msra.mxu0 0
  %113 = vmatprep.subr.bf16.mxu0 0
  %114 = vmatpush1.bf16.msra.mxu0 0
  %115 = vmatprep.mubr.bf16.mxu0 0
  %116 = vmatmul.mubr.bf16.gmra.mrb[0].mxu0 %v18
  %v117 = vpop.f32.mrb[0].mxu0
  %v118 = vadd.f32 0.0, %v117
  %v119 = vpop.f32.mrb[0].mxu0
  %v120 = vpop.f32.mrb[0].mxu0
  %v121 = vpop.f32.mrb[0].mxu0
  %122 = vdwg.mxu0
  %v123 = vld [vmem:[%s2] sm:$0x1]
  %v125 = vlaneseq
  %v126 = vshrl.u32 %v125, 7
  %v127 = vsub.s32 0, %v126
  %v128 = vrot.slane %v123, %v127
  %v130 = vmul.f32 %v118, %v128
  %v131 = vld [vmem:[%s3] sm:$0x1]
  %v133 = vlaneseq
  %v134 = vshrl.u32 %v133, 7
  %v135 = vsub.s32 0, %v134
  %v136 = vrot.slane %v131, %v135
  %v138 = vadd.f32 %v130, %v136
  %v139 = vpack.c.bf16 %v138, %v138
  %140 = vst [vmem:[%s4] sm:$0x1] %v139
  // Predicated region
  $region18: #{resnet_forward.38} parent=0 // pred_check
    _
  $region19: #{resnet_forward.38} parent=0 // pred_check_branch
    %142 = sbr.rel (0) target = $region21
  $region20: #{resnet_forward.38} parent=0 // pred_region
    _
  $region21: #{resnet_forward.38} parent=0 // pred_fallthru
    _
  // Predicated region
  $region22: #{resnet_forward.38} parent=0 // pred_check
    _
  $region23: #{resnet_forward.38} parent=0 // pred_check_branch
    %144 = sbr.rel (0) target = $region25
  $region24: #{resnet_forward.38} parent=0 // pred_region
    _
  $region25: #{resnet_forward.38} parent=0 // pred_fallthru
    _

// kernel: resnet_forward.39
$region0: #{resnet_forward.39}
  #allocation0 [shape = 'u32[]', space=smem, size = 0x4, offset = 0x4, fixed_abs, tag = 'smem constant byte address 0x4 - core index']
  #allocation1 [shape = 'u32[144,128]{1,0:T(1,128)}', space=vmem, size = 0x12000, scoped, tag = 'internal scratch']
  %s0 = inlined_call_operand.vmem [shape: bf16[2,640], index: 0, kind: input, shape index: {}]
  %s1 = inlined_call_operand.vmem [shape: bf16[640,128], index: 1, kind: input, shape index: {}]
  %s2 = inlined_call_operand.vmem [shape: f32[1,128], index: 2, kind: input, shape index: {}]
  %s3 = inlined_call_operand.vmem [shape: f32[1,128], index: 3, kind: input, shape index: {}]
  %s4 = inlined_call_operand.vmem [shape: bf16[2,128], index: 4, kind: output, shape index: {}]
  %s5 = sld [smem:[#allocation0]]
  $region26: #{resnet_forward.39} parent=0
    _
  %s7 = ssub.s32 1, %s5
  %s8 = scalar_select 0, %s7, %s5
  // Predicated region
  $region2: #{resnet_forward.39} parent=0 // pred_check
    _
  $region3: #{resnet_forward.39} parent=0 // pred_check_branch
    %10 = sbr.rel (0) target = $region5
  $region4: #{resnet_forward.39} parent=0 // pred_region
    _
  $region5: #{resnet_forward.39} parent=0 // pred_fallthru
    _
  // Predicated region
  $region6: #{resnet_forward.39} parent=0 // pred_check
    _
  $region7: #{resnet_forward.39} parent=0 // pred_check_branch
    %12 = sbr.rel (0) target = $region9
  $region8: #{resnet_forward.39} parent=0 // pred_region
    _
  $region9: #{resnet_forward.39} parent=0 // pred_fallthru
    _
  // Predicated region
  $region10: #{resnet_forward.39} parent=0 // pred_check
    _
  $region11: #{resnet_forward.39} parent=0 // pred_check_branch
    %14 = sbr.rel (0) target = $region13
  $region12: #{resnet_forward.39} parent=0 // pred_region
    _
  $region13: #{resnet_forward.39} parent=0 // pred_fallthru
    _
  // Predicated region
  $region14: #{resnet_forward.39} parent=0 // pred_check
    _
  $region15: #{resnet_forward.39} parent=0 // pred_check_branch
    %16 = sbr.rel (0) target = $region17
  $region16: #{resnet_forward.39} parent=0 // pred_region
    _
  $region17: #{resnet_forward.39} parent=0 // pred_fallthru
    _
  %v18 = vld [vmem:[%s0] sm:$0x1f]
  %v19 = vld [vmem:[%s1] sm:$0xf]
  %v20 = vld [vmem:[%s1 + $0x4] sm:$0xf]
  %v21 = vld [vmem:[%s1 + $0x8] sm:$0xf]
  %v22 = vld [vmem:[%s1 + $0xc] sm:$0xf]
  %v23 = vld [vmem:[%s1 + $0x10] sm:$0xf]
  %v24 = vld [vmem:[%s1 + $0x14] sm:$0xf]
  %v25 = vld [vmem:[%s1 + $0x18] sm:$0xf]
  %v26 = vld [vmem:[%s1 + $0x1c] sm:$0xf]
  %v27 = vld [vmem:[%s1 + $0x20] sm:$0xf]
  %v28 = vld [vmem:[%s1 + $0x24] sm:$0xf]
  %v29 = vld [vmem:[%s1 + $0x28] sm:$0xf]
  %v30 = vld [vmem:[%s1 + $0x2c] sm:$0xf]
  %v31 = vld [vmem:[%s1 + $0x30] sm:$0xf]
  %v32 = vld [vmem:[%s1 + $0x34] sm:$0xf]
  %v33 = vld [vmem:[%s1 + $0x38] sm:$0xf]
  %v34 = vld [vmem:[%s1 + $0x3c] sm:$0xf]
  %v35 = vld [vmem:[%s1 + $0x40] sm:$0xf]
  %v36 = vld [vmem:[%s1 + $0x44] sm:$0xf]
  %v37 = vld [vmem:[%s1 + $0x48] sm:$0xf]
  %v38 = vld [vmem:[%s1 + $0x4c] sm:$0xf]
  %v39 = vld [vmem:[%s1 + $0x50] sm:$0xf]
  %v40 = vld [vmem:[%s1 + $0x54] sm:$0xf]
  %v41 = vld [vmem:[%s1 + $0x58] sm:$0xf]
  %v42 = vld [vmem:[%s1 + $0x5c] sm:$0xf]
  %v43 = vld [vmem:[%s1 + $0x60] sm:$0xf]
  %v44 = vld [vmem:[%s1 + $0x64] sm:$0xf]
  %v45 = vld [vmem:[%s1 + $0x68] sm:$0xf]
  %v46 = vld [vmem:[%s1 + $0x6c] sm:$0xf]
  %v47 = vld [vmem:[%s1 + $0x70] sm:$0xf]
  %v48 = vld [vmem:[%s1 + $0x74] sm:$0xf]
  %v49 = vld [vmem:[%s1 + $0x78] sm:$0xf]
  %v50 = vld [vmem:[%s1 + $0x7c] sm:$0xf]
  %v51 = vld [vmem:[%s1 + $0x80] sm:$0xf]
  %v52 = vld [vmem:[%s1 + $0x84] sm:$0xf]
  %v53 = vld [vmem:[%s1 + $0x88] sm:$0xf]
  %v54 = vld [vmem:[%s1 + $0x8c] sm:$0xf]
  %v55 = vld [vmem:[%s1 + $0x90] sm:$0xf]
  %v56 = vld [vmem:[%s1 + $0x94] sm:$0xf]
  %v57 = vld [vmem:[%s1 + $0x98] sm:$0xf]
  %v58 = vld [vmem:[%s1 + $0x9c] sm:$0xf]
  %v59 = vld [vmem:[%s1 + $0xa0] sm:$0xf]
  %v60 = vld [vmem:[%s1 + $0xa4] sm:$0xf]
  %v61 = vld [vmem:[%s1 + $0xa8] sm:$0xf]
  %v62 = vld [vmem:[%s1 + $0xac] sm:$0xf]
  %v63 = vld [vmem:[%s1 + $0xb0] sm:$0xf]
  %v64 = vld [vmem:[%s1 + $0xb4] sm:$0xf]
  %v65 = vld [vmem:[%s1 + $0xb8] sm:$0xf]
  %v66 = vld [vmem:[%s1 + $0xbc] sm:$0xf]
  %v67 = vld [vmem:[%s1 + $0xc0] sm:$0xf]
  %v68 = vld [vmem:[%s1 + $0xc4] sm:$0xf]
  %v69 = vld [vmem:[%s1 + $0xc8] sm:$0xf]
  %v70 = vld [vmem:[%s1 + $0xcc] sm:$0xf]
  %v71 = vld [vmem:[%s1 + $0xd0] sm:$0xf]
  %v72 = vld [vmem:[%s1 + $0xd4] sm:$0xf]
  %v73 = vld [vmem:[%s1 + $0xd8] sm:$0xf]
  %v74 = vld [vmem:[%s1 + $0xdc] sm:$0xf]
  %v75 = vld [vmem:[%s1 + $0xe0] sm:$0xf]
  %v76 = vld [vmem:[%s1 + $0xe4] sm:$0xf]
  %v77 = vld [vmem:[%s1 + $0xe8] sm:$0xf]
  %v78 = vld [vmem:[%s1 + $0xec] sm:$0xf]
  %v79 = vld [vmem:[%s1 + $0xf0] sm:$0xf]
  %v80 = vld [vmem:[%s1 + $0xf4] sm:$0xf]
  %v81 = vld [vmem:[%s1 + $0xf8] sm:$0xf]
  %v82 = vld [vmem:[%s1 + $0xfc] sm:$0xf]
  %v83 = vld [vmem:[%s1 + $0x100] sm:$0xf]
  %v84 = vld [vmem:[%s1 + $0x104] sm:$0xf]
  %v85 = vld [vmem:[%s1 + $0x108] sm:$0xf]
  %v86 = vld [vmem:[%s1 + $0x10c] sm:$0xf]
  %v87 = vld [vmem:[%s1 + $0x110] sm:$0xf]
  %v88 = vld [vmem:[%s1 + $0x114] sm:$0xf]
  %v89 = vld [vmem:[%s1 + $0x118] sm:$0xf]
  %v90 = vld [vmem:[%s1 + $0x11c] sm:$0xf]
  %v91 = vld [vmem:[%s1 + $0x120] sm:$0xf]
  %v92 = vld [vmem:[%s1 + $0x124] sm:$0xf]
  %v93 = vld [vmem:[%s1 + $0x128] sm:$0xf]
  %v94 = vld [vmem:[%s1 + $0x12c] sm:$0xf]
  %v95 = vld [vmem:[%s1 + $0x130] sm:$0xf]
  %v96 = vld [vmem:[%s1 + $0x134] sm:$0xf]
  %v97 = vld [vmem:[%s1 + $0x138] sm:$0xf]
  %v98 = vld [vmem:[%s1 + $0x13c] sm:$0xf]
  %v100 = vcombine.high %v18, %v18
  %v102 = vunpack.c.l.s4 1966171168
  %v103 = vunpack.c.0.s8 %v102
  %v104 = vlaneseq
  %v105 = vshrl.u32 %v104, 7
  %v106 = vsub.s32 %v103, %v105
  %v107 = vrot.slane %v18, %v106
  %v109 = vunpack.c.l.s4 1966171168
  %v110 = vunpack.c.0.s8 %v109
  %v111 = vlaneseq
  %v112 = vshrl.u32 %v111, 7
  %v113 = vsub.s32 %v110, %v112
  %v114 = vrot.slane %v100, %v113
  %v115 = vcombine.high %v107, %v107
  %v117 = vunpack.c.l.s4 1966171168
  %v118 = vunpack.c.0.s8 %v117
  %v119 = vlaneseq
  %v120 = vshrl.u32 %v119, 7
  %v121 = vsub.s32 %v118, %v120
  %v122 = vrot.slane %v107, %v121
  %v124 = vunpack.c.l.s4 1966171168
  %v125 = vunpack.c.0.s8 %v124
  %v126 = vlaneseq
  %v127 = vshrl.u32 %v126, 7
  %v128 = vsub.s32 %v125, %v127
  %v129 = vrot.slane %v114, %v128
  %v131 = vunpack.c.l.s4 1966171168
  %v132 = vunpack.c.0.s8 %v131
  %v133 = vlaneseq
  %v134 = vshrl.u32 %v133, 7
  %v135 = vsub.s32 %v132, %v134
  %v136 = vrot.slane %v115, %v135
  %v137 = vcombine.high %v122, %v122
  %v138 = vcombine.high %v136, %v136
  %v224 = vunpack.c.l.b16 %v19
  %v225 = vunpack.c.l.b16 %v20
  %v226 = vunpack.c.l.b16 %v21
  %v227 = vunpack.c.l.b16 %v22
  %v228 = vunpack.c.l.b16 %v23
  %v229 = vunpack.c.l.b16 %v24
  %v230 = vunpack.c.l.b16 %v25
  %v231 = vunpack.c.l.b16 %v26
  %v232 = vunpack.c.l.b16 %v27
  %v233 = vunpack.c.l.b16 %v28
  %v234 = vunpack.c.l.b16 %v29
  %v235 = vunpack.c.l.b16 %v30
  %v236 = vunpack.c.l.b16 %v31
  %v237 = vunpack.c.l.b16 %v32
  %v238 = vunpack.c.l.b16 %v33
  %v239 = vunpack.c.l.b16 %v34
  %v240 = vunpack.c.l.b16 %v35
  %v241 = vunpack.c.l.b16 %v36
  %v242 = vunpack.c.l.b16 %v37
  %v243 = vunpack.c.l.b16 %v38
  %v244 = vunpack.c.l.b16 %v39
  %v245 = vunpack.c.l.b16 %v40
  %v246 = vunpack.c.l.b16 %v41
  %v247 = vunpack.c.l.b16 %v42
  %v248 = vunpack.c.l.b16 %v43
  %v249 = vunpack.c.l.b16 %v44
  %v250 = vunpack.c.l.b16 %v45
  %v251 = vunpack.c.l.b16 %v46
  %v252 = vunpack.c.l.b16 %v47
  %v253 = vunpack.c.l.b16 %v48
  %v254 = vunpack.c.l.b16 %v49
  %v255 = vunpack.c.l.b16 %v50
  %v256 = vunpack.c.l.b16 %v51
  %v257 = vunpack.c.l.b16 %v52
  %v258 = vunpack.c.l.b16 %v53
  %v259 = vunpack.c.l.b16 %v54
  %v260 = vunpack.c.l.b16 %v55
  %v261 = vunpack.c.l.b16 %v56
  %v262 = vunpack.c.l.b16 %v57
  %v263 = vunpack.c.l.b16 %v58
  %v264 = vunpack.c.l.b16 %v59
  %v265 = vunpack.c.l.b16 %v60
  %v266 = vunpack.c.l.b16 %v61
  %v267 = vunpack.c.l.b16 %v62
  %v268 = vunpack.c.l.b16 %v63
  %v269 = vunpack.c.l.b16 %v64
  %v270 = vunpack.c.l.b16 %v65
  %v271 = vunpack.c.l.b16 %v66
  %v272 = vunpack.c.l.b16 %v67
  %v273 = vunpack.c.l.b16 %v68
  %v274 = vunpack.c.l.b16 %v69
  %v275 = vunpack.c.l.b16 %v70
  %v276 = vunpack.c.l.b16 %v71
  %v277 = vunpack.c.l.b16 %v72
  %v278 = vunpack.c.l.b16 %v73
  %v279 = vunpack.c.l.b16 %v74
  %v280 = vunpack.c.l.b16 %v75
  %v281 = vunpack.c.l.b16 %v76
  %v282 = vunpack.c.l.b16 %v77
  %v283 = vunpack.c.l.b16 %v78
  %v284 = vunpack.c.l.b16 %v79
  %v285 = vunpack.c.l.b16 %v80
  %v286 = vunpack.c.l.b16 %v81
  %v287 = vunpack.c.l.b16 %v82
  %v288 = vunpack.c.l.b16 %v83
  %v289 = vunpack.c.l.b16 %v84
  %v290 = vunpack.c.l.b16 %v85
  %v291 = vunpack.c.l.b16 %v86
  %v292 = vunpack.c.l.b16 %v87
  %v293 = vunpack.c.l.b16 %v88
  %v294 = vunpack.c.l.b16 %v89
  %v295 = vunpack.c.l.b16 %v90
  %v296 = vunpack.c.l.b16 %v91
  %v297 = vunpack.c.l.b16 %v92
  %v298 = vunpack.c.l.b16 %v93
  %v299 = vunpack.c.l.b16 %v94
  %v300 = vunpack.c.l.b16 %v95
  %v301 = vunpack.c.l.b16 %v96
  %v302 = vunpack.c.l.b16 %v97
  %v303 = vunpack.c.l.b16 %v98
  %v304 = vpack.c.b16 %v225, %v224
  %v305 = vpack.c.b16 %v227, %v226
  %v306 = vpack.c.b16 %v229, %v228
  %v307 = vpack.c.b16 %v231, %v230
  %v308 = vpack.c.b16 %v233, %v232
  %v309 = vpack.c.b16 %v235, %v234
  %v310 = vpack.c.b16 %v237, %v236
  %v311 = vpack.c.b16 %v239, %v238
  %v312 = vpack.c.b16 %v241, %v240
  %v313 = vpack.c.b16 %v243, %v242
  %v314 = vpack.c.b16 %v245, %v244
  %v315 = vpack.c.b16 %v247, %v246
  %v316 = vpack.c.b16 %v249, %v248
  %v317 = vpack.c.b16 %v251, %v250
  %v318 = vpack.c.b16 %v253, %v252
  %v319 = vpack.c.b16 %v255, %v254
  %v320 = vpack.c.b16 %v257, %v256
  %v321 = vpack.c.b16 %v259, %v258
  %v322 = vpack.c.b16 %v261, %v260
  %v323 = vpack.c.b16 %v263, %v262
  %v324 = vpack.c.b16 %v265, %v264
  %v325 = vpack.c.b16 %v267, %v266
  %v326 = vpack.c.b16 %v269, %v268
  %v327 = vpack.c.b16 %v271, %v270
  %v328 = vpack.c.b16 %v273, %v272
  %v329 = vpack.c.b16 %v275, %v274
  %v330 = vpack.c.b16 %v277, %v276
  %v331 = vpack.c.b16 %v279, %v278
  %v332 = vpack.c.b16 %v281, %v280
  %v333 = vpack.c.b16 %v283, %v282
  %v334 = vpack.c.b16 %v285, %v284
  %v335 = vpack.c.b16 %v287, %v286
  %v336 = vpack.c.b16 %v289, %v288
  %v337 = vpack.c.b16 %v291, %v290
  %v338 = vpack.c.b16 %v293, %v292
  %v339 = vpack.c.b16 %v295, %v294
  %v340 = vpack.c.b16 %v297, %v296
  %v341 = vpack.c.b16 %v299, %v298
  %v342 = vpack.c.b16 %v301, %v300
  %v343 = vpack.c.b16 %v303, %v302
  %384 = vmatprep.subr.bf16.mxu0 0
  %385 = vmatpush1.bf16.msra.mxu0 %v304
  %386 = vmatprep.subr.bf16.mxu0 0
  %387 = vmatpush1.bf16.msra.mxu0 %v305
  %388 = vmatprep.subr.bf16.mxu0 0
  %389 = vmatpush1.bf16.msra.mxu0 %v306
  %390 = vmatprep.subr.bf16.mxu0 0
  %391 = vmatpush1.bf16.msra.mxu0 %v307
  %392 = vmatprep.subr.bf16.mxu0 0
  %393 = vmatpush1.bf16.msra.mxu0 %v308
  %394 = vmatprep.subr.bf16.mxu0 0
  %395 = vmatpush1.bf16.msra.mxu0 %v309
  %396 = vmatprep.subr.bf16.mxu0 0
  %397 = vmatpush1.bf16.msra.mxu0 %v310
  %398 = vmatprep.subr.bf16.mxu0 0
  %399 = vmatpush1.bf16.msra.mxu0 %v311
  %400 = vmatprep.subr.bf16.mxu0 0
  %401 = vmatpush1.bf16.msra.mxu0 %v312
  %402 = vmatprep.subr.bf16.mxu0 0
  %403 = vmatpush1.bf16.msra.mxu0 %v313
  %404 = vmatprep.subr.bf16.mxu0 0
  %405 = vmatpush1.bf16.msra.mxu0 %v314
  %406 = vmatprep.subr.bf16.mxu0 0
  %407 = vmatpush1.bf16.msra.mxu0 %v315
  %408 = vmatprep.subr.bf16.mxu0 0
  %409 = vmatpush1.bf16.msra.mxu0 %v316
  %410 = vmatprep.subr.bf16.mxu0 0
  %411 = vmatpush1.bf16.msra.mxu0 %v317
  %412 = vmatprep.subr.bf16.mxu0 0
  %413 = vmatpush1.bf16.msra.mxu0 %v318
  %414 = vmatprep.subr.bf16.mxu0 0
  %415 = vmatpush1.bf16.msra.mxu0 %v319
  %416 = vmatprep.mubr.bf16.mxu0 %v136
  %417 = vmatmul.mubr.bf16.gmra.mrb[0].mxu0 %v122
  %v418 = vpop.f32.mrb[0].mxu0
  %v419 = vadd.f32 0.0, %v418
  %v420 = vpop.f32.mrb[0].mxu0
  %v421 = vpop.f32.mrb[0].mxu0
  %v422 = vpop.f32.mrb[0].mxu0
  %423 = vdwg.mxu0
  %424 = vmatprep.subr.bf16.mxu0 0
  %425 = vmatpush1.bf16.msra.mxu0 %v320
  %426 = vmatprep.subr.bf16.mxu0 0
  %427 = vmatpush1.bf16.msra.mxu0 %v321
  %428 = vmatprep.subr.bf16.mxu0 0
  %429 = vmatpush1.bf16.msra.mxu0 %v322
  %430 = vmatprep.subr.bf16.mxu0 0
  %431 = vmatpush1.bf16.msra.mxu0 %v323
  %432 = vmatprep.subr.bf16.mxu0 0
  %433 = vmatpush1.bf16.msra.mxu0 %v324
  %434 = vmatprep.subr.bf16.mxu0 0
  %435 = vmatpush1.bf16.msra.mxu0 %v325
  %436 = vmatprep.subr.bf16.mxu0 0
  %437 = vmatpush1.bf16.msra.mxu0 %v326
  %438 = vmatprep.subr.bf16.mxu0 0
  %439 = vmatpush1.bf16.msra.mxu0 %v327
  %440 = vmatprep.subr.bf16.mxu0 0
  %441 = vmatpush1.bf16.msra.mxu0 %v328
  %442 = vmatprep.subr.bf16.mxu0 0
  %443 = vmatpush1.bf16.msra.mxu0 %v329
  %444 = vmatprep.subr.bf16.mxu0 0
  %445 = vmatpush1.bf16.msra.mxu0 %v330
  %446 = vmatprep.subr.bf16.mxu0 0
  %447 = vmatpush1.bf16.msra.mxu0 %v331
  %448 = vmatprep.subr.bf16.mxu0 0
  %449 = vmatpush1.bf16.msra.mxu0 %v332
  %450 = vmatprep.subr.bf16.mxu0 0
  %451 = vmatpush1.bf16.msra.mxu0 %v333
  %452 = vmatprep.subr.bf16.mxu0 0
  %453 = vmatpush1.bf16.msra.mxu0 %v334
  %454 = vmatprep.subr.bf16.mxu0 0
  %455 = vmatpush1.bf16.msra.mxu0 %v335
  %456 = vmatprep.mubr.bf16.mxu0 %v138
  %457 = vmatmul.mubr.bf16.gmra.mrb[0].mxu0 %v137
  %v458 = vpop.f32.mrb[0].mxu0
  %v459 = vadd.f32 %v419, %v458
  %v460 = vpop.f32.mrb[0].mxu0
  %v461 = vpop.f32.mrb[0].mxu0
  %v462 = vpop.f32.mrb[0].mxu0
  %463 = vdwg.mxu0
  %464 = vmatprep.subr.bf16.mxu0 0
  %465 = vmatpush1.bf16.msra.mxu0 %v336
  %466 = vmatprep.subr.bf16.mxu0 0
  %467 = vmatpush1.bf16.msra.mxu0 %v337
  %468 = vmatprep.subr.bf16.mxu0 0
  %469 = vmatpush1.bf16.msra.mxu0 %v338
  %470 = vmatprep.subr.bf16.mxu0 0
  %471 = vmatpush1.bf16.msra.mxu0 %v339
  %472 = vmatprep.subr.bf16.mxu0 0
  %473 = vmatpush1.bf16.msra.mxu0 %v340
  %474 = vmatprep.subr.bf16.mxu0 0
  %475 = vmatpush1.bf16.msra.mxu0 %v341
  %476 = vmatprep.subr.bf16.mxu0 0
  %477 = vmatpush1.bf16.msra.mxu0 %v342
  %478 = vmatprep.subr.bf16.mxu0 0
  %479 = vmatpush1.bf16.msra.mxu0 %v343
  %480 = vmatprep.subr.bf16.mxu0 0
  %481 = vmatpush1.bf16.msra.mxu0 0
  %482 = vmatprep.subr.bf16.mxu0 0
  %483 = vmatpush1.bf16.msra.mxu0 0
  %484 = vmatprep.subr.bf16.mxu0 0
  %485 = vmatpush1.bf16.msra.mxu0 0
  %486 = vmatprep.subr.bf16.mxu0 0
  %487 = vmatpush1.bf16.msra.mxu0 0
  %488 = vmatprep.subr.bf16.mxu0 0
  %489 = vmatpush1.bf16.msra.mxu0 0
  %490 = vmatprep.subr.bf16.mxu0 0
  %491 = vmatpush1.bf16.msra.mxu0 0
  %492 = vmatprep.subr.bf16.mxu0 0
  %493 = vmatpush1.bf16.msra.mxu0 0
  %494 = vmatprep.subr.bf16.mxu0 0
  %495 = vmatpush1.bf16.msra.mxu0 0
  %496 = vmatprep.mubr.bf16.mxu0 0
  %497 = vmatmul.mubr.bf16.gmra.mrb[0].mxu0 %v129
  %v498 = vpop.f32.mrb[0].mxu0
  %v499 = vadd.f32 %v459, %v498
  %v500 = vpop.f32.mrb[0].mxu0
  %v501 = vpop.f32.mrb[0].mxu0
  %v502 = vpop.f32.mrb[0].mxu0
  %503 = vdwg.mxu0
  %v504 = vld [vmem:[%s2] sm:$0x1]
  %v506 = vlaneseq
  %v507 = vshrl.u32 %v506, 7
  %v508 = vsub.s32 0, %v507
  %v509 = vrot.slane %v504, %v508
  %v511 = vmul.f32 %v499, %v509
  %v512 = vld [vmem:[%s3] sm:$0x1]
  %v514 = vlaneseq
  %v515 = vshrl.u32 %v514, 7
  %v516 = vsub.s32 0, %v515
  %v517 = vrot.slane %v512, %v516
  %v519 = vadd.f32 %v511, %v517
  %v520 = vmax.f32 %v519, 0.0
  %v521 = vpack.c.bf16 %v520, %v520
  %522 = vst [vmem:[%s4] sm:$0x1] %v521
  // Predicated region
  $region18: #{resnet_forward.39} parent=0 // pred_check
    _
  $region19: #{resnet_forward.39} parent=0 // pred_check_branch
    %524 = sbr.rel (0) target = $region21
  $region20: #{resnet_forward.39} parent=0 // pred_region
    _
  $region21: #{resnet_forward.39} parent=0 // pred_fallthru
    _
  // Predicated region
  $region22: #{resnet_forward.39} parent=0 // pred_check
    _
  $region23: #{resnet_forward.39} parent=0 // pred_check_branch
    %526 = sbr.rel (0) target = $region25
  $region24: #{resnet_forward.39} parent=0 // pred_region
    _
  $region25: #{resnet_forward.39} parent=0 // pred_fallthru
    _

// kernel: resnet_forward.41
$region0: #{resnet_forward.41}
  #allocation0 [shape = 'u32[]', space=smem, size = 0x4, offset = 0x4, fixed_abs, tag = 'smem constant byte address 0x4 - core index']
  #allocation1 [shape = 'u32[144,128]{1,0:T(1,128)}', space=vmem, size = 0x12000, scoped, tag = 'internal scratch']
  %s0 = inlined_call_operand.vmem [shape: bf16[2,1152], index: 0, kind: input, shape index: {}]
  %s1 = inlined_call_operand.vmem [shape: bf16[1152,128], index: 1, kind: input, shape index: {}]
  %s2 = inlined_call_operand.vmem [shape: f32[1,128], index: 2, kind: input, shape index: {}]
  %s3 = inlined_call_operand.vmem [shape: f32[1,128], index: 3, kind: input, shape index: {}]
  %s4 = inlined_call_operand.vmem [shape: bf16[2,128], index: 4, kind: output, shape index: {}]
  %s5 = sld [smem:[#allocation0]]
  $region26: #{resnet_forward.41} parent=0
    _
  %s7 = ssub.s32 1, %s5
  %s8 = scalar_select 0, %s7, %s5
  // Predicated region
  $region2: #{resnet_forward.41} parent=0 // pred_check
    _
  $region3: #{resnet_forward.41} parent=0 // pred_check_branch
    %10 = sbr.rel (0) target = $region5
  $region4: #{resnet_forward.41} parent=0 // pred_region
    _
  $region5: #{resnet_forward.41} parent=0 // pred_fallthru
    _
  // Predicated region
  $region6: #{resnet_forward.41} parent=0 // pred_check
    _
  $region7: #{resnet_forward.41} parent=0 // pred_check_branch
    %12 = sbr.rel (0) target = $region9
  $region8: #{resnet_forward.41} parent=0 // pred_region
    _
  $region9: #{resnet_forward.41} parent=0 // pred_fallthru
    _
  // Predicated region
  $region10: #{resnet_forward.41} parent=0 // pred_check
    _
  $region11: #{resnet_forward.41} parent=0 // pred_check_branch
    %14 = sbr.rel (0) target = $region13
  $region12: #{resnet_forward.41} parent=0 // pred_region
    _
  $region13: #{resnet_forward.41} parent=0 // pred_fallthru
    _
  // Predicated region
  $region14: #{resnet_forward.41} parent=0 // pred_check
    _
  $region15: #{resnet_forward.41} parent=0 // pred_check_branch
    %16 = sbr.rel (0) target = $region17
  $region16: #{resnet_forward.41} parent=0 // pred_region
    _
  $region17: #{resnet_forward.41} parent=0 // pred_fallthru
    _
  %v18 = vld [vmem:[%s0] sm:$0xff]
  %v19 = vld [vmem:[%s0 + $0x8] sm:$0x1]
  %v20 = vld [vmem:[%s1] sm:$0xf]
  %v21 = vld [vmem:[%s1 + $0x4] sm:$0xf]
  %v22 = vld [vmem:[%s1 + $0x8] sm:$0xf]
  %v23 = vld [vmem:[%s1 + $0xc] sm:$0xf]
  %v24 = vld [vmem:[%s1 + $0x10] sm:$0xf]
  %v25 = vld [vmem:[%s1 + $0x14] sm:$0xf]
  %v26 = vld [vmem:[%s1 + $0x18] sm:$0xf]
  %v27 = vld [vmem:[%s1 + $0x1c] sm:$0xf]
  %v28 = vld [vmem:[%s1 + $0x20] sm:$0xf]
  %v29 = vld [vmem:[%s1 + $0x24] sm:$0xf]
  %v30 = vld [vmem:[%s1 + $0x28] sm:$0xf]
  %v31 = vld [vmem:[%s1 + $0x2c] sm:$0xf]
  %v32 = vld [vmem:[%s1 + $0x30] sm:$0xf]
  %v33 = vld [vmem:[%s1 + $0x34] sm:$0xf]
  %v34 = vld [vmem:[%s1 + $0x38] sm:$0xf]
  %v35 = vld [vmem:[%s1 + $0x3c] sm:$0xf]
  %v36 = vld [vmem:[%s1 + $0x40] sm:$0xf]
  %v37 = vld [vmem:[%s1 + $0x44] sm:$0xf]
  %v38 = vld [vmem:[%s1 + $0x48] sm:$0xf]
  %v39 = vld [vmem:[%s1 + $0x4c] sm:$0xf]
  %v40 = vld [vmem:[%s1 + $0x50] sm:$0xf]
  %v41 = vld [vmem:[%s1 + $0x54] sm:$0xf]
  %v42 = vld [vmem:[%s1 + $0x58] sm:$0xf]
  %v43 = vld [vmem:[%s1 + $0x5c] sm:$0xf]
  %v44 = vld [vmem:[%s1 + $0x60] sm:$0xf]
  %v45 = vld [vmem:[%s1 + $0x64] sm:$0xf]
  %v46 = vld [vmem:[%s1 + $0x68] sm:$0xf]
  %v47 = vld [vmem:[%s1 + $0x6c] sm:$0xf]
  %v48 = vld [vmem:[%s1 + $0x70] sm:$0xf]
  %v49 = vld [vmem:[%s1 + $0x74] sm:$0xf]
  %v50 = vld [vmem:[%s1 + $0x78] sm:$0xf]
  %v51 = vld [vmem:[%s1 + $0x7c] sm:$0xf]
  %v52 = vld [vmem:[%s1 + $0x80] sm:$0xf]
  %v53 = vld [vmem:[%s1 + $0x84] sm:$0xf]
  %v54 = vld [vmem:[%s1 + $0x88] sm:$0xf]
  %v55 = vld [vmem:[%s1 + $0x8c] sm:$0xf]
  %v56 = vld [vmem:[%s1 + $0x90] sm:$0xf]
  %v57 = vld [vmem:[%s1 + $0x94] sm:$0xf]
  %v58 = vld [vmem:[%s1 + $0x98] sm:$0xf]
  %v59 = vld [vmem:[%s1 + $0x9c] sm:$0xf]
  %v60 = vld [vmem:[%s1 + $0xa0] sm:$0xf]
  %v61 = vld [vmem:[%s1 + $0xa4] sm:$0xf]
  %v62 = vld [vmem:[%s1 + $0xa8] sm:$0xf]
  %v63 = vld [vmem:[%s1 + $0xac] sm:$0xf]
  %v64 = vld [vmem:[%s1 + $0xb0] sm:$0xf]
  %v65 = vld [vmem:[%s1 + $0xb4] sm:$0xf]
  %v66 = vld [vmem:[%s1 + $0xb8] sm:$0xf]
  %v67 = vld [vmem:[%s1 + $0xbc] sm:$0xf]
  %v68 = vld [vmem:[%s1 + $0xc0] sm:$0xf]
  %v69 = vld [vmem:[%s1 + $0xc4] sm:$0xf]
  %v70 = vld [vmem:[%s1 + $0xc8] sm:$0xf]
  %v71 = vld [vmem:[%s1 + $0xcc] sm:$0xf]
  %v72 = vld [vmem:[%s1 + $0xd0] sm:$0xf]
  %v73 = vld [vmem:[%s1 + $0xd4] sm:$0xf]
  %v74 = vld [vmem:[%s1 + $0xd8] sm:$0xf]
  %v75 = vld [vmem:[%s1 + $0xdc] sm:$0xf]
  %v76 = vld [vmem:[%s1 + $0xe0] sm:$0xf]
  %v77 = vld [vmem:[%s1 + $0xe4] sm:$0xf]
  %v78 = vld [vmem:[%s1 + $0xe8] sm:$0xf]
  %v79 = vld [vmem:[%s1 + $0xec] sm:$0xf]
  %v80 = vld [vmem:[%s1 + $0xf0] sm:$0xf]
  %v81 = vld [vmem:[%s1 + $0xf4] sm:$0xf]
  %v82 = vld [vmem:[%s1 + $0xf8] sm:$0xf]
  %v83 = vld [vmem:[%s1 + $0xfc] sm:$0xf]
  %v84 = vld [vmem:[%s1 + $0x100] sm:$0xf]
  %v85 = vld [vmem:[%s1 + $0x104] sm:$0xf]
  %v86 = vld [vmem:[%s1 + $0x108] sm:$0xf]
  %v87 = vld [vmem:[%s1 + $0x10c] sm:$0xf]
  %v88 = vld [vmem:[%s1 + $0x110] sm:$0xf]
  %v89 = vld [vmem:[%s1 + $0x114] sm:$0xf]
  %v90 = vld [vmem:[%s1 + $0x118] sm:$0xf]
  %v91 = vld [vmem:[%s1 + $0x11c] sm:$0xf]
  %v92 = vld [vmem:[%s1 + $0x120] sm:$0xf]
  %v93 = vld [vmem:[%s1 + $0x124] sm:$0xf]
  %v94 = vld [vmem:[%s1 + $0x128] sm:$0xf]
  %v95 = vld [vmem:[%s1 + $0x12c] sm:$0xf]
  %v96 = vld [vmem:[%s1 + $0x130] sm:$0xf]
  %v97 = vld [vmem:[%s1 + $0x134] sm:$0xf]
  %v98 = vld [vmem:[%s1 + $0x138] sm:$0xf]
  %v99 = vld [vmem:[%s1 + $0x13c] sm:$0xf]
  %v100 = vld [vmem:[%s1 + $0x140] sm:$0xf]
  %v101 = vld [vmem:[%s1 + $0x144] sm:$0xf]
  %v102 = vld [vmem:[%s1 + $0x148] sm:$0xf]
  %v103 = vld [vmem:[%s1 + $0x14c] sm:$0xf]
  %v104 = vld [vmem:[%s1 + $0x150] sm:$0xf]
  %v105 = vld [vmem:[%s1 + $0x154] sm:$0xf]
  %v106 = vld [vmem:[%s1 + $0x158] sm:$0xf]
  %v107 = vld [vmem:[%s1 + $0x15c] sm:$0xf]
  %v108 = vld [vmem:[%s1 + $0x160] sm:$0xf]
  %v109 = vld [vmem:[%s1 + $0x164] sm:$0xf]
  %v110 = vld [vmem:[%s1 + $0x168] sm:$0xf]
  %v111 = vld [vmem:[%s1 + $0x16c] sm:$0xf]
  %v112 = vld [vmem:[%s1 + $0x170] sm:$0xf]
  %v113 = vld [vmem:[%s1 + $0x174] sm:$0xf]
  %v114 = vld [vmem:[%s1 + $0x178] sm:$0xf]
  %v115 = vld [vmem:[%s1 + $0x17c] sm:$0xf]
  %v116 = vld [vmem:[%s1 + $0x180] sm:$0xf]
  %v117 = vld [vmem:[%s1 + $0x184] sm:$0xf]
  %v118 = vld [vmem:[%s1 + $0x188] sm:$0xf]
  %v119 = vld [vmem:[%s1 + $0x18c] sm:$0xf]
  %v120 = vld [vmem:[%s1 + $0x190] sm:$0xf]
  %v121 = vld [vmem:[%s1 + $0x194] sm:$0xf]
  %v122 = vld [vmem:[%s1 + $0x198] sm:$0xf]
  %v123 = vld [vmem:[%s1 + $0x19c] sm:$0xf]
  %v124 = vld [vmem:[%s1 + $0x1a0] sm:$0xf]
  %v125 = vld [vmem:[%s1 + $0x1a4] sm:$0xf]
  %v126 = vld [vmem:[%s1 + $0x1a8] sm:$0xf]
  %v127 = vld [vmem:[%s1 + $0x1ac] sm:$0xf]
  %v128 = vld [vmem:[%s1 + $0x1b0] sm:$0xf]
  %v129 = vld [vmem:[%s1 + $0x1b4] sm:$0xf]
  %v130 = vld [vmem:[%s1 + $0x1b8] sm:$0xf]
  %v131 = vld [vmem:[%s1 + $0x1bc] sm:$0xf]
  %v132 = vld [vmem:[%s1 + $0x1c0] sm:$0xf]
  %v133 = vld [vmem:[%s1 + $0x1c4] sm:$0xf]
  %v134 = vld [vmem:[%s1 + $0x1c8] sm:$0xf]
  %v135 = vld [vmem:[%s1 + $0x1cc] sm:$0xf]
  %v136 = vld [vmem:[%s1 + $0x1d0] sm:$0xf]
  %v137 = vld [vmem:[%s1 + $0x1d4] sm:$0xf]
  %v138 = vld [vmem:[%s1 + $0x1d8] sm:$0xf]
  %v139 = vld [vmem:[%s1 + $0x1dc] sm:$0xf]
  %v140 = vld [vmem:[%s1 + $0x1e0] sm:$0xf]
  %v141 = vld [vmem:[%s1 + $0x1e4] sm:$0xf]
  %v142 = vld [vmem:[%s1 + $0x1e8] sm:$0xf]
  %v143 = vld [vmem:[%s1 + $0x1ec] sm:$0xf]
  %v144 = vld [vmem:[%s1 + $0x1f0] sm:$0xf]
  %v145 = vld [vmem:[%s1 + $0x1f4] sm:$0xf]
  %v146 = vld [vmem:[%s1 + $0x1f8] sm:$0xf]
  %v147 = vld [vmem:[%s1 + $0x1fc] sm:$0xf]
  %v148 = vld [vmem:[%s1 + $0x200] sm:$0xf]
  %v149 = vld [vmem:[%s1 + $0x204] sm:$0xf]
  %v150 = vld [vmem:[%s1 + $0x208] sm:$0xf]
  %v151 = vld [vmem:[%s1 + $0x20c] sm:$0xf]
  %v152 = vld [vmem:[%s1 + $0x210] sm:$0xf]
  %v153 = vld [vmem:[%s1 + $0x214] sm:$0xf]
  %v154 = vld [vmem:[%s1 + $0x218] sm:$0xf]
  %v155 = vld [vmem:[%s1 + $0x21c] sm:$0xf]
  %v156 = vld [vmem:[%s1 + $0x220] sm:$0xf]
  %v157 = vld [vmem:[%s1 + $0x224] sm:$0xf]
  %v158 = vld [vmem:[%s1 + $0x228] sm:$0xf]
  %v159 = vld [vmem:[%s1 + $0x22c] sm:$0xf]
  %v160 = vld [vmem:[%s1 + $0x230] sm:$0xf]
  %v161 = vld [vmem:[%s1 + $0x234] sm:$0xf]
  %v162 = vld [vmem:[%s1 + $0x238] sm:$0xf]
  %v163 = vld [vmem:[%s1 + $0x23c] sm:$0xf]
  %v166 = vcombine.high %v18, %v18
  %v168 = vunpack.c.l.s4 1966171168
  %v169 = vunpack.c.0.s8 %v168
  %v170 = vlaneseq
  %v171 = vshrl.u32 %v170, 7
  %v172 = vsub.s32 %v169, %v171
  %v173 = vrot.slane %v18, %v172
  %v175 = vunpack.c.l.s4 1966171168
  %v176 = vunpack.c.0.s8 %v175
  %v177 = vlaneseq
  %v178 = vshrl.u32 %v177, 7
  %v179 = vsub.s32 %v176, %v178
  %v180 = vrot.slane %v166, %v179
  %v181 = vcombine.high %v173, %v173
  %v182 = vcombine.high %v180, %v180
  %v184 = vunpack.c.l.s4 1966171168
  %v185 = vunpack.c.0.s8 %v184
  %v186 = vlaneseq
  %v187 = vshrl.u32 %v186, 7
  %v188 = vsub.s32 %v185, %v187
  %v189 = vrot.slane %v173, %v188
  %v191 = vunpack.c.l.s4 1966171168
  %v192 = vunpack.c.0.s8 %v191
  %v193 = vlaneseq
  %v194 = vshrl.u32 %v193, 7
  %v195 = vsub.s32 %v192, %v194
  %v196 = vrot.slane %v180, %v195
  %v198 = vunpack.c.l.s4 1966171168
  %v199 = vunpack.c.0.s8 %v198
  %v200 = vlaneseq
  %v201 = vshrl.u32 %v200, 7
  %v202 = vsub.s32 %v199, %v201
  %v203 = vrot.slane %v181, %v202
  %v205 = vunpack.c.l.s4 1966171168
  %v206 = vunpack.c.0.s8 %v205
  %v207 = vlaneseq
  %v208 = vshrl.u32 %v207, 7
  %v209 = vsub.s32 %v206, %v208
  %v210 = vrot.slane %v182, %v209
  %v211 = vcombine.high %v189, %v189
  %v212 = vcombine.high %v196, %v196
  %v213 = vcombine.high %v203, %v203
  %v214 = vcombine.high %v210, %v210
  %v216 = vunpack.c.l.s4 1966171168
  %v217 = vunpack.c.0.s8 %v216
  %v218 = vlaneseq
  %v219 = vshrl.u32 %v218, 7
  %v220 = vsub.s32 %v217, %v219
  %v221 = vrot.slane %v19, %v220
  %v223 = vunpack.c.l.s4 1966171168
  %v224 = vunpack.c.0.s8 %v223
  %v225 = vlaneseq
  %v226 = vshrl.u32 %v225, 7
  %v227 = vsub.s32 %v224, %v226
  %v228 = vrot.slane %v221, %v227
  %v382 = vunpack.c.l.b16 %v20
  %v383 = vunpack.c.l.b16 %v21
  %v384 = vunpack.c.l.b16 %v22
  %v385 = vunpack.c.l.b16 %v23
  %v386 = vunpack.c.l.b16 %v24
  %v387 = vunpack.c.l.b16 %v25
  %v388 = vunpack.c.l.b16 %v26
  %v389 = vunpack.c.l.b16 %v27
  %v390 = vunpack.c.l.b16 %v28
  %v391 = vunpack.c.l.b16 %v29
  %v392 = vunpack.c.l.b16 %v30
  %v393 = vunpack.c.l.b16 %v31
  %v394 = vunpack.c.l.b16 %v32
  %v395 = vunpack.c.l.b16 %v33
  %v396 = vunpack.c.l.b16 %v34
  %v397 = vunpack.c.l.b16 %v35
  %v398 = vunpack.c.l.b16 %v36
  %v399 = vunpack.c.l.b16 %v37
  %v400 = vunpack.c.l.b16 %v38
  %v401 = vunpack.c.l.b16 %v39
  %v402 = vunpack.c.l.b16 %v40
  %v403 = vunpack.c.l.b16 %v41
  %v404 = vunpack.c.l.b16 %v42
  %v405 = vunpack.c.l.b16 %v43
  %v406 = vunpack.c.l.b16 %v44
  %v407 = vunpack.c.l.b16 %v45
  %v408 = vunpack.c.l.b16 %v46
  %v409 = vunpack.c.l.b16 %v47
  %v410 = vunpack.c.l.b16 %v48
  %v411 = vunpack.c.l.b16 %v49
  %v412 = vunpack.c.l.b16 %v50
  %v413 = vunpack.c.l.b16 %v51
  %v414 = vunpack.c.l.b16 %v52
  %v415 = vunpack.c.l.b16 %v53
  %v416 = vunpack.c.l.b16 %v54
  %v417 = vunpack.c.l.b16 %v55
  %v418 = vunpack.c.l.b16 %v56
  %v419 = vunpack.c.l.b16 %v57
  %v420 = vunpack.c.l.b16 %v58
  %v421 = vunpack.c.l.b16 %v59
  %v422 = vunpack.c.l.b16 %v60
  %v423 = vunpack.c.l.b16 %v61
  %v424 = vunpack.c.l.b16 %v62
  %v425 = vunpack.c.l.b16 %v63
  %v426 = vunpack.c.l.b16 %v64
  %v427 = vunpack.c.l.b16 %v65
  %v428 = vunpack.c.l.b16 %v66
  %v429 = vunpack.c.l.b16 %v67
  %v430 = vunpack.c.l.b16 %v68
  %v431 = vunpack.c.l.b16 %v69
  %v432 = vunpack.c.l.b16 %v70
  %v433 = vunpack.c.l.b16 %v71
  %v434 = vunpack.c.l.b16 %v72
  %v435 = vunpack.c.l.b16 %v73
  %v436 = vunpack.c.l.b16 %v74
  %v437 = vunpack.c.l.b16 %v75
  %v438 = vunpack.c.l.b16 %v76
  %v439 = vunpack.c.l.b16 %v77
  %v440 = vunpack.c.l.b16 %v78
  %v441 = vunpack.c.l.b16 %v79
  %v442 = vunpack.c.l.b16 %v80
  %v443 = vunpack.c.l.b16 %v81
  %v444 = vunpack.c.l.b16 %v82
  %v445 = vunpack.c.l.b16 %v83
  %v446 = vunpack.c.l.b16 %v84
  %v447 = vunpack.c.l.b16 %v85
  %v448 = vunpack.c.l.b16 %v86
  %v449 = vunpack.c.l.b16 %v87
  %v450 = vunpack.c.l.b16 %v88
  %v451 = vunpack.c.l.b16 %v89
  %v452 = vunpack.c.l.b16 %v90
  %v453 = vunpack.c.l.b16 %v91
  %v454 = vunpack.c.l.b16 %v92
  %v455 = vunpack.c.l.b16 %v93
  %v456 = vunpack.c.l.b16 %v94
  %v457 = vunpack.c.l.b16 %v95
  %v458 = vunpack.c.l.b16 %v96
  %v459 = vunpack.c.l.b16 %v97
  %v460 = vunpack.c.l.b16 %v98
  %v461 = vunpack.c.l.b16 %v99
  %v462 = vunpack.c.l.b16 %v100
  %v463 = vunpack.c.l.b16 %v101
  %v464 = vunpack.c.l.b16 %v102
  %v465 = vunpack.c.l.b16 %v103
  %v466 = vunpack.c.l.b16 %v104
  %v467 = vunpack.c.l.b16 %v105
  %v468 = vunpack.c.l.b16 %v106
  %v469 = vunpack.c.l.b16 %v107
  %v470 = vunpack.c.l.b16 %v108
  %v471 = vunpack.c.l.b16 %v109
  %v472 = vunpack.c.l.b16 %v110
  %v473 = vunpack.c.l.b16 %v111
  %v474 = vunpack.c.l.b16 %v112
  %v475 = vunpack.c.l.b16 %v113
  %v476 = vunpack.c.l.b16 %v114
  %v477 = vunpack.c.l.b16 %v115
  %v478 = vunpack.c.l.b16 %v116
  %v479 = vunpack.c.l.b16 %v117
  %v480 = vunpack.c.l.b16 %v118
  %v481 = vunpack.c.l.b16 %v119
  %v482 = vunpack.c.l.b16 %v120
  %v483 = vunpack.c.l.b16 %v121
  %v484 = vunpack.c.l.b16 %v122
  %v485 = vunpack.c.l.b16 %v123
  %v486 = vunpack.c.l.b16 %v124
  %v487 = vunpack.c.l.b16 %v125
  %v488 = vunpack.c.l.b16 %v126
  %v489 = vunpack.c.l.b16 %v127
  %v490 = vunpack.c.l.b16 %v128
  %v491 = vunpack.c.l.b16 %v129
  %v492 = vunpack.c.l.b16 %v130
  %v493 = vunpack.c.l.b16 %v131
  %v494 = vunpack.c.l.b16 %v132
  %v495 = vunpack.c.l.b16 %v133
  %v496 = vunpack.c.l.b16 %v134
  %v497 = vunpack.c.l.b16 %v135
  %v498 = vunpack.c.l.b16 %v136
  %v499 = vunpack.c.l.b16 %v137
  %v500 = vunpack.c.l.b16 %v138
  %v501 = vunpack.c.l.b16 %v139
  %v502 = vunpack.c.l.b16 %v140
  %v503 = vunpack.c.l.b16 %v141
  %v504 = vunpack.c.l.b16 %v142
  %v505 = vunpack.c.l.b16 %v143
  %v506 = vunpack.c.l.b16 %v144
  %v507 = vunpack.c.l.b16 %v145
  %v508 = vunpack.c.l.b16 %v146
  %v509 = vunpack.c.l.b16 %v147
  %v510 = vunpack.c.l.b16 %v148
  %v511 = vunpack.c.l.b16 %v149
  %v512 = vunpack.c.l.b16 %v150
  %v513 = vunpack.c.l.b16 %v151
  %v514 = vunpack.c.l.b16 %v152
  %v515 = vunpack.c.l.b16 %v153
  %v516 = vunpack.c.l.b16 %v154
  %v517 = vunpack.c.l.b16 %v155
  %v518 = vunpack.c.l.b16 %v156
  %v519 = vunpack.c.l.b16 %v157
  %v520 = vunpack.c.l.b16 %v158
  %v521 = vunpack.c.l.b16 %v159
  %v522 = vunpack.c.l.b16 %v160
  %v523 = vunpack.c.l.b16 %v161
  %v524 = vunpack.c.l.b16 %v162
  %v525 = vunpack.c.l.b16 %v163
  %v526 = vpack.c.b16 %v383, %v382
  %v527 = vpack.c.b16 %v385, %v384
  %v528 = vpack.c.b16 %v387, %v386
  %v529 = vpack.c.b16 %v389, %v388
  %v530 = vpack.c.b16 %v391, %v390
  %v531 = vpack.c.b16 %v393, %v392
  %v532 = vpack.c.b16 %v395, %v394
  %v533 = vpack.c.b16 %v397, %v396
  %v534 = vpack.c.b16 %v399, %v398
  %v535 = vpack.c.b16 %v401, %v400
  %v536 = vpack.c.b16 %v403, %v402
  %v537 = vpack.c.b16 %v405, %v404
  %v538 = vpack.c.b16 %v407, %v406
  %v539 = vpack.c.b16 %v409, %v408
  %v540 = vpack.c.b16 %v411, %v410
  %v541 = vpack.c.b16 %v413, %v412
  %v542 = vpack.c.b16 %v415, %v414
  %v543 = vpack.c.b16 %v417, %v416
  %v544 = vpack.c.b16 %v419, %v418
  %v545 = vpack.c.b16 %v421, %v420
  %v546 = vpack.c.b16 %v423, %v422
  %v547 = vpack.c.b16 %v425, %v424
  %v548 = vpack.c.b16 %v427, %v426
  %v549 = vpack.c.b16 %v429, %v428
  %v550 = vpack.c.b16 %v431, %v430
  %v551 = vpack.c.b16 %v433, %v432
  %v552 = vpack.c.b16 %v435, %v434
  %v553 = vpack.c.b16 %v437, %v436
  %v554 = vpack.c.b16 %v439, %v438
  %v555 = vpack.c.b16 %v441, %v440
  %v556 = vpack.c.b16 %v443, %v442
  %v557 = vpack.c.b16 %v445, %v444
  %v558 = vpack.c.b16 %v447, %v446
  %v559 = vpack.c.b16 %v449, %v448
  %v560 = vpack.c.b16 %v451, %v450
  %v561 = vpack.c.b16 %v453, %v452
  %v562 = vpack.c.b16 %v455, %v454
  %v563 = vpack.c.b16 %v457, %v456
  %v564 = vpack.c.b16 %v459, %v458
  %v565 = vpack.c.b16 %v461, %v460
  %v566 = vpack.c.b16 %v463, %v462
  %v567 = vpack.c.b16 %v465, %v464
  %v568 = vpack.c.b16 %v467, %v466
  %v569 = vpack.c.b16 %v469, %v468
  %v570 = vpack.c.b16 %v471, %v470
  %v571 = vpack.c.b16 %v473, %v472
  %v572 = vpack.c.b16 %v475, %v474
  %v573 = vpack.c.b16 %v477, %v476
  %v574 = vpack.c.b16 %v479, %v478
  %v575 = vpack.c.b16 %v481, %v480
  %v576 = vpack.c.b16 %v483, %v482
  %v577 = vpack.c.b16 %v485, %v484
  %v578 = vpack.c.b16 %v487, %v486
  %v579 = vpack.c.b16 %v489, %v488
  %v580 = vpack.c.b16 %v491, %v490
  %v581 = vpack.c.b16 %v493, %v492
  %v582 = vpack.c.b16 %v495, %v494
  %v583 = vpack.c.b16 %v497, %v496
  %v584 = vpack.c.b16 %v499, %v498
  %v585 = vpack.c.b16 %v501, %v500
  %v586 = vpack.c.b16 %v503, %v502
  %v587 = vpack.c.b16 %v505, %v504
  %v588 = vpack.c.b16 %v507, %v506
  %v589 = vpack.c.b16 %v509, %v508
  %v590 = vpack.c.b16 %v511, %v510
  %v591 = vpack.c.b16 %v513, %v512
  %v592 = vpack.c.b16 %v515, %v514
  %v593 = vpack.c.b16 %v517, %v516
  %v594 = vpack.c.b16 %v519, %v518
  %v595 = vpack.c.b16 %v521, %v520
  %v596 = vpack.c.b16 %v523, %v522
  %v597 = vpack.c.b16 %v525, %v524
  %670 = vmatprep.subr.bf16.mxu0 0
  %671 = vmatpush1.bf16.msra.mxu0 %v526
  %672 = vmatprep.subr.bf16.mxu0 0
  %673 = vmatpush1.bf16.msra.mxu0 %v527
  %674 = vmatprep.subr.bf16.mxu0 0
  %675 = vmatpush1.bf16.msra.mxu0 %v528
  %676 = vmatprep.subr.bf16.mxu0 0
  %677 = vmatpush1.bf16.msra.mxu0 %v529
  %678 = vmatprep.subr.bf16.mxu0 0
  %679 = vmatpush1.bf16.msra.mxu0 %v530
  %680 = vmatprep.subr.bf16.mxu0 0
  %681 = vmatpush1.bf16.msra.mxu0 %v531
  %682 = vmatprep.subr.bf16.mxu0 0
  %683 = vmatpush1.bf16.msra.mxu0 %v532
  %684 = vmatprep.subr.bf16.mxu0 0
  %685 = vmatpush1.bf16.msra.mxu0 %v533
  %686 = vmatprep.subr.bf16.mxu0 0
  %687 = vmatpush1.bf16.msra.mxu0 %v534
  %688 = vmatprep.subr.bf16.mxu0 0
  %689 = vmatpush1.bf16.msra.mxu0 %v535
  %690 = vmatprep.subr.bf16.mxu0 0
  %691 = vmatpush1.bf16.msra.mxu0 %v536
  %692 = vmatprep.subr.bf16.mxu0 0
  %693 = vmatpush1.bf16.msra.mxu0 %v537
  %694 = vmatprep.subr.bf16.mxu0 0
  %695 = vmatpush1.bf16.msra.mxu0 %v538
  %696 = vmatprep.subr.bf16.mxu0 0
  %697 = vmatpush1.bf16.msra.mxu0 %v539
  %698 = vmatprep.subr.bf16.mxu0 0
  %699 = vmatpush1.bf16.msra.mxu0 %v540
  %700 = vmatprep.subr.bf16.mxu0 0
  %701 = vmatpush1.bf16.msra.mxu0 %v541
  %702 = vmatprep.mubr.bf16.mxu0 %v203
  %703 = vmatmul.mubr.bf16.gmra.mrb[0].mxu0 %v189
  %v704 = vpop.f32.mrb[0].mxu0
  %v705 = vadd.f32 0.0, %v704
  %v706 = vpop.f32.mrb[0].mxu0
  %v707 = vpop.f32.mrb[0].mxu0
  %v708 = vpop.f32.mrb[0].mxu0
  %709 = vdwg.mxu0
  %710 = vmatprep.subr.bf16.mxu0 0
  %711 = vmatpush1.bf16.msra.mxu0 %v542
  %712 = vmatprep.subr.bf16.mxu0 0
  %713 = vmatpush1.bf16.msra.mxu0 %v543
  %714 = vmatprep.subr.bf16.mxu0 0
  %715 = vmatpush1.bf16.msra.mxu0 %v544
  %716 = vmatprep.subr.bf16.mxu0 0
  %717 = vmatpush1.bf16.msra.mxu0 %v545
  %718 = vmatprep.subr.bf16.mxu0 0
  %719 = vmatpush1.bf16.msra.mxu0 %v546
  %720 = vmatprep.subr.bf16.mxu0 0
  %721 = vmatpush1.bf16.msra.mxu0 %v547
  %722 = vmatprep.subr.bf16.mxu0 0
  %723 = vmatpush1.bf16.msra.mxu0 %v548
  %724 = vmatprep.subr.bf16.mxu0 0
  %725 = vmatpush1.bf16.msra.mxu0 %v549
  %726 = vmatprep.subr.bf16.mxu0 0
  %727 = vmatpush1.bf16.msra.mxu0 %v550
  %728 = vmatprep.subr.bf16.mxu0 0
  %729 = vmatpush1.bf16.msra.mxu0 %v551
  %730 = vmatprep.subr.bf16.mxu0 0
  %731 = vmatpush1.bf16.msra.mxu0 %v552
  %732 = vmatprep.subr.bf16.mxu0 0
  %733 = vmatpush1.bf16.msra.mxu0 %v553
  %734 = vmatprep.subr.bf16.mxu0 0
  %735 = vmatpush1.bf16.msra.mxu0 %v554
  %736 = vmatprep.subr.bf16.mxu0 0
  %737 = vmatpush1.bf16.msra.mxu0 %v555
  %738 = vmatprep.subr.bf16.mxu0 0
  %739 = vmatpush1.bf16.msra.mxu0 %v556
  %740 = vmatprep.subr.bf16.mxu0 0
  %741 = vmatpush1.bf16.msra.mxu0 %v557
  %742 = vmatprep.mubr.bf16.mxu0 %v213
  %743 = vmatmul.mubr.bf16.gmra.mrb[0].mxu0 %v211
  %v744 = vpop.f32.mrb[0].mxu0
  %v745 = vadd.f32 %v705, %v744
  %v746 = vpop.f32.mrb[0].mxu0
  %v747 = vpop.f32.mrb[0].mxu0
  %v748 = vpop.f32.mrb[0].mxu0
  %749 = vdwg.mxu0
  %750 = vmatprep.subr.bf16.mxu0 0
  %751 = vmatpush1.bf16.msra.mxu0 %v558
  %752 = vmatprep.subr.bf16.mxu0 0
  %753 = vmatpush1.bf16.msra.mxu0 %v559
  %754 = vmatprep.subr.bf16.mxu0 0
  %755 = vmatpush1.bf16.msra.mxu0 %v560
  %756 = vmatprep.subr.bf16.mxu0 0
  %757 = vmatpush1.bf16.msra.mxu0 %v561
  %758 = vmatprep.subr.bf16.mxu0 0
  %759 = vmatpush1.bf16.msra.mxu0 %v562
  %760 = vmatprep.subr.bf16.mxu0 0
  %761 = vmatpush1.bf16.msra.mxu0 %v563
  %762 = vmatprep.subr.bf16.mxu0 0
  %763 = vmatpush1.bf16.msra.mxu0 %v564
  %764 = vmatprep.subr.bf16.mxu0 0
  %765 = vmatpush1.bf16.msra.mxu0 %v565
  %766 = vmatprep.subr.bf16.mxu0 0
  %767 = vmatpush1.bf16.msra.mxu0 %v566
  %768 = vmatprep.subr.bf16.mxu0 0
  %769 = vmatpush1.bf16.msra.mxu0 %v567
  %770 = vmatprep.subr.bf16.mxu0 0
  %771 = vmatpush1.bf16.msra.mxu0 %v568
  %772 = vmatprep.subr.bf16.mxu0 0
  %773 = vmatpush1.bf16.msra.mxu0 %v569
  %774 = vmatprep.subr.bf16.mxu0 0
  %775 = vmatpush1.bf16.msra.mxu0 %v570
  %776 = vmatprep.subr.bf16.mxu0 0
  %777 = vmatpush1.bf16.msra.mxu0 %v571
  %778 = vmatprep.subr.bf16.mxu0 0
  %779 = vmatpush1.bf16.msra.mxu0 %v572
  %780 = vmatprep.subr.bf16.mxu0 0
  %781 = vmatpush1.bf16.msra.mxu0 %v573
  %782 = vmatprep.mubr.bf16.mxu0 %v210
  %783 = vmatmul.mubr.bf16.gmra.mrb[0].mxu0 %v196
  %v784 = vpop.f32.mrb[0].mxu0
  %v785 = vadd.f32 %v745, %v784
  %v786 = vpop.f32.mrb[0].mxu0
  %v787 = vpop.f32.mrb[0].mxu0
  %v788 = vpop.f32.mrb[0].mxu0
  %789 = vdwg.mxu0
  %790 = vmatprep.subr.bf16.mxu0 0
  %791 = vmatpush1.bf16.msra.mxu0 %v574
  %792 = vmatprep.subr.bf16.mxu0 0
  %793 = vmatpush1.bf16.msra.mxu0 %v575
  %794 = vmatprep.subr.bf16.mxu0 0
  %795 = vmatpush1.bf16.msra.mxu0 %v576
  %796 = vmatprep.subr.bf16.mxu0 0
  %797 = vmatpush1.bf16.msra.mxu0 %v577
  %798 = vmatprep.subr.bf16.mxu0 0
  %799 = vmatpush1.bf16.msra.mxu0 %v578
  %800 = vmatprep.subr.bf16.mxu0 0
  %801 = vmatpush1.bf16.msra.mxu0 %v579
  %802 = vmatprep.subr.bf16.mxu0 0
  %803 = vmatpush1.bf16.msra.mxu0 %v580
  %804 = vmatprep.subr.bf16.mxu0 0
  %805 = vmatpush1.bf16.msra.mxu0 %v581
  %806 = vmatprep.subr.bf16.mxu0 0
  %807 = vmatpush1.bf16.msra.mxu0 %v582
  %808 = vmatprep.subr.bf16.mxu0 0
  %809 = vmatpush1.bf16.msra.mxu0 %v583
  %810 = vmatprep.subr.bf16.mxu0 0
  %811 = vmatpush1.bf16.msra.mxu0 %v584
  %812 = vmatprep.subr.bf16.mxu0 0
  %813 = vmatpush1.bf16.msra.mxu0 %v585
  %814 = vmatprep.subr.bf16.mxu0 0
  %815 = vmatpush1.bf16.msra.mxu0 %v586
  %816 = vmatprep.subr.bf16.mxu0 0
  %817 = vmatpush1.bf16.msra.mxu0 %v587
  %818 = vmatprep.subr.bf16.mxu0 0
  %819 = vmatpush1.bf16.msra.mxu0 %v588
  %820 = vmatprep.subr.bf16.mxu0 0
  %821 = vmatpush1.bf16.msra.mxu0 %v589
  %822 = vmatprep.mubr.bf16.mxu0 %v214
  %823 = vmatmul.mubr.bf16.gmra.mrb[0].mxu0 %v212
  %v824 = vpop.f32.mrb[0].mxu0
  %v825 = vadd.f32 %v785, %v824
  %v826 = vpop.f32.mrb[0].mxu0
  %v827 = vpop.f32.mrb[0].mxu0
  %v828 = vpop.f32.mrb[0].mxu0
  %829 = vdwg.mxu0
  %830 = vmatprep.subr.bf16.mxu0 0
  %831 = vmatpush1.bf16.msra.mxu0 %v590
  %832 = vmatprep.subr.bf16.mxu0 0
  %833 = vmatpush1.bf16.msra.mxu0 %v591
  %834 = vmatprep.subr.bf16.mxu0 0
  %835 = vmatpush1.bf16.msra.mxu0 %v592
  %836 = vmatprep.subr.bf16.mxu0 0
  %837 = vmatpush1.bf16.msra.mxu0 %v593
  %838 = vmatprep.subr.bf16.mxu0 0
  %839 = vmatpush1.bf16.msra.mxu0 %v594
  %840 = vmatprep.subr.bf16.mxu0 0
  %841 = vmatpush1.bf16.msra.mxu0 %v595
  %842 = vmatprep.subr.bf16.mxu0 0
  %843 = vmatpush1.bf16.msra.mxu0 %v596
  %844 = vmatprep.subr.bf16.mxu0 0
  %845 = vmatpush1.bf16.msra.mxu0 %v597
  %846 = vmatprep.subr.bf16.mxu0 0
  %847 = vmatpush1.bf16.msra.mxu0 0
  %848 = vmatprep.subr.bf16.mxu0 0
  %849 = vmatpush1.bf16.msra.mxu0 0
  %850 = vmatprep.subr.bf16.mxu0 0
  %851 = vmatpush1.bf16.msra.mxu0 0
  %852 = vmatprep.subr.bf16.mxu0 0
  %853 = vmatpush1.bf16.msra.mxu0 0
  %854 = vmatprep.subr.bf16.mxu0 0
  %855 = vmatpush1.bf16.msra.mxu0 0
  %856 = vmatprep.subr.bf16.mxu0 0
  %857 = vmatpush1.bf16.msra.mxu0 0
  %858 = vmatprep.subr.bf16.mxu0 0
  %859 = vmatpush1.bf16.msra.mxu0 0
  %860 = vmatprep.subr.bf16.mxu0 0
  %861 = vmatpush1.bf16.msra.mxu0 0
  %862 = vmatprep.mubr.bf16.mxu0 0
  %863 = vmatmul.mubr.bf16.gmra.mrb[0].mxu0 %v228
  %v864 = vpop.f32.mrb[0].mxu0
  %v865 = vadd.f32 %v825, %v864
  %v866 = vpop.f32.mrb[0].mxu0
  %v867 = vpop.f32.mrb[0].mxu0
  %v868 = vpop.f32.mrb[0].mxu0
  %869 = vdwg.mxu0
  %v870 = vld [vmem:[%s2] sm:$0x1]
  %v872 = vlaneseq
  %v873 = vshrl.u32 %v872, 7
  %v874 = vsub.s32 0, %v873
  %v875 = vrot.slane %v870, %v874
  %v877 = vmul.f32 %v865, %v875
  %v878 = vld [vmem:[%s3] sm:$0x1]
  %v880 = vlaneseq
  %v881 = vshrl.u32 %v880, 7
  %v882 = vsub.s32 0, %v881
  %v883 = vrot.slane %v878, %v882
  %v885 = vadd.f32 %v877, %v883
  %v886 = vmax.f32 %v885, 0.0
  %v887 = vpack.c.bf16 %v886, %v886
  %888 = vst [vmem:[%s4] sm:$0x1] %v887
  // Predicated region
  $region18: #{resnet_forward.41} parent=0 // pred_check
    _
  $region19: #{resnet_forward.41} parent=0 // pred_check_branch
    %890 = sbr.rel (0) target = $region21
  $region20: #{resnet_forward.41} parent=0 // pred_region
    _
  $region21: #{resnet_forward.41} parent=0 // pred_fallthru
    _
  // Predicated region
  $region22: #{resnet_forward.41} parent=0 // pred_check
    _
  $region23: #{resnet_forward.41} parent=0 // pred_check_branch
    %892 = sbr.rel (0) target = $region25
  $region24: #{resnet_forward.41} parent=0 // pred_region
    _
  $region25: #{resnet_forward.41} parent=0 // pred_fallthru
    _

// kernel: resnet_forward.40
$region0: #{resnet_forward.40}
  #allocation0 [shape = 'u32[]', space=smem, size = 0x4, offset = 0x4, fixed_abs, tag = 'smem constant byte address 0x4 - core index']
  #allocation1 [shape = 'u32[144,128]{1,0:T(1,128)}', space=vmem, size = 0x12000, scoped, tag = 'internal scratch']
  %s0 = inlined_call_operand.vmem [shape: bf16[2,1152], index: 0, kind: input, shape index: {}]
  %s1 = inlined_call_operand.vmem [shape: bf16[1152,128], index: 1, kind: input, shape index: {}]
  %s2 = inlined_call_operand.vmem [shape: f32[1,128], index: 2, kind: input, shape index: {}]
  %s3 = inlined_call_operand.vmem [shape: f32[1,128], index: 3, kind: input, shape index: {}]
  %s4 = inlined_call_operand.vmem [shape: bf16[2,128], index: 4, kind: input, shape index: {}]
  %s5 = inlined_call_operand.vmem [shape: bf16[2,128], index: 5, kind: output, shape index: {}]
  %s6 = sld [smem:[#allocation0]]
  $region30: #{resnet_forward.40} parent=0
    _
  %s8 = ssub.s32 1, %s6
  %s9 = scalar_select 0, %s8, %s6
  // Predicated region
  $region2: #{resnet_forward.40} parent=0 // pred_check
    _
  $region3: #{resnet_forward.40} parent=0 // pred_check_branch
    %11 = sbr.rel (0) target = $region5
  $region4: #{resnet_forward.40} parent=0 // pred_region
    _
  $region5: #{resnet_forward.40} parent=0 // pred_fallthru
    _
  // Predicated region
  $region6: #{resnet_forward.40} parent=0 // pred_check
    _
  $region7: #{resnet_forward.40} parent=0 // pred_check_branch
    %13 = sbr.rel (0) target = $region9
  $region8: #{resnet_forward.40} parent=0 // pred_region
    _
  $region9: #{resnet_forward.40} parent=0 // pred_fallthru
    _
  // Predicated region
  $region10: #{resnet_forward.40} parent=0 // pred_check
    _
  $region11: #{resnet_forward.40} parent=0 // pred_check_branch
    %15 = sbr.rel (0) target = $region13
  $region12: #{resnet_forward.40} parent=0 // pred_region
    _
  $region13: #{resnet_forward.40} parent=0 // pred_fallthru
    _
  // Predicated region
  $region14: #{resnet_forward.40} parent=0 // pred_check
    _
  $region15: #{resnet_forward.40} parent=0 // pred_check_branch
    %17 = sbr.rel (0) target = $region17
  $region16: #{resnet_forward.40} parent=0 // pred_region
    _
  $region17: #{resnet_forward.40} parent=0 // pred_fallthru
    _
  // Predicated region
  $region18: #{resnet_forward.40} parent=0 // pred_check
    _
  $region19: #{resnet_forward.40} parent=0 // pred_check_branch
    %19 = sbr.rel (0) target = $region21
  $region20: #{resnet_forward.40} parent=0 // pred_region
    _
  $region21: #{resnet_forward.40} parent=0 // pred_fallthru
    _
  %v21 = vld [vmem:[%s0] sm:$0xff]
  %v22 = vld [vmem:[%s0 + $0x8] sm:$0x1]
  %v23 = vld [vmem:[%s1] sm:$0xf]
  %v24 = vld [vmem:[%s1 + $0x4] sm:$0xf]
  %v25 = vld [vmem:[%s1 + $0x8] sm:$0xf]
  %v26 = vld [vmem:[%s1 + $0xc] sm:$0xf]
  %v27 = vld [vmem:[%s1 + $0x10] sm:$0xf]
  %v28 = vld [vmem:[%s1 + $0x14] sm:$0xf]
  %v29 = vld [vmem:[%s1 + $0x18] sm:$0xf]
  %v30 = vld [vmem:[%s1 + $0x1c] sm:$0xf]
  %v31 = vld [vmem:[%s1 + $0x20] sm:$0xf]
  %v32 = vld [vmem:[%s1 + $0x24] sm:$0xf]
  %v33 = vld [vmem:[%s1 + $0x28] sm:$0xf]
  %v34 = vld [vmem:[%s1 + $0x2c] sm:$0xf]
  %v35 = vld [vmem:[%s1 + $0x30] sm:$0xf]
  %v36 = vld [vmem:[%s1 + $0x34] sm:$0xf]
  %v37 = vld [vmem:[%s1 + $0x38] sm:$0xf]
  %v38 = vld [vmem:[%s1 + $0x3c] sm:$0xf]
  %v39 = vld [vmem:[%s1 + $0x40] sm:$0xf]
  %v40 = vld [vmem:[%s1 + $0x44] sm:$0xf]
  %v41 = vld [vmem:[%s1 + $0x48] sm:$0xf]
  %v42 = vld [vmem:[%s1 + $0x4c] sm:$0xf]
  %v43 = vld [vmem:[%s1 + $0x50] sm:$0xf]
  %v44 = vld [vmem:[%s1 + $0x54] sm:$0xf]
  %v45 = vld [vmem:[%s1 + $0x58] sm:$0xf]
  %v46 = vld [vmem:[%s1 + $0x5c] sm:$0xf]
  %v47 = vld [vmem:[%s1 + $0x60] sm:$0xf]
  %v48 = vld [vmem:[%s1 + $0x64] sm:$0xf]
  %v49 = vld [vmem:[%s1 + $0x68] sm:$0xf]
  %v50 = vld [vmem:[%s1 + $0x6c] sm:$0xf]
  %v51 = vld [vmem:[%s1 + $0x70] sm:$0xf]
  %v52 = vld [vmem:[%s1 + $0x74] sm:$0xf]
  %v53 = vld [vmem:[%s1 + $0x78] sm:$0xf]
  %v54 = vld [vmem:[%s1 + $0x7c] sm:$0xf]
  %v55 = vld [vmem:[%s1 + $0x80] sm:$0xf]
  %v56 = vld [vmem:[%s1 + $0x84] sm:$0xf]
  %v57 = vld [vmem:[%s1 + $0x88] sm:$0xf]
  %v58 = vld [vmem:[%s1 + $0x8c] sm:$0xf]
  %v59 = vld [vmem:[%s1 + $0x90] sm:$0xf]
  %v60 = vld [vmem:[%s1 + $0x94] sm:$0xf]
  %v61 = vld [vmem:[%s1 + $0x98] sm:$0xf]
  %v62 = vld [vmem:[%s1 + $0x9c] sm:$0xf]
  %v63 = vld [vmem:[%s1 + $0xa0] sm:$0xf]
  %v64 = vld [vmem:[%s1 + $0xa4] sm:$0xf]
  %v65 = vld [vmem:[%s1 + $0xa8] sm:$0xf]
  %v66 = vld [vmem:[%s1 + $0xac] sm:$0xf]
  %v67 = vld [vmem:[%s1 + $0xb0] sm:$0xf]
  %v68 = vld [vmem:[%s1 + $0xb4] sm:$0xf]
  %v69 = vld [vmem:[%s1 + $0xb8] sm:$0xf]
  %v70 = vld [vmem:[%s1 + $0xbc] sm:$0xf]
  %v71 = vld [vmem:[%s1 + $0xc0] sm:$0xf]
  %v72 = vld [vmem:[%s1 + $0xc4] sm:$0xf]
  %v73 = vld [vmem:[%s1 + $0xc8] sm:$0xf]
  %v74 = vld [vmem:[%s1 + $0xcc] sm:$0xf]
  %v75 = vld [vmem:[%s1 + $0xd0] sm:$0xf]
  %v76 = vld [vmem:[%s1 + $0xd4] sm:$0xf]
  %v77 = vld [vmem:[%s1 + $0xd8] sm:$0xf]
  %v78 = vld [vmem:[%s1 + $0xdc] sm:$0xf]
  %v79 = vld [vmem:[%s1 + $0xe0] sm:$0xf]
  %v80 = vld [vmem:[%s1 + $0xe4] sm:$0xf]
  %v81 = vld [vmem:[%s1 + $0xe8] sm:$0xf]
  %v82 = vld [vmem:[%s1 + $0xec] sm:$0xf]
  %v83 = vld [vmem:[%s1 + $0xf0] sm:$0xf]
  %v84 = vld [vmem:[%s1 + $0xf4] sm:$0xf]
  %v85 = vld [vmem:[%s1 + $0xf8] sm:$0xf]
  %v86 = vld [vmem:[%s1 + $0xfc] sm:$0xf]
  %v87 = vld [vmem:[%s1 + $0x100] sm:$0xf]
  %v88 = vld [vmem:[%s1 + $0x104] sm:$0xf]
  %v89 = vld [vmem:[%s1 + $0x108] sm:$0xf]
  %v90 = vld [vmem:[%s1 + $0x10c] sm:$0xf]
  %v91 = vld [vmem:[%s1 + $0x110] sm:$0xf]
  %v92 = vld [vmem:[%s1 + $0x114] sm:$0xf]
  %v93 = vld [vmem:[%s1 + $0x118] sm:$0xf]
  %v94 = vld [vmem:[%s1 + $0x11c] sm:$0xf]
  %v95 = vld [vmem:[%s1 + $0x120] sm:$0xf]
  %v96 = vld [vmem:[%s1 + $0x124] sm:$0xf]
  %v97 = vld [vmem:[%s1 + $0x128] sm:$0xf]
  %v98 = vld [vmem:[%s1 + $0x12c] sm:$0xf]
  %v99 = vld [vmem:[%s1 + $0x130] sm:$0xf]
  %v100 = vld [vmem:[%s1 + $0x134] sm:$0xf]
  %v101 = vld [vmem:[%s1 + $0x138] sm:$0xf]
  %v102 = vld [vmem:[%s1 + $0x13c] sm:$0xf]
  %v103 = vld [vmem:[%s1 + $0x140] sm:$0xf]
  %v104 = vld [vmem:[%s1 + $0x144] sm:$0xf]
  %v105 = vld [vmem:[%s1 + $0x148] sm:$0xf]
  %v106 = vld [vmem:[%s1 + $0x14c] sm:$0xf]
  %v107 = vld [vmem:[%s1 + $0x150] sm:$0xf]
  %v108 = vld [vmem:[%s1 + $0x154] sm:$0xf]
  %v109 = vld [vmem:[%s1 + $0x158] sm:$0xf]
  %v110 = vld [vmem:[%s1 + $0x15c] sm:$0xf]
  %v111 = vld [vmem:[%s1 + $0x160] sm:$0xf]
  %v112 = vld [vmem:[%s1 + $0x164] sm:$0xf]
  %v113 = vld [vmem:[%s1 + $0x168] sm:$0xf]
  %v114 = vld [vmem:[%s1 + $0x16c] sm:$0xf]
  %v115 = vld [vmem:[%s1 + $0x170] sm:$0xf]
  %v116 = vld [vmem:[%s1 + $0x174] sm:$0xf]
  %v117 = vld [vmem:[%s1 + $0x178] sm:$0xf]
  %v118 = vld [vmem:[%s1 + $0x17c] sm:$0xf]
  %v119 = vld [vmem:[%s1 + $0x180] sm:$0xf]
  %v120 = vld [vmem:[%s1 + $0x184] sm:$0xf]
  %v121 = vld [vmem:[%s1 + $0x188] sm:$0xf]
  %v122 = vld [vmem:[%s1 + $0x18c] sm:$0xf]
  %v123 = vld [vmem:[%s1 + $0x190] sm:$0xf]
  %v124 = vld [vmem:[%s1 + $0x194] sm:$0xf]
  %v125 = vld [vmem:[%s1 + $0x198] sm:$0xf]
  %v126 = vld [vmem:[%s1 + $0x19c] sm:$0xf]
  %v127 = vld [vmem:[%s1 + $0x1a0] sm:$0xf]
  %v128 = vld [vmem:[%s1 + $0x1a4] sm:$0xf]
  %v129 = vld [vmem:[%s1 + $0x1a8] sm:$0xf]
  %v130 = vld [vmem:[%s1 + $0x1ac] sm:$0xf]
  %v131 = vld [vmem:[%s1 + $0x1b0] sm:$0xf]
  %v132 = vld [vmem:[%s1 + $0x1b4] sm:$0xf]
  %v133 = vld [vmem:[%s1 + $0x1b8] sm:$0xf]
  %v134 = vld [vmem:[%s1 + $0x1bc] sm:$0xf]
  %v135 = vld [vmem:[%s1 + $0x1c0] sm:$0xf]
  %v136 = vld [vmem:[%s1 + $0x1c4] sm:$0xf]
  %v137 = vld [vmem:[%s1 + $0x1c8] sm:$0xf]
  %v138 = vld [vmem:[%s1 + $0x1cc] sm:$0xf]
  %v139 = vld [vmem:[%s1 + $0x1d0] sm:$0xf]
  %v140 = vld [vmem:[%s1 + $0x1d4] sm:$0xf]
  %v141 = vld [vmem:[%s1 + $0x1d8] sm:$0xf]
  %v142 = vld [vmem:[%s1 + $0x1dc] sm:$0xf]
  %v143 = vld [vmem:[%s1 + $0x1e0] sm:$0xf]
  %v144 = vld [vmem:[%s1 + $0x1e4] sm:$0xf]
  %v145 = vld [vmem:[%s1 + $0x1e8] sm:$0xf]
  %v146 = vld [vmem:[%s1 + $0x1ec] sm:$0xf]
  %v147 = vld [vmem:[%s1 + $0x1f0] sm:$0xf]
  %v148 = vld [vmem:[%s1 + $0x1f4] sm:$0xf]
  %v149 = vld [vmem:[%s1 + $0x1f8] sm:$0xf]
  %v150 = vld [vmem:[%s1 + $0x1fc] sm:$0xf]
  %v151 = vld [vmem:[%s1 + $0x200] sm:$0xf]
  %v152 = vld [vmem:[%s1 + $0x204] sm:$0xf]
  %v153 = vld [vmem:[%s1 + $0x208] sm:$0xf]
  %v154 = vld [vmem:[%s1 + $0x20c] sm:$0xf]
  %v155 = vld [vmem:[%s1 + $0x210] sm:$0xf]
  %v156 = vld [vmem:[%s1 + $0x214] sm:$0xf]
  %v157 = vld [vmem:[%s1 + $0x218] sm:$0xf]
  %v158 = vld [vmem:[%s1 + $0x21c] sm:$0xf]
  %v159 = vld [vmem:[%s1 + $0x220] sm:$0xf]
  %v160 = vld [vmem:[%s1 + $0x224] sm:$0xf]
  %v161 = vld [vmem:[%s1 + $0x228] sm:$0xf]
  %v162 = vld [vmem:[%s1 + $0x22c] sm:$0xf]
  %v163 = vld [vmem:[%s1 + $0x230] sm:$0xf]
  %v164 = vld [vmem:[%s1 + $0x234] sm:$0xf]
  %v165 = vld [vmem:[%s1 + $0x238] sm:$0xf]
  %v166 = vld [vmem:[%s1 + $0x23c] sm:$0xf]
  %v169 = vcombine.high %v21, %v21
  %v171 = vunpack.c.l.s4 1966171168
  %v172 = vunpack.c.0.s8 %v171
  %v173 = vlaneseq
  %v174 = vshrl.u32 %v173, 7
  %v175 = vsub.s32 %v172, %v174
  %v176 = vrot.slane %v21, %v175
  %v178 = vunpack.c.l.s4 1966171168
  %v179 = vunpack.c.0.s8 %v178
  %v180 = vlaneseq
  %v181 = vshrl.u32 %v180, 7
  %v182 = vsub.s32 %v179, %v181
  %v183 = vrot.slane %v169, %v182
  %v184 = vcombine.high %v176, %v176
  %v185 = vcombine.high %v183, %v183
  %v187 = vunpack.c.l.s4 1966171168
  %v188 = vunpack.c.0.s8 %v187
  %v189 = vlaneseq
  %v190 = vshrl.u32 %v189, 7
  %v191 = vsub.s32 %v188, %v190
  %v192 = vrot.slane %v176, %v191
  %v194 = vunpack.c.l.s4 1966171168
  %v195 = vunpack.c.0.s8 %v194
  %v196 = vlaneseq
  %v197 = vshrl.u32 %v196, 7
  %v198 = vsub.s32 %v195, %v197
  %v199 = vrot.slane %v183, %v198
  %v201 = vunpack.c.l.s4 1966171168
  %v202 = vunpack.c.0.s8 %v201
  %v203 = vlaneseq
  %v204 = vshrl.u32 %v203, 7
  %v205 = vsub.s32 %v202, %v204
  %v206 = vrot.slane %v184, %v205
  %v208 = vunpack.c.l.s4 1966171168
  %v209 = vunpack.c.0.s8 %v208
  %v210 = vlaneseq
  %v211 = vshrl.u32 %v210, 7
  %v212 = vsub.s32 %v209, %v211
  %v213 = vrot.slane %v185, %v212
  %v214 = vcombine.high %v192, %v192
  %v215 = vcombine.high %v199, %v199
  %v216 = vcombine.high %v206, %v206
  %v217 = vcombine.high %v213, %v213
  %v219 = vunpack.c.l.s4 1966171168
  %v220 = vunpack.c.0.s8 %v219
  %v221 = vlaneseq
  %v222 = vshrl.u32 %v221, 7
  %v223 = vsub.s32 %v220, %v222
  %v224 = vrot.slane %v22, %v223
  %v226 = vunpack.c.l.s4 1966171168
  %v227 = vunpack.c.0.s8 %v226
  %v228 = vlaneseq
  %v229 = vshrl.u32 %v228, 7
  %v230 = vsub.s32 %v227, %v229
  %v231 = vrot.slane %v224, %v230
  %v385 = vunpack.c.l.b16 %v23
  %v386 = vunpack.c.l.b16 %v24
  %v387 = vunpack.c.l.b16 %v25
  %v388 = vunpack.c.l.b16 %v26
  %v389 = vunpack.c.l.b16 %v27
  %v390 = vunpack.c.l.b16 %v28
  %v391 = vunpack.c.l.b16 %v29
  %v392 = vunpack.c.l.b16 %v30
  %v393 = vunpack.c.l.b16 %v31
  %v394 = vunpack.c.l.b16 %v32
  %v395 = vunpack.c.l.b16 %v33
  %v396 = vunpack.c.l.b16 %v34
  %v397 = vunpack.c.l.b16 %v35
  %v398 = vunpack.c.l.b16 %v36
  %v399 = vunpack.c.l.b16 %v37
  %v400 = vunpack.c.l.b16 %v38
  %v401 = vunpack.c.l.b16 %v39
  %v402 = vunpack.c.l.b16 %v40
  %v403 = vunpack.c.l.b16 %v41
  %v404 = vunpack.c.l.b16 %v42
  %v405 = vunpack.c.l.b16 %v43
  %v406 = vunpack.c.l.b16 %v44
  %v407 = vunpack.c.l.b16 %v45
  %v408 = vunpack.c.l.b16 %v46
  %v409 = vunpack.c.l.b16 %v47
  %v410 = vunpack.c.l.b16 %v48
  %v411 = vunpack.c.l.b16 %v49
  %v412 = vunpack.c.l.b16 %v50
  %v413 = vunpack.c.l.b16 %v51
  %v414 = vunpack.c.l.b16 %v52
  %v415 = vunpack.c.l.b16 %v53
  %v416 = vunpack.c.l.b16 %v54
  %v417 = vunpack.c.l.b16 %v55
  %v418 = vunpack.c.l.b16 %v56
  %v419 = vunpack.c.l.b16 %v57
  %v420 = vunpack.c.l.b16 %v58
  %v421 = vunpack.c.l.b16 %v59
  %v422 = vunpack.c.l.b16 %v60
  %v423 = vunpack.c.l.b16 %v61
  %v424 = vunpack.c.l.b16 %v62
  %v425 = vunpack.c.l.b16 %v63
  %v426 = vunpack.c.l.b16 %v64
  %v427 = vunpack.c.l.b16 %v65
  %v428 = vunpack.c.l.b16 %v66
  %v429 = vunpack.c.l.b16 %v67
  %v430 = vunpack.c.l.b16 %v68
  %v431 = vunpack.c.l.b16 %v69
  %v432 = vunpack.c.l.b16 %v70
  %v433 = vunpack.c.l.b16 %v71
  %v434 = vunpack.c.l.b16 %v72
  %v435 = vunpack.c.l.b16 %v73
  %v436 = vunpack.c.l.b16 %v74
  %v437 = vunpack.c.l.b16 %v75
  %v438 = vunpack.c.l.b16 %v76
  %v439 = vunpack.c.l.b16 %v77
  %v440 = vunpack.c.l.b16 %v78
  %v441 = vunpack.c.l.b16 %v79
  %v442 = vunpack.c.l.b16 %v80
  %v443 = vunpack.c.l.b16 %v81
  %v444 = vunpack.c.l.b16 %v82
  %v445 = vunpack.c.l.b16 %v83
  %v446 = vunpack.c.l.b16 %v84
  %v447 = vunpack.c.l.b16 %v85
  %v448 = vunpack.c.l.b16 %v86
  %v449 = vunpack.c.l.b16 %v87
  %v450 = vunpack.c.l.b16 %v88
  %v451 = vunpack.c.l.b16 %v89
  %v452 = vunpack.c.l.b16 %v90
  %v453 = vunpack.c.l.b16 %v91
  %v454 = vunpack.c.l.b16 %v92
  %v455 = vunpack.c.l.b16 %v93
  %v456 = vunpack.c.l.b16 %v94
  %v457 = vunpack.c.l.b16 %v95
  %v458 = vunpack.c.l.b16 %v96
  %v459 = vunpack.c.l.b16 %v97
  %v460 = vunpack.c.l.b16 %v98
  %v461 = vunpack.c.l.b16 %v99
  %v462 = vunpack.c.l.b16 %v100
  %v463 = vunpack.c.l.b16 %v101
  %v464 = vunpack.c.l.b16 %v102
  %v465 = vunpack.c.l.b16 %v103
  %v466 = vunpack.c.l.b16 %v104
  %v467 = vunpack.c.l.b16 %v105
  %v468 = vunpack.c.l.b16 %v106
  %v469 = vunpack.c.l.b16 %v107
  %v470 = vunpack.c.l.b16 %v108
  %v471 = vunpack.c.l.b16 %v109
  %v472 = vunpack.c.l.b16 %v110
  %v473 = vunpack.c.l.b16 %v111
  %v474 = vunpack.c.l.b16 %v112
  %v475 = vunpack.c.l.b16 %v113
  %v476 = vunpack.c.l.b16 %v114
  %v477 = vunpack.c.l.b16 %v115
  %v478 = vunpack.c.l.b16 %v116
  %v479 = vunpack.c.l.b16 %v117
  %v480 = vunpack.c.l.b16 %v118
  %v481 = vunpack.c.l.b16 %v119
  %v482 = vunpack.c.l.b16 %v120
  %v483 = vunpack.c.l.b16 %v121
  %v484 = vunpack.c.l.b16 %v122
  %v485 = vunpack.c.l.b16 %v123
  %v486 = vunpack.c.l.b16 %v124
  %v487 = vunpack.c.l.b16 %v125
  %v488 = vunpack.c.l.b16 %v126
  %v489 = vunpack.c.l.b16 %v127
  %v490 = vunpack.c.l.b16 %v128
  %v491 = vunpack.c.l.b16 %v129
  %v492 = vunpack.c.l.b16 %v130
  %v493 = vunpack.c.l.b16 %v131
  %v494 = vunpack.c.l.b16 %v132
  %v495 = vunpack.c.l.b16 %v133
  %v496 = vunpack.c.l.b16 %v134
  %v497 = vunpack.c.l.b16 %v135
  %v498 = vunpack.c.l.b16 %v136
  %v499 = vunpack.c.l.b16 %v137
  %v500 = vunpack.c.l.b16 %v138
  %v501 = vunpack.c.l.b16 %v139
  %v502 = vunpack.c.l.b16 %v140
  %v503 = vunpack.c.l.b16 %v141
  %v504 = vunpack.c.l.b16 %v142
  %v505 = vunpack.c.l.b16 %v143
  %v506 = vunpack.c.l.b16 %v144
  %v507 = vunpack.c.l.b16 %v145
  %v508 = vunpack.c.l.b16 %v146
  %v509 = vunpack.c.l.b16 %v147
  %v510 = vunpack.c.l.b16 %v148
  %v511 = vunpack.c.l.b16 %v149
  %v512 = vunpack.c.l.b16 %v150
  %v513 = vunpack.c.l.b16 %v151
  %v514 = vunpack.c.l.b16 %v152
  %v515 = vunpack.c.l.b16 %v153
  %v516 = vunpack.c.l.b16 %v154
  %v517 = vunpack.c.l.b16 %v155
  %v518 = vunpack.c.l.b16 %v156
  %v519 = vunpack.c.l.b16 %v157
  %v520 = vunpack.c.l.b16 %v158
  %v521 = vunpack.c.l.b16 %v159
  %v522 = vunpack.c.l.b16 %v160
  %v523 = vunpack.c.l.b16 %v161
  %v524 = vunpack.c.l.b16 %v162
  %v525 = vunpack.c.l.b16 %v163
  %v526 = vunpack.c.l.b16 %v164
  %v527 = vunpack.c.l.b16 %v165
  %v528 = vunpack.c.l.b16 %v166
  %v529 = vpack.c.b16 %v386, %v385
  %v530 = vpack.c.b16 %v388, %v387
  %v531 = vpack.c.b16 %v390, %v389
  %v532 = vpack.c.b16 %v392, %v391
  %v533 = vpack.c.b16 %v394, %v393
  %v534 = vpack.c.b16 %v396, %v395
  %v535 = vpack.c.b16 %v398, %v397
  %v536 = vpack.c.b16 %v400, %v399
  %v537 = vpack.c.b16 %v402, %v401
  %v538 = vpack.c.b16 %v404, %v403
  %v539 = vpack.c.b16 %v406, %v405
  %v540 = vpack.c.b16 %v408, %v407
  %v541 = vpack.c.b16 %v410, %v409
  %v542 = vpack.c.b16 %v412, %v411
  %v543 = vpack.c.b16 %v414, %v413
  %v544 = vpack.c.b16 %v416, %v415
  %v545 = vpack.c.b16 %v418, %v417
  %v546 = vpack.c.b16 %v420, %v419
  %v547 = vpack.c.b16 %v422, %v421
  %v548 = vpack.c.b16 %v424, %v423
  %v549 = vpack.c.b16 %v426, %v425
  %v550 = vpack.c.b16 %v428, %v427
  %v551 = vpack.c.b16 %v430, %v429
  %v552 = vpack.c.b16 %v432, %v431
  %v553 = vpack.c.b16 %v434, %v433
  %v554 = vpack.c.b16 %v436, %v435
  %v555 = vpack.c.b16 %v438, %v437
  %v556 = vpack.c.b16 %v440, %v439
  %v557 = vpack.c.b16 %v442, %v441
  %v558 = vpack.c.b16 %v444, %v443
  %v559 = vpack.c.b16 %v446, %v445
  %v560 = vpack.c.b16 %v448, %v447
  %v561 = vpack.c.b16 %v450, %v449
  %v562 = vpack.c.b16 %v452, %v451
  %v563 = vpack.c.b16 %v454, %v453
  %v564 = vpack.c.b16 %v456, %v455
  %v565 = vpack.c.b16 %v458, %v457
  %v566 = vpack.c.b16 %v460, %v459
  %v567 = vpack.c.b16 %v462, %v461
  %v568 = vpack.c.b16 %v464, %v463
  %v569 = vpack.c.b16 %v466, %v465
  %v570 = vpack.c.b16 %v468, %v467
  %v571 = vpack.c.b16 %v470, %v469
  %v572 = vpack.c.b16 %v472, %v471
  %v573 = vpack.c.b16 %v474, %v473
  %v574 = vpack.c.b16 %v476, %v475
  %v575 = vpack.c.b16 %v478, %v477
  %v576 = vpack.c.b16 %v480, %v479
  %v577 = vpack.c.b16 %v482, %v481
  %v578 = vpack.c.b16 %v484, %v483
  %v579 = vpack.c.b16 %v486, %v485
  %v580 = vpack.c.b16 %v488, %v487
  %v581 = vpack.c.b16 %v490, %v489
  %v582 = vpack.c.b16 %v492, %v491
  %v583 = vpack.c.b16 %v494, %v493
  %v584 = vpack.c.b16 %v496, %v495
  %v585 = vpack.c.b16 %v498, %v497
  %v586 = vpack.c.b16 %v500, %v499
  %v587 = vpack.c.b16 %v502, %v501
  %v588 = vpack.c.b16 %v504, %v503
  %v589 = vpack.c.b16 %v506, %v505
  %v590 = vpack.c.b16 %v508, %v507
  %v591 = vpack.c.b16 %v510, %v509
  %v592 = vpack.c.b16 %v512, %v511
  %v593 = vpack.c.b16 %v514, %v513
  %v594 = vpack.c.b16 %v516, %v515
  %v595 = vpack.c.b16 %v518, %v517
  %v596 = vpack.c.b16 %v520, %v519
  %v597 = vpack.c.b16 %v522, %v521
  %v598 = vpack.c.b16 %v524, %v523
  %v599 = vpack.c.b16 %v526, %v525
  %v600 = vpack.c.b16 %v528, %v527
  %673 = vmatprep.subr.bf16.mxu0 0
  %674 = vmatpush1.bf16.msra.mxu0 %v529
  %675 = vmatprep.subr.bf16.mxu0 0
  %676 = vmatpush1.bf16.msra.mxu0 %v530
  %677 = vmatprep.subr.bf16.mxu0 0
  %678 = vmatpush1.bf16.msra.mxu0 %v531
  %679 = vmatprep.subr.bf16.mxu0 0
  %680 = vmatpush1.bf16.msra.mxu0 %v532
  %681 = vmatprep.subr.bf16.mxu0 0
  %682 = vmatpush1.bf16.msra.mxu0 %v533
  %683 = vmatprep.subr.bf16.mxu0 0
  %684 = vmatpush1.bf16.msra.mxu0 %v534
  %685 = vmatprep.subr.bf16.mxu0 0
  %686 = vmatpush1.bf16.msra.mxu0 %v535
  %687 = vmatprep.subr.bf16.mxu0 0
  %688 = vmatpush1.bf16.msra.mxu0 %v536
  %689 = vmatprep.subr.bf16.mxu0 0
  %690 = vmatpush1.bf16.msra.mxu0 %v537
  %691 = vmatprep.subr.bf16.mxu0 0
  %692 = vmatpush1.bf16.msra.mxu0 %v538
  %693 = vmatprep.subr.bf16.mxu0 0
  %694 = vmatpush1.bf16.msra.mxu0 %v539
  %695 = vmatprep.subr.bf16.mxu0 0
  %696 = vmatpush1.bf16.msra.mxu0 %v540
  %697 = vmatprep.subr.bf16.mxu0 0
  %698 = vmatpush1.bf16.msra.mxu0 %v541
  %699 = vmatprep.subr.bf16.mxu0 0
  %700 = vmatpush1.bf16.msra.mxu0 %v542
  %701 = vmatprep.subr.bf16.mxu0 0
  %702 = vmatpush1.bf16.msra.mxu0 %v543
  %703 = vmatprep.subr.bf16.mxu0 0
  %704 = vmatpush1.bf16.msra.mxu0 %v544
  %705 = vmatprep.mubr.bf16.mxu0 %v206
  %706 = vmatmul.mubr.bf16.gmra.mrb[0].mxu0 %v192
  %v707 = vpop.f32.mrb[0].mxu0
  %v708 = vadd.f32 0.0, %v707
  %v709 = vpop.f32.mrb[0].mxu0
  %v710 = vpop.f32.mrb[0].mxu0
  %v711 = vpop.f32.mrb[0].mxu0
  %712 = vdwg.mxu0
  %713 = vmatprep.subr.bf16.mxu0 0
  %714 = vmatpush1.bf16.msra.mxu0 %v545
  %715 = vmatprep.subr.bf16.mxu0 0
  %716 = vmatpush1.bf16.msra.mxu0 %v546
  %717 = vmatprep.subr.bf16.mxu0 0
  %718 = vmatpush1.bf16.msra.mxu0 %v547
  %719 = vmatprep.subr.bf16.mxu0 0
  %720 = vmatpush1.bf16.msra.mxu0 %v548
  %721 = vmatprep.subr.bf16.mxu0 0
  %722 = vmatpush1.bf16.msra.mxu0 %v549
  %723 = vmatprep.subr.bf16.mxu0 0
  %724 = vmatpush1.bf16.msra.mxu0 %v550
  %725 = vmatprep.subr.bf16.mxu0 0
  %726 = vmatpush1.bf16.msra.mxu0 %v551
  %727 = vmatprep.subr.bf16.mxu0 0
  %728 = vmatpush1.bf16.msra.mxu0 %v552
  %729 = vmatprep.subr.bf16.mxu0 0
  %730 = vmatpush1.bf16.msra.mxu0 %v553
  %731 = vmatprep.subr.bf16.mxu0 0
  %732 = vmatpush1.bf16.msra.mxu0 %v554
  %733 = vmatprep.subr.bf16.mxu0 0
  %734 = vmatpush1.bf16.msra.mxu0 %v555
  %735 = vmatprep.subr.bf16.mxu0 0
  %736 = vmatpush1.bf16.msra.mxu0 %v556
  %737 = vmatprep.subr.bf16.mxu0 0
  %738 = vmatpush1.bf16.msra.mxu0 %v557
  %739 = vmatprep.subr.bf16.mxu0 0
  %740 = vmatpush1.bf16.msra.mxu0 %v558
  %741 = vmatprep.subr.bf16.mxu0 0
  %742 = vmatpush1.bf16.msra.mxu0 %v559
  %743 = vmatprep.subr.bf16.mxu0 0
  %744 = vmatpush1.bf16.msra.mxu0 %v560
  %745 = vmatprep.mubr.bf16.mxu0 %v216
  %746 = vmatmul.mubr.bf16.gmra.mrb[0].mxu0 %v214
  %v747 = vpop.f32.mrb[0].mxu0
  %v748 = vadd.f32 %v708, %v747
  %v749 = vpop.f32.mrb[0].mxu0
  %v750 = vpop.f32.mrb[0].mxu0
  %v751 = vpop.f32.mrb[0].mxu0
  %752 = vdwg.mxu0
  %753 = vmatprep.subr.bf16.mxu0 0
  %754 = vmatpush1.bf16.msra.mxu0 %v561
  %755 = vmatprep.subr.bf16.mxu0 0
  %756 = vmatpush1.bf16.msra.mxu0 %v562
  %757 = vmatprep.subr.bf16.mxu0 0
  %758 = vmatpush1.bf16.msra.mxu0 %v563
  %759 = vmatprep.subr.bf16.mxu0 0
  %760 = vmatpush1.bf16.msra.mxu0 %v564
  %761 = vmatprep.subr.bf16.mxu0 0
  %762 = vmatpush1.bf16.msra.mxu0 %v565
  %763 = vmatprep.subr.bf16.mxu0 0
  %764 = vmatpush1.bf16.msra.mxu0 %v566
  %765 = vmatprep.subr.bf16.mxu0 0
  %766 = vmatpush1.bf16.msra.mxu0 %v567
  %767 = vmatprep.subr.bf16.mxu0 0
  %768 = vmatpush1.bf16.msra.mxu0 %v568
  %769 = vmatprep.subr.bf16.mxu0 0
  %770 = vmatpush1.bf16.msra.mxu0 %v569
  %771 = vmatprep.subr.bf16.mxu0 0
  %772 = vmatpush1.bf16.msra.mxu0 %v570
  %773 = vmatprep.subr.bf16.mxu0 0
  %774 = vmatpush1.bf16.msra.mxu0 %v571
  %775 = vmatprep.subr.bf16.mxu0 0
  %776 = vmatpush1.bf16.msra.mxu0 %v572
  %777 = vmatprep.subr.bf16.mxu0 0
  %778 = vmatpush1.bf16.msra.mxu0 %v573
  %779 = vmatprep.subr.bf16.mxu0 0
  %780 = vmatpush1.bf16.msra.mxu0 %v574
  %781 = vmatprep.subr.bf16.mxu0 0
  %782 = vmatpush1.bf16.msra.mxu0 %v575
  %783 = vmatprep.subr.bf16.mxu0 0
  %784 = vmatpush1.bf16.msra.mxu0 %v576
  %785 = vmatprep.mubr.bf16.mxu0 %v213
  %786 = vmatmul.mubr.bf16.gmra.mrb[0].mxu0 %v199
  %v787 = vpop.f32.mrb[0].mxu0
  %v788 = vadd.f32 %v748, %v787
  %v789 = vpop.f32.mrb[0].mxu0
  %v790 = vpop.f32.mrb[0].mxu0
  %v791 = vpop.f32.mrb[0].mxu0
  %792 = vdwg.mxu0
  %793 = vmatprep.subr.bf16.mxu0 0
  %794 = vmatpush1.bf16.msra.mxu0 %v577
  %795 = vmatprep.subr.bf16.mxu0 0
  %796 = vmatpush1.bf16.msra.mxu0 %v578
  %797 = vmatprep.subr.bf16.mxu0 0
  %798 = vmatpush1.bf16.msra.mxu0 %v579
  %799 = vmatprep.subr.bf16.mxu0 0
  %800 = vmatpush1.bf16.msra.mxu0 %v580
  %801 = vmatprep.subr.bf16.mxu0 0
  %802 = vmatpush1.bf16.msra.mxu0 %v581
  %803 = vmatprep.subr.bf16.mxu0 0
  %804 = vmatpush1.bf16.msra.mxu0 %v582
  %805 = vmatprep.subr.bf16.mxu0 0
  %806 = vmatpush1.bf16.msra.mxu0 %v583
  %807 = vmatprep.subr.bf16.mxu0 0
  %808 = vmatpush1.bf16.msra.mxu0 %v584
  %809 = vmatprep.subr.bf16.mxu0 0
  %810 = vmatpush1.bf16.msra.mxu0 %v585
  %811 = vmatprep.subr.bf16.mxu0 0
  %812 = vmatpush1.bf16.msra.mxu0 %v586
  %813 = vmatprep.subr.bf16.mxu0 0
  %814 = vmatpush1.bf16.msra.mxu0 %v587
  %815 = vmatprep.subr.bf16.mxu0 0
  %816 = vmatpush1.bf16.msra.mxu0 %v588
  %817 = vmatprep.subr.bf16.mxu0 0
  %818 = vmatpush1.bf16.msra.mxu0 %v589
  %819 = vmatprep.subr.bf16.mxu0 0
  %820 = vmatpush1.bf16.msra.mxu0 %v590
  %821 = vmatprep.subr.bf16.mxu0 0
  %822 = vmatpush1.bf16.msra.mxu0 %v591
  %823 = vmatprep.subr.bf16.mxu0 0
  %824 = vmatpush1.bf16.msra.mxu0 %v592
  %825 = vmatprep.mubr.bf16.mxu0 %v217
  %826 = vmatmul.mubr.bf16.gmra.mrb[0].mxu0 %v215
  %v827 = vpop.f32.mrb[0].mxu0
  %v828 = vadd.f32 %v788, %v827
  %v829 = vpop.f32.mrb[0].mxu0
  %v830 = vpop.f32.mrb[0].mxu0
  %v831 = vpop.f32.mrb[0].mxu0
  %832 = vdwg.mxu0
  %833 = vmatprep.subr.bf16.mxu0 0
  %834 = vmatpush1.bf16.msra.mxu0 %v593
  %835 = vmatprep.subr.bf16.mxu0 0
  %836 = vmatpush1.bf16.msra.mxu0 %v594
  %837 = vmatprep.subr.bf16.mxu0 0
  %838 = vmatpush1.bf16.msra.mxu0 %v595
  %839 = vmatprep.subr.bf16.mxu0 0
  %840 = vmatpush1.bf16.msra.mxu0 %v596
  %841 = vmatprep.subr.bf16.mxu0 0
  %842 = vmatpush1.bf16.msra.mxu0 %v597
  %843 = vmatprep.subr.bf16.mxu0 0
  %844 = vmatpush1.bf16.msra.mxu0 %v598
  %845 = vmatprep.subr.bf16.mxu0 0
  %846 = vmatpush1.bf16.msra.mxu0 %v599
  %847 = vmatprep.subr.bf16.mxu0 0
  %848 = vmatpush1.bf16.msra.mxu0 %v600
  %849 = vmatprep.subr.bf16.mxu0 0
  %850 = vmatpush1.bf16.msra.mxu0 0
  %851 = vmatprep.subr.bf16.mxu0 0
  %852 = vmatpush1.bf16.msra.mxu0 0
  %853 = vmatprep.subr.bf16.mxu0 0
  %854 = vmatpush1.bf16.msra.mxu0 0
  %855 = vmatprep.subr.bf16.mxu0 0
  %856 = vmatpush1.bf16.msra.mxu0 0
  %857 = vmatprep.subr.bf16.mxu0 0
  %858 = vmatpush1.bf16.msra.mxu0 0
  %859 = vmatprep.subr.bf16.mxu0 0
  %860 = vmatpush1.bf16.msra.mxu0 0
  %861 = vmatprep.subr.bf16.mxu0 0
  %862 = vmatpush1.bf16.msra.mxu0 0
  %863 = vmatprep.subr.bf16.mxu0 0
  %864 = vmatpush1.bf16.msra.mxu0 0
  %865 = vmatprep.mubr.bf16.mxu0 0
  %866 = vmatmul.mubr.bf16.gmra.mrb[0].mxu0 %v231
  %v867 = vpop.f32.mrb[0].mxu0
  %v868 = vadd.f32 %v828, %v867
  %v869 = vpop.f32.mrb[0].mxu0
  %v870 = vpop.f32.mrb[0].mxu0
  %v871 = vpop.f32.mrb[0].mxu0
  %872 = vdwg.mxu0
  %v873 = vld [vmem:[%s2] sm:$0x1]
  %v875 = vlaneseq
  %v876 = vshrl.u32 %v875, 7
  %v877 = vsub.s32 0, %v876
  %v878 = vrot.slane %v873, %v877
  %v880 = vmul.f32 %v868, %v878
  %v881 = vld [vmem:[%s3] sm:$0x1]
  %v883 = vlaneseq
  %v884 = vshrl.u32 %v883, 7
  %v885 = vsub.s32 0, %v884
  %v886 = vrot.slane %v881, %v885
  %v888 = vadd.f32 %v880, %v886
  %v889 = vld [vmem:[%s4] sm:$0x1]
  %v890 = vunpack.c.l.bf16 %v889
  %v891 = vadd.f32 %v888, %v890
  %v892 = vmax.f32 %v891, 0.0
  %v893 = vpack.c.bf16 %v892, %v892
  %894 = vst [vmem:[%s5] sm:$0x1] %v893
  // Predicated region
  $region22: #{resnet_forward.40} parent=0 // pred_check
    _
  $region23: #{resnet_forward.40} parent=0 // pred_check_branch
    %896 = sbr.rel (0) target = $region25
  $region24: #{resnet_forward.40} parent=0 // pred_region
    _
  $region25: #{resnet_forward.40} parent=0 // pred_fallthru
    _
  // Predicated region
  $region26: #{resnet_forward.40} parent=0 // pred_check
    _
  $region27: #{resnet_forward.40} parent=0 // pred_check_branch
    %898 = sbr.rel (0) target = $region29
  $region28: #{resnet_forward.40} parent=0 // pred_region
    _
  $region29: #{resnet_forward.40} parent=0 // pred_fallthru
    _

// kernel: resnet_forward.43
$region0: #{resnet_forward.43}
  #allocation0 [shape = 'u32[]', space=smem, size = 0x4, offset = 0x4, fixed_abs, tag = 'smem constant byte address 0x4 - core index']
  #allocation1 [shape = 'u32[144,128]{1,0:T(1,128)}', space=vmem, size = 0x12000, scoped, tag = 'internal scratch']
  %s0 = inlined_call_operand.vmem [shape: bf16[2,1,128], index: 0, kind: input, shape index: {}]
  %s1 = inlined_call_operand.vmem [shape: bf16[128,128], index: 1, kind: input, shape index: {}]
  %s2 = inlined_call_operand.vmem [shape: f32[1,128], index: 2, kind: input, shape index: {}]
  %s3 = inlined_call_operand.hbm [shape: f32[2,128], index: 3, kind: output, shape index: {}]
  %s4 = sld [smem:[#allocation0]]
  $region22: #{resnet_forward.43} parent=0
    _
  %s6 = ssub.s32 1, %s4
  %s7 = scalar_select 0, %s6, %s4
  $region1: #{resnet_forward.43} parent=0
    #allocation2 [shape = 'u8[1024]{0}', space=vmem, size = 0x400, scoped, tag = 'output window, operand 0, single buffered']
    #allocation3 [shape = 's32[1]{0}', space=sflag, size = 0x4, scoped, tag = 'scoped memory for resnet_forward.43']
    %8 = vsyncpa [#allocation3], 0
    // Predicated region
    $region2: #{resnet_forward.43} parent=1 // pred_check
      _
    $region3: #{resnet_forward.43} parent=1 // pred_check_branch
      %10 = sbr.rel (0) target = $region5
    $region4: #{resnet_forward.43} parent=1 // pred_region
      _
    $region5: #{resnet_forward.43} parent=1 // pred_fallthru
      _
    // Predicated region
    $region6: #{resnet_forward.43} parent=1 // pred_check
      _
    $region7: #{resnet_forward.43} parent=1 // pred_check_branch
      %12 = sbr.rel (0) target = $region9
    $region8: #{resnet_forward.43} parent=1 // pred_region
      _
    $region9: #{resnet_forward.43} parent=1 // pred_fallthru
      _
    // Predicated region
    $region10: #{resnet_forward.43} parent=1 // pred_check
      _
    $region11: #{resnet_forward.43} parent=1 // pred_check_branch
      %14 = sbr.rel (0) target = $region13
    $region12: #{resnet_forward.43} parent=1 // pred_region
      _
    $region13: #{resnet_forward.43} parent=1 // pred_fallthru
      _
    %v16 = vld [vmem:[%s0] sm:$0x1]
    %v17 = vld [vmem:[%s0 + $0x1] sm:$0x1]
    %v18 = vunpack.c.l.bf16 %v16
    %v19 = vunpack.c.l.bf16 %v17
    %v20 = vadd.f32 %v18, 0.0
    %v21 = vadd.f32 %v19, 0.0
    %v22 = vpack.c.bf16 %v20, %v20
    %v23 = vpack.c.bf16 %v21, %v21
    %v24 = vld [vmem:[%s1] sm:$0xf]
    %v25 = vld [vmem:[%s1 + $0x4] sm:$0xf]
    %v26 = vld [vmem:[%s1 + $0x8] sm:$0xf]
    %v27 = vld [vmem:[%s1 + $0xc] sm:$0xf]
    %v28 = vld [vmem:[%s1 + $0x10] sm:$0xf]
    %v29 = vld [vmem:[%s1 + $0x14] sm:$0xf]
    %v30 = vld [vmem:[%s1 + $0x18] sm:$0xf]
    %v31 = vld [vmem:[%s1 + $0x1c] sm:$0xf]
    %v32 = vld [vmem:[%s1 + $0x20] sm:$0xf]
    %v33 = vld [vmem:[%s1 + $0x24] sm:$0xf]
    %v34 = vld [vmem:[%s1 + $0x28] sm:$0xf]
    %v35 = vld [vmem:[%s1 + $0x2c] sm:$0xf]
    %v36 = vld [vmem:[%s1 + $0x30] sm:$0xf]
    %v37 = vld [vmem:[%s1 + $0x34] sm:$0xf]
    %v38 = vld [vmem:[%s1 + $0x38] sm:$0xf]
    %v39 = vld [vmem:[%s1 + $0x3c] sm:$0xf]
    %v40 = vld [vmem:[%s2] sm:$0x1]
    %v42 = vlaneseq
    %v43 = vshrl.u32 %v42, 7
    %v44 = vsub.s32 0, %v43
    %v45 = vrot.slane %v40, %v44
    %v49 = vunpack.c.l.b16 %v22
    %v50 = vunpack.c.l.b16 %v23
    %v51 = vrot.slane %v50, 7
    %vm52 = vcmask 1041409
    %v53 = vsel %vm52, %v51, %v49
    %v54 = vpack.c.b16 %v53, %v53
    %v72 = vunpack.c.l.b16 %v24
    %v73 = vunpack.c.l.b16 %v25
    %v74 = vunpack.c.l.b16 %v26
    %v75 = vunpack.c.l.b16 %v27
    %v76 = vunpack.c.l.b16 %v28
    %v77 = vunpack.c.l.b16 %v29
    %v78 = vunpack.c.l.b16 %v30
    %v79 = vunpack.c.l.b16 %v31
    %v80 = vunpack.c.l.b16 %v32
    %v81 = vunpack.c.l.b16 %v33
    %v82 = vunpack.c.l.b16 %v34
    %v83 = vunpack.c.l.b16 %v35
    %v84 = vunpack.c.l.b16 %v36
    %v85 = vunpack.c.l.b16 %v37
    %v86 = vunpack.c.l.b16 %v38
    %v87 = vunpack.c.l.b16 %v39
    %v88 = vpack.c.b16 %v73, %v72
    %v89 = vpack.c.b16 %v75, %v74
    %v90 = vpack.c.b16 %v77, %v76
    %v91 = vpack.c.b16 %v79, %v78
    %v92 = vpack.c.b16 %v81, %v80
    %v93 = vpack.c.b16 %v83, %v82
    %v94 = vpack.c.b16 %v85, %v84
    %v95 = vpack.c.b16 %v87, %v86
    %104 = vmatprep.subr.bf16.mxu0 0
    %105 = vmatpush1.bf16.msra.mxu0 %v88
    %106 = vmatprep.subr.bf16.mxu0 0
    %107 = vmatpush1.bf16.msra.mxu0 %v89
    %108 = vmatprep.subr.bf16.mxu0 0
    %109 = vmatpush1.bf16.msra.mxu0 %v90
    %110 = vmatprep.subr.bf16.mxu0 0
    %111 = vmatpush1.bf16.msra.mxu0 %v91
    %112 = vmatprep.subr.bf16.mxu0 0
    %113 = vmatpush1.bf16.msra.mxu0 %v92
    %114 = vmatprep.subr.bf16.mxu0 0
    %115 = vmatpush1.bf16.msra.mxu0 %v93
    %116 = vmatprep.subr.bf16.mxu0 0
    %117 = vmatpush1.bf16.msra.mxu0 %v94
    %118 = vmatprep.subr.bf16.mxu0 0
    %119 = vmatpush1.bf16.msra.mxu0 %v95
    %120 = vmatprep.subr.bf16.mxu0 0
    %121 = vmatpush1.bf16.msra.mxu0 0
    %122 = vmatprep.subr.bf16.mxu0 0
    %123 = vmatpush1.bf16.msra.mxu0 0
    %124 = vmatprep.subr.bf16.mxu0 0
    %125 = vmatpush1.bf16.msra.mxu0 0
    %126 = vmatprep.subr.bf16.mxu0 0
    %127 = vmatpush1.bf16.msra.mxu0 0
    %128 = vmatprep.subr.bf16.mxu0 0
    %129 = vmatpush1.bf16.msra.mxu0 0
    %130 = vmatprep.subr.bf16.mxu0 0
    %131 = vmatpush1.bf16.msra.mxu0 0
    %132 = vmatprep.subr.bf16.mxu0 0
    %133 = vmatpush1.bf16.msra.mxu0 0
    %134 = vmatprep.subr.bf16.mxu0 0
    %135 = vmatpush1.bf16.msra.mxu0 0
    %136 = vmatprep.mubr.bf16.mxu0 0
    %137 = vmatmul.mubr.bf16.gmra.mrb[0].mxu0 %v54
    %v138 = vpop.f32.mrb[0].mxu0
    %v139 = vadd.f32 %v45, %v138
    %v140 = vpop.f32.mrb[0].mxu0
    %v141 = vpop.f32.mrb[0].mxu0
    %v142 = vpop.f32.mrb[0].mxu0
    %143 = vdwg.mxu0
    %144 = vst [vmem:[#allocation2] sm:$0x3] %v139
    // Predicated region
    $region14: #{resnet_forward.43} parent=1 // pred_check
      _
    $region15: #{resnet_forward.43} parent=1 // pred_check_branch
      %146 = sbr.rel (0) target = $region17
    $region16: #{resnet_forward.43} parent=1 // pred_region
      %s148 = ssub.s32 32, 32
      %149 = vsyncadd [#allocation3], %s148
      %s151 = sshll.u32 [#allocation2], 4
      %s152 = int_to_ptr.vmem [resolvable:$true] %s151
      %154 = dma.vmem_to_hbm [thread:$0]  %s152, 32, %s3, [#allocation3]
    $region17: #{resnet_forward.43} parent=1 // pred_fallthru
      _
    // Predicated region
    $region18: #{resnet_forward.43} parent=1 // pred_check
      _
    $region19: #{resnet_forward.43} parent=1 // pred_check_branch
      %156 = sbr.rel (0) target = $region21
    $region20: #{resnet_forward.43} parent=1 // pred_region
      %157 = dma.done [#allocation3], 32
    $region21: #{resnet_forward.43} parent=1 // pred_fallthru
      _
    %158 = vsyncpa [#allocation3], 1

</llo_original>
